<compile_context>
chip_gen: v7x
topology: tpu7x:2x2x1
jax: 0.10.0
libtpu: 0.0.40
codegen_flags: <defaults>
</compile_context>

<pallas_src>
import functools
import math

import jax
import jax.numpy as jnp
from jax.experimental import pallas as pl
from jax.experimental.pallas import tpu as pltpu

_INV_SQRT2 = 1.0 / math.sqrt(2.0)


def _gelu(x):
    # exact (erf) GELU, matching torch.nn.GELU() default
    return 0.5 * x * (1.0 + jax.lax.erf(x * _INV_SQRT2))


def _round_up(v, m):
    return (v + m - 1) // m * m


# ------------------------------ Pallas kernel -------------------------------

def _conv_chain_kernel(x_ref, w1_ref, b1_ref, w2_ref, b2_ref, w3_ref, b3_ref,
                       o_ref, cols1_ref, cols2_ref, h1_ref, h2_ref, *,
                       frame_w, k, hw_pad, block_n, m_rows, m_out):
    """Three fused valid stride-1 KxK convs + GELU on block_n flat frames.

    x_ref  : (block_n*hw_pad, Cin)   bf16 flat frames (zero-padded per image)
    w*_ref : (K*K*Ci, Co)            bf16 im2col weights (tap-major rows)
    b*_ref : (1, Co)                 f32 biases
    o_ref  : (block_n, m_out, Co3)   f32 output frame rows per image
    cols*  : bf16 im2col scratch;  h1/h2: bf16 intermediate activations
    """
    m1, m2, m3 = m_rows

    def conv_gelu(src_ref, cols_ref, w_ref, b_ref, m):
        ci = src_ref.shape[-1]
        # Build the (m, K*K*ci) im2col block: tap (dy, dx) of a stride-1
        # valid conv over the flat frame is the row window shifted by
        # dy*frame_w + dx.  9 bf16 copies, then ONE MXU matmul.
        for dy in range(k):
            for dx in range(k):
                t = dy * k + dx
                off = dy * frame_w + dx
                cols_ref[0:m, t * ci:(t + 1) * ci] = src_ref[off:off + m, :]
        acc = jnp.dot(cols_ref[0:m, 0:k * k * ci], w_ref[...],
                      preferred_element_type=jnp.float32)
        return _gelu(acc + b_ref[...])                       # f32 epilogue

    h1_ref[...] = conv_gelu(x_ref, cols1_ref, w1_ref, b1_ref,
                            m1).astype(h1_ref.dtype)
    h2_ref[...] = conv_gelu(h1_ref, cols2_ref, w2_ref, b2_ref,
                            m2).astype(h2_ref.dtype)
    out3 = conv_gelu(h2_ref, cols2_ref, w3_ref, b3_ref, m3)  # (m3, Co3) f32

    for j in range(block_n):                                 # static unroll
        o_ref[j, :, :] = out3[j * hw_pad:j * hw_pad + m_out, :]


# --------------------------------- wrapper -----------------------------------

def my_conv2d_forward(params, x_nchw):
    """GELU(conv3(GELU(conv2(GELU(conv1(x)))))) for an NCHW f32 input."""
    n, c, h, w = x_nchw.shape
    k = params["w1"].shape[0]
    oc1, oc2, oc3 = (params[f"w{i}"].shape[-1] for i in (1, 2, 3))
    kk = k * k
    oh, ow = h - 3 * (k - 1), w - 3 * (k - 1)    # final spatial size
    assert oh > 0 and ow > 0
    hw = h * w
    shrink = (k - 1) * w + (k - 1)               # flat-frame rows consumed/conv
    m_out = oh * w                               # output frame rows kept/image

    # Batch blocking: fold block_n images into the matmul M dimension, but
    # keep >= 2 grid steps when possible so both v7x TensorCores get work.
    block_n = 1
    for d in range(min(8, max(1, n // 2)), 0, -1):
        if n % d == 0:
            block_n = d
            break
    num_blocks = n // block_n

    # Per-image frame stride (>= hw), padded so the rounded-up row counts
    # below never index past the block's input rows.
    hw_pad = _round_up(max(hw, m_out + 3 * shrink + 24), 8)
    m3 = _round_up((block_n - 1) * hw_pad + m_out, 8)   # rows computed, conv3
    m2 = _round_up(m3 + shrink, 8)                      # rows computed, conv2
    m1 = _round_up(m2 + shrink, 8)                      # rows computed, conv1
    assert m1 + shrink <= block_n * hw_pad              # all tap reads in-bounds

    # NCHW -> channels-last flat frames, zero-padded to hw_pad rows per image,
    # bf16 for the MXU.  This is the only pre-kernel glue.
    xf = jnp.transpose(x_nchw, (0, 2, 3, 1)).reshape(n, hw, c)
    xf = jnp.pad(xf, ((0, 0), (0, hw_pad - hw), (0, 0)))
    xf = xf.reshape(n * hw_pad, c).astype(jnp.bfloat16)

    def prep_w(wk):   # (k, k, ci, co) -> (k*k*ci, co) bf16, tap-major rows
        return wk.reshape(kk * wk.shape[2], wk.shape[3]).astype(jnp.bfloat16)

    def prep_b(bk):
        return bk.reshape(1, -1).astype(jnp.float32)

    kernel = functools.partial(_conv_chain_kernel, frame_w=w, k=k,
                               hw_pad=hw_pad, block_n=block_n,
                               m_rows=(m1, m2, m3), m_out=m_out)

    out = pl.pallas_call(
        kernel,
        out_shape=jax.ShapeDtypeStruct((n, m_out, oc3), jnp.float32),
        grid=(num_blocks,),
        in_specs=[
            pl.BlockSpec((block_n * hw_pad, c), lambda i: (i, 0)),   # frames
            pl.BlockSpec((kk * c, oc1), lambda i: (0, 0)),           # w1
            pl.BlockSpec((1, oc1), lambda i: (0, 0)),                # b1
            pl.BlockSpec((kk * oc1, oc2), lambda i: (0, 0)),         # w2
            pl.BlockSpec((1, oc2), lambda i: (0, 0)),                # b2
            pl.BlockSpec((kk * oc2, oc3), lambda i: (0, 0)),         # w3
            pl.BlockSpec((1, oc3), lambda i: (0, 0)),                # b3
        ],
        out_specs=pl.BlockSpec((block_n, m_out, oc3), lambda i: (i, 0, 0)),
        scratch_shapes=[
            pltpu.VMEM((m1, kk * c), jnp.bfloat16),                # im2col L1
            pltpu.VMEM((m2, kk * max(oc1, oc2)), jnp.bfloat16),    # im2col L2/L3
            pltpu.VMEM((m1, oc1), jnp.bfloat16),                   # h1 (bf16)
            pltpu.VMEM((m2, oc2), jnp.bfloat16),                   # h2 (bf16)
        ],
        compiler_params=pltpu.CompilerParams(
            dimension_semantics=("parallel",)),
    )(xf, prep_w(params["w1"]), prep_b(params["b1"]),
      prep_w(params["w2"]), prep_b(params["b2"]),
      prep_w(params["w3"]), prep_b(params["b3"]))

    # Frame rows -> valid (OH, OW) window -> NCHW.
    out = out.reshape(n, oh, w, oc3)[:, :, :ow, :]
    return jnp.transpose(out, (0, 3, 1, 2))


# ----------------------------- reference & init ------------------------------

def reference_forward(params, x_nchw):
    """Pure-JAX reference (lax.conv); matmul operands rounded to bf16 like the
    kernel's MXU path, accumulation/bias/GELU in f32."""
    x = x_nchw.astype(jnp.float32)
    for i in (1, 2, 3):
        wk = params[f"w{i}"].astype(jnp.bfloat16).astype(jnp.float32)
        bk = params[f"b{i}"].astype(jnp.float32)
        xb = x.astype(jnp.bfloat16).astype(jnp.float32)
        x = jax.lax.conv_general_dilated(
            xb, wk, window_strides=(1, 1), padding="VALID",
            dimension_numbers=("NCHW", "HWIO", "NCHW"))
        x = _gelu(x + bk.reshape(1, -1, 1, 1))
    return x


def init_params(key, inp, out, k):
    keys = jax.random.split(key, 6)

    def conv_init(kw, kb, ci, co):
        bound = 1.0 / math.sqrt(ci * k * k)          # torch Conv2d default init
        wk = jax.random.uniform(kw, (k, k, ci, co), jnp.float32, -bound, bound)
        bk = jax.random.uniform(kb, (co,), jnp.float32, -bound, bound)
        return wk, bk

    p = {}
    p["w1"], p["b1"] = conv_init(keys[0], keys[1], inp, out)
    p["w2"], p["b2"] = conv_init(keys[2], keys[3], out, out)
    p["w3"], p["b3"] = conv_init(keys[4], keys[5], out, out)
    return p


if __name__ == "__main__":
    key = jax.random.PRNGKey(0)
    pkey, xkey = jax.random.split(key)

    inp, out_ch, ksize = 4, 32, 3                    # MyConv2d(4, 32, 3)
    params = init_params(pkey, inp, out_ch, ksize)
    x = jax.random.uniform(xkey, (2, inp, 16, 16), jnp.float32)   # NCHW

    y = jax.jit(my_conv2d_forward)(params, x)
    y = jax.block_until_ready(y)

    assert y.shape == (2, out_ch, 10, 10), y.shape
    assert bool(jnp.all(jnp.isfinite(y)))

    y_ref = reference_forward(params, x)
    max_err = float(jnp.max(jnp.abs(y - y_ref)))
    assert max_err < 2e-2, f"max abs err vs reference: {max_err}"
    print("KERNEL_OK")
</pallas_src>

<mosaic_0001>
module attributes {stable_mosaic.version = 11 : i64} {
  func.func @_conv_chain_kernel(%arg0: i32, %arg1: memref<288x4xbf16, #tpu.memory_space<vmem>>, %arg2: memref<36x32xbf16, #tpu.memory_space<vmem>>, %arg3: memref<1x32xf32, #tpu.memory_space<vmem>>, %arg4: memref<288x32xbf16, #tpu.memory_space<vmem>>, %arg5: memref<1x32xf32, #tpu.memory_space<vmem>>, %arg6: memref<288x32xbf16, #tpu.memory_space<vmem>>, %arg7: memref<1x32xf32, #tpu.memory_space<vmem>>, %arg8: memref<1x160x32xf32, #tpu.memory_space<vmem>>, %arg9: memref<240x36xbf16, #tpu.memory_space<vmem>>, %arg10: memref<200x288xbf16, #tpu.memory_space<vmem>>, %arg11: memref<240x32xbf16, #tpu.memory_space<vmem>>, %arg12: memref<200x32xbf16, #tpu.memory_space<vmem>>) attributes {dimension_semantics = [#tpu.dimension_semantics<parallel>], iteration_bounds = array<i64: 2>, scalar_prefetch = 0 : i64, scratch_operands = 4 : i64, tpu.core_type = #tpu.core_type<tc>, window_params = [{transform_indices = @transform_0, window_bounds = array<i64: 288, 4>}, {pipeline_mode = #tpu.pipeline_mode<synchronous>, transform_indices = @transform_1, window_bounds = array<i64: 36, 32>}, {pipeline_mode = #tpu.pipeline_mode<synchronous>, transform_indices = @transform_2, window_bounds = array<i64: 1, 32>}, {pipeline_mode = #tpu.pipeline_mode<synchronous>, transform_indices = @transform_3, window_bounds = array<i64: 288, 32>}, {pipeline_mode = #tpu.pipeline_mode<synchronous>, transform_indices = @transform_4, window_bounds = array<i64: 1, 32>}, {pipeline_mode = #tpu.pipeline_mode<synchronous>, transform_indices = @transform_5, window_bounds = array<i64: 288, 32>}, {pipeline_mode = #tpu.pipeline_mode<synchronous>, transform_indices = @transform_6, window_bounds = array<i64: 1, 32>}, {transform_indices = @transform_7, window_bounds = array<i64: 1, 160, 32>}]} {
    %c0 = arith.constant 0 : index
    %c0_0 = arith.constant 0 : index
    %0 = vector.load %arg1[%c0, %c0_0] : memref<288x4xbf16, #tpu.memory_space<vmem>>, vector<240x4xbf16>
    %c0_1 = arith.constant 0 : index
    %c0_2 = arith.constant 0 : index
    %1 = vector.load %arg9[%c0_1, %c0_2] : memref<240x36xbf16, #tpu.memory_space<vmem>>, vector<240x4xbf16>
    tpu.vector_store %arg9[%c0_1, %c0_2], %0 {strides = array<i32>} : memref<240x36xbf16, #tpu.memory_space<vmem>>, vector<240x4xbf16>,
    %c1 = arith.constant 1 : index
    %c0_3 = arith.constant 0 : index
    %2 = vector.load %arg1[%c1, %c0_3] : memref<288x4xbf16, #tpu.memory_space<vmem>>, vector<240x4xbf16>
    %c0_4 = arith.constant 0 : index
    %c4 = arith.constant 4 : index
    %3 = vector.load %arg9[%c0_4, %c4] : memref<240x36xbf16, #tpu.memory_space<vmem>>, vector<240x4xbf16>
    tpu.vector_store %arg9[%c0_4, %c4], %2 {strides = array<i32>} : memref<240x36xbf16, #tpu.memory_space<vmem>>, vector<240x4xbf16>,
    %c2 = arith.constant 2 : index
    %c0_5 = arith.constant 0 : index
    %4 = vector.load %arg1[%c2, %c0_5] : memref<288x4xbf16, #tpu.memory_space<vmem>>, vector<240x4xbf16>
    %c0_6 = arith.constant 0 : index
    %c8 = arith.constant 8 : index
    %5 = vector.load %arg9[%c0_6, %c8] : memref<240x36xbf16, #tpu.memory_space<vmem>>, vector<240x4xbf16>
    tpu.vector_store %arg9[%c0_6, %c8], %4 {strides = array<i32>} : memref<240x36xbf16, #tpu.memory_space<vmem>>, vector<240x4xbf16>,
    %c16 = arith.constant 16 : index
    %c0_7 = arith.constant 0 : index
    %6 = vector.load %arg1[%c16, %c0_7] : memref<288x4xbf16, #tpu.memory_space<vmem>>, vector<240x4xbf16>
    %c0_8 = arith.constant 0 : index
    %c12 = arith.constant 12 : index
    %7 = vector.load %arg9[%c0_8, %c12] : memref<240x36xbf16, #tpu.memory_space<vmem>>, vector<240x4xbf16>
    tpu.vector_store %arg9[%c0_8, %c12], %6 {strides = array<i32>} : memref<240x36xbf16, #tpu.memory_space<vmem>>, vector<240x4xbf16>,
    %c17 = arith.constant 17 : index
    %c0_9 = arith.constant 0 : index
    %8 = vector.load %arg1[%c17, %c0_9] : memref<288x4xbf16, #tpu.memory_space<vmem>>, vector<240x4xbf16>
    %c0_10 = arith.constant 0 : index
    %c16_11 = arith.constant 16 : index
    %9 = vector.load %arg9[%c0_10, %c16_11] : memref<240x36xbf16, #tpu.memory_space<vmem>>, vector<240x4xbf16>
    tpu.vector_store %arg9[%c0_10, %c16_11], %8 {strides = array<i32>} : memref<240x36xbf16, #tpu.memory_space<vmem>>, vector<240x4xbf16>,
    %c18 = arith.constant 18 : index
    %c0_12 = arith.constant 0 : index
    %10 = vector.load %arg1[%c18, %c0_12] : memref<288x4xbf16, #tpu.memory_space<vmem>>, vector<240x4xbf16>
    %c0_13 = arith.constant 0 : index
    %c20 = arith.constant 20 : index
    %11 = vector.load %arg9[%c0_13, %c20] : memref<240x36xbf16, #tpu.memory_space<vmem>>, vector<240x4xbf16>
    tpu.vector_store %arg9[%c0_13, %c20], %10 {strides = array<i32>} : memref<240x36xbf16, #tpu.memory_space<vmem>>, vector<240x4xbf16>,
    %c32 = arith.constant 32 : index
    %c0_14 = arith.constant 0 : index
    %12 = vector.load %arg1[%c32, %c0_14] : memref<288x4xbf16, #tpu.memory_space<vmem>>, vector<240x4xbf16>
    %c0_15 = arith.constant 0 : index
    %c24 = arith.constant 24 : index
    %13 = vector.load %arg9[%c0_15, %c24] : memref<240x36xbf16, #tpu.memory_space<vmem>>, vector<240x4xbf16>
    tpu.vector_store %arg9[%c0_15, %c24], %12 {strides = array<i32>} : memref<240x36xbf16, #tpu.memory_space<vmem>>, vector<240x4xbf16>,
    %c33 = arith.constant 33 : index
    %c0_16 = arith.constant 0 : index
    %14 = vector.load %arg1[%c33, %c0_16] : memref<288x4xbf16, #tpu.memory_space<vmem>>, vector<240x4xbf16>
    %c0_17 = arith.constant 0 : index
    %c28 = arith.constant 28 : index
    %15 = vector.load %arg9[%c0_17, %c28] : memref<240x36xbf16, #tpu.memory_space<vmem>>, vector<240x4xbf16>
    tpu.vector_store %arg9[%c0_17, %c28], %14 {strides = array<i32>} : memref<240x36xbf16, #tpu.memory_space<vmem>>, vector<240x4xbf16>,
    %c34 = arith.constant 34 : index
    %c0_18 = arith.constant 0 : index
    %16 = vector.load %arg1[%c34, %c0_18] : memref<288x4xbf16, #tpu.memory_space<vmem>>, vector<240x4xbf16>
    %c0_19 = arith.constant 0 : index
    %c32_20 = arith.constant 32 : index
    %17 = vector.load %arg9[%c0_19, %c32_20] : memref<240x36xbf16, #tpu.memory_space<vmem>>, vector<240x4xbf16>
    tpu.vector_store %arg9[%c0_19, %c32_20], %16 {strides = array<i32>} : memref<240x36xbf16, #tpu.memory_space<vmem>>, vector<240x4xbf16>,
    %c0_21 = arith.constant 0 : index
    %c0_22 = arith.constant 0 : index
    %18 = vector.load %arg9[%c0_21, %c0_22] : memref<240x36xbf16, #tpu.memory_space<vmem>>, vector<240x36xbf16>
    %c0_23 = arith.constant 0 : index
    %c0_24 = arith.constant 0 : index
    %19 = vector.load %arg2[%c0_23, %c0_24] : memref<36x32xbf16, #tpu.memory_space<vmem>>, vector<36x32xbf16>
    %cst = arith.constant dense<0.000000e+00> : vector<240x32xf32>
    %20 = tpu.matmul %18, %19, %cst {dimension_numbers = #tpu.dot_dimension_numbers<[1], [0], [0], [1], [0, 0, 1, 1], [], []>} : vector<240x36xbf16>, vector<36x32xbf16>, vector<240x32xf32> -> vector<240x32xf32>
    %c0_25 = arith.constant 0 : index
    %c0_26 = arith.constant 0 : index
    %21 = vector.load %arg3[%c0_25, %c0_26] : memref<1x32xf32, #tpu.memory_space<vmem>>, vector<1x32xf32>
    %22 = vector.broadcast %21 : vector<1x32xf32> to vector<240x32xf32>
    %23 = arith.addf %20, %22 : vector<240x32xf32>
    %cst_27 = arith.constant 5.000000e-01 : f32
    %24 = vector.broadcast %cst_27 : f32 to vector<240x32xf32>
    %25 = arith.mulf %24, %23 : vector<240x32xf32>
    %cst_28 = arith.constant 0.707106769 : f32
    %26 = vector.broadcast %cst_28 : f32 to vector<240x32xf32>
    %27 = arith.mulf %23, %26 : vector<240x32xf32>
    %28 = math.erf %27 : vector<240x32xf32>
    %cst_29 = arith.constant 1.000000e+00 : f32
    %29 = vector.broadcast %cst_29 : f32 to vector<240x32xf32>
    %30 = arith.addf %29, %28 : vector<240x32xf32>
    %31 = arith.mulf %25, %30 : vector<240x32xf32>
    %32 = arith.truncf %31 : vector<240x32xf32> to vector<240x32xbf16>
    %c0_30 = arith.constant 0 : index
    %c0_31 = arith.constant 0 : index
    %33 = vector.load %arg11[%c0_30, %c0_31] : memref<240x32xbf16, #tpu.memory_space<vmem>>, vector<240x32xbf16>
    tpu.vector_store %arg11[%c0_30, %c0_31], %32 {strides = array<i32>} : memref<240x32xbf16, #tpu.memory_space<vmem>>, vector<240x32xbf16>,
    %c0_32 = arith.constant 0 : index
    %c0_33 = arith.constant 0 : index
    %34 = vector.load %arg11[%c0_32, %c0_33] : memref<240x32xbf16, #tpu.memory_space<vmem>>, vector<200x32xbf16>
    %c0_34 = arith.constant 0 : index
    %c0_35 = arith.constant 0 : index
    %35 = vector.load %arg10[%c0_34, %c0_35] : memref<200x288xbf16, #tpu.memory_space<vmem>>, vector<200x32xbf16>
    tpu.vector_store %arg10[%c0_34, %c0_35], %34 {strides = array<i32>} : memref<200x288xbf16, #tpu.memory_space<vmem>>, vector<200x32xbf16>,
    %c1_36 = arith.constant 1 : index
    %c0_37 = arith.constant 0 : index
    %36 = vector.load %arg11[%c1_36, %c0_37] : memref<240x32xbf16, #tpu.memory_space<vmem>>, vector<200x32xbf16>
    %c0_38 = arith.constant 0 : index
    %c32_39 = arith.constant 32 : index
    %37 = vector.load %arg10[%c0_38, %c32_39] : memref<200x288xbf16, #tpu.memory_space<vmem>>, vector<200x32xbf16>
    tpu.vector_store %arg10[%c0_38, %c32_39], %36 {strides = array<i32>} : memref<200x288xbf16, #tpu.memory_space<vmem>>, vector<200x32xbf16>,
    %c2_40 = arith.constant 2 : index
    %c0_41 = arith.constant 0 : index
    %38 = vector.load %arg11[%c2_40, %c0_41] : memref<240x32xbf16, #tpu.memory_space<vmem>>, vector<200x32xbf16>
    %c0_42 = arith.constant 0 : index
    %c64 = arith.constant 64 : index
    %39 = vector.load %arg10[%c0_42, %c64] : memref<200x288xbf16, #tpu.memory_space<vmem>>, vector<200x32xbf16>
    tpu.vector_store %arg10[%c0_42, %c64], %38 {strides = array<i32>} : memref<200x288xbf16, #tpu.memory_space<vmem>>, vector<200x32xbf16>,
    %c16_43 = arith.constant 16 : index
    %c0_44 = arith.constant 0 : index
    %40 = vector.load %arg11[%c16_43, %c0_44] : memref<240x32xbf16, #tpu.memory_space<vmem>>, vector<200x32xbf16>
    %c0_45 = arith.constant 0 : index
    %c96 = arith.constant 96 : index
    %41 = vector.load %arg10[%c0_45, %c96] : memref<200x288xbf16, #tpu.memory_space<vmem>>, vector<200x32xbf16>
    tpu.vector_store %arg10[%c0_45, %c96], %40 {strides = array<i32>} : memref<200x288xbf16, #tpu.memory_space<vmem>>, vector<200x32xbf16>,
    %c17_46 = arith.constant 17 : index
    %c0_47 = arith.constant 0 : index
    %42 = vector.load %arg11[%c17_46, %c0_47] : memref<240x32xbf16, #tpu.memory_space<vmem>>, vector<200x32xbf16>
    %c0_48 = arith.constant 0 : index
    %c128 = arith.constant 128 : index
    %43 = vector.load %arg10[%c0_48, %c128] : memref<200x288xbf16, #tpu.memory_space<vmem>>, vector<200x32xbf16>
    tpu.vector_store %arg10[%c0_48, %c128], %42 {strides = array<i32>} : memref<200x288xbf16, #tpu.memory_space<vmem>>, vector<200x32xbf16>,
    %c18_49 = arith.constant 18 : index
    %c0_50 = arith.constant 0 : index
    %44 = vector.load %arg11[%c18_49, %c0_50] : memref<240x32xbf16, #tpu.memory_space<vmem>>, vector<200x32xbf16>
    %c0_51 = arith.constant 0 : index
    %c160 = arith.constant 160 : index
    %45 = vector.load %arg10[%c0_51, %c160] : memref<200x288xbf16, #tpu.memory_space<vmem>>, vector<200x32xbf16>
    tpu.vector_store %arg10[%c0_51, %c160], %44 {strides = array<i32>} : memref<200x288xbf16, #tpu.memory_space<vmem>>, vector<200x32xbf16>,
    %c32_52 = arith.constant 32 : index
    %c0_53 = arith.constant 0 : index
    %46 = vector.load %arg11[%c32_52, %c0_53] : memref<240x32xbf16, #tpu.memory_space<vmem>>, vector<200x32xbf16>
    %c0_54 = arith.constant 0 : index
    %c192 = arith.constant 192 : index
    %47 = vector.load %arg10[%c0_54, %c192] : memref<200x288xbf16, #tpu.memory_space<vmem>>, vector<200x32xbf16>
    tpu.vector_store %arg10[%c0_54, %c192], %46 {strides = array<i32>} : memref<200x288xbf16, #tpu.memory_space<vmem>>, vector<200x32xbf16>,
    %c33_55 = arith.constant 33 : index
    %c0_56 = arith.constant 0 : index
    %48 = vector.load %arg11[%c33_55, %c0_56] : memref<240x32xbf16, #tpu.memory_space<vmem>>, vector<200x32xbf16>
    %c0_57 = arith.constant 0 : index
    %c224 = arith.constant 224 : index
    %49 = vector.load %arg10[%c0_57, %c224] : memref<200x288xbf16, #tpu.memory_space<vmem>>, vector<200x32xbf16>
    tpu.vector_store %arg10[%c0_57, %c224], %48 {strides = array<i32>} : memref<200x288xbf16, #tpu.memory_space<vmem>>, vector<200x32xbf16>,
    %c34_58 = arith.constant 34 : index
    %c0_59 = arith.constant 0 : index
    %50 = vector.load %arg11[%c34_58, %c0_59] : memref<240x32xbf16, #tpu.memory_space<vmem>>, vector<200x32xbf16>
    %c0_60 = arith.constant 0 : index
    %c256 = arith.constant 256 : index
    %51 = vector.load %arg10[%c0_60, %c256] : memref<200x288xbf16, #tpu.memory_space<vmem>>, vector<200x32xbf16>
    tpu.vector_store %arg10[%c0_60, %c256], %50 {strides = array<i32>} : memref<200x288xbf16, #tpu.memory_space<vmem>>, vector<200x32xbf16>,
    %c0_61 = arith.constant 0 : index
    %c0_62 = arith.constant 0 : index
    %52 = vector.load %arg10[%c0_61, %c0_62] : memref<200x288xbf16, #tpu.memory_space<vmem>>, vector<200x288xbf16>
    %c0_63 = arith.constant 0 : index
    %c0_64 = arith.constant 0 : index
    %53 = vector.load %arg4[%c0_63, %c0_64] : memref<288x32xbf16, #tpu.memory_space<vmem>>, vector<288x32xbf16>
    %cst_65 = arith.constant dense<0.000000e+00> : vector<200x32xf32>
    %54 = tpu.matmul %52, %53, %cst_65 {dimension_numbers = #tpu.dot_dimension_numbers<[1], [0], [0], [1], [0, 0, 1, 1], [], []>} : vector<200x288xbf16>, vector<288x32xbf16>, vector<200x32xf32> -> vector<200x32xf32>
    %c0_66 = arith.constant 0 : index
    %c0_67 = arith.constant 0 : index
    %55 = vector.load %arg5[%c0_66, %c0_67] : memref<1x32xf32, #tpu.memory_space<vmem>>, vector<1x32xf32>
    %56 = vector.broadcast %55 : vector<1x32xf32> to vector<200x32xf32>
    %57 = arith.addf %54, %56 : vector<200x32xf32>
    %cst_68 = arith.constant 5.000000e-01 : f32
    %58 = vector.broadcast %cst_68 : f32 to vector<200x32xf32>
    %59 = arith.mulf %58, %57 : vector<200x32xf32>
    %cst_69 = arith.constant 0.707106769 : f32
    %60 = vector.broadcast %cst_69 : f32 to vector<200x32xf32>
    %61 = arith.mulf %57, %60 : vector<200x32xf32>
    %62 = math.erf %61 : vector<200x32xf32>
    %cst_70 = arith.constant 1.000000e+00 : f32
    %63 = vector.broadcast %cst_70 : f32 to vector<200x32xf32>
    %64 = arith.addf %63, %62 : vector<200x32xf32>
    %65 = arith.mulf %59, %64 : vector<200x32xf32>
    %66 = arith.truncf %65 : vector<200x32xf32> to vector<200x32xbf16>
    %c0_71 = arith.constant 0 : index
    %c0_72 = arith.constant 0 : index
    %67 = vector.load %arg12[%c0_71, %c0_72] : memref<200x32xbf16, #tpu.memory_space<vmem>>, vector<200x32xbf16>
    tpu.vector_store %arg12[%c0_71, %c0_72], %66 {strides = array<i32>} : memref<200x32xbf16, #tpu.memory_space<vmem>>, vector<200x32xbf16>,
    %c0_73 = arith.constant 0 : index
    %c0_74 = arith.constant 0 : index
    %68 = vector.load %arg12[%c0_73, %c0_74] : memref<200x32xbf16, #tpu.memory_space<vmem>>, vector<160x32xbf16>
    %c0_75 = arith.constant 0 : index
    %c0_76 = arith.constant 0 : index
    %69 = vector.load %arg10[%c0_75, %c0_76] : memref<200x288xbf16, #tpu.memory_space<vmem>>, vector<160x32xbf16>
    tpu.vector_store %arg10[%c0_75, %c0_76], %68 {strides = array<i32>} : memref<200x288xbf16, #tpu.memory_space<vmem>>, vector<160x32xbf16>,
    %c1_77 = arith.constant 1 : index
    %c0_78 = arith.constant 0 : index
    %70 = vector.load %arg12[%c1_77, %c0_78] : memref<200x32xbf16, #tpu.memory_space<vmem>>, vector<160x32xbf16>
    %c0_79 = arith.constant 0 : index
    %c32_80 = arith.constant 32 : index
    %71 = vector.load %arg10[%c0_79, %c32_80] : memref<200x288xbf16, #tpu.memory_space<vmem>>, vector<160x32xbf16>
    tpu.vector_store %arg10[%c0_79, %c32_80], %70 {strides = array<i32>} : memref<200x288xbf16, #tpu.memory_space<vmem>>, vector<160x32xbf16>,
    %c2_81 = arith.constant 2 : index
    %c0_82 = arith.constant 0 : index
    %72 = vector.load %arg12[%c2_81, %c0_82] : memref<200x32xbf16, #tpu.memory_space<vmem>>, vector<160x32xbf16>
    %c0_83 = arith.constant 0 : index
    %c64_84 = arith.constant 64 : index
    %73 = vector.load %arg10[%c0_83, %c64_84] : memref<200x288xbf16, #tpu.memory_space<vmem>>, vector<160x32xbf16>
    tpu.vector_store %arg10[%c0_83, %c64_84], %72 {strides = array<i32>} : memref<200x288xbf16, #tpu.memory_space<vmem>>, vector<160x32xbf16>,
    %c16_85 = arith.constant 16 : index
    %c0_86 = arith.constant 0 : index
    %74 = vector.load %arg12[%c16_85, %c0_86] : memref<200x32xbf16, #tpu.memory_space<vmem>>, vector<160x32xbf16>
    %c0_87 = arith.constant 0 : index
    %c96_88 = arith.constant 96 : index
    %75 = vector.load %arg10[%c0_87, %c96_88] : memref<200x288xbf16, #tpu.memory_space<vmem>>, vector<160x32xbf16>
    tpu.vector_store %arg10[%c0_87, %c96_88], %74 {strides = array<i32>} : memref<200x288xbf16, #tpu.memory_space<vmem>>, vector<160x32xbf16>,
    %c17_89 = arith.constant 17 : index
    %c0_90 = arith.constant 0 : index
    %76 = vector.load %arg12[%c17_89, %c0_90] : memref<200x32xbf16, #tpu.memory_space<vmem>>, vector<160x32xbf16>
    %c0_91 = arith.constant 0 : index
    %c128_92 = arith.constant 128 : index
    %77 = vector.load %arg10[%c0_91, %c128_92] : memref<200x288xbf16, #tpu.memory_space<vmem>>, vector<160x32xbf16>
    tpu.vector_store %arg10[%c0_91, %c128_92], %76 {strides = array<i32>} : memref<200x288xbf16, #tpu.memory_space<vmem>>, vector<160x32xbf16>,
    %c18_93 = arith.constant 18 : index
    %c0_94 = arith.constant 0 : index
    %78 = vector.load %arg12[%c18_93, %c0_94] : memref<200x32xbf16, #tpu.memory_space<vmem>>, vector<160x32xbf16>
    %c0_95 = arith.constant 0 : index
    %c160_96 = arith.constant 160 : index
    %79 = vector.load %arg10[%c0_95, %c160_96] : memref<200x288xbf16, #tpu.memory_space<vmem>>, vector<160x32xbf16>
    tpu.vector_store %arg10[%c0_95, %c160_96], %78 {strides = array<i32>} : memref<200x288xbf16, #tpu.memory_space<vmem>>, vector<160x32xbf16>,
    %c32_97 = arith.constant 32 : index
    %c0_98 = arith.constant 0 : index
    %80 = vector.load %arg12[%c32_97, %c0_98] : memref<200x32xbf16, #tpu.memory_space<vmem>>, vector<160x32xbf16>
    %c0_99 = arith.constant 0 : index
    %c192_100 = arith.constant 192 : index
    %81 = vector.load %arg10[%c0_99, %c192_100] : memref<200x288xbf16, #tpu.memory_space<vmem>>, vector<160x32xbf16>
    tpu.vector_store %arg10[%c0_99, %c192_100], %80 {strides = array<i32>} : memref<200x288xbf16, #tpu.memory_space<vmem>>, vector<160x32xbf16>,
    %c33_101 = arith.constant 33 : index
    %c0_102 = arith.constant 0 : index
    %82 = vector.load %arg12[%c33_101, %c0_102] : memref<200x32xbf16, #tpu.memory_space<vmem>>, vector<160x32xbf16>
    %c0_103 = arith.constant 0 : index
    %c224_104 = arith.constant 224 : index
    %83 = vector.load %arg10[%c0_103, %c224_104] : memref<200x288xbf16, #tpu.memory_space<vmem>>, vector<160x32xbf16>
    tpu.vector_store %arg10[%c0_103, %c224_104], %82 {strides = array<i32>} : memref<200x288xbf16, #tpu.memory_space<vmem>>, vector<160x32xbf16>,
    %c34_105 = arith.constant 34 : index
    %c0_106 = arith.constant 0 : index
    %84 = vector.load %arg12[%c34_105, %c0_106] : memref<200x32xbf16, #tpu.memory_space<vmem>>, vector<160x32xbf16>
    %c0_107 = arith.constant 0 : index
    %c256_108 = arith.constant 256 : index
    %85 = vector.load %arg10[%c0_107, %c256_108] : memref<200x288xbf16, #tpu.memory_space<vmem>>, vector<160x32xbf16>
    tpu.vector_store %arg10[%c0_107, %c256_108], %84 {strides = array<i32>} : memref<200x288xbf16, #tpu.memory_space<vmem>>, vector<160x32xbf16>,
    %c0_109 = arith.constant 0 : index
    %c0_110 = arith.constant 0 : index
    %86 = vector.load %arg10[%c0_109, %c0_110] : memref<200x288xbf16, #tpu.memory_space<vmem>>, vector<160x288xbf16>
    %c0_111 = arith.constant 0 : index
    %c0_112 = arith.constant 0 : index
    %87 = vector.load %arg6[%c0_111, %c0_112] : memref<288x32xbf16, #tpu.memory_space<vmem>>, vector<288x32xbf16>
    %cst_113 = arith.constant dense<0.000000e+00> : vector<160x32xf32>
    %88 = tpu.matmul %86, %87, %cst_113 {dimension_numbers = #tpu.dot_dimension_numbers<[1], [0], [0], [1], [0, 0, 1, 1], [], []>} : vector<160x288xbf16>, vector<288x32xbf16>, vector<160x32xf32> -> vector<160x32xf32>
    %c0_114 = arith.constant 0 : index
    %c0_115 = arith.constant 0 : index
    %89 = vector.load %arg7[%c0_114, %c0_115] : memref<1x32xf32, #tpu.memory_space<vmem>>, vector<1x32xf32>
    %90 = vector.broadcast %89 : vector<1x32xf32> to vector<160x32xf32>
    %91 = arith.addf %88, %90 : vector<160x32xf32>
    %cst_116 = arith.constant 5.000000e-01 : f32
    %92 = vector.broadcast %cst_116 : f32 to vector<160x32xf32>
    %93 = arith.mulf %92, %91 : vector<160x32xf32>
    %cst_117 = arith.constant 0.707106769 : f32
    %94 = vector.broadcast %cst_117 : f32 to vector<160x32xf32>
    %95 = arith.mulf %91, %94 : vector<160x32xf32>
    %96 = math.erf %95 : vector<160x32xf32>
    %cst_118 = arith.constant 1.000000e+00 : f32
    %97 = vector.broadcast %cst_118 : f32 to vector<160x32xf32>
    %98 = arith.addf %97, %96 : vector<160x32xf32>
    %99 = arith.mulf %93, %98 : vector<160x32xf32>
    %c0_119 = arith.constant 0 : index
    %c0_120 = arith.constant 0 : index
    %c0_121 = arith.constant 0 : index
    %100 = vector.load %arg8[%c0_119, %c0_120, %c0_121] : memref<1x160x32xf32, #tpu.memory_space<vmem>>, vector<1x160x32xf32>
    %101 = vector.shape_cast %100 : vector<1x160x32xf32> to vector<160x32xf32>
    %102 = vector.shape_cast %99 : vector<160x32xf32> to vector<1x160x32xf32>
    tpu.vector_store %arg8[%c0_119, %c0_120, %c0_121], %102 {strides = array<i32>} : memref<1x160x32xf32, #tpu.memory_space<vmem>>, vector<1x160x32xf32>,
    return
  }
  func.func @transform_0(%arg0: i32) -> (i32, i32) {
    %c0_i32 = arith.constant 0 : i32
    %c0_i32_0 = arith.constant 0 : i32
    return %arg0, %c0_i32 : i32, i32
  }
  func.func @transform_1(%arg0: i32) -> (i32, i32) {
    %c0_i32 = arith.constant 0 : i32
    %c0_i32_0 = arith.constant 0 : i32
    %c0_i32_1 = arith.constant 0 : i32
    return %c0_i32, %c0_i32_0 : i32, i32
  }
  func.func @transform_2(%arg0: i32) -> (i32, i32) {
    %c0_i32 = arith.constant 0 : i32
    %c0_i32_0 = arith.constant 0 : i32
    %c0_i32_1 = arith.constant 0 : i32
    return %c0_i32, %c0_i32_0 : i32, i32
  }
  func.func @transform_3(%arg0: i32) -> (i32, i32) {
    %c0_i32 = arith.constant 0 : i32
    %c0_i32_0 = arith.constant 0 : i32
    %c0_i32_1 = arith.constant 0 : i32
    return %c0_i32, %c0_i32_0 : i32, i32
  }
  func.func @transform_4(%arg0: i32) -> (i32, i32) {
    %c0_i32 = arith.constant 0 : i32
    %c0_i32_0 = arith.constant 0 : i32
    %c0_i32_1 = arith.constant 0 : i32
    return %c0_i32, %c0_i32_0 : i32, i32
  }
  func.func @transform_5(%arg0: i32) -> (i32, i32) {
    %c0_i32 = arith.constant 0 : i32
    %c0_i32_0 = arith.constant 0 : i32
    %c0_i32_1 = arith.constant 0 : i32
    return %c0_i32, %c0_i32_0 : i32, i32
  }
  func.func @transform_6(%arg0: i32) -> (i32, i32) {
    %c0_i32 = arith.constant 0 : i32
    %c0_i32_0 = arith.constant 0 : i32
    %c0_i32_1 = arith.constant 0 : i32
    return %c0_i32, %c0_i32_0 : i32, i32
  }
  func.func @transform_7(%arg0: i32) -> (i32, i32, i32) {
    %c0_i32 = arith.constant 0 : i32
    %c0_i32_0 = arith.constant 0 : i32
    %c0_i32_1 = arith.constant 0 : i32
    return %arg0, %c0_i32, %c0_i32_0 : i32, i32, i32
  }
}

</mosaic_0001>

<llo_original>
// kernel: my_conv2d_forward.1
$region0: #{my_conv2d_forward.1}
  #allocation0 [shape = 'u32[]', space=smem, size = 0x4, offset = 0x4, fixed_abs, tag = 'smem constant byte address 0x4 - core index']
  #allocation1 [shape = 'u32[144,128]{1,0:T(1,128)}', space=vmem, size = 0x12000, scoped, tag = 'internal scratch']
  #allocation2 [shape = 'bf16[240,36]{1,0:T(16,128)(2,1)}', space=vmem, size = 0xf000, scoped, tag = 'scratch operand']
  #allocation3 [shape = 'bf16[200,288]{1,0:T(8,128)(2,1)}', space=vmem, size = 0x25800, scoped, tag = 'scratch operand']
  #allocation4 [shape = 'bf16[240,32]{1,0:T(16,128)(2,1)}', space=vmem, size = 0xf000, scoped, tag = 'scratch operand']
  #allocation5 [shape = 'bf16[200,32]{1,0:T(8,128)(2,1)}', space=vmem, size = 0xc800, scoped, tag = 'scratch operand']
  %s0 = inlined_call_operand.vmem [shape: bf16[576,4], index: 0, kind: input, shape index: {}]
  %s1 = inlined_call_operand.vmem [shape: bf16[36,32], index: 1, kind: input, shape index: {}]
  %s2 = inlined_call_operand.vmem [shape: f32[1,32], index: 2, kind: input, shape index: {}]
  %s3 = inlined_call_operand.vmem [shape: bf16[288,32], index: 3, kind: input, shape index: {}]
  %s4 = inlined_call_operand.vmem [shape: f32[1,32], index: 4, kind: input, shape index: {}]
  %s5 = inlined_call_operand.vmem [shape: bf16[288,32], index: 5, kind: input, shape index: {}]
  %s6 = inlined_call_operand.vmem [shape: f32[1,32], index: 6, kind: input, shape index: {}]
  %s7 = inlined_call_operand.vmem [shape: f32[2,160,32], index: 7, kind: output, shape index: {}]
  %s8 = sld [smem:[#allocation0]]
  $region61: #{my_conv2d_forward.1} parent=0
    _
  %s10 = ssub.s32 1, %s8
  %s11 = scalar_select 0, %s10, %s8
  loop: start=0, step=1, limit=4
  $region2: #{my_conv2d_forward.1} parent=0 // loop_pre_header
    _
  $region3: #{my_conv2d_forward.1} parent=0 // loop_header
    %s13 = sphi 0, %s17
    %p14 = scmp.ge.s32.totalorder %s13, 4
    %s23 = sphi 0, %s25
    %s26 = sphi 0, %s23
    %s27 = sphi 0, %s26
    %s43 = sphi 0, %s27
    %s47 = sphi 0, %s47
    %s49 = sphi 0, %s47
    %s50 = sphi 0, %s49
    %s64 = sphi 0, %s50
    %s68 = sphi 0, %s68
    %s70 = sphi 0, %s68
    %s71 = sphi 0, %s70
    %s85 = sphi 0, %s71
    %s89 = sphi 0, %s89
    %s91 = sphi 0, %s89
    %s92 = sphi 0, %s91
    %s106 = sphi 0, %s92
    %s110 = sphi 0, %s110
    %s112 = sphi 0, %s110
    %s113 = sphi 0, %s112
    %s127 = sphi 0, %s113
    %s131 = sphi 0, %s131
    %s133 = sphi 0, %s131
    %s134 = sphi 0, %s133
    %s148 = sphi 0, %s134
    %s152 = sphi 0, %s152
    %s154 = sphi 0, %s152
    %s155 = sphi 0, %s154
    %s169 = sphi 0, %s155
    %s175 = sphi 0, %s177
    %s178 = sphi 0, %s175
    %s179 = sphi 0, %s178
    %s195 = sphi 0, %s179
  $region4: #{my_conv2d_forward.1} parent=0 // loop_header_branch
    %16 = sbr.rel (%p14) target = $region8
  $region5: #{my_conv2d_forward.1} parent=0 // loop_body
    %s18 = ssub.s32 %s13, 1
    %s19 = ssub.s32 %s13, 2
    %s20 = sadd.s32 %s13, 1
    %s21 = ssub.s32 %s13, %s20
    %p22 = scmp.eq.s32.totalorder %s21, 0
    %s24 = sadd.s32 %s23, 1
    %s25 = scalar_select %p22, %s23, %s24
    %p28 = pneg %p22
    %p29 = scmp.eq.s32.totalorder %s13, 1
    %p30 = por %p28, %p29
    %p31 = scmp.ne.s32.totalorder %s23, %s26
    %p32 = scmp.eq.s32.totalorder %s13, 0
    %p33 = por %p31, %p32
    %p34 = scmp.ne.s32.totalorder %s23, %s26
    %p35 = scmp.eq.s32.totalorder %s18, 1
    %p36 = por %p34, %p35
    %p37 = scmp.ne.s32.totalorder %s26, %s27
    %p38 = scmp.eq.s32.totalorder %s18, 0
    %p39 = por %p37, %p38
    %p40 = scmp.ne.s32.totalorder %s26, %s27
    %p41 = scmp.eq.s32.totalorder %s19, 1
    %p42 = por %p40, %p41
    %p44 = scmp.ne.s32.totalorder %s27, %s43
    %p45 = scmp.eq.s32.totalorder %s19, 0
    %p46 = por %p44, %p45
    %s48 = sadd.s32 %s47, 1
    %p51 = scmp.eq.s32.totalorder %s13, 1
    %p52 = scmp.ne.s32.totalorder %s47, %s49
    %p53 = scmp.eq.s32.totalorder %s13, 0
    %p54 = por %p52, %p53
    %p55 = scmp.ne.s32.totalorder %s47, %s49
    %p56 = scmp.eq.s32.totalorder %s18, 1
    %p57 = por %p55, %p56
    %p58 = scmp.ne.s32.totalorder %s49, %s50
    %p59 = scmp.eq.s32.totalorder %s18, 0
    %p60 = por %p58, %p59
    %p61 = scmp.ne.s32.totalorder %s49, %s50
    %p62 = scmp.eq.s32.totalorder %s19, 1
    %p63 = por %p61, %p62
    %p65 = scmp.ne.s32.totalorder %s50, %s64
    %p66 = scmp.eq.s32.totalorder %s19, 0
    %p67 = por %p65, %p66
    %s69 = sadd.s32 %s68, 1
    %p72 = scmp.eq.s32.totalorder %s13, 1
    %p73 = scmp.ne.s32.totalorder %s68, %s70
    %p74 = scmp.eq.s32.totalorder %s13, 0
    %p75 = por %p73, %p74
    %p76 = scmp.ne.s32.totalorder %s68, %s70
    %p77 = scmp.eq.s32.totalorder %s18, 1
    %p78 = por %p76, %p77
    %p79 = scmp.ne.s32.totalorder %s70, %s71
    %p80 = scmp.eq.s32.totalorder %s18, 0
    %p81 = por %p79, %p80
    %p82 = scmp.ne.s32.totalorder %s70, %s71
    %p83 = scmp.eq.s32.totalorder %s19, 1
    %p84 = por %p82, %p83
    %p86 = scmp.ne.s32.totalorder %s71, %s85
    %p87 = scmp.eq.s32.totalorder %s19, 0
    %p88 = por %p86, %p87
    %s90 = sadd.s32 %s89, 1
    %p93 = scmp.eq.s32.totalorder %s13, 1
    %p94 = scmp.ne.s32.totalorder %s89, %s91
    %p95 = scmp.eq.s32.totalorder %s13, 0
    %p96 = por %p94, %p95
    %p97 = scmp.ne.s32.totalorder %s89, %s91
    %p98 = scmp.eq.s32.totalorder %s18, 1
    %p99 = por %p97, %p98
    %p100 = scmp.ne.s32.totalorder %s91, %s92
    %p101 = scmp.eq.s32.totalorder %s18, 0
    %p102 = por %p100, %p101
    %p103 = scmp.ne.s32.totalorder %s91, %s92
    %p104 = scmp.eq.s32.totalorder %s19, 1
    %p105 = por %p103, %p104
    %p107 = scmp.ne.s32.totalorder %s92, %s106
    %p108 = scmp.eq.s32.totalorder %s19, 0
    %p109 = por %p107, %p108
    %s111 = sadd.s32 %s110, 1
    %p114 = scmp.eq.s32.totalorder %s13, 1
    %p115 = scmp.ne.s32.totalorder %s110, %s112
    %p116 = scmp.eq.s32.totalorder %s13, 0
    %p117 = por %p115, %p116
    %p118 = scmp.ne.s32.totalorder %s110, %s112
    %p119 = scmp.eq.s32.totalorder %s18, 1
    %p120 = por %p118, %p119
    %p121 = scmp.ne.s32.totalorder %s112, %s113
    %p122 = scmp.eq.s32.totalorder %s18, 0
    %p123 = por %p121, %p122
    %p124 = scmp.ne.s32.totalorder %s112, %s113
    %p125 = scmp.eq.s32.totalorder %s19, 1
    %p126 = por %p124, %p125
    %p128 = scmp.ne.s32.totalorder %s113, %s127
    %p129 = scmp.eq.s32.totalorder %s19, 0
    %p130 = por %p128, %p129
    %s132 = sadd.s32 %s131, 1
    %p135 = scmp.eq.s32.totalorder %s13, 1
    %p136 = scmp.ne.s32.totalorder %s131, %s133
    %p137 = scmp.eq.s32.totalorder %s13, 0
    %p138 = por %p136, %p137
    %p139 = scmp.ne.s32.totalorder %s131, %s133
    %p140 = scmp.eq.s32.totalorder %s18, 1
    %p141 = por %p139, %p140
    %p142 = scmp.ne.s32.totalorder %s133, %s134
    %p143 = scmp.eq.s32.totalorder %s18, 0
    %p144 = por %p142, %p143
    %p145 = scmp.ne.s32.totalorder %s133, %s134
    %p146 = scmp.eq.s32.totalorder %s19, 1
    %p147 = por %p145, %p146
    %p149 = scmp.ne.s32.totalorder %s134, %s148
    %p150 = scmp.eq.s32.totalorder %s19, 0
    %p151 = por %p149, %p150
    %s153 = sadd.s32 %s152, 1
    %p156 = scmp.eq.s32.totalorder %s13, 1
    %p157 = scmp.ne.s32.totalorder %s152, %s154
    %p158 = scmp.eq.s32.totalorder %s13, 0
    %p159 = por %p157, %p158
    %p160 = scmp.ne.s32.totalorder %s152, %s154
    %p161 = scmp.eq.s32.totalorder %s18, 1
    %p162 = por %p160, %p161
    %p163 = scmp.ne.s32.totalorder %s154, %s155
    %p164 = scmp.eq.s32.totalorder %s18, 0
    %p165 = por %p163, %p164
    %p166 = scmp.ne.s32.totalorder %s154, %s155
    %p167 = scmp.eq.s32.totalorder %s19, 1
    %p168 = por %p166, %p167
    %p170 = scmp.ne.s32.totalorder %s155, %s169
    %p171 = scmp.eq.s32.totalorder %s19, 0
    %p172 = por %p170, %p171
    %s173 = ssub.s32 %s13, %s20
    %p174 = scmp.eq.s32.totalorder %s173, 0
    %s176 = sadd.s32 %s175, 1
    %s177 = scalar_select %p174, %s175, %s176
    %p180 = pneg %p174
    %p181 = scmp.eq.s32.totalorder %s13, 1
    %p182 = por %p180, %p181
    %p183 = scmp.ne.s32.totalorder %s175, %s178
    %p184 = scmp.eq.s32.totalorder %s13, 0
    %p185 = por %p183, %p184
    %p186 = scmp.ne.s32.totalorder %s175, %s178
    %p187 = scmp.eq.s32.totalorder %s18, 1
    %p188 = por %p186, %p187
    %p189 = scmp.ne.s32.totalorder %s178, %s179
    %p190 = scmp.eq.s32.totalorder %s18, 0
    %p191 = por %p189, %p190
    %p192 = scmp.ne.s32.totalorder %s178, %s179
    %p193 = scmp.eq.s32.totalorder %s19, 1
    %p194 = por %p192, %p193
    %p196 = scmp.ne.s32.totalorder %s179, %s195
    %p197 = scmp.eq.s32.totalorder %s19, 0
    %p198 = por %p196, %p197
    %p199 = scmp.le.s32.totalorder 1, %s13
    %p200 = scmp.lt.s32.totalorder %s13, 3
    %p201 = pnand %p199, %p200
    %p202 = pneg %p201
    // Predicated region
    $region9: #{my_conv2d_forward.1} parent=5 // pred_check
      _
    $region10: #{my_conv2d_forward.1} parent=5 // pred_check_branch
      %204 = sbr.rel (%p201) target = $region12
    $region11: #{my_conv2d_forward.1} parent=5 // pred_region
      %s205 = ssub.s32 %s13, 1
      // Predicated region
      $region13: #{my_conv2d_forward.1} parent=11 // pred_check
        %p206 = pneg %p60
      $region14: #{my_conv2d_forward.1} parent=11 // pred_check_branch
        %208 = sbr.rel (%p206) target = $region16
      $region15: #{my_conv2d_forward.1} parent=11 // pred_region
        _
      $region16: #{my_conv2d_forward.1} parent=11 // pred_fallthru
        _
      // Predicated region
      $region17: #{my_conv2d_forward.1} parent=11 // pred_check
        %p209 = pneg %p81
      $region18: #{my_conv2d_forward.1} parent=11 // pred_check_branch
        %211 = sbr.rel (%p209) target = $region20
      $region19: #{my_conv2d_forward.1} parent=11 // pred_region
        _
      $region20: #{my_conv2d_forward.1} parent=11 // pred_fallthru
        _
      // Predicated region
      $region21: #{my_conv2d_forward.1} parent=11 // pred_check
        %p212 = pneg %p102
      $region22: #{my_conv2d_forward.1} parent=11 // pred_check_branch
        %214 = sbr.rel (%p212) target = $region24
      $region23: #{my_conv2d_forward.1} parent=11 // pred_region
        _
      $region24: #{my_conv2d_forward.1} parent=11 // pred_fallthru
        _
      // Predicated region
      $region25: #{my_conv2d_forward.1} parent=11 // pred_check
        %p215 = pneg %p123
      $region26: #{my_conv2d_forward.1} parent=11 // pred_check_branch
        %217 = sbr.rel (%p215) target = $region28
      $region27: #{my_conv2d_forward.1} parent=11 // pred_region
        _
      $region28: #{my_conv2d_forward.1} parent=11 // pred_fallthru
        _
      // Predicated region
      $region29: #{my_conv2d_forward.1} parent=11 // pred_check
        %p218 = pneg %p144
      $region30: #{my_conv2d_forward.1} parent=11 // pred_check_branch
        %220 = sbr.rel (%p218) target = $region32
      $region31: #{my_conv2d_forward.1} parent=11 // pred_region
        _
      $region32: #{my_conv2d_forward.1} parent=11 // pred_fallthru
        _
      // Predicated region
      $region33: #{my_conv2d_forward.1} parent=11 // pred_check
        %p221 = pneg %p165
      $region34: #{my_conv2d_forward.1} parent=11 // pred_check_branch
        %223 = sbr.rel (%p221) target = $region36
      $region35: #{my_conv2d_forward.1} parent=11 // pred_region
        _
      $region36: #{my_conv2d_forward.1} parent=11 // pred_fallthru
        _
    $region12: #{my_conv2d_forward.1} parent=5 // pred_fallthru
      _
    %p224 = scmp.lt.s32.totalorder %s13, 2
    // Predicated region
    $region37: #{my_conv2d_forward.1} parent=5 // pred_check
      %p225 = pneg %p224
    $region38: #{my_conv2d_forward.1} parent=5 // pred_check_branch
      %227 = sbr.rel (%p225) target = $region40
    $region39: #{my_conv2d_forward.1} parent=5 // pred_region
      // Predicated region
      $region41: #{my_conv2d_forward.1} parent=39 // pred_check
        %p228 = pneg %p33
      $region42: #{my_conv2d_forward.1} parent=39 // pred_check_branch
        %230 = sbr.rel (%p228) target = $region44
      $region43: #{my_conv2d_forward.1} parent=39 // pred_region
        %s231 = smul.u32 36, %s13
        %p232 = scmp.lt.s32.totalorder %s231, 71
        %s233 = scalar_select %p232, %s231, 71
        %s234 = smul.addr %s233, 4
        %s235 = scalar_lea.vmem %s0, %s234
        %s236 = smul.u32 36, %s13
      $region44: #{my_conv2d_forward.1} parent=39 // pred_fallthru
        _
    $region40: #{my_conv2d_forward.1} parent=5 // pred_fallthru
      _
    %p237 = scmp.le.s32.totalorder 1, %s13
    %p238 = scmp.lt.s32.totalorder %s13, 3
    %p239 = pnand %p237, %p238
    %p240 = pneg %p239
    // Predicated region
    $region45: #{my_conv2d_forward.1} parent=5 // pred_check
      _
    $region46: #{my_conv2d_forward.1} parent=5 // pred_check_branch
      %242 = sbr.rel (%p239) target = $region48
    $region47: #{my_conv2d_forward.1} parent=5 // pred_region
      %s243 = ssub.s32 %s13, 1
      %s244 = smul.u32 36, %s18
      %p245 = scmp.lt.s32.totalorder %s244, 71
      %s246 = scalar_select %p245, %s244, 71
      %s247 = smul.addr %s246, 4
      %s248 = scalar_lea.vmem %s0, %s247
      %p249 = pneg %p39
      %p250 = pneg %p36
      %p251 = pneg %p60
      %p252 = pneg %p57
      %p253 = pneg %p81
      %p254 = pneg %p78
      %p255 = pneg %p102
      %p256 = pneg %p99
      %p257 = pneg %p123
      %p258 = pneg %p120
      %p259 = pneg %p144
      %p260 = pneg %p141
      %p261 = pneg %p165
      %p262 = pneg %p162
      %p263 = pneg %p191
      %p264 = pneg %p188
      %p265 = scmp.lt.s32.totalorder %s18, 1
      %s266 = scalar_select %p265, %s18, 1
      %s267 = smul.addr %s266, 20
      %s268 = smul.addr %s267, 8
      %s269 = scalar_lea.vmem %s7, %s268
      %s270 = smul.u32 36, %s18
      %p271 = scmp.lt.s32.totalorder %s270, 71
      %s272 = scalar_select %p271, %s270, 71
      %s273 = smul.addr %s272, 4
      %s274 = scalar_lea.vmem %s0, %s273
      %s275 = smul.u32 36, %s18
      %p276 = scmp.lt.s32.totalorder %s18, 1
      %s277 = scalar_select %p276, %s18, 1
      %s278 = smul.addr %s277, 20
      %s279 = smul.addr %s278, 8
      %s280 = scalar_lea.vmem %s7, %s279
      %v282 = vld [vmem:[%s274] sm:$0xf]
      %v283 = vld [vmem:[%s274 + $0x4] sm:$0xf]
      %v284 = vld [vmem:[%s274 + $0x8] sm:$0xf]
      %v285 = vld [vmem:[%s274 + $0xc] sm:$0xf]
      %v286 = vld [vmem:[%s274 + $0x10] sm:$0xf]
      %v287 = vld [vmem:[%s274 + $0x14] sm:$0xf]
      %v288 = vld [vmem:[%s274 + $0x18] sm:$0xf]
      %v289 = vld [vmem:[%s274 + $0x1c] sm:$0xf]
      %v290 = vld [vmem:[%s274 + $0x20] sm:$0xf]
      %v291 = vld [vmem:[%s274 + $0x24] sm:$0xf]
      %v292 = vld [vmem:[%s274 + $0x28] sm:$0xf]
      %v293 = vld [vmem:[%s274 + $0x2c] sm:$0xf]
      %v294 = vld [vmem:[%s274 + $0x30] sm:$0xf]
      %v295 = vld [vmem:[%s274 + $0x34] sm:$0xf]
      %v296 = vld [vmem:[%s274 + $0x38] sm:$0xf]
      %v297 = vld [vmem:[%s274 + $0x3c] sm:$0xf]
      %v298 = vld [vmem:[%s274 + $0x40] sm:$0xf]
      %v299 = vld [vmem:[%s274 + $0x44] sm:$0xf]
      %v300 = vld [vmem:[%s274 + $0x48] sm:$0xf]
      %v301 = vld [vmem:[%s274 + $0x4c] sm:$0xf]
      %v302 = vld [vmem:[%s274 + $0x50] sm:$0xf]
      %v303 = vld [vmem:[%s274 + $0x54] sm:$0xf]
      %v304 = vld [vmem:[%s274 + $0x58] sm:$0xf]
      %v305 = vld [vmem:[%s274 + $0x5c] sm:$0xf]
      %v306 = vld [vmem:[%s274 + $0x60] sm:$0xf]
      %v307 = vld [vmem:[%s274 + $0x64] sm:$0xf]
      %v308 = vld [vmem:[%s274 + $0x68] sm:$0xf]
      %v309 = vld [vmem:[%s274 + $0x6c] sm:$0xf]
      %v310 = vld [vmem:[%s274 + $0x70] sm:$0xf]
      %v311 = vld [vmem:[%s274 + $0x74] sm:$0xf]
      %v342 = vunpack.c.l.b16 %v282
      %v343 = vunpack.c.l.b16 %v283
      %v344 = vunpack.c.l.b16 %v284
      %v345 = vunpack.c.l.b16 %v285
      %v346 = vunpack.c.l.b16 %v286
      %v347 = vunpack.c.l.b16 %v287
      %v348 = vunpack.c.l.b16 %v288
      %v349 = vunpack.c.l.b16 %v289
      %v350 = vunpack.c.l.b16 %v290
      %v351 = vunpack.c.l.b16 %v291
      %v352 = vunpack.c.l.b16 %v292
      %v353 = vunpack.c.l.b16 %v293
      %v354 = vunpack.c.l.b16 %v294
      %v355 = vunpack.c.l.b16 %v295
      %v356 = vunpack.c.l.b16 %v296
      %v357 = vunpack.c.l.b16 %v297
      %v358 = vunpack.c.l.b16 %v298
      %v359 = vunpack.c.l.b16 %v299
      %v360 = vunpack.c.l.b16 %v300
      %v361 = vunpack.c.l.b16 %v301
      %v362 = vunpack.c.l.b16 %v302
      %v363 = vunpack.c.l.b16 %v303
      %v364 = vunpack.c.l.b16 %v304
      %v365 = vunpack.c.l.b16 %v305
      %v366 = vunpack.c.l.b16 %v306
      %v367 = vunpack.c.l.b16 %v307
      %v368 = vunpack.c.l.b16 %v308
      %v369 = vunpack.c.l.b16 %v309
      %v370 = vunpack.c.l.b16 %v310
      %v371 = vunpack.c.l.b16 %v311
      %v372 = vpack.c.b16 %v343, %v342
      %v373 = vpack.c.b16 %v345, %v344
      %v374 = vpack.c.b16 %v347, %v346
      %v375 = vpack.c.b16 %v349, %v348
      %v376 = vpack.c.b16 %v351, %v350
      %v377 = vpack.c.b16 %v353, %v352
      %v378 = vpack.c.b16 %v355, %v354
      %v379 = vpack.c.b16 %v357, %v356
      %v380 = vpack.c.b16 %v359, %v358
      %v381 = vpack.c.b16 %v361, %v360
      %v382 = vpack.c.b16 %v363, %v362
      %v383 = vpack.c.b16 %v365, %v364
      %v384 = vpack.c.b16 %v367, %v366
      %v385 = vpack.c.b16 %v369, %v368
      %v386 = vpack.c.b16 %v371, %v370
      %vm402 = vcmask 31744
      %403 = vst.msk [vmem:[#allocation2] sm:$0xff] %vm402, %v372
      %404 = vst.msk [vmem:[#allocation2 + $0x8] sm:$0xff] %vm402, %v373
      %405 = vst.msk [vmem:[#allocation2 + $0x10] sm:$0xff] %vm402, %v374
      %406 = vst.msk [vmem:[#allocation2 + $0x18] sm:$0xff] %vm402, %v375
      %407 = vst.msk [vmem:[#allocation2 + $0x20] sm:$0xff] %vm402, %v376
      %408 = vst.msk [vmem:[#allocation2 + $0x28] sm:$0xff] %vm402, %v377
      %409 = vst.msk [vmem:[#allocation2 + $0x30] sm:$0xff] %vm402, %v378
      %410 = vst.msk [vmem:[#allocation2 + $0x38] sm:$0xff] %vm402, %v379
      %411 = vst.msk [vmem:[#allocation2 + $0x40] sm:$0xff] %vm402, %v380
      %412 = vst.msk [vmem:[#allocation2 + $0x48] sm:$0xff] %vm402, %v381
      %413 = vst.msk [vmem:[#allocation2 + $0x50] sm:$0xff] %vm402, %v382
      %414 = vst.msk [vmem:[#allocation2 + $0x58] sm:$0xff] %vm402, %v383
      %415 = vst.msk [vmem:[#allocation2 + $0x60] sm:$0xff] %vm402, %v384
      %416 = vst.msk [vmem:[#allocation2 + $0x68] sm:$0xff] %vm402, %v385
      %417 = vst.msk [vmem:[#allocation2 + $0x70] sm:$0xff] %vm402, %v386
      %v418 = vld [vmem:[%s274] sm:$0xf]
      %v419 = vld [vmem:[%s274 + $0x4] sm:$0xf]
      %v420 = vld [vmem:[%s274 + $0x8] sm:$0xf]
      %v421 = vld [vmem:[%s274 + $0xc] sm:$0xf]
      %v422 = vld [vmem:[%s274 + $0x10] sm:$0xf]
      %v423 = vld [vmem:[%s274 + $0x14] sm:$0xf]
      %v424 = vld [vmem:[%s274 + $0x18] sm:$0xf]
      %v425 = vld [vmem:[%s274 + $0x1c] sm:$0xf]
      %v426 = vld [vmem:[%s274 + $0x20] sm:$0xf]
      %v427 = vld [vmem:[%s274 + $0x24] sm:$0xf]
      %v428 = vld [vmem:[%s274 + $0x28] sm:$0xf]
      %v429 = vld [vmem:[%s274 + $0x2c] sm:$0xf]
      %v430 = vld [vmem:[%s274 + $0x30] sm:$0xf]
      %v431 = vld [vmem:[%s274 + $0x34] sm:$0xf]
      %v432 = vld [vmem:[%s274 + $0x38] sm:$0xf]
      %v433 = vld [vmem:[%s274 + $0x3c] sm:$0xf]
      %v434 = vld [vmem:[%s274 + $0x40] sm:$0xf]
      %v435 = vld [vmem:[%s274 + $0x44] sm:$0xf]
      %v436 = vld [vmem:[%s274 + $0x48] sm:$0xf]
      %v437 = vld [vmem:[%s274 + $0x4c] sm:$0xf]
      %v438 = vld [vmem:[%s274 + $0x50] sm:$0xf]
      %v439 = vld [vmem:[%s274 + $0x54] sm:$0xf]
      %v440 = vld [vmem:[%s274 + $0x58] sm:$0xf]
      %v441 = vld [vmem:[%s274 + $0x5c] sm:$0xf]
      %v442 = vld [vmem:[%s274 + $0x60] sm:$0xf]
      %v443 = vld [vmem:[%s274 + $0x64] sm:$0xf]
      %v444 = vld [vmem:[%s274 + $0x68] sm:$0xf]
      %v445 = vld [vmem:[%s274 + $0x6c] sm:$0xf]
      %v446 = vld [vmem:[%s274 + $0x70] sm:$0xf]
      %v447 = vld [vmem:[%s274 + $0x74] sm:$0xf]
      %v448 = vld [vmem:[%s274 + $0x78] sm:$0x1]
      %v480 = vunpack.c.l.b16 %v418
      %v481 = vunpack.c.l.b16 %v419
      %v482 = vunpack.c.l.b16 %v420
      %v483 = vunpack.c.l.b16 %v421
      %v484 = vunpack.c.l.b16 %v422
      %v485 = vunpack.c.l.b16 %v423
      %v486 = vunpack.c.l.b16 %v424
      %v487 = vunpack.c.l.b16 %v425
      %v488 = vunpack.c.l.b16 %v426
      %v489 = vunpack.c.l.b16 %v427
      %v490 = vunpack.c.l.b16 %v428
      %v491 = vunpack.c.l.b16 %v429
      %v492 = vunpack.c.l.b16 %v430
      %v493 = vunpack.c.l.b16 %v431
      %v494 = vunpack.c.l.b16 %v432
      %v495 = vunpack.c.l.b16 %v433
      %v496 = vunpack.c.l.b16 %v434
      %v497 = vunpack.c.l.b16 %v435
      %v498 = vunpack.c.l.b16 %v436
      %v499 = vunpack.c.l.b16 %v437
      %v500 = vunpack.c.l.b16 %v438
      %v501 = vunpack.c.l.b16 %v439
      %v502 = vunpack.c.l.b16 %v440
      %v503 = vunpack.c.l.b16 %v441
      %v504 = vunpack.c.l.b16 %v442
      %v505 = vunpack.c.l.b16 %v443
      %v506 = vunpack.c.l.b16 %v444
      %v507 = vunpack.c.l.b16 %v445
      %v508 = vunpack.c.l.b16 %v446
      %v509 = vunpack.c.l.b16 %v447
      %v510 = vunpack.c.l.b16 %v448
      %v511 = vpack.c.b16 %v481, %v480
      %v512 = vpack.c.b16 %v483, %v482
      %v513 = vpack.c.b16 %v485, %v484
      %v514 = vpack.c.b16 %v487, %v486
      %v515 = vpack.c.b16 %v489, %v488
      %v516 = vpack.c.b16 %v491, %v490
      %v517 = vpack.c.b16 %v493, %v492
      %v518 = vpack.c.b16 %v495, %v494
      %v519 = vpack.c.b16 %v497, %v496
      %v520 = vpack.c.b16 %v499, %v498
      %v521 = vpack.c.b16 %v501, %v500
      %v522 = vpack.c.b16 %v503, %v502
      %v523 = vpack.c.b16 %v505, %v504
      %v524 = vpack.c.b16 %v507, %v506
      %v525 = vpack.c.b16 %v509, %v508
      %v526 = vpack.c.b16 %v510, %v510
      %vm527 = vsmask.f32 7424
      %v529 = vshrl.u32 %v511, 16
      %v531 = vshll.u32 %v511, 16
      %v533 = vrot.slane %v531, 1
      %v534 = vor.u32 %v529, %v533
      %v536 = vshll.u32 %v512, 16
      %v538 = vrot.slane %v536, 1
      %v539 = vsel %vm527, %v534, %v538
      %v540 = vshrl.u32 %v512, 16
      %v542 = vor.u32 %v540, %v538
      %v544 = vshll.u32 %v513, 16
      %v546 = vrot.slane %v544, 1
      %v547 = vsel %vm527, %v542, %v546
      %v548 = vshrl.u32 %v513, 16
      %v550 = vor.u32 %v548, %v546
      %v552 = vshll.u32 %v514, 16
      %v554 = vrot.slane %v552, 1
      %v555 = vsel %vm527, %v550, %v554
      %v556 = vshrl.u32 %v514, 16
      %v558 = vor.u32 %v556, %v554
      %v560 = vshll.u32 %v515, 16
      %v562 = vrot.slane %v560, 1
      %v563 = vsel %vm527, %v558, %v562
      %v564 = vshrl.u32 %v515, 16
      %v566 = vor.u32 %v564, %v562
      %v568 = vshll.u32 %v516, 16
      %v570 = vrot.slane %v568, 1
      %v571 = vsel %vm527, %v566, %v570
      %v572 = vshrl.u32 %v516, 16
      %v574 = vor.u32 %v572, %v570
      %v576 = vshll.u32 %v517, 16
      %v578 = vrot.slane %v576, 1
      %v579 = vsel %vm527, %v574, %v578
      %v580 = vshrl.u32 %v517, 16
      %v582 = vor.u32 %v580, %v578
      %v584 = vshll.u32 %v518, 16
      %v586 = vrot.slane %v584, 1
      %v587 = vsel %vm527, %v582, %v586
      %v588 = vshrl.u32 %v518, 16
      %v590 = vor.u32 %v588, %v586
      %v592 = vshll.u32 %v519, 16
      %v594 = vrot.slane %v592, 1
      %v595 = vsel %vm527, %v590, %v594
      %v596 = vshrl.u32 %v519, 16
      %v598 = vor.u32 %v596, %v594
      %v600 = vshll.u32 %v520, 16
      %v602 = vrot.slane %v600, 1
      %v603 = vsel %vm527, %v598, %v602
      %v604 = vshrl.u32 %v520, 16
      %v606 = vor.u32 %v604, %v602
      %v608 = vshll.u32 %v521, 16
      %v610 = vrot.slane %v608, 1
      %v611 = vsel %vm527, %v606, %v610
      %v612 = vshrl.u32 %v521, 16
      %v614 = vor.u32 %v612, %v610
      %v616 = vshll.u32 %v522, 16
      %v618 = vrot.slane %v616, 1
      %v619 = vsel %vm527, %v614, %v618
      %v620 = vshrl.u32 %v522, 16
      %v622 = vor.u32 %v620, %v618
      %v624 = vshll.u32 %v523, 16
      %v626 = vrot.slane %v624, 1
      %v627 = vsel %vm527, %v622, %v626
      %v628 = vshrl.u32 %v523, 16
      %v630 = vor.u32 %v628, %v626
      %v632 = vshll.u32 %v524, 16
      %v634 = vrot.slane %v632, 1
      %v635 = vsel %vm527, %v630, %v634
      %v636 = vshrl.u32 %v524, 16
      %v638 = vor.u32 %v636, %v634
      %v640 = vshll.u32 %v525, 16
      %v642 = vrot.slane %v640, 1
      %v643 = vsel %vm527, %v638, %v642
      %v644 = vshrl.u32 %v525, 16
      %v646 = vor.u32 %v644, %v642
      %v648 = vshll.u32 %v526, 16
      %v650 = vrot.slane %v648, 1
      %v651 = vsel %vm527, %v646, %v650
      %652 = vrot.lane.b32.xlu0 %v539, 4
      %v653 = vpop.permute.xlu0 %652
      %654 = vrot.lane.b32.xlu0 %v547, 4
      %v655 = vpop.permute.xlu0 %654
      %656 = vrot.lane.b32.xlu0 %v555, 4
      %v657 = vpop.permute.xlu0 %656
      %658 = vrot.lane.b32.xlu0 %v563, 4
      %v659 = vpop.permute.xlu0 %658
      %660 = vrot.lane.b32.xlu0 %v571, 4
      %v661 = vpop.permute.xlu0 %660
      %662 = vrot.lane.b32.xlu0 %v579, 4
      %v663 = vpop.permute.xlu0 %662
      %664 = vrot.lane.b32.xlu0 %v587, 4
      %v665 = vpop.permute.xlu0 %664
      %666 = vrot.lane.b32.xlu0 %v595, 4
      %v667 = vpop.permute.xlu0 %666
      %668 = vrot.lane.b32.xlu0 %v603, 4
      %v669 = vpop.permute.xlu0 %668
      %670 = vrot.lane.b32.xlu0 %v611, 4
      %v671 = vpop.permute.xlu0 %670
      %672 = vrot.lane.b32.xlu0 %v619, 4
      %v673 = vpop.permute.xlu0 %672
      %674 = vrot.lane.b32.xlu0 %v627, 4
      %v675 = vpop.permute.xlu0 %674
      %676 = vrot.lane.b32.xlu0 %v635, 4
      %v677 = vpop.permute.xlu0 %676
      %678 = vrot.lane.b32.xlu0 %v643, 4
      %v679 = vpop.permute.xlu0 %678
      %680 = vrot.lane.b32.xlu0 %v651, 4
      %v681 = vpop.permute.xlu0 %680
      %vm697 = vcmask 64544
      %698 = vst.msk [vmem:[#allocation2] sm:$0xff] %vm697, %v653
      %699 = vst.msk [vmem:[#allocation2 + $0x8] sm:$0xff] %vm697, %v655
      %700 = vst.msk [vmem:[#allocation2 + $0x10] sm:$0xff] %vm697, %v657
      %701 = vst.msk [vmem:[#allocation2 + $0x18] sm:$0xff] %vm697, %v659
      %702 = vst.msk [vmem:[#allocation2 + $0x20] sm:$0xff] %vm697, %v661
      %703 = vst.msk [vmem:[#allocation2 + $0x28] sm:$0xff] %vm697, %v663
      %704 = vst.msk [vmem:[#allocation2 + $0x30] sm:$0xff] %vm697, %v665
      %705 = vst.msk [vmem:[#allocation2 + $0x38] sm:$0xff] %vm697, %v667
      %706 = vst.msk [vmem:[#allocation2 + $0x40] sm:$0xff] %vm697, %v669
      %707 = vst.msk [vmem:[#allocation2 + $0x48] sm:$0xff] %vm697, %v671
      %708 = vst.msk [vmem:[#allocation2 + $0x50] sm:$0xff] %vm697, %v673
      %709 = vst.msk [vmem:[#allocation2 + $0x58] sm:$0xff] %vm697, %v675
      %710 = vst.msk [vmem:[#allocation2 + $0x60] sm:$0xff] %vm697, %v677
      %711 = vst.msk [vmem:[#allocation2 + $0x68] sm:$0xff] %vm697, %v679
      %712 = vst.msk [vmem:[#allocation2 + $0x70] sm:$0xff] %vm697, %v681
      %v713 = vld [vmem:[%s274] sm:$0xe]
      %v714 = vld [vmem:[%s274 + $0x4] sm:$0xf]
      %v715 = vld [vmem:[%s274 + $0x8] sm:$0xf]
      %v716 = vld [vmem:[%s274 + $0xc] sm:$0xf]
      %v717 = vld [vmem:[%s274 + $0x10] sm:$0xf]
      %v718 = vld [vmem:[%s274 + $0x14] sm:$0xf]
      %v719 = vld [vmem:[%s274 + $0x18] sm:$0xf]
      %v720 = vld [vmem:[%s274 + $0x1c] sm:$0xf]
      %v721 = vld [vmem:[%s274 + $0x20] sm:$0xf]
      %v722 = vld [vmem:[%s274 + $0x24] sm:$0xf]
      %v723 = vld [vmem:[%s274 + $0x28] sm:$0xf]
      %v724 = vld [vmem:[%s274 + $0x2c] sm:$0xf]
      %v725 = vld [vmem:[%s274 + $0x30] sm:$0xf]
      %v726 = vld [vmem:[%s274 + $0x34] sm:$0xf]
      %v727 = vld [vmem:[%s274 + $0x38] sm:$0xf]
      %v728 = vld [vmem:[%s274 + $0x3c] sm:$0xf]
      %v729 = vld [vmem:[%s274 + $0x40] sm:$0xf]
      %v730 = vld [vmem:[%s274 + $0x44] sm:$0xf]
      %v731 = vld [vmem:[%s274 + $0x48] sm:$0xf]
      %v732 = vld [vmem:[%s274 + $0x4c] sm:$0xf]
      %v733 = vld [vmem:[%s274 + $0x50] sm:$0xf]
      %v734 = vld [vmem:[%s274 + $0x54] sm:$0xf]
      %v735 = vld [vmem:[%s274 + $0x58] sm:$0xf]
      %v736 = vld [vmem:[%s274 + $0x5c] sm:$0xf]
      %v737 = vld [vmem:[%s274 + $0x60] sm:$0xf]
      %v738 = vld [vmem:[%s274 + $0x64] sm:$0xf]
      %v739 = vld [vmem:[%s274 + $0x68] sm:$0xf]
      %v740 = vld [vmem:[%s274 + $0x6c] sm:$0xf]
      %v741 = vld [vmem:[%s274 + $0x70] sm:$0xf]
      %v742 = vld [vmem:[%s274 + $0x74] sm:$0xf]
      %v743 = vld [vmem:[%s274 + $0x78] sm:$0x1]
      %v775 = vunpack.c.l.b16 %v713
      %v776 = vunpack.c.l.b16 %v714
      %v777 = vunpack.c.l.b16 %v715
      %v778 = vunpack.c.l.b16 %v716
      %v779 = vunpack.c.l.b16 %v717
      %v780 = vunpack.c.l.b16 %v718
      %v781 = vunpack.c.l.b16 %v719
      %v782 = vunpack.c.l.b16 %v720
      %v783 = vunpack.c.l.b16 %v721
      %v784 = vunpack.c.l.b16 %v722
      %v785 = vunpack.c.l.b16 %v723
      %v786 = vunpack.c.l.b16 %v724
      %v787 = vunpack.c.l.b16 %v725
      %v788 = vunpack.c.l.b16 %v726
      %v789 = vunpack.c.l.b16 %v727
      %v790 = vunpack.c.l.b16 %v728
      %v791 = vunpack.c.l.b16 %v729
      %v792 = vunpack.c.l.b16 %v730
      %v793 = vunpack.c.l.b16 %v731
      %v794 = vunpack.c.l.b16 %v732
      %v795 = vunpack.c.l.b16 %v733
      %v796 = vunpack.c.l.b16 %v734
      %v797 = vunpack.c.l.b16 %v735
      %v798 = vunpack.c.l.b16 %v736
      %v799 = vunpack.c.l.b16 %v737
      %v800 = vunpack.c.l.b16 %v738
      %v801 = vunpack.c.l.b16 %v739
      %v802 = vunpack.c.l.b16 %v740
      %v803 = vunpack.c.l.b16 %v741
      %v804 = vunpack.c.l.b16 %v742
      %v805 = vunpack.c.l.b16 %v743
      %v806 = vpack.c.b16 %v776, %v775
      %v807 = vpack.c.b16 %v778, %v777
      %v808 = vpack.c.b16 %v780, %v779
      %v809 = vpack.c.b16 %v782, %v781
      %v810 = vpack.c.b16 %v784, %v783
      %v811 = vpack.c.b16 %v786, %v785
      %v812 = vpack.c.b16 %v788, %v787
      %v813 = vpack.c.b16 %v790, %v789
      %v814 = vpack.c.b16 %v792, %v791
      %v815 = vpack.c.b16 %v794, %v793
      %v816 = vpack.c.b16 %v796, %v795
      %v817 = vpack.c.b16 %v798, %v797
      %v818 = vpack.c.b16 %v800, %v799
      %v819 = vpack.c.b16 %v802, %v801
      %v820 = vpack.c.b16 %v804, %v803
      %v821 = vpack.c.b16 %v805, %v805
      %vm822 = vcmask 1046528
      %v823 = vrot.slane %v806, 1
      %v824 = vrot.slane %v807, 1
      %v825 = vsel %vm822, %v823, %v824
      %v826 = vrot.slane %v808, 1
      %v827 = vsel %vm822, %v824, %v826
      %v828 = vrot.slane %v809, 1
      %v829 = vsel %vm822, %v826, %v828
      %v830 = vrot.slane %v810, 1
      %v831 = vsel %vm822, %v828, %v830
      %v832 = vrot.slane %v811, 1
      %v833 = vsel %vm822, %v830, %v832
      %v834 = vrot.slane %v812, 1
      %v835 = vsel %vm822, %v832, %v834
      %v836 = vrot.slane %v813, 1
      %v837 = vsel %vm822, %v834, %v836
      %v838 = vrot.slane %v814, 1
      %v839 = vsel %vm822, %v836, %v838
      %v840 = vrot.slane %v815, 1
      %v841 = vsel %vm822, %v838, %v840
      %v842 = vrot.slane %v816, 1
      %v843 = vsel %vm822, %v840, %v842
      %v844 = vrot.slane %v817, 1
      %v845 = vsel %vm822, %v842, %v844
      %v846 = vrot.slane %v818, 1
      %v847 = vsel %vm822, %v844, %v846
      %v848 = vrot.slane %v819, 1
      %v849 = vsel %vm822, %v846, %v848
      %v850 = vrot.slane %v820, 1
      %v851 = vsel %vm822, %v848, %v850
      %v852 = vrot.slane %v821, 1
      %v853 = vsel %vm822, %v850, %v852
      %854 = vrot.lane.b32.xlu0 %v825, 8
      %v855 = vpop.permute.xlu0 %854
      %856 = vrot.lane.b32.xlu0 %v827, 8
      %v857 = vpop.permute.xlu0 %856
      %858 = vrot.lane.b32.xlu0 %v829, 8
      %v859 = vpop.permute.xlu0 %858
      %860 = vrot.lane.b32.xlu0 %v831, 8
      %v861 = vpop.permute.xlu0 %860
      %862 = vrot.lane.b32.xlu0 %v833, 8
      %v863 = vpop.permute.xlu0 %862
      %864 = vrot.lane.b32.xlu0 %v835, 8
      %v865 = vpop.permute.xlu0 %864
      %866 = vrot.lane.b32.xlu0 %v837, 8
      %v867 = vpop.permute.xlu0 %866
      %868 = vrot.lane.b32.xlu0 %v839, 8
      %v869 = vpop.permute.xlu0 %868
      %870 = vrot.lane.b32.xlu0 %v841, 8
      %v871 = vpop.permute.xlu0 %870
      %872 = vrot.lane.b32.xlu0 %v843, 8
      %v873 = vpop.permute.xlu0 %872
      %874 = vrot.lane.b32.xlu0 %v845, 8
      %v875 = vpop.permute.xlu0 %874
      %876 = vrot.lane.b32.xlu0 %v847, 8
      %v877 = vpop.permute.xlu0 %876
      %878 = vrot.lane.b32.xlu0 %v849, 8
      %v879 = vpop.permute.xlu0 %878
      %880 = vrot.lane.b32.xlu0 %v851, 8
      %v881 = vpop.permute.xlu0 %880
      %882 = vrot.lane.b32.xlu0 %v853, 8
      %v883 = vpop.permute.xlu0 %882
      %vm899 = vcmask 97344
      %900 = vst.msk [vmem:[#allocation2] sm:$0xff] %vm899, %v855
      %901 = vst.msk [vmem:[#allocation2 + $0x8] sm:$0xff] %vm899, %v857
      %902 = vst.msk [vmem:[#allocation2 + $0x10] sm:$0xff] %vm899, %v859
      %903 = vst.msk [vmem:[#allocation2 + $0x18] sm:$0xff] %vm899, %v861
      %904 = vst.msk [vmem:[#allocation2 + $0x20] sm:$0xff] %vm899, %v863
      %905 = vst.msk [vmem:[#allocation2 + $0x28] sm:$0xff] %vm899, %v865
      %906 = vst.msk [vmem:[#allocation2 + $0x30] sm:$0xff] %vm899, %v867
      %907 = vst.msk [vmem:[#allocation2 + $0x38] sm:$0xff] %vm899, %v869
      %908 = vst.msk [vmem:[#allocation2 + $0x40] sm:$0xff] %vm899, %v871
      %909 = vst.msk [vmem:[#allocation2 + $0x48] sm:$0xff] %vm899, %v873
      %910 = vst.msk [vmem:[#allocation2 + $0x50] sm:$0xff] %vm899, %v875
      %911 = vst.msk [vmem:[#allocation2 + $0x58] sm:$0xff] %vm899, %v877
      %912 = vst.msk [vmem:[#allocation2 + $0x60] sm:$0xff] %vm899, %v879
      %913 = vst.msk [vmem:[#allocation2 + $0x68] sm:$0xff] %vm899, %v881
      %914 = vst.msk [vmem:[#allocation2 + $0x70] sm:$0xff] %vm899, %v883
      %v915 = vld [vmem:[%s274 + $0x8] sm:$0xf]
      %v916 = vld [vmem:[%s274 + $0xc] sm:$0xf]
      %v917 = vld [vmem:[%s274 + $0x10] sm:$0xf]
      %v918 = vld [vmem:[%s274 + $0x14] sm:$0xf]
      %v919 = vld [vmem:[%s274 + $0x18] sm:$0xf]
      %v920 = vld [vmem:[%s274 + $0x1c] sm:$0xf]
      %v921 = vld [vmem:[%s274 + $0x20] sm:$0xf]
      %v922 = vld [vmem:[%s274 + $0x24] sm:$0xf]
      %v923 = vld [vmem:[%s274 + $0x28] sm:$0xf]
      %v924 = vld [vmem:[%s274 + $0x2c] sm:$0xf]
      %v925 = vld [vmem:[%s274 + $0x30] sm:$0xf]
      %v926 = vld [vmem:[%s274 + $0x34] sm:$0xf]
      %v927 = vld [vmem:[%s274 + $0x38] sm:$0xf]
      %v928 = vld [vmem:[%s274 + $0x3c] sm:$0xf]
      %v929 = vld [vmem:[%s274 + $0x40] sm:$0xf]
      %v930 = vld [vmem:[%s274 + $0x44] sm:$0xf]
      %v931 = vld [vmem:[%s274 + $0x48] sm:$0xf]
      %v932 = vld [vmem:[%s274 + $0x4c] sm:$0xf]
      %v933 = vld [vmem:[%s274 + $0x50] sm:$0xf]
      %v934 = vld [vmem:[%s274 + $0x54] sm:$0xf]
      %v935 = vld [vmem:[%s274 + $0x58] sm:$0xf]
      %v936 = vld [vmem:[%s274 + $0x5c] sm:$0xf]
      %v937 = vld [vmem:[%s274 + $0x60] sm:$0xf]
      %v938 = vld [vmem:[%s274 + $0x64] sm:$0xf]
      %v939 = vld [vmem:[%s274 + $0x68] sm:$0xf]
      %v940 = vld [vmem:[%s274 + $0x6c] sm:$0xf]
      %v941 = vld [vmem:[%s274 + $0x70] sm:$0xf]
      %v942 = vld [vmem:[%s274 + $0x74] sm:$0xf]
      %v943 = vld [vmem:[%s274 + $0x78] sm:$0xf]
      %v944 = vld [vmem:[%s274 + $0x7c] sm:$0xf]
      %v975 = vunpack.c.l.b16 %v915
      %v976 = vunpack.c.l.b16 %v916
      %v977 = vunpack.c.l.b16 %v917
      %v978 = vunpack.c.l.b16 %v918
      %v979 = vunpack.c.l.b16 %v919
      %v980 = vunpack.c.l.b16 %v920
      %v981 = vunpack.c.l.b16 %v921
      %v982 = vunpack.c.l.b16 %v922
      %v983 = vunpack.c.l.b16 %v923
      %v984 = vunpack.c.l.b16 %v924
      %v985 = vunpack.c.l.b16 %v925
      %v986 = vunpack.c.l.b16 %v926
      %v987 = vunpack.c.l.b16 %v927
      %v988 = vunpack.c.l.b16 %v928
      %v989 = vunpack.c.l.b16 %v929
      %v990 = vunpack.c.l.b16 %v930
      %v991 = vunpack.c.l.b16 %v931
      %v992 = vunpack.c.l.b16 %v932
      %v993 = vunpack.c.l.b16 %v933
      %v994 = vunpack.c.l.b16 %v934
      %v995 = vunpack.c.l.b16 %v935
      %v996 = vunpack.c.l.b16 %v936
      %v997 = vunpack.c.l.b16 %v937
      %v998 = vunpack.c.l.b16 %v938
      %v999 = vunpack.c.l.b16 %v939
      %v1000 = vunpack.c.l.b16 %v940
      %v1001 = vunpack.c.l.b16 %v941
      %v1002 = vunpack.c.l.b16 %v942
      %v1003 = vunpack.c.l.b16 %v943
      %v1004 = vunpack.c.l.b16 %v944
      %v1005 = vpack.c.b16 %v976, %v975
      %v1006 = vpack.c.b16 %v978, %v977
      %v1007 = vpack.c.b16 %v980, %v979
      %v1008 = vpack.c.b16 %v982, %v981
      %v1009 = vpack.c.b16 %v984, %v983
      %v1010 = vpack.c.b16 %v986, %v985
      %v1011 = vpack.c.b16 %v988, %v987
      %v1012 = vpack.c.b16 %v990, %v989
      %v1013 = vpack.c.b16 %v992, %v991
      %v1014 = vpack.c.b16 %v994, %v993
      %v1015 = vpack.c.b16 %v996, %v995
      %v1016 = vpack.c.b16 %v998, %v997
      %v1017 = vpack.c.b16 %v1000, %v999
      %v1018 = vpack.c.b16 %v1002, %v1001
      %v1019 = vpack.c.b16 %v1004, %v1003
      %1020 = vrot.lane.b32.xlu0 %v1005, 12
      %v1021 = vpop.permute.xlu0 %1020
      %1022 = vrot.lane.b32.xlu0 %v1006, 12
      %v1023 = vpop.permute.xlu0 %1022
      %1024 = vrot.lane.b32.xlu0 %v1007, 12
      %v1025 = vpop.permute.xlu0 %1024
      %1026 = vrot.lane.b32.xlu0 %v1008, 12
      %v1027 = vpop.permute.xlu0 %1026
      %1028 = vrot.lane.b32.xlu0 %v1009, 12
      %v1029 = vpop.permute.xlu0 %1028
      %1030 = vrot.lane.b32.xlu0 %v1010, 12
      %v1031 = vpop.permute.xlu0 %1030
      %1032 = vrot.lane.b32.xlu0 %v1011, 12
      %v1033 = vpop.permute.xlu0 %1032
      %1034 = vrot.lane.b32.xlu0 %v1012, 12
      %v1035 = vpop.permute.xlu0 %1034
      %1036 = vrot.lane.b32.xlu0 %v1013, 12
      %v1037 = vpop.permute.xlu0 %1036
      %1038 = vrot.lane.b32.xlu0 %v1014, 12
      %v1039 = vpop.permute.xlu0 %1038
      %1040 = vrot.lane.b32.xlu0 %v1015, 12
      %v1041 = vpop.permute.xlu0 %1040
      %1042 = vrot.lane.b32.xlu0 %v1016, 12
      %v1043 = vpop.permute.xlu0 %1042
      %1044 = vrot.lane.b32.xlu0 %v1017, 12
      %v1045 = vpop.permute.xlu0 %1044
      %1046 = vrot.lane.b32.xlu0 %v1018, 12
      %v1047 = vpop.permute.xlu0 %1046
      %1048 = vrot.lane.b32.xlu0 %v1019, 12
      %v1049 = vpop.permute.xlu0 %1048
      %vm1065 = vcmask 130144
      %1066 = vst.msk [vmem:[#allocation2] sm:$0xff] %vm1065, %v1021
      %1067 = vst.msk [vmem:[#allocation2 + $0x8] sm:$0xff] %vm1065, %v1023
      %1068 = vst.msk [vmem:[#allocation2 + $0x10] sm:$0xff] %vm1065, %v1025
      %1069 = vst.msk [vmem:[#allocation2 + $0x18] sm:$0xff] %vm1065, %v1027
      %1070 = vst.msk [vmem:[#allocation2 + $0x20] sm:$0xff] %vm1065, %v1029
      %1071 = vst.msk [vmem:[#allocation2 + $0x28] sm:$0xff] %vm1065, %v1031
      %1072 = vst.msk [vmem:[#allocation2 + $0x30] sm:$0xff] %vm1065, %v1033
      %1073 = vst.msk [vmem:[#allocation2 + $0x38] sm:$0xff] %vm1065, %v1035
      %1074 = vst.msk [vmem:[#allocation2 + $0x40] sm:$0xff] %vm1065, %v1037
      %1075 = vst.msk [vmem:[#allocation2 + $0x48] sm:$0xff] %vm1065, %v1039
      %1076 = vst.msk [vmem:[#allocation2 + $0x50] sm:$0xff] %vm1065, %v1041
      %1077 = vst.msk [vmem:[#allocation2 + $0x58] sm:$0xff] %vm1065, %v1043
      %1078 = vst.msk [vmem:[#allocation2 + $0x60] sm:$0xff] %vm1065, %v1045
      %1079 = vst.msk [vmem:[#allocation2 + $0x68] sm:$0xff] %vm1065, %v1047
      %1080 = vst.msk [vmem:[#allocation2 + $0x70] sm:$0xff] %vm1065, %v1049
      %v1081 = vld [vmem:[%s274 + $0x8] sm:$0xf]
      %v1082 = vld [vmem:[%s274 + $0xc] sm:$0xf]
      %v1083 = vld [vmem:[%s274 + $0x10] sm:$0xf]
      %v1084 = vld [vmem:[%s274 + $0x14] sm:$0xf]
      %v1085 = vld [vmem:[%s274 + $0x18] sm:$0xf]
      %v1086 = vld [vmem:[%s274 + $0x1c] sm:$0xf]
      %v1087 = vld [vmem:[%s274 + $0x20] sm:$0xf]
      %v1088 = vld [vmem:[%s274 + $0x24] sm:$0xf]
      %v1089 = vld [vmem:[%s274 + $0x28] sm:$0xf]
      %v1090 = vld [vmem:[%s274 + $0x2c] sm:$0xf]
      %v1091 = vld [vmem:[%s274 + $0x30] sm:$0xf]
      %v1092 = vld [vmem:[%s274 + $0x34] sm:$0xf]
      %v1093 = vld [vmem:[%s274 + $0x38] sm:$0xf]
      %v1094 = vld [vmem:[%s274 + $0x3c] sm:$0xf]
      %v1095 = vld [vmem:[%s274 + $0x40] sm:$0xf]
      %v1096 = vld [vmem:[%s274 + $0x44] sm:$0xf]
      %v1097 = vld [vmem:[%s274 + $0x48] sm:$0xf]
      %v1098 = vld [vmem:[%s274 + $0x4c] sm:$0xf]
      %v1099 = vld [vmem:[%s274 + $0x50] sm:$0xf]
      %v1100 = vld [vmem:[%s274 + $0x54] sm:$0xf]
      %v1101 = vld [vmem:[%s274 + $0x58] sm:$0xf]
      %v1102 = vld [vmem:[%s274 + $0x5c] sm:$0xf]
      %v1103 = vld [vmem:[%s274 + $0x60] sm:$0xf]
      %v1104 = vld [vmem:[%s274 + $0x64] sm:$0xf]
      %v1105 = vld [vmem:[%s274 + $0x68] sm:$0xf]
      %v1106 = vld [vmem:[%s274 + $0x6c] sm:$0xf]
      %v1107 = vld [vmem:[%s274 + $0x70] sm:$0xf]
      %v1108 = vld [vmem:[%s274 + $0x74] sm:$0xf]
      %v1109 = vld [vmem:[%s274 + $0x78] sm:$0xf]
      %v1110 = vld [vmem:[%s274 + $0x7c] sm:$0xf]
      %v1111 = vld [vmem:[%s274 + $0x80] sm:$0x1]
      %v1143 = vunpack.c.l.b16 %v1081
      %v1144 = vunpack.c.l.b16 %v1082
      %v1145 = vunpack.c.l.b16 %v1083
      %v1146 = vunpack.c.l.b16 %v1084
      %v1147 = vunpack.c.l.b16 %v1085
      %v1148 = vunpack.c.l.b16 %v1086
      %v1149 = vunpack.c.l.b16 %v1087
      %v1150 = vunpack.c.l.b16 %v1088
      %v1151 = vunpack.c.l.b16 %v1089
      %v1152 = vunpack.c.l.b16 %v1090
      %v1153 = vunpack.c.l.b16 %v1091
      %v1154 = vunpack.c.l.b16 %v1092
      %v1155 = vunpack.c.l.b16 %v1093
      %v1156 = vunpack.c.l.b16 %v1094
      %v1157 = vunpack.c.l.b16 %v1095
      %v1158 = vunpack.c.l.b16 %v1096
      %v1159 = vunpack.c.l.b16 %v1097
      %v1160 = vunpack.c.l.b16 %v1098
      %v1161 = vunpack.c.l.b16 %v1099
      %v1162 = vunpack.c.l.b16 %v1100
      %v1163 = vunpack.c.l.b16 %v1101
      %v1164 = vunpack.c.l.b16 %v1102
      %v1165 = vunpack.c.l.b16 %v1103
      %v1166 = vunpack.c.l.b16 %v1104
      %v1167 = vunpack.c.l.b16 %v1105
      %v1168 = vunpack.c.l.b16 %v1106
      %v1169 = vunpack.c.l.b16 %v1107
      %v1170 = vunpack.c.l.b16 %v1108
      %v1171 = vunpack.c.l.b16 %v1109
      %v1172 = vunpack.c.l.b16 %v1110
      %v1173 = vunpack.c.l.b16 %v1111
      %v1174 = vpack.c.b16 %v1144, %v1143
      %v1175 = vpack.c.b16 %v1146, %v1145
      %v1176 = vpack.c.b16 %v1148, %v1147
      %v1177 = vpack.c.b16 %v1150, %v1149
      %v1178 = vpack.c.b16 %v1152, %v1151
      %v1179 = vpack.c.b16 %v1154, %v1153
      %v1180 = vpack.c.b16 %v1156, %v1155
      %v1181 = vpack.c.b16 %v1158, %v1157
      %v1182 = vpack.c.b16 %v1160, %v1159
      %v1183 = vpack.c.b16 %v1162, %v1161
      %v1184 = vpack.c.b16 %v1164, %v1163
      %v1185 = vpack.c.b16 %v1166, %v1165
      %v1186 = vpack.c.b16 %v1168, %v1167
      %v1187 = vpack.c.b16 %v1170, %v1169
      %v1188 = vpack.c.b16 %v1172, %v1171
      %v1189 = vpack.c.b16 %v1173, %v1173
      %v1191 = vshrl.u32 %v1174, 16
      %v1193 = vshll.u32 %v1174, 16
      %v1195 = vrot.slane %v1193, 1
      %v1196 = vor.u32 %v1191, %v1195
      %v1198 = vshll.u32 %v1175, 16
      %v1200 = vrot.slane %v1198, 1
      %v1201 = vsel %vm527, %v1196, %v1200
      %v1202 = vshrl.u32 %v1175, 16
      %v1204 = vor.u32 %v1202, %v1200
      %v1206 = vshll.u32 %v1176, 16
      %v1208 = vrot.slane %v1206, 1
      %v1209 = vsel %vm527, %v1204, %v1208
      %v1210 = vshrl.u32 %v1176, 16
      %v1212 = vor.u32 %v1210, %v1208
      %v1214 = vshll.u32 %v1177, 16
      %v1216 = vrot.slane %v1214, 1
      %v1217 = vsel %vm527, %v1212, %v1216
      %v1218 = vshrl.u32 %v1177, 16
      %v1220 = vor.u32 %v1218, %v1216
      %v1222 = vshll.u32 %v1178, 16
      %v1224 = vrot.slane %v1222, 1
      %v1225 = vsel %vm527, %v1220, %v1224
      %v1226 = vshrl.u32 %v1178, 16
      %v1228 = vor.u32 %v1226, %v1224
      %v1230 = vshll.u32 %v1179, 16
      %v1232 = vrot.slane %v1230, 1
      %v1233 = vsel %vm527, %v1228, %v1232
      %v1234 = vshrl.u32 %v1179, 16
      %v1236 = vor.u32 %v1234, %v1232
      %v1238 = vshll.u32 %v1180, 16
      %v1240 = vrot.slane %v1238, 1
      %v1241 = vsel %vm527, %v1236, %v1240
      %v1242 = vshrl.u32 %v1180, 16
      %v1244 = vor.u32 %v1242, %v1240
      %v1246 = vshll.u32 %v1181, 16
      %v1248 = vrot.slane %v1246, 1
      %v1249 = vsel %vm527, %v1244, %v1248
      %v1250 = vshrl.u32 %v1181, 16
      %v1252 = vor.u32 %v1250, %v1248
      %v1254 = vshll.u32 %v1182, 16
      %v1256 = vrot.slane %v1254, 1
      %v1257 = vsel %vm527, %v1252, %v1256
      %v1258 = vshrl.u32 %v1182, 16
      %v1260 = vor.u32 %v1258, %v1256
      %v1262 = vshll.u32 %v1183, 16
      %v1264 = vrot.slane %v1262, 1
      %v1265 = vsel %vm527, %v1260, %v1264
      %v1266 = vshrl.u32 %v1183, 16
      %v1268 = vor.u32 %v1266, %v1264
      %v1270 = vshll.u32 %v1184, 16
      %v1272 = vrot.slane %v1270, 1
      %v1273 = vsel %vm527, %v1268, %v1272
      %v1274 = vshrl.u32 %v1184, 16
      %v1276 = vor.u32 %v1274, %v1272
      %v1278 = vshll.u32 %v1185, 16
      %v1280 = vrot.slane %v1278, 1
      %v1281 = vsel %vm527, %v1276, %v1280
      %v1282 = vshrl.u32 %v1185, 16
      %v1284 = vor.u32 %v1282, %v1280
      %v1286 = vshll.u32 %v1186, 16
      %v1288 = vrot.slane %v1286, 1
      %v1289 = vsel %vm527, %v1284, %v1288
      %v1290 = vshrl.u32 %v1186, 16
      %v1292 = vor.u32 %v1290, %v1288
      %v1294 = vshll.u32 %v1187, 16
      %v1296 = vrot.slane %v1294, 1
      %v1297 = vsel %vm527, %v1292, %v1296
      %v1298 = vshrl.u32 %v1187, 16
      %v1300 = vor.u32 %v1298, %v1296
      %v1302 = vshll.u32 %v1188, 16
      %v1304 = vrot.slane %v1302, 1
      %v1305 = vsel %vm527, %v1300, %v1304
      %v1306 = vshrl.u32 %v1188, 16
      %v1308 = vor.u32 %v1306, %v1304
      %v1310 = vshll.u32 %v1189, 16
      %v1312 = vrot.slane %v1310, 1
      %v1313 = vsel %vm527, %v1308, %v1312
      %1314 = vrot.lane.b32.xlu0 %v1201, 16
      %v1315 = vpop.permute.xlu0 %1314
      %1316 = vrot.lane.b32.xlu0 %v1209, 16
      %v1317 = vpop.permute.xlu0 %1316
      %1318 = vrot.lane.b32.xlu0 %v1217, 16
      %v1319 = vpop.permute.xlu0 %1318
      %1320 = vrot.lane.b32.xlu0 %v1225, 16
      %v1321 = vpop.permute.xlu0 %1320
      %1322 = vrot.lane.b32.xlu0 %v1233, 16
      %v1323 = vpop.permute.xlu0 %1322
      %1324 = vrot.lane.b32.xlu0 %v1241, 16
      %v1325 = vpop.permute.xlu0 %1324
      %1326 = vrot.lane.b32.xlu0 %v1249, 16
      %v1327 = vpop.permute.xlu0 %1326
      %1328 = vrot.lane.b32.xlu0 %v1257, 16
      %v1329 = vpop.permute.xlu0 %1328
      %1330 = vrot.lane.b32.xlu0 %v1265, 16
      %v1331 = vpop.permute.xlu0 %1330
      %1332 = vrot.lane.b32.xlu0 %v1273, 16
      %v1333 = vpop.permute.xlu0 %1332
      %1334 = vrot.lane.b32.xlu0 %v1281, 16
      %v1335 = vpop.permute.xlu0 %1334
      %1336 = vrot.lane.b32.xlu0 %v1289, 16
      %v1337 = vpop.permute.xlu0 %1336
      %1338 = vrot.lane.b32.xlu0 %v1297, 16
      %v1339 = vpop.permute.xlu0 %1338
      %1340 = vrot.lane.b32.xlu0 %v1305, 16
      %v1341 = vpop.permute.xlu0 %1340
      %1342 = vrot.lane.b32.xlu0 %v1313, 16
      %v1343 = vpop.permute.xlu0 %1342
      %vm1359 = vcmask 162944
      %1360 = vst.msk [vmem:[#allocation2] sm:$0xff] %vm1359, %v1315
      %1361 = vst.msk [vmem:[#allocation2 + $0x8] sm:$0xff] %vm1359, %v1317
      %1362 = vst.msk [vmem:[#allocation2 + $0x10] sm:$0xff] %vm1359, %v1319
      %1363 = vst.msk [vmem:[#allocation2 + $0x18] sm:$0xff] %vm1359, %v1321
      %1364 = vst.msk [vmem:[#allocation2 + $0x20] sm:$0xff] %vm1359, %v1323
      %1365 = vst.msk [vmem:[#allocation2 + $0x28] sm:$0xff] %vm1359, %v1325
      %1366 = vst.msk [vmem:[#allocation2 + $0x30] sm:$0xff] %vm1359, %v1327
      %1367 = vst.msk [vmem:[#allocation2 + $0x38] sm:$0xff] %vm1359, %v1329
      %1368 = vst.msk [vmem:[#allocation2 + $0x40] sm:$0xff] %vm1359, %v1331
      %1369 = vst.msk [vmem:[#allocation2 + $0x48] sm:$0xff] %vm1359, %v1333
      %1370 = vst.msk [vmem:[#allocation2 + $0x50] sm:$0xff] %vm1359, %v1335
      %1371 = vst.msk [vmem:[#allocation2 + $0x58] sm:$0xff] %vm1359, %v1337
      %1372 = vst.msk [vmem:[#allocation2 + $0x60] sm:$0xff] %vm1359, %v1339
      %1373 = vst.msk [vmem:[#allocation2 + $0x68] sm:$0xff] %vm1359, %v1341
      %1374 = vst.msk [vmem:[#allocation2 + $0x70] sm:$0xff] %vm1359, %v1343
      %v1375 = vld [vmem:[%s274 + $0x8] sm:$0xe]
      %v1376 = vld [vmem:[%s274 + $0xc] sm:$0xf]
      %v1377 = vld [vmem:[%s274 + $0x10] sm:$0xf]
      %v1378 = vld [vmem:[%s274 + $0x14] sm:$0xf]
      %v1379 = vld [vmem:[%s274 + $0x18] sm:$0xf]
      %v1380 = vld [vmem:[%s274 + $0x1c] sm:$0xf]
      %v1381 = vld [vmem:[%s274 + $0x20] sm:$0xf]
      %v1382 = vld [vmem:[%s274 + $0x24] sm:$0xf]
      %v1383 = vld [vmem:[%s274 + $0x28] sm:$0xf]
      %v1384 = vld [vmem:[%s274 + $0x2c] sm:$0xf]
      %v1385 = vld [vmem:[%s274 + $0x30] sm:$0xf]
      %v1386 = vld [vmem:[%s274 + $0x34] sm:$0xf]
      %v1387 = vld [vmem:[%s274 + $0x38] sm:$0xf]
      %v1388 = vld [vmem:[%s274 + $0x3c] sm:$0xf]
      %v1389 = vld [vmem:[%s274 + $0x40] sm:$0xf]
      %v1390 = vld [vmem:[%s274 + $0x44] sm:$0xf]
      %v1391 = vld [vmem:[%s274 + $0x48] sm:$0xf]
      %v1392 = vld [vmem:[%s274 + $0x4c] sm:$0xf]
      %v1393 = vld [vmem:[%s274 + $0x50] sm:$0xf]
      %v1394 = vld [vmem:[%s274 + $0x54] sm:$0xf]
      %v1395 = vld [vmem:[%s274 + $0x58] sm:$0xf]
      %v1396 = vld [vmem:[%s274 + $0x5c] sm:$0xf]
      %v1397 = vld [vmem:[%s274 + $0x60] sm:$0xf]
      %v1398 = vld [vmem:[%s274 + $0x64] sm:$0xf]
      %v1399 = vld [vmem:[%s274 + $0x68] sm:$0xf]
      %v1400 = vld [vmem:[%s274 + $0x6c] sm:$0xf]
      %v1401 = vld [vmem:[%s274 + $0x70] sm:$0xf]
      %v1402 = vld [vmem:[%s274 + $0x74] sm:$0xf]
      %v1403 = vld [vmem:[%s274 + $0x78] sm:$0xf]
      %v1404 = vld [vmem:[%s274 + $0x7c] sm:$0xf]
      %v1405 = vld [vmem:[%s274 + $0x80] sm:$0x1]
      %v1437 = vunpack.c.l.b16 %v1375
      %v1438 = vunpack.c.l.b16 %v1376
      %v1439 = vunpack.c.l.b16 %v1377
      %v1440 = vunpack.c.l.b16 %v1378
      %v1441 = vunpack.c.l.b16 %v1379
      %v1442 = vunpack.c.l.b16 %v1380
      %v1443 = vunpack.c.l.b16 %v1381
      %v1444 = vunpack.c.l.b16 %v1382
      %v1445 = vunpack.c.l.b16 %v1383
      %v1446 = vunpack.c.l.b16 %v1384
      %v1447 = vunpack.c.l.b16 %v1385
      %v1448 = vunpack.c.l.b16 %v1386
      %v1449 = vunpack.c.l.b16 %v1387
      %v1450 = vunpack.c.l.b16 %v1388
      %v1451 = vunpack.c.l.b16 %v1389
      %v1452 = vunpack.c.l.b16 %v1390
      %v1453 = vunpack.c.l.b16 %v1391
      %v1454 = vunpack.c.l.b16 %v1392
      %v1455 = vunpack.c.l.b16 %v1393
      %v1456 = vunpack.c.l.b16 %v1394
      %v1457 = vunpack.c.l.b16 %v1395
      %v1458 = vunpack.c.l.b16 %v1396
      %v1459 = vunpack.c.l.b16 %v1397
      %v1460 = vunpack.c.l.b16 %v1398
      %v1461 = vunpack.c.l.b16 %v1399
      %v1462 = vunpack.c.l.b16 %v1400
      %v1463 = vunpack.c.l.b16 %v1401
      %v1464 = vunpack.c.l.b16 %v1402
      %v1465 = vunpack.c.l.b16 %v1403
      %v1466 = vunpack.c.l.b16 %v1404
      %v1467 = vunpack.c.l.b16 %v1405
      %v1468 = vpack.c.b16 %v1438, %v1437
      %v1469 = vpack.c.b16 %v1440, %v1439
      %v1470 = vpack.c.b16 %v1442, %v1441
      %v1471 = vpack.c.b16 %v1444, %v1443
      %v1472 = vpack.c.b16 %v1446, %v1445
      %v1473 = vpack.c.b16 %v1448, %v1447
      %v1474 = vpack.c.b16 %v1450, %v1449
      %v1475 = vpack.c.b16 %v1452, %v1451
      %v1476 = vpack.c.b16 %v1454, %v1453
      %v1477 = vpack.c.b16 %v1456, %v1455
      %v1478 = vpack.c.b16 %v1458, %v1457
      %v1479 = vpack.c.b16 %v1460, %v1459
      %v1480 = vpack.c.b16 %v1462, %v1461
      %v1481 = vpack.c.b16 %v1464, %v1463
      %v1482 = vpack.c.b16 %v1466, %v1465
      %v1483 = vpack.c.b16 %v1467, %v1467
      %v1484 = vrot.slane %v1468, 1
      %v1485 = vrot.slane %v1469, 1
      %v1486 = vsel %vm822, %v1484, %v1485
      %v1487 = vrot.slane %v1470, 1
      %v1488 = vsel %vm822, %v1485, %v1487
      %v1489 = vrot.slane %v1471, 1
      %v1490 = vsel %vm822, %v1487, %v1489
      %v1491 = vrot.slane %v1472, 1
      %v1492 = vsel %vm822, %v1489, %v1491
      %v1493 = vrot.slane %v1473, 1
      %v1494 = vsel %vm822, %v1491, %v1493
      %v1495 = vrot.slane %v1474, 1
      %v1496 = vsel %vm822, %v1493, %v1495
      %v1497 = vrot.slane %v1475, 1
      %v1498 = vsel %vm822, %v1495, %v1497
      %v1499 = vrot.slane %v1476, 1
      %v1500 = vsel %vm822, %v1497, %v1499
      %v1501 = vrot.slane %v1477, 1
      %v1502 = vsel %vm822, %v1499, %v1501
      %v1503 = vrot.slane %v1478, 1
      %v1504 = vsel %vm822, %v1501, %v1503
      %v1505 = vrot.slane %v1479, 1
      %v1506 = vsel %vm822, %v1503, %v1505
      %v1507 = vrot.slane %v1480, 1
      %v1508 = vsel %vm822, %v1505, %v1507
      %v1509 = vrot.slane %v1481, 1
      %v1510 = vsel %vm822, %v1507, %v1509
      %v1511 = vrot.slane %v1482, 1
      %v1512 = vsel %vm822, %v1509, %v1511
      %v1513 = vrot.slane %v1483, 1
      %v1514 = vsel %vm822, %v1511, %v1513
      %1515 = vrot.lane.b32.xlu0 %v1486, 20
      %v1516 = vpop.permute.xlu0 %1515
      %1517 = vrot.lane.b32.xlu0 %v1488, 20
      %v1518 = vpop.permute.xlu0 %1517
      %1519 = vrot.lane.b32.xlu0 %v1490, 20
      %v1520 = vpop.permute.xlu0 %1519
      %1521 = vrot.lane.b32.xlu0 %v1492, 20
      %v1522 = vpop.permute.xlu0 %1521
      %1523 = vrot.lane.b32.xlu0 %v1494, 20
      %v1524 = vpop.permute.xlu0 %1523
      %1525 = vrot.lane.b32.xlu0 %v1496, 20
      %v1526 = vpop.permute.xlu0 %1525
      %1527 = vrot.lane.b32.xlu0 %v1498, 20
      %v1528 = vpop.permute.xlu0 %1527
      %1529 = vrot.lane.b32.xlu0 %v1500, 20
      %v1530 = vpop.permute.xlu0 %1529
      %1531 = vrot.lane.b32.xlu0 %v1502, 20
      %v1532 = vpop.permute.xlu0 %1531
      %1533 = vrot.lane.b32.xlu0 %v1504, 20
      %v1534 = vpop.permute.xlu0 %1533
      %1535 = vrot.lane.b32.xlu0 %v1506, 20
      %v1536 = vpop.permute.xlu0 %1535
      %1537 = vrot.lane.b32.xlu0 %v1508, 20
      %v1538 = vpop.permute.xlu0 %1537
      %1539 = vrot.lane.b32.xlu0 %v1510, 20
      %v1540 = vpop.permute.xlu0 %1539
      %1541 = vrot.lane.b32.xlu0 %v1512, 20
      %v1542 = vpop.permute.xlu0 %1541
      %1543 = vrot.lane.b32.xlu0 %v1514, 20
      %v1544 = vpop.permute.xlu0 %1543
      %vm1560 = vcmask 195744
      %1561 = vst.msk [vmem:[#allocation2] sm:$0xff] %vm1560, %v1516
      %1562 = vst.msk [vmem:[#allocation2 + $0x8] sm:$0xff] %vm1560, %v1518
      %1563 = vst.msk [vmem:[#allocation2 + $0x10] sm:$0xff] %vm1560, %v1520
      %1564 = vst.msk [vmem:[#allocation2 + $0x18] sm:$0xff] %vm1560, %v1522
      %1565 = vst.msk [vmem:[#allocation2 + $0x20] sm:$0xff] %vm1560, %v1524
      %1566 = vst.msk [vmem:[#allocation2 + $0x28] sm:$0xff] %vm1560, %v1526
      %1567 = vst.msk [vmem:[#allocation2 + $0x30] sm:$0xff] %vm1560, %v1528
      %1568 = vst.msk [vmem:[#allocation2 + $0x38] sm:$0xff] %vm1560, %v1530
      %1569 = vst.msk [vmem:[#allocation2 + $0x40] sm:$0xff] %vm1560, %v1532
      %1570 = vst.msk [vmem:[#allocation2 + $0x48] sm:$0xff] %vm1560, %v1534
      %1571 = vst.msk [vmem:[#allocation2 + $0x50] sm:$0xff] %vm1560, %v1536
      %1572 = vst.msk [vmem:[#allocation2 + $0x58] sm:$0xff] %vm1560, %v1538
      %1573 = vst.msk [vmem:[#allocation2 + $0x60] sm:$0xff] %vm1560, %v1540
      %1574 = vst.msk [vmem:[#allocation2 + $0x68] sm:$0xff] %vm1560, %v1542
      %1575 = vst.msk [vmem:[#allocation2 + $0x70] sm:$0xff] %vm1560, %v1544
      %v1576 = vld [vmem:[%s274 + $0x10] sm:$0xf]
      %v1577 = vld [vmem:[%s274 + $0x14] sm:$0xf]
      %v1578 = vld [vmem:[%s274 + $0x18] sm:$0xf]
      %v1579 = vld [vmem:[%s274 + $0x1c] sm:$0xf]
      %v1580 = vld [vmem:[%s274 + $0x20] sm:$0xf]
      %v1581 = vld [vmem:[%s274 + $0x24] sm:$0xf]
      %v1582 = vld [vmem:[%s274 + $0x28] sm:$0xf]
      %v1583 = vld [vmem:[%s274 + $0x2c] sm:$0xf]
      %v1584 = vld [vmem:[%s274 + $0x30] sm:$0xf]
      %v1585 = vld [vmem:[%s274 + $0x34] sm:$0xf]
      %v1586 = vld [vmem:[%s274 + $0x38] sm:$0xf]
      %v1587 = vld [vmem:[%s274 + $0x3c] sm:$0xf]
      %v1588 = vld [vmem:[%s274 + $0x40] sm:$0xf]
      %v1589 = vld [vmem:[%s274 + $0x44] sm:$0xf]
      %v1590 = vld [vmem:[%s274 + $0x48] sm:$0xf]
      %v1591 = vld [vmem:[%s274 + $0x4c] sm:$0xf]
      %v1592 = vld [vmem:[%s274 + $0x50] sm:$0xf]
      %v1593 = vld [vmem:[%s274 + $0x54] sm:$0xf]
      %v1594 = vld [vmem:[%s274 + $0x58] sm:$0xf]
      %v1595 = vld [vmem:[%s274 + $0x5c] sm:$0xf]
      %v1596 = vld [vmem:[%s274 + $0x60] sm:$0xf]
      %v1597 = vld [vmem:[%s274 + $0x64] sm:$0xf]
      %v1598 = vld [vmem:[%s274 + $0x68] sm:$0xf]
      %v1599 = vld [vmem:[%s274 + $0x6c] sm:$0xf]
      %v1600 = vld [vmem:[%s274 + $0x70] sm:$0xf]
      %v1601 = vld [vmem:[%s274 + $0x74] sm:$0xf]
      %v1602 = vld [vmem:[%s274 + $0x78] sm:$0xf]
      %v1603 = vld [vmem:[%s274 + $0x7c] sm:$0xf]
      %v1604 = vld [vmem:[%s274 + $0x80] sm:$0xf]
      %v1605 = vld [vmem:[%s274 + $0x84] sm:$0xf]
      %v1636 = vunpack.c.l.b16 %v1576
      %v1637 = vunpack.c.l.b16 %v1577
      %v1638 = vunpack.c.l.b16 %v1578
      %v1639 = vunpack.c.l.b16 %v1579
      %v1640 = vunpack.c.l.b16 %v1580
      %v1641 = vunpack.c.l.b16 %v1581
      %v1642 = vunpack.c.l.b16 %v1582
      %v1643 = vunpack.c.l.b16 %v1583
      %v1644 = vunpack.c.l.b16 %v1584
      %v1645 = vunpack.c.l.b16 %v1585
      %v1646 = vunpack.c.l.b16 %v1586
      %v1647 = vunpack.c.l.b16 %v1587
      %v1648 = vunpack.c.l.b16 %v1588
      %v1649 = vunpack.c.l.b16 %v1589
      %v1650 = vunpack.c.l.b16 %v1590
      %v1651 = vunpack.c.l.b16 %v1591
      %v1652 = vunpack.c.l.b16 %v1592
      %v1653 = vunpack.c.l.b16 %v1593
      %v1654 = vunpack.c.l.b16 %v1594
      %v1655 = vunpack.c.l.b16 %v1595
      %v1656 = vunpack.c.l.b16 %v1596
      %v1657 = vunpack.c.l.b16 %v1597
      %v1658 = vunpack.c.l.b16 %v1598
      %v1659 = vunpack.c.l.b16 %v1599
      %v1660 = vunpack.c.l.b16 %v1600
      %v1661 = vunpack.c.l.b16 %v1601
      %v1662 = vunpack.c.l.b16 %v1602
      %v1663 = vunpack.c.l.b16 %v1603
      %v1664 = vunpack.c.l.b16 %v1604
      %v1665 = vunpack.c.l.b16 %v1605
      %v1666 = vpack.c.b16 %v1637, %v1636
      %v1667 = vpack.c.b16 %v1639, %v1638
      %v1668 = vpack.c.b16 %v1641, %v1640
      %v1669 = vpack.c.b16 %v1643, %v1642
      %v1670 = vpack.c.b16 %v1645, %v1644
      %v1671 = vpack.c.b16 %v1647, %v1646
      %v1672 = vpack.c.b16 %v1649, %v1648
      %v1673 = vpack.c.b16 %v1651, %v1650
      %v1674 = vpack.c.b16 %v1653, %v1652
      %v1675 = vpack.c.b16 %v1655, %v1654
      %v1676 = vpack.c.b16 %v1657, %v1656
      %v1677 = vpack.c.b16 %v1659, %v1658
      %v1678 = vpack.c.b16 %v1661, %v1660
      %v1679 = vpack.c.b16 %v1663, %v1662
      %v1680 = vpack.c.b16 %v1665, %v1664
      %1681 = vrot.lane.b32.xlu0 %v1666, 24
      %v1682 = vpop.permute.xlu0 %1681
      %1683 = vrot.lane.b32.xlu0 %v1667, 24
      %v1684 = vpop.permute.xlu0 %1683
      %1685 = vrot.lane.b32.xlu0 %v1668, 24
      %v1686 = vpop.permute.xlu0 %1685
      %1687 = vrot.lane.b32.xlu0 %v1669, 24
      %v1688 = vpop.permute.xlu0 %1687
      %1689 = vrot.lane.b32.xlu0 %v1670, 24
      %v1690 = vpop.permute.xlu0 %1689
      %1691 = vrot.lane.b32.xlu0 %v1671, 24
      %v1692 = vpop.permute.xlu0 %1691
      %1693 = vrot.lane.b32.xlu0 %v1672, 24
      %v1694 = vpop.permute.xlu0 %1693
      %1695 = vrot.lane.b32.xlu0 %v1673, 24
      %v1696 = vpop.permute.xlu0 %1695
      %1697 = vrot.lane.b32.xlu0 %v1674, 24
      %v1698 = vpop.permute.xlu0 %1697
      %1699 = vrot.lane.b32.xlu0 %v1675, 24
      %v1700 = vpop.permute.xlu0 %1699
      %1701 = vrot.lane.b32.xlu0 %v1676, 24
      %v1702 = vpop.permute.xlu0 %1701
      %1703 = vrot.lane.b32.xlu0 %v1677, 24
      %v1704 = vpop.permute.xlu0 %1703
      %1705 = vrot.lane.b32.xlu0 %v1678, 24
      %v1706 = vpop.permute.xlu0 %1705
      %1707 = vrot.lane.b32.xlu0 %v1679, 24
      %v1708 = vpop.permute.xlu0 %1707
      %1709 = vrot.lane.b32.xlu0 %v1680, 24
      %v1710 = vpop.permute.xlu0 %1709
      %vm1726 = vcmask 228544
      %1727 = vst.msk [vmem:[#allocation2] sm:$0xff] %vm1726, %v1682
      %1728 = vst.msk [vmem:[#allocation2 + $0x8] sm:$0xff] %vm1726, %v1684
      %1729 = vst.msk [vmem:[#allocation2 + $0x10] sm:$0xff] %vm1726, %v1686
      %1730 = vst.msk [vmem:[#allocation2 + $0x18] sm:$0xff] %vm1726, %v1688
      %1731 = vst.msk [vmem:[#allocation2 + $0x20] sm:$0xff] %vm1726, %v1690
      %1732 = vst.msk [vmem:[#allocation2 + $0x28] sm:$0xff] %vm1726, %v1692
      %1733 = vst.msk [vmem:[#allocation2 + $0x30] sm:$0xff] %vm1726, %v1694
      %1734 = vst.msk [vmem:[#allocation2 + $0x38] sm:$0xff] %vm1726, %v1696
      %1735 = vst.msk [vmem:[#allocation2 + $0x40] sm:$0xff] %vm1726, %v1698
      %1736 = vst.msk [vmem:[#allocation2 + $0x48] sm:$0xff] %vm1726, %v1700
      %1737 = vst.msk [vmem:[#allocation2 + $0x50] sm:$0xff] %vm1726, %v1702
      %1738 = vst.msk [vmem:[#allocation2 + $0x58] sm:$0xff] %vm1726, %v1704
      %1739 = vst.msk [vmem:[#allocation2 + $0x60] sm:$0xff] %vm1726, %v1706
      %1740 = vst.msk [vmem:[#allocation2 + $0x68] sm:$0xff] %vm1726, %v1708
      %1741 = vst.msk [vmem:[#allocation2 + $0x70] sm:$0xff] %vm1726, %v1710
      %v1742 = vld [vmem:[%s274 + $0x10] sm:$0xf]
      %v1743 = vld [vmem:[%s274 + $0x14] sm:$0xf]
      %v1744 = vld [vmem:[%s274 + $0x18] sm:$0xf]
      %v1745 = vld [vmem:[%s274 + $0x1c] sm:$0xf]
      %v1746 = vld [vmem:[%s274 + $0x20] sm:$0xf]
      %v1747 = vld [vmem:[%s274 + $0x24] sm:$0xf]
      %v1748 = vld [vmem:[%s274 + $0x28] sm:$0xf]
      %v1749 = vld [vmem:[%s274 + $0x2c] sm:$0xf]
      %v1750 = vld [vmem:[%s274 + $0x30] sm:$0xf]
      %v1751 = vld [vmem:[%s274 + $0x34] sm:$0xf]
      %v1752 = vld [vmem:[%s274 + $0x38] sm:$0xf]
      %v1753 = vld [vmem:[%s274 + $0x3c] sm:$0xf]
      %v1754 = vld [vmem:[%s274 + $0x40] sm:$0xf]
      %v1755 = vld [vmem:[%s274 + $0x44] sm:$0xf]
      %v1756 = vld [vmem:[%s274 + $0x48] sm:$0xf]
      %v1757 = vld [vmem:[%s274 + $0x4c] sm:$0xf]
      %v1758 = vld [vmem:[%s274 + $0x50] sm:$0xf]
      %v1759 = vld [vmem:[%s274 + $0x54] sm:$0xf]
      %v1760 = vld [vmem:[%s274 + $0x58] sm:$0xf]
      %v1761 = vld [vmem:[%s274 + $0x5c] sm:$0xf]
      %v1762 = vld [vmem:[%s274 + $0x60] sm:$0xf]
      %v1763 = vld [vmem:[%s274 + $0x64] sm:$0xf]
      %v1764 = vld [vmem:[%s274 + $0x68] sm:$0xf]
      %v1765 = vld [vmem:[%s274 + $0x6c] sm:$0xf]
      %v1766 = vld [vmem:[%s274 + $0x70] sm:$0xf]
      %v1767 = vld [vmem:[%s274 + $0x74] sm:$0xf]
      %v1768 = vld [vmem:[%s274 + $0x78] sm:$0xf]
      %v1769 = vld [vmem:[%s274 + $0x7c] sm:$0xf]
      %v1770 = vld [vmem:[%s274 + $0x80] sm:$0xf]
      %v1771 = vld [vmem:[%s274 + $0x84] sm:$0xf]
      %v1772 = vld [vmem:[%s274 + $0x88] sm:$0x1]
      %v1804 = vunpack.c.l.b16 %v1742
      %v1805 = vunpack.c.l.b16 %v1743
      %v1806 = vunpack.c.l.b16 %v1744
      %v1807 = vunpack.c.l.b16 %v1745
      %v1808 = vunpack.c.l.b16 %v1746
      %v1809 = vunpack.c.l.b16 %v1747
      %v1810 = vunpack.c.l.b16 %v1748
      %v1811 = vunpack.c.l.b16 %v1749
      %v1812 = vunpack.c.l.b16 %v1750
      %v1813 = vunpack.c.l.b16 %v1751
      %v1814 = vunpack.c.l.b16 %v1752
      %v1815 = vunpack.c.l.b16 %v1753
      %v1816 = vunpack.c.l.b16 %v1754
      %v1817 = vunpack.c.l.b16 %v1755
      %v1818 = vunpack.c.l.b16 %v1756
      %v1819 = vunpack.c.l.b16 %v1757
      %v1820 = vunpack.c.l.b16 %v1758
      %v1821 = vunpack.c.l.b16 %v1759
      %v1822 = vunpack.c.l.b16 %v1760
      %v1823 = vunpack.c.l.b16 %v1761
      %v1824 = vunpack.c.l.b16 %v1762
      %v1825 = vunpack.c.l.b16 %v1763
      %v1826 = vunpack.c.l.b16 %v1764
      %v1827 = vunpack.c.l.b16 %v1765
      %v1828 = vunpack.c.l.b16 %v1766
      %v1829 = vunpack.c.l.b16 %v1767
      %v1830 = vunpack.c.l.b16 %v1768
      %v1831 = vunpack.c.l.b16 %v1769
      %v1832 = vunpack.c.l.b16 %v1770
      %v1833 = vunpack.c.l.b16 %v1771
      %v1834 = vunpack.c.l.b16 %v1772
      %v1835 = vpack.c.b16 %v1805, %v1804
      %v1836 = vpack.c.b16 %v1807, %v1806
      %v1837 = vpack.c.b16 %v1809, %v1808
      %v1838 = vpack.c.b16 %v1811, %v1810
      %v1839 = vpack.c.b16 %v1813, %v1812
      %v1840 = vpack.c.b16 %v1815, %v1814
      %v1841 = vpack.c.b16 %v1817, %v1816
      %v1842 = vpack.c.b16 %v1819, %v1818
      %v1843 = vpack.c.b16 %v1821, %v1820
      %v1844 = vpack.c.b16 %v1823, %v1822
      %v1845 = vpack.c.b16 %v1825, %v1824
      %v1846 = vpack.c.b16 %v1827, %v1826
      %v1847 = vpack.c.b16 %v1829, %v1828
      %v1848 = vpack.c.b16 %v1831, %v1830
      %v1849 = vpack.c.b16 %v1833, %v1832
      %v1850 = vpack.c.b16 %v1834, %v1834
      %v1852 = vshrl.u32 %v1835, 16
      %v1854 = vshll.u32 %v1835, 16
      %v1856 = vrot.slane %v1854, 1
      %v1857 = vor.u32 %v1852, %v1856
      %v1859 = vshll.u32 %v1836, 16
      %v1861 = vrot.slane %v1859, 1
      %v1862 = vsel %vm527, %v1857, %v1861
      %v1863 = vshrl.u32 %v1836, 16
      %v1865 = vor.u32 %v1863, %v1861
      %v1867 = vshll.u32 %v1837, 16
      %v1869 = vrot.slane %v1867, 1
      %v1870 = vsel %vm527, %v1865, %v1869
      %v1871 = vshrl.u32 %v1837, 16
      %v1873 = vor.u32 %v1871, %v1869
      %v1875 = vshll.u32 %v1838, 16
      %v1877 = vrot.slane %v1875, 1
      %v1878 = vsel %vm527, %v1873, %v1877
      %v1879 = vshrl.u32 %v1838, 16
      %v1881 = vor.u32 %v1879, %v1877
      %v1883 = vshll.u32 %v1839, 16
      %v1885 = vrot.slane %v1883, 1
      %v1886 = vsel %vm527, %v1881, %v1885
      %v1887 = vshrl.u32 %v1839, 16
      %v1889 = vor.u32 %v1887, %v1885
      %v1891 = vshll.u32 %v1840, 16
      %v1893 = vrot.slane %v1891, 1
      %v1894 = vsel %vm527, %v1889, %v1893
      %v1895 = vshrl.u32 %v1840, 16
      %v1897 = vor.u32 %v1895, %v1893
      %v1899 = vshll.u32 %v1841, 16
      %v1901 = vrot.slane %v1899, 1
      %v1902 = vsel %vm527, %v1897, %v1901
      %v1903 = vshrl.u32 %v1841, 16
      %v1905 = vor.u32 %v1903, %v1901
      %v1907 = vshll.u32 %v1842, 16
      %v1909 = vrot.slane %v1907, 1
      %v1910 = vsel %vm527, %v1905, %v1909
      %v1911 = vshrl.u32 %v1842, 16
      %v1913 = vor.u32 %v1911, %v1909
      %v1915 = vshll.u32 %v1843, 16
      %v1917 = vrot.slane %v1915, 1
      %v1918 = vsel %vm527, %v1913, %v1917
      %v1919 = vshrl.u32 %v1843, 16
      %v1921 = vor.u32 %v1919, %v1917
      %v1923 = vshll.u32 %v1844, 16
      %v1925 = vrot.slane %v1923, 1
      %v1926 = vsel %vm527, %v1921, %v1925
      %v1927 = vshrl.u32 %v1844, 16
      %v1929 = vor.u32 %v1927, %v1925
      %v1931 = vshll.u32 %v1845, 16
      %v1933 = vrot.slane %v1931, 1
      %v1934 = vsel %vm527, %v1929, %v1933
      %v1935 = vshrl.u32 %v1845, 16
      %v1937 = vor.u32 %v1935, %v1933
      %v1939 = vshll.u32 %v1846, 16
      %v1941 = vrot.slane %v1939, 1
      %v1942 = vsel %vm527, %v1937, %v1941
      %v1943 = vshrl.u32 %v1846, 16
      %v1945 = vor.u32 %v1943, %v1941
      %v1947 = vshll.u32 %v1847, 16
      %v1949 = vrot.slane %v1947, 1
      %v1950 = vsel %vm527, %v1945, %v1949
      %v1951 = vshrl.u32 %v1847, 16
      %v1953 = vor.u32 %v1951, %v1949
      %v1955 = vshll.u32 %v1848, 16
      %v1957 = vrot.slane %v1955, 1
      %v1958 = vsel %vm527, %v1953, %v1957
      %v1959 = vshrl.u32 %v1848, 16
      %v1961 = vor.u32 %v1959, %v1957
      %v1963 = vshll.u32 %v1849, 16
      %v1965 = vrot.slane %v1963, 1
      %v1966 = vsel %vm527, %v1961, %v1965
      %v1967 = vshrl.u32 %v1849, 16
      %v1969 = vor.u32 %v1967, %v1965
      %v1971 = vshll.u32 %v1850, 16
      %v1973 = vrot.slane %v1971, 1
      %v1974 = vsel %vm527, %v1969, %v1973
      %1975 = vrot.lane.b32.xlu0 %v1862, 28
      %v1976 = vpop.permute.xlu0 %1975
      %1977 = vrot.lane.b32.xlu0 %v1870, 28
      %v1978 = vpop.permute.xlu0 %1977
      %1979 = vrot.lane.b32.xlu0 %v1878, 28
      %v1980 = vpop.permute.xlu0 %1979
      %1981 = vrot.lane.b32.xlu0 %v1886, 28
      %v1982 = vpop.permute.xlu0 %1981
      %1983 = vrot.lane.b32.xlu0 %v1894, 28
      %v1984 = vpop.permute.xlu0 %1983
      %1985 = vrot.lane.b32.xlu0 %v1902, 28
      %v1986 = vpop.permute.xlu0 %1985
      %1987 = vrot.lane.b32.xlu0 %v1910, 28
      %v1988 = vpop.permute.xlu0 %1987
      %1989 = vrot.lane.b32.xlu0 %v1918, 28
      %v1990 = vpop.permute.xlu0 %1989
      %1991 = vrot.lane.b32.xlu0 %v1926, 28
      %v1992 = vpop.permute.xlu0 %1991
      %1993 = vrot.lane.b32.xlu0 %v1934, 28
      %v1994 = vpop.permute.xlu0 %1993
      %1995 = vrot.lane.b32.xlu0 %v1942, 28
      %v1996 = vpop.permute.xlu0 %1995
      %1997 = vrot.lane.b32.xlu0 %v1950, 28
      %v1998 = vpop.permute.xlu0 %1997
      %1999 = vrot.lane.b32.xlu0 %v1958, 28
      %v2000 = vpop.permute.xlu0 %1999
      %2001 = vrot.lane.b32.xlu0 %v1966, 28
      %v2002 = vpop.permute.xlu0 %2001
      %2003 = vrot.lane.b32.xlu0 %v1974, 28
      %v2004 = vpop.permute.xlu0 %2003
      %vm2020 = vcmask 261344
      %2021 = vst.msk [vmem:[#allocation2] sm:$0xff] %vm2020, %v1976
      %2022 = vst.msk [vmem:[#allocation2 + $0x8] sm:$0xff] %vm2020, %v1978
      %2023 = vst.msk [vmem:[#allocation2 + $0x10] sm:$0xff] %vm2020, %v1980
      %2024 = vst.msk [vmem:[#allocation2 + $0x18] sm:$0xff] %vm2020, %v1982
      %2025 = vst.msk [vmem:[#allocation2 + $0x20] sm:$0xff] %vm2020, %v1984
      %2026 = vst.msk [vmem:[#allocation2 + $0x28] sm:$0xff] %vm2020, %v1986
      %2027 = vst.msk [vmem:[#allocation2 + $0x30] sm:$0xff] %vm2020, %v1988
      %2028 = vst.msk [vmem:[#allocation2 + $0x38] sm:$0xff] %vm2020, %v1990
      %2029 = vst.msk [vmem:[#allocation2 + $0x40] sm:$0xff] %vm2020, %v1992
      %2030 = vst.msk [vmem:[#allocation2 + $0x48] sm:$0xff] %vm2020, %v1994
      %2031 = vst.msk [vmem:[#allocation2 + $0x50] sm:$0xff] %vm2020, %v1996
      %2032 = vst.msk [vmem:[#allocation2 + $0x58] sm:$0xff] %vm2020, %v1998
      %2033 = vst.msk [vmem:[#allocation2 + $0x60] sm:$0xff] %vm2020, %v2000
      %2034 = vst.msk [vmem:[#allocation2 + $0x68] sm:$0xff] %vm2020, %v2002
      %2035 = vst.msk [vmem:[#allocation2 + $0x70] sm:$0xff] %vm2020, %v2004
      %v2036 = vld [vmem:[%s274 + $0x10] sm:$0xe]
      %v2037 = vld [vmem:[%s274 + $0x14] sm:$0xf]
      %v2038 = vld [vmem:[%s274 + $0x18] sm:$0xf]
      %v2039 = vld [vmem:[%s274 + $0x1c] sm:$0xf]
      %v2040 = vld [vmem:[%s274 + $0x20] sm:$0xf]
      %v2041 = vld [vmem:[%s274 + $0x24] sm:$0xf]
      %v2042 = vld [vmem:[%s274 + $0x28] sm:$0xf]
      %v2043 = vld [vmem:[%s274 + $0x2c] sm:$0xf]
      %v2044 = vld [vmem:[%s274 + $0x30] sm:$0xf]
      %v2045 = vld [vmem:[%s274 + $0x34] sm:$0xf]
      %v2046 = vld [vmem:[%s274 + $0x38] sm:$0xf]
      %v2047 = vld [vmem:[%s274 + $0x3c] sm:$0xf]
      %v2048 = vld [vmem:[%s274 + $0x40] sm:$0xf]
      %v2049 = vld [vmem:[%s274 + $0x44] sm:$0xf]
      %v2050 = vld [vmem:[%s274 + $0x48] sm:$0xf]
      %v2051 = vld [vmem:[%s274 + $0x4c] sm:$0xf]
      %v2052 = vld [vmem:[%s274 + $0x50] sm:$0xf]
      %v2053 = vld [vmem:[%s274 + $0x54] sm:$0xf]
      %v2054 = vld [vmem:[%s274 + $0x58] sm:$0xf]
      %v2055 = vld [vmem:[%s274 + $0x5c] sm:$0xf]
      %v2056 = vld [vmem:[%s274 + $0x60] sm:$0xf]
      %v2057 = vld [vmem:[%s274 + $0x64] sm:$0xf]
      %v2058 = vld [vmem:[%s274 + $0x68] sm:$0xf]
      %v2059 = vld [vmem:[%s274 + $0x6c] sm:$0xf]
      %v2060 = vld [vmem:[%s274 + $0x70] sm:$0xf]
      %v2061 = vld [vmem:[%s274 + $0x74] sm:$0xf]
      %v2062 = vld [vmem:[%s274 + $0x78] sm:$0xf]
      %v2063 = vld [vmem:[%s274 + $0x7c] sm:$0xf]
      %v2064 = vld [vmem:[%s274 + $0x80] sm:$0xf]
      %v2065 = vld [vmem:[%s274 + $0x84] sm:$0xf]
      %v2066 = vld [vmem:[%s274 + $0x88] sm:$0x1]
      %v2098 = vunpack.c.l.b16 %v2036
      %v2099 = vunpack.c.l.b16 %v2037
      %v2100 = vunpack.c.l.b16 %v2038
      %v2101 = vunpack.c.l.b16 %v2039
      %v2102 = vunpack.c.l.b16 %v2040
      %v2103 = vunpack.c.l.b16 %v2041
      %v2104 = vunpack.c.l.b16 %v2042
      %v2105 = vunpack.c.l.b16 %v2043
      %v2106 = vunpack.c.l.b16 %v2044
      %v2107 = vunpack.c.l.b16 %v2045
      %v2108 = vunpack.c.l.b16 %v2046
      %v2109 = vunpack.c.l.b16 %v2047
      %v2110 = vunpack.c.l.b16 %v2048
      %v2111 = vunpack.c.l.b16 %v2049
      %v2112 = vunpack.c.l.b16 %v2050
      %v2113 = vunpack.c.l.b16 %v2051
      %v2114 = vunpack.c.l.b16 %v2052
      %v2115 = vunpack.c.l.b16 %v2053
      %v2116 = vunpack.c.l.b16 %v2054
      %v2117 = vunpack.c.l.b16 %v2055
      %v2118 = vunpack.c.l.b16 %v2056
      %v2119 = vunpack.c.l.b16 %v2057
      %v2120 = vunpack.c.l.b16 %v2058
      %v2121 = vunpack.c.l.b16 %v2059
      %v2122 = vunpack.c.l.b16 %v2060
      %v2123 = vunpack.c.l.b16 %v2061
      %v2124 = vunpack.c.l.b16 %v2062
      %v2125 = vunpack.c.l.b16 %v2063
      %v2126 = vunpack.c.l.b16 %v2064
      %v2127 = vunpack.c.l.b16 %v2065
      %v2128 = vunpack.c.l.b16 %v2066
      %v2129 = vpack.c.b16 %v2099, %v2098
      %v2130 = vpack.c.b16 %v2101, %v2100
      %v2131 = vpack.c.b16 %v2103, %v2102
      %v2132 = vpack.c.b16 %v2105, %v2104
      %v2133 = vpack.c.b16 %v2107, %v2106
      %v2134 = vpack.c.b16 %v2109, %v2108
      %v2135 = vpack.c.b16 %v2111, %v2110
      %v2136 = vpack.c.b16 %v2113, %v2112
      %v2137 = vpack.c.b16 %v2115, %v2114
      %v2138 = vpack.c.b16 %v2117, %v2116
      %v2139 = vpack.c.b16 %v2119, %v2118
      %v2140 = vpack.c.b16 %v2121, %v2120
      %v2141 = vpack.c.b16 %v2123, %v2122
      %v2142 = vpack.c.b16 %v2125, %v2124
      %v2143 = vpack.c.b16 %v2127, %v2126
      %v2144 = vpack.c.b16 %v2128, %v2128
      %v2145 = vrot.slane %v2129, 1
      %v2146 = vrot.slane %v2130, 1
      %v2147 = vsel %vm822, %v2145, %v2146
      %v2148 = vrot.slane %v2131, 1
      %v2149 = vsel %vm822, %v2146, %v2148
      %v2150 = vrot.slane %v2132, 1
      %v2151 = vsel %vm822, %v2148, %v2150
      %v2152 = vrot.slane %v2133, 1
      %v2153 = vsel %vm822, %v2150, %v2152
      %v2154 = vrot.slane %v2134, 1
      %v2155 = vsel %vm822, %v2152, %v2154
      %v2156 = vrot.slane %v2135, 1
      %v2157 = vsel %vm822, %v2154, %v2156
      %v2158 = vrot.slane %v2136, 1
      %v2159 = vsel %vm822, %v2156, %v2158
      %v2160 = vrot.slane %v2137, 1
      %v2161 = vsel %vm822, %v2158, %v2160
      %v2162 = vrot.slane %v2138, 1
      %v2163 = vsel %vm822, %v2160, %v2162
      %v2164 = vrot.slane %v2139, 1
      %v2165 = vsel %vm822, %v2162, %v2164
      %v2166 = vrot.slane %v2140, 1
      %v2167 = vsel %vm822, %v2164, %v2166
      %v2168 = vrot.slane %v2141, 1
      %v2169 = vsel %vm822, %v2166, %v2168
      %v2170 = vrot.slane %v2142, 1
      %v2171 = vsel %vm822, %v2168, %v2170
      %v2172 = vrot.slane %v2143, 1
      %v2173 = vsel %vm822, %v2170, %v2172
      %v2174 = vrot.slane %v2144, 1
      %v2175 = vsel %vm822, %v2172, %v2174
      %2176 = vrot.lane.b32.xlu0 %v2147, 32
      %v2177 = vpop.permute.xlu0 %2176
      %2178 = vrot.lane.b32.xlu0 %v2149, 32
      %v2179 = vpop.permute.xlu0 %2178
      %2180 = vrot.lane.b32.xlu0 %v2151, 32
      %v2181 = vpop.permute.xlu0 %2180
      %2182 = vrot.lane.b32.xlu0 %v2153, 32
      %v2183 = vpop.permute.xlu0 %2182
      %2184 = vrot.lane.b32.xlu0 %v2155, 32
      %v2185 = vpop.permute.xlu0 %2184
      %2186 = vrot.lane.b32.xlu0 %v2157, 32
      %v2187 = vpop.permute.xlu0 %2186
      %2188 = vrot.lane.b32.xlu0 %v2159, 32
      %v2189 = vpop.permute.xlu0 %2188
      %2190 = vrot.lane.b32.xlu0 %v2161, 32
      %v2191 = vpop.permute.xlu0 %2190
      %2192 = vrot.lane.b32.xlu0 %v2163, 32
      %v2193 = vpop.permute.xlu0 %2192
      %2194 = vrot.lane.b32.xlu0 %v2165, 32
      %v2195 = vpop.permute.xlu0 %2194
      %2196 = vrot.lane.b32.xlu0 %v2167, 32
      %v2197 = vpop.permute.xlu0 %2196
      %2198 = vrot.lane.b32.xlu0 %v2169, 32
      %v2199 = vpop.permute.xlu0 %2198
      %2200 = vrot.lane.b32.xlu0 %v2171, 32
      %v2201 = vpop.permute.xlu0 %2200
      %2202 = vrot.lane.b32.xlu0 %v2173, 32
      %v2203 = vpop.permute.xlu0 %2202
      %2204 = vrot.lane.b32.xlu0 %v2175, 32
      %v2205 = vpop.permute.xlu0 %2204
      %vm2221 = vcmask 294144
      %2222 = vst.msk [vmem:[#allocation2] sm:$0xff] %vm2221, %v2177
      %2223 = vst.msk [vmem:[#allocation2 + $0x8] sm:$0xff] %vm2221, %v2179
      %2224 = vst.msk [vmem:[#allocation2 + $0x10] sm:$0xff] %vm2221, %v2181
      %2225 = vst.msk [vmem:[#allocation2 + $0x18] sm:$0xff] %vm2221, %v2183
      %2226 = vst.msk [vmem:[#allocation2 + $0x20] sm:$0xff] %vm2221, %v2185
      %2227 = vst.msk [vmem:[#allocation2 + $0x28] sm:$0xff] %vm2221, %v2187
      %2228 = vst.msk [vmem:[#allocation2 + $0x30] sm:$0xff] %vm2221, %v2189
      %2229 = vst.msk [vmem:[#allocation2 + $0x38] sm:$0xff] %vm2221, %v2191
      %2230 = vst.msk [vmem:[#allocation2 + $0x40] sm:$0xff] %vm2221, %v2193
      %2231 = vst.msk [vmem:[#allocation2 + $0x48] sm:$0xff] %vm2221, %v2195
      %2232 = vst.msk [vmem:[#allocation2 + $0x50] sm:$0xff] %vm2221, %v2197
      %2233 = vst.msk [vmem:[#allocation2 + $0x58] sm:$0xff] %vm2221, %v2199
      %2234 = vst.msk [vmem:[#allocation2 + $0x60] sm:$0xff] %vm2221, %v2201
      %2235 = vst.msk [vmem:[#allocation2 + $0x68] sm:$0xff] %vm2221, %v2203
      %2236 = vst.msk [vmem:[#allocation2 + $0x70] sm:$0xff] %vm2221, %v2205
      %v2237 = vld [vmem:[#allocation2] sm:$0xff]
      %v2238 = vld [vmem:[#allocation2 + $0x8] sm:$0xff]
      %v2239 = vld [vmem:[#allocation2 + $0x10] sm:$0xff]
      %v2240 = vld [vmem:[#allocation2 + $0x18] sm:$0xff]
      %v2241 = vld [vmem:[#allocation2 + $0x20] sm:$0xff]
      %v2242 = vld [vmem:[#allocation2 + $0x28] sm:$0xff]
      %v2243 = vld [vmem:[#allocation2 + $0x30] sm:$0xff]
      %v2244 = vld [vmem:[#allocation2 + $0x38] sm:$0xff]
      %v2245 = vld [vmem:[#allocation2 + $0x40] sm:$0xff]
      %v2246 = vld [vmem:[#allocation2 + $0x48] sm:$0xff]
      %v2247 = vld [vmem:[#allocation2 + $0x50] sm:$0xff]
      %v2248 = vld [vmem:[#allocation2 + $0x58] sm:$0xff]
      %v2249 = vld [vmem:[#allocation2 + $0x60] sm:$0xff]
      %v2250 = vld [vmem:[#allocation2 + $0x68] sm:$0xff]
      %v2251 = vld [vmem:[#allocation2 + $0x70] sm:$0xff]
      %v2252 = vld [vmem:[%s1] sm:$0xf]
      %v2253 = vld [vmem:[%s1 + $0x4] sm:$0xf]
      %v2254 = vld [vmem:[%s1 + $0x8] sm:$0xf]
      %v2255 = vld [vmem:[%s1 + $0xc] sm:$0xf]
      %v2256 = vld [vmem:[%s1 + $0x10] sm:$0x3]
      %v2257 = vld [vmem:[%s2] sm:$0x1]
      %v2259 = vlaneseq
      %v2260 = vshrl.u32 %v2259, 7
      %v2261 = vsub.s32 0, %v2260
      %v2262 = vrot.slane %v2257, %v2261
      %v2269 = vunpack.c.l.b16 %v2252
      %v2270 = vunpack.c.l.b16 %v2253
      %v2271 = vunpack.c.l.b16 %v2254
      %v2272 = vunpack.c.l.b16 %v2255
      %v2273 = vunpack.c.l.b16 %v2256
      %v2274 = vpack.c.b16 %v2270, %v2269
      %v2275 = vpack.c.b16 %v2272, %v2271
      %v2276 = vpack.c.b16 %v2273, %v2273
      %vm2279 = vcmask 293888
      %v2281 = vsel %vm2279, %v2237, 0
      %v2284 = vsel %vm2279, %v2238, 0
      %v2287 = vsel %vm2279, %v2239, 0
      %v2290 = vsel %vm2279, %v2240, 0
      %v2293 = vsel %vm2279, %v2241, 0
      %v2296 = vsel %vm2279, %v2242, 0
      %v2299 = vsel %vm2279, %v2243, 0
      %v2302 = vsel %vm2279, %v2244, 0
      %v2305 = vsel %vm2279, %v2245, 0
      %v2308 = vsel %vm2279, %v2246, 0
      %v2311 = vsel %vm2279, %v2247, 0
      %v2314 = vsel %vm2279, %v2248, 0
      %v2317 = vsel %vm2279, %v2249, 0
      %v2320 = vsel %vm2279, %v2250, 0
      %v2323 = vsel %vm2279, %v2251, 0
      %vm2325 = vcmask 1041408
      %v2327 = vsel %vm2325, %v2276, 0
      %2329 = vmatprep.subr.bf16.mxu0 0
      %2330 = vmatpush1.bf16.msra.mxu0 %v2274
      %2331 = vmatprep.subr.bf16.mxu0 0
      %2332 = vmatpush1.bf16.msra.mxu0 %v2275
      %2333 = vmatprep.subr.bf16.mxu0 0
      %2334 = vmatpush1.bf16.msra.mxu0 %v2327
      %2335 = vmatprep.subr.bf16.mxu0 0
      %2336 = vmatpush1.bf16.msra.mxu0 0
      %2337 = vmatprep.subr.bf16.mxu0 0
      %2338 = vmatpush1.bf16.msra.mxu0 0
      %2339 = vmatprep.subr.bf16.mxu0 0
      %2340 = vmatpush1.bf16.msra.mxu0 0
      %2341 = vmatprep.subr.bf16.mxu0 0
      %2342 = vmatpush1.bf16.msra.mxu0 0
      %2343 = vmatprep.subr.bf16.mxu0 0
      %2344 = vmatpush1.bf16.msra.mxu0 0
      %2345 = vmatprep.subr.bf16.mxu0 0
      %2346 = vmatpush1.bf16.msra.mxu0 0
      %2347 = vmatprep.subr.bf16.mxu0 0
      %2348 = vmatpush1.bf16.msra.mxu0 0
      %2349 = vmatprep.subr.bf16.mxu0 0
      %2350 = vmatpush1.bf16.msra.mxu0 0
      %2351 = vmatprep.subr.bf16.mxu0 0
      %2352 = vmatpush1.bf16.msra.mxu0 0
      %2353 = vmatprep.subr.bf16.mxu0 0
      %2354 = vmatpush1.bf16.msra.mxu0 0
      %2355 = vmatprep.subr.bf16.mxu0 0
      %2356 = vmatpush1.bf16.msra.mxu0 0
      %2357 = vmatprep.subr.bf16.mxu0 0
      %2358 = vmatpush1.bf16.msra.mxu0 0
      %2359 = vmatprep.subr.bf16.mxu0 0
      %2360 = vmatpush1.bf16.msra.mxu0 0
      %2361 = vmatprep.mubr.bf16.mxu0 0
      %2362 = vmatmul.mubr.bf16.gmra.mrb[0].mxu0 %v2281
      %v2363 = vpop.f32.mrb[0].mxu0
      %v2364 = vadd.f32 %v2262, %v2363
      %v2365 = vpop.f32.mrb[0].mxu0
      %v2366 = vpop.f32.mrb[0].mxu0
      %v2367 = vadd.f32 %v2262, %v2366
      %v2368 = vpop.f32.mrb[0].mxu0
      %2369 = vmatprep.mubr.bf16.mxu0 0
      %2370 = vmatmul.mubr.bf16.gmra.mrb[0].mxu0 %v2284
      %v2371 = vpop.f32.mrb[0].mxu0
      %v2372 = vadd.f32 %v2262, %v2371
      %v2373 = vpop.f32.mrb[0].mxu0
      %v2374 = vpop.f32.mrb[0].mxu0
      %v2375 = vadd.f32 %v2262, %v2374
      %v2376 = vpop.f32.mrb[0].mxu0
      %2377 = vmatprep.mubr.bf16.mxu0 0
      %2378 = vmatmul.mubr.bf16.gmra.mrb[0].mxu0 %v2287
      %v2379 = vpop.f32.mrb[0].mxu0
      %v2380 = vadd.f32 %v2262, %v2379
      %v2381 = vpop.f32.mrb[0].mxu0
      %v2382 = vpop.f32.mrb[0].mxu0
      %v2383 = vadd.f32 %v2262, %v2382
      %v2384 = vpop.f32.mrb[0].mxu0
      %2385 = vmatprep.mubr.bf16.mxu0 0
      %2386 = vmatmul.mubr.bf16.gmra.mrb[0].mxu0 %v2290
      %v2387 = vpop.f32.mrb[0].mxu0
      %v2388 = vadd.f32 %v2262, %v2387
      %v2389 = vpop.f32.mrb[0].mxu0
      %v2390 = vpop.f32.mrb[0].mxu0
      %v2391 = vadd.f32 %v2262, %v2390
      %v2392 = vpop.f32.mrb[0].mxu0
      %2393 = vmatprep.mubr.bf16.mxu0 0
      %2394 = vmatmul.mubr.bf16.gmra.mrb[0].mxu0 %v2293
      %v2395 = vpop.f32.mrb[0].mxu0
      %v2396 = vadd.f32 %v2262, %v2395
      %v2397 = vpop.f32.mrb[0].mxu0
      %v2398 = vpop.f32.mrb[0].mxu0
      %v2399 = vadd.f32 %v2262, %v2398
      %v2400 = vpop.f32.mrb[0].mxu0
      %2401 = vmatprep.mubr.bf16.mxu0 0
      %2402 = vmatmul.mubr.bf16.gmra.mrb[0].mxu0 %v2296
      %v2403 = vpop.f32.mrb[0].mxu0
      %v2404 = vadd.f32 %v2262, %v2403
      %v2405 = vpop.f32.mrb[0].mxu0
      %v2406 = vpop.f32.mrb[0].mxu0
      %v2407 = vadd.f32 %v2262, %v2406
      %v2408 = vpop.f32.mrb[0].mxu0
      %2409 = vmatprep.mubr.bf16.mxu0 0
      %2410 = vmatmul.mubr.bf16.gmra.mrb[0].mxu0 %v2299
      %v2411 = vpop.f32.mrb[0].mxu0
      %v2412 = vadd.f32 %v2262, %v2411
      %v2413 = vpop.f32.mrb[0].mxu0
      %v2414 = vpop.f32.mrb[0].mxu0
      %v2415 = vadd.f32 %v2262, %v2414
      %v2416 = vpop.f32.mrb[0].mxu0
      %2417 = vmatprep.mubr.bf16.mxu0 0
      %2418 = vmatmul.mubr.bf16.gmra.mrb[0].mxu0 %v2302
      %v2419 = vpop.f32.mrb[0].mxu0
      %v2420 = vadd.f32 %v2262, %v2419
      %v2421 = vpop.f32.mrb[0].mxu0
      %v2422 = vpop.f32.mrb[0].mxu0
      %v2423 = vadd.f32 %v2262, %v2422
      %v2424 = vpop.f32.mrb[0].mxu0
      %2425 = vmatprep.mubr.bf16.mxu0 0
      %2426 = vmatmul.mubr.bf16.gmra.mrb[0].mxu0 %v2305
      %v2427 = vpop.f32.mrb[0].mxu0
      %v2428 = vadd.f32 %v2262, %v2427
      %v2429 = vpop.f32.mrb[0].mxu0
      %v2430 = vpop.f32.mrb[0].mxu0
      %v2431 = vadd.f32 %v2262, %v2430
      %v2432 = vpop.f32.mrb[0].mxu0
      %2433 = vmatprep.mubr.bf16.mxu0 0
      %2434 = vmatmul.mubr.bf16.gmra.mrb[0].mxu0 %v2308
      %v2435 = vpop.f32.mrb[0].mxu0
      %v2436 = vadd.f32 %v2262, %v2435
      %v2437 = vpop.f32.mrb[0].mxu0
      %v2438 = vpop.f32.mrb[0].mxu0
      %v2439 = vadd.f32 %v2262, %v2438
      %v2440 = vpop.f32.mrb[0].mxu0
      %2441 = vmatprep.mubr.bf16.mxu0 0
      %2442 = vmatmul.mubr.bf16.gmra.mrb[0].mxu0 %v2311
      %v2443 = vpop.f32.mrb[0].mxu0
      %v2444 = vadd.f32 %v2262, %v2443
      %v2445 = vpop.f32.mrb[0].mxu0
      %v2446 = vpop.f32.mrb[0].mxu0
      %v2447 = vadd.f32 %v2262, %v2446
      %v2448 = vpop.f32.mrb[0].mxu0
      %2449 = vmatprep.mubr.bf16.mxu0 0
      %2450 = vmatmul.mubr.bf16.gmra.mrb[0].mxu0 %v2314
      %v2451 = vpop.f32.mrb[0].mxu0
      %v2452 = vadd.f32 %v2262, %v2451
      %v2453 = vpop.f32.mrb[0].mxu0
      %v2454 = vpop.f32.mrb[0].mxu0
      %v2455 = vadd.f32 %v2262, %v2454
      %v2456 = vpop.f32.mrb[0].mxu0
      %2457 = vmatprep.mubr.bf16.mxu0 0
      %2458 = vmatmul.mubr.bf16.gmra.mrb[0].mxu0 %v2317
      %v2459 = vpop.f32.mrb[0].mxu0
      %v2460 = vadd.f32 %v2262, %v2459
      %v2461 = vpop.f32.mrb[0].mxu0
      %v2462 = vpop.f32.mrb[0].mxu0
      %v2463 = vadd.f32 %v2262, %v2462
      %v2464 = vpop.f32.mrb[0].mxu0
      %2465 = vmatprep.mubr.bf16.mxu0 0
      %2466 = vmatmul.mubr.bf16.gmra.mrb[0].mxu0 %v2320
      %v2467 = vpop.f32.mrb[0].mxu0
      %v2468 = vadd.f32 %v2262, %v2467
      %v2469 = vpop.f32.mrb[0].mxu0
      %v2470 = vpop.f32.mrb[0].mxu0
      %v2471 = vadd.f32 %v2262, %v2470
      %v2472 = vpop.f32.mrb[0].mxu0
      %2473 = vmatprep.mubr.bf16.mxu0 0
      %2474 = vmatmul.mubr.bf16.gmra.mrb[0].mxu0 %v2323
      %v2475 = vpop.f32.mrb[0].mxu0
      %v2476 = vadd.f32 %v2262, %v2475
      %v2477 = vpop.f32.mrb[0].mxu0
      %v2478 = vpop.f32.mrb[0].mxu0
      %v2479 = vadd.f32 %v2262, %v2478
      %v2480 = vpop.f32.mrb[0].mxu0
      %2481 = vdwg.mxu0
      %v2482 = vmul.f32 %v2364, 0.5
      %v2483 = vmul.f32 %v2367, 0.5
      %v2484 = vmul.f32 %v2372, 0.5
      %v2485 = vmul.f32 %v2375, 0.5
      %v2486 = vmul.f32 %v2380, 0.5
      %v2487 = vmul.f32 %v2383, 0.5
      %v2488 = vmul.f32 %v2388, 0.5
      %v2489 = vmul.f32 %v2391, 0.5
      %v2490 = vmul.f32 %v2396, 0.5
      %v2491 = vmul.f32 %v2399, 0.5
      %v2492 = vmul.f32 %v2404, 0.5
      %v2493 = vmul.f32 %v2407, 0.5
      %v2494 = vmul.f32 %v2412, 0.5
      %v2495 = vmul.f32 %v2415, 0.5
      %v2496 = vmul.f32 %v2420, 0.5
      %v2497 = vmul.f32 %v2423, 0.5
      %v2498 = vmul.f32 %v2428, 0.5
      %v2499 = vmul.f32 %v2431, 0.5
      %v2500 = vmul.f32 %v2436, 0.5
      %v2501 = vmul.f32 %v2439, 0.5
      %v2502 = vmul.f32 %v2444, 0.5
      %v2503 = vmul.f32 %v2447, 0.5
      %v2504 = vmul.f32 %v2452, 0.5
      %v2505 = vmul.f32 %v2455, 0.5
      %v2506 = vmul.f32 %v2460, 0.5
      %v2507 = vmul.f32 %v2463, 0.5
      %v2508 = vmul.f32 %v2468, 0.5
      %v2509 = vmul.f32 %v2471, 0.5
      %v2510 = vmul.f32 %v2476, 0.5
      %v2511 = vmul.f32 %v2479, 0.5
      %v2512 = vmul.f32 %v2364, 0.70710677
      %v2513 = vmul.f32 %v2367, 0.70710677
      %v2514 = vmul.f32 %v2372, 0.70710677
      %v2515 = vmul.f32 %v2375, 0.70710677
      %v2516 = vmul.f32 %v2380, 0.70710677
      %v2517 = vmul.f32 %v2383, 0.70710677
      %v2518 = vmul.f32 %v2388, 0.70710677
      %v2519 = vmul.f32 %v2391, 0.70710677
      %v2520 = vmul.f32 %v2396, 0.70710677
      %v2521 = vmul.f32 %v2399, 0.70710677
      %v2522 = vmul.f32 %v2404, 0.70710677
      %v2523 = vmul.f32 %v2407, 0.70710677
      %v2524 = vmul.f32 %v2412, 0.70710677
      %v2525 = vmul.f32 %v2415, 0.70710677
      %v2526 = vmul.f32 %v2420, 0.70710677
      %v2527 = vmul.f32 %v2423, 0.70710677
      %v2528 = vmul.f32 %v2428, 0.70710677
      %v2529 = vmul.f32 %v2431, 0.70710677
      %v2530 = vmul.f32 %v2436, 0.70710677
      %v2531 = vmul.f32 %v2439, 0.70710677
      %v2532 = vmul.f32 %v2444, 0.70710677
      %v2533 = vmul.f32 %v2447, 0.70710677
      %v2534 = vmul.f32 %v2452, 0.70710677
      %v2535 = vmul.f32 %v2455, 0.70710677
      %v2536 = vmul.f32 %v2460, 0.70710677
      %v2537 = vmul.f32 %v2463, 0.70710677
      %v2538 = vmul.f32 %v2468, 0.70710677
      %v2539 = vmul.f32 %v2471, 0.70710677
      %v2540 = vmul.f32 %v2476, 0.70710677
      %v2541 = vmul.f32 %v2479, 0.70710677
      %v2542 = verf.f32.pop %v2512
      %v2543 = verf.f32.pop %v2513
      %v2544 = verf.f32.pop %v2514
      %v2545 = verf.f32.pop %v2515
      %v2546 = verf.f32.pop %v2516
      %v2547 = verf.f32.pop %v2517
      %v2548 = verf.f32.pop %v2518
      %v2549 = verf.f32.pop %v2519
      %v2550 = verf.f32.pop %v2520
      %v2551 = verf.f32.pop %v2521
      %v2552 = verf.f32.pop %v2522
      %v2553 = verf.f32.pop %v2523
      %v2554 = verf.f32.pop %v2524
      %v2555 = verf.f32.pop %v2525
      %v2556 = verf.f32.pop %v2526
      %v2557 = verf.f32.pop %v2527
      %v2558 = verf.f32.pop %v2528
      %v2559 = verf.f32.pop %v2529
      %v2560 = verf.f32.pop %v2530
      %v2561 = verf.f32.pop %v2531
      %v2562 = verf.f32.pop %v2532
      %v2563 = verf.f32.pop %v2533
      %v2564 = verf.f32.pop %v2534
      %v2565 = verf.f32.pop %v2535
      %v2566 = verf.f32.pop %v2536
      %v2567 = verf.f32.pop %v2537
      %v2568 = verf.f32.pop %v2538
      %v2569 = verf.f32.pop %v2539
      %v2570 = verf.f32.pop %v2540
      %v2571 = verf.f32.pop %v2541
      %v2572 = vadd.f32 %v2542, 1.0
      %v2573 = vadd.f32 %v2543, 1.0
      %v2574 = vadd.f32 %v2544, 1.0
      %v2575 = vadd.f32 %v2545, 1.0
      %v2576 = vadd.f32 %v2546, 1.0
      %v2577 = vadd.f32 %v2547, 1.0
      %v2578 = vadd.f32 %v2548, 1.0
      %v2579 = vadd.f32 %v2549, 1.0
      %v2580 = vadd.f32 %v2550, 1.0
      %v2581 = vadd.f32 %v2551, 1.0
      %v2582 = vadd.f32 %v2552, 1.0
      %v2583 = vadd.f32 %v2553, 1.0
      %v2584 = vadd.f32 %v2554, 1.0
      %v2585 = vadd.f32 %v2555, 1.0
      %v2586 = vadd.f32 %v2556, 1.0
      %v2587 = vadd.f32 %v2557, 1.0
      %v2588 = vadd.f32 %v2558, 1.0
      %v2589 = vadd.f32 %v2559, 1.0
      %v2590 = vadd.f32 %v2560, 1.0
      %v2591 = vadd.f32 %v2561, 1.0
      %v2592 = vadd.f32 %v2562, 1.0
      %v2593 = vadd.f32 %v2563, 1.0
      %v2594 = vadd.f32 %v2564, 1.0
      %v2595 = vadd.f32 %v2565, 1.0
      %v2596 = vadd.f32 %v2566, 1.0
      %v2597 = vadd.f32 %v2567, 1.0
      %v2598 = vadd.f32 %v2568, 1.0
      %v2599 = vadd.f32 %v2569, 1.0
      %v2600 = vadd.f32 %v2570, 1.0
      %v2601 = vadd.f32 %v2571, 1.0
      %v2602 = vmul.f32 %v2482, %v2572
      %v2603 = vmul.f32 %v2483, %v2573
      %v2604 = vmul.f32 %v2484, %v2574
      %v2605 = vmul.f32 %v2485, %v2575
      %v2606 = vmul.f32 %v2486, %v2576
      %v2607 = vmul.f32 %v2487, %v2577
      %v2608 = vmul.f32 %v2488, %v2578
      %v2609 = vmul.f32 %v2489, %v2579
      %v2610 = vmul.f32 %v2490, %v2580
      %v2611 = vmul.f32 %v2491, %v2581
      %v2612 = vmul.f32 %v2492, %v2582
      %v2613 = vmul.f32 %v2493, %v2583
      %v2614 = vmul.f32 %v2494, %v2584
      %v2615 = vmul.f32 %v2495, %v2585
      %v2616 = vmul.f32 %v2496, %v2586
      %v2617 = vmul.f32 %v2497, %v2587
      %v2618 = vmul.f32 %v2498, %v2588
      %v2619 = vmul.f32 %v2499, %v2589
      %v2620 = vmul.f32 %v2500, %v2590
      %v2621 = vmul.f32 %v2501, %v2591
      %v2622 = vmul.f32 %v2502, %v2592
      %v2623 = vmul.f32 %v2503, %v2593
      %v2624 = vmul.f32 %v2504, %v2594
      %v2625 = vmul.f32 %v2505, %v2595
      %v2626 = vmul.f32 %v2506, %v2596
      %v2627 = vmul.f32 %v2507, %v2597
      %v2628 = vmul.f32 %v2508, %v2598
      %v2629 = vmul.f32 %v2509, %v2599
      %v2630 = vmul.f32 %v2510, %v2600
      %v2631 = vmul.f32 %v2511, %v2601
      %v2632 = vpack.c.bf16 %v2603, %v2602
      %v2633 = vpack.c.bf16 %v2605, %v2604
      %v2634 = vpack.c.bf16 %v2607, %v2606
      %v2635 = vpack.c.bf16 %v2609, %v2608
      %v2636 = vpack.c.bf16 %v2611, %v2610
      %v2637 = vpack.c.bf16 %v2613, %v2612
      %v2638 = vpack.c.bf16 %v2615, %v2614
      %v2639 = vpack.c.bf16 %v2617, %v2616
      %v2640 = vpack.c.bf16 %v2619, %v2618
      %v2641 = vpack.c.bf16 %v2621, %v2620
      %v2642 = vpack.c.bf16 %v2623, %v2622
      %v2643 = vpack.c.bf16 %v2625, %v2624
      %v2644 = vpack.c.bf16 %v2627, %v2626
      %v2645 = vpack.c.bf16 %v2629, %v2628
      %v2646 = vpack.c.bf16 %v2631, %v2630
      %vm2647 = vcmask 261120
      %2648 = vst.msk [vmem:[#allocation4] sm:$0xff] %vm2647, %v2632
      %2649 = vst.msk [vmem:[#allocation4 + $0x8] sm:$0xff] %vm2647, %v2633
      %2650 = vst.msk [vmem:[#allocation4 + $0x10] sm:$0xff] %vm2647, %v2634
      %2651 = vst.msk [vmem:[#allocation4 + $0x18] sm:$0xff] %vm2647, %v2635
      %2652 = vst.msk [vmem:[#allocation4 + $0x20] sm:$0xff] %vm2647, %v2636
      %2653 = vst.msk [vmem:[#allocation4 + $0x28] sm:$0xff] %vm2647, %v2637
      %2654 = vst.msk [vmem:[#allocation4 + $0x30] sm:$0xff] %vm2647, %v2638
      %2655 = vst.msk [vmem:[#allocation4 + $0x38] sm:$0xff] %vm2647, %v2639
      %2656 = vst.msk [vmem:[#allocation4 + $0x40] sm:$0xff] %vm2647, %v2640
      %2657 = vst.msk [vmem:[#allocation4 + $0x48] sm:$0xff] %vm2647, %v2641
      %2658 = vst.msk [vmem:[#allocation4 + $0x50] sm:$0xff] %vm2647, %v2642
      %2659 = vst.msk [vmem:[#allocation4 + $0x58] sm:$0xff] %vm2647, %v2643
      %2660 = vst.msk [vmem:[#allocation4 + $0x60] sm:$0xff] %vm2647, %v2644
      %2661 = vst.msk [vmem:[#allocation4 + $0x68] sm:$0xff] %vm2647, %v2645
      %2662 = vst.msk [vmem:[#allocation4 + $0x70] sm:$0xff] %vm2647, %v2646
      %v2663 = vld [vmem:[#allocation4] sm:$0xff]
      %v2664 = vld [vmem:[#allocation4 + $0x8] sm:$0xff]
      %v2665 = vld [vmem:[#allocation4 + $0x10] sm:$0xff]
      %v2666 = vld [vmem:[#allocation4 + $0x18] sm:$0xff]
      %v2667 = vld [vmem:[#allocation4 + $0x20] sm:$0xff]
      %v2668 = vld [vmem:[#allocation4 + $0x28] sm:$0xff]
      %v2669 = vld [vmem:[#allocation4 + $0x30] sm:$0xff]
      %v2670 = vld [vmem:[#allocation4 + $0x38] sm:$0xff]
      %v2671 = vld [vmem:[#allocation4 + $0x40] sm:$0xff]
      %v2672 = vld [vmem:[#allocation4 + $0x48] sm:$0xff]
      %v2673 = vld [vmem:[#allocation4 + $0x50] sm:$0xff]
      %v2674 = vld [vmem:[#allocation4 + $0x58] sm:$0xff]
      %v2675 = vld [vmem:[#allocation4 + $0x60] sm:$0xf]
      %v2689 = vunpack.c.l.b16 %v2663
      %v2690 = vunpack.c.h.b16 %v2663
      %v2691 = vunpack.c.l.b16 %v2664
      %v2692 = vunpack.c.h.b16 %v2664
      %v2693 = vunpack.c.l.b16 %v2665
      %v2694 = vunpack.c.h.b16 %v2665
      %v2695 = vunpack.c.l.b16 %v2666
      %v2696 = vunpack.c.h.b16 %v2666
      %v2697 = vunpack.c.l.b16 %v2667
      %v2698 = vunpack.c.h.b16 %v2667
      %v2699 = vunpack.c.l.b16 %v2668
      %v2700 = vunpack.c.h.b16 %v2668
      %v2701 = vunpack.c.l.b16 %v2669
      %v2702 = vunpack.c.h.b16 %v2669
      %v2703 = vunpack.c.l.b16 %v2670
      %v2704 = vunpack.c.h.b16 %v2670
      %v2705 = vunpack.c.l.b16 %v2671
      %v2706 = vunpack.c.h.b16 %v2671
      %v2707 = vunpack.c.l.b16 %v2672
      %v2708 = vunpack.c.h.b16 %v2672
      %v2709 = vunpack.c.l.b16 %v2673
      %v2710 = vunpack.c.h.b16 %v2673
      %v2711 = vunpack.c.l.b16 %v2674
      %v2712 = vunpack.c.h.b16 %v2674
      %v2713 = vunpack.c.l.b16 %v2675
      %v2714 = vpack.c.b16 %v2689, %v2689
      %v2715 = vpack.c.b16 %v2690, %v2690
      %v2716 = vpack.c.b16 %v2691, %v2691
      %v2717 = vpack.c.b16 %v2692, %v2692
      %v2718 = vpack.c.b16 %v2693, %v2693
      %v2719 = vpack.c.b16 %v2694, %v2694
      %v2720 = vpack.c.b16 %v2695, %v2695
      %v2721 = vpack.c.b16 %v2696, %v2696
      %v2722 = vpack.c.b16 %v2697, %v2697
      %v2723 = vpack.c.b16 %v2698, %v2698
      %v2724 = vpack.c.b16 %v2699, %v2699
      %v2725 = vpack.c.b16 %v2700, %v2700
      %v2726 = vpack.c.b16 %v2701, %v2701
      %v2727 = vpack.c.b16 %v2702, %v2702
      %v2728 = vpack.c.b16 %v2703, %v2703
      %v2729 = vpack.c.b16 %v2704, %v2704
      %v2730 = vpack.c.b16 %v2705, %v2705
      %v2731 = vpack.c.b16 %v2706, %v2706
      %v2732 = vpack.c.b16 %v2707, %v2707
      %v2733 = vpack.c.b16 %v2708, %v2708
      %v2734 = vpack.c.b16 %v2709, %v2709
      %v2735 = vpack.c.b16 %v2710, %v2710
      %v2736 = vpack.c.b16 %v2711, %v2711
      %v2737 = vpack.c.b16 %v2712, %v2712
      %v2738 = vpack.c.b16 %v2713, %v2713
      %vm2764 = vcmask 257024
      %2765 = vst.msk [vmem:[#allocation3] sm:$0xf] %vm2764, %v2714
      %2766 = vst.msk [vmem:[#allocation3 + $0xc] sm:$0xf] %vm2764, %v2715
      %2767 = vst.msk [vmem:[#allocation3 + $0x18] sm:$0xf] %vm2764, %v2716
      %2768 = vst.msk [vmem:[#allocation3 + $0x24] sm:$0xf] %vm2764, %v2717
      %2769 = vst.msk [vmem:[#allocation3 + $0x30] sm:$0xf] %vm2764, %v2718
      %2770 = vst.msk [vmem:[#allocation3 + $0x3c] sm:$0xf] %vm2764, %v2719
      %2771 = vst.msk [vmem:[#allocation3 + $0x48] sm:$0xf] %vm2764, %v2720
      %2772 = vst.msk [vmem:[#allocation3 + $0x54] sm:$0xf] %vm2764, %v2721
      %2773 = vst.msk [vmem:[#allocation3 + $0x60] sm:$0xf] %vm2764, %v2722
      %2774 = vst.msk [vmem:[#allocation3 + $0x6c] sm:$0xf] %vm2764, %v2723
      %2775 = vst.msk [vmem:[#allocation3 + $0x78] sm:$0xf] %vm2764, %v2724
      %2776 = vst.msk [vmem:[#allocation3 + $0x84] sm:$0xf] %vm2764, %v2725
      %2777 = vst.msk [vmem:[#allocation3 + $0x90] sm:$0xf] %vm2764, %v2726
      %2778 = vst.msk [vmem:[#allocation3 + $0x9c] sm:$0xf] %vm2764, %v2727
      %2779 = vst.msk [vmem:[#allocation3 + $0xa8] sm:$0xf] %vm2764, %v2728
      %2780 = vst.msk [vmem:[#allocation3 + $0xb4] sm:$0xf] %vm2764, %v2729
      %2781 = vst.msk [vmem:[#allocation3 + $0xc0] sm:$0xf] %vm2764, %v2730
      %2782 = vst.msk [vmem:[#allocation3 + $0xcc] sm:$0xf] %vm2764, %v2731
      %2783 = vst.msk [vmem:[#allocation3 + $0xd8] sm:$0xf] %vm2764, %v2732
      %2784 = vst.msk [vmem:[#allocation3 + $0xe4] sm:$0xf] %vm2764, %v2733
      %2785 = vst.msk [vmem:[#allocation3 + $0xf0] sm:$0xf] %vm2764, %v2734
      %2786 = vst.msk [vmem:[#allocation3 + $0xfc] sm:$0xf] %vm2764, %v2735
      %2787 = vst.msk [vmem:[#allocation3 + $0x108] sm:$0xf] %vm2764, %v2736
      %2788 = vst.msk [vmem:[#allocation3 + $0x114] sm:$0xf] %vm2764, %v2737
      %2789 = vst.msk [vmem:[#allocation3 + $0x120] sm:$0xf] %vm2764, %v2738
      %v2790 = vld [vmem:[#allocation4] sm:$0xff]
      %v2791 = vld [vmem:[#allocation4 + $0x8] sm:$0xff]
      %v2792 = vld [vmem:[#allocation4 + $0x10] sm:$0xff]
      %v2793 = vld [vmem:[#allocation4 + $0x18] sm:$0xff]
      %v2794 = vld [vmem:[#allocation4 + $0x20] sm:$0xff]
      %v2795 = vld [vmem:[#allocation4 + $0x28] sm:$0xff]
      %v2796 = vld [vmem:[#allocation4 + $0x30] sm:$0xff]
      %v2797 = vld [vmem:[#allocation4 + $0x38] sm:$0xff]
      %v2798 = vld [vmem:[#allocation4 + $0x40] sm:$0xff]
      %v2799 = vld [vmem:[#allocation4 + $0x48] sm:$0xff]
      %v2800 = vld [vmem:[#allocation4 + $0x50] sm:$0xff]
      %v2801 = vld [vmem:[#allocation4 + $0x58] sm:$0xff]
      %v2802 = vld [vmem:[#allocation4 + $0x60] sm:$0x1f]
      %v2816 = vunpack.c.l.b16 %v2790
      %v2817 = vunpack.c.h.b16 %v2790
      %v2818 = vunpack.c.l.b16 %v2791
      %v2819 = vunpack.c.h.b16 %v2791
      %v2820 = vunpack.c.l.b16 %v2792
      %v2821 = vunpack.c.h.b16 %v2792
      %v2822 = vunpack.c.l.b16 %v2793
      %v2823 = vunpack.c.h.b16 %v2793
      %v2824 = vunpack.c.l.b16 %v2794
      %v2825 = vunpack.c.h.b16 %v2794
      %v2826 = vunpack.c.l.b16 %v2795
      %v2827 = vunpack.c.h.b16 %v2795
      %v2828 = vunpack.c.l.b16 %v2796
      %v2829 = vunpack.c.h.b16 %v2796
      %v2830 = vunpack.c.l.b16 %v2797
      %v2831 = vunpack.c.h.b16 %v2797
      %v2832 = vunpack.c.l.b16 %v2798
      %v2833 = vunpack.c.h.b16 %v2798
      %v2834 = vunpack.c.l.b16 %v2799
      %v2835 = vunpack.c.h.b16 %v2799
      %v2836 = vunpack.c.l.b16 %v2800
      %v2837 = vunpack.c.h.b16 %v2800
      %v2838 = vunpack.c.l.b16 %v2801
      %v2839 = vunpack.c.h.b16 %v2801
      %v2840 = vunpack.c.l.b16 %v2802
      %v2841 = vunpack.c.h.b16 %v2802
      %v2842 = vpack.c.b16 %v2816, %v2816
      %v2843 = vpack.c.b16 %v2817, %v2817
      %v2844 = vpack.c.b16 %v2818, %v2818
      %v2845 = vpack.c.b16 %v2819, %v2819
      %v2846 = vpack.c.b16 %v2820, %v2820
      %v2847 = vpack.c.b16 %v2821, %v2821
      %v2848 = vpack.c.b16 %v2822, %v2822
      %v2849 = vpack.c.b16 %v2823, %v2823
      %v2850 = vpack.c.b16 %v2824, %v2824
      %v2851 = vpack.c.b16 %v2825, %v2825
      %v2852 = vpack.c.b16 %v2826, %v2826
      %v2853 = vpack.c.b16 %v2827, %v2827
      %v2854 = vpack.c.b16 %v2828, %v2828
      %v2855 = vpack.c.b16 %v2829, %v2829
      %v2856 = vpack.c.b16 %v2830, %v2830
      %v2857 = vpack.c.b16 %v2831, %v2831
      %v2858 = vpack.c.b16 %v2832, %v2832
      %v2859 = vpack.c.b16 %v2833, %v2833
      %v2860 = vpack.c.b16 %v2834, %v2834
      %v2861 = vpack.c.b16 %v2835, %v2835
      %v2862 = vpack.c.b16 %v2836, %v2836
      %v2863 = vpack.c.b16 %v2837, %v2837
      %v2864 = vpack.c.b16 %v2838, %v2838
      %v2865 = vpack.c.b16 %v2839, %v2839
      %v2866 = vpack.c.b16 %v2840, %v2840
      %v2867 = vpack.c.b16 %v2841, %v2841
      %vm2868 = vsmask.f32 3328
      %vm2869 = vsmask.f32 7440
      %vm2870 = vmor %vm2868, %vm2869
      %v2872 = vshrl.u32 %v2842, 16
      %v2874 = vrot.slane %v2872, 4
      %v2875 = vshll.u32 %v2842, 16
      %v2877 = vrot.slane %v2875, 5
      %v2878 = vor.u32 %v2874, %v2877
      %v2879 = vrot.slane %v2878, 4
      %v2881 = vshll.u32 %v2843, 16
      %v2883 = vrot.slane %v2881, 5
      %v2884 = vsel %vm2870, %v2879, %v2883
      %v2885 = vshrl.u32 %v2843, 16
      %v2887 = vrot.slane %v2885, 4
      %v2888 = vor.u32 %v2887, %v2883
      %v2889 = vrot.slane %v2888, 4
      %v2891 = vshll.u32 %v2844, 16
      %v2893 = vrot.slane %v2891, 5
      %v2894 = vsel %vm2870, %v2889, %v2893
      %v2895 = vshrl.u32 %v2844, 16
      %v2897 = vrot.slane %v2895, 4
      %v2898 = vor.u32 %v2897, %v2893
      %v2899 = vrot.slane %v2898, 4
      %v2901 = vshll.u32 %v2845, 16
      %v2903 = vrot.slane %v2901, 5
      %v2904 = vsel %vm2870, %v2899, %v2903
      %v2905 = vshrl.u32 %v2845, 16
      %v2907 = vrot.slane %v2905, 4
      %v2908 = vor.u32 %v2907, %v2903
      %v2909 = vrot.slane %v2908, 4
      %v2911 = vshll.u32 %v2846, 16
      %v2913 = vrot.slane %v2911, 5
      %v2914 = vsel %vm2870, %v2909, %v2913
      %v2915 = vshrl.u32 %v2846, 16
      %v2917 = vrot.slane %v2915, 4
      %v2918 = vor.u32 %v2917, %v2913
      %v2919 = vrot.slane %v2918, 4
      %v2921 = vshll.u32 %v2847, 16
      %v2923 = vrot.slane %v2921, 5
      %v2924 = vsel %vm2870, %v2919, %v2923
      %v2925 = vshrl.u32 %v2847, 16
      %v2927 = vrot.slane %v2925, 4
      %v2928 = vor.u32 %v2927, %v2923
      %v2929 = vrot.slane %v2928, 4
      %v2931 = vshll.u32 %v2848, 16
      %v2933 = vrot.slane %v2931, 5
      %v2934 = vsel %vm2870, %v2929, %v2933
      %v2935 = vshrl.u32 %v2848, 16
      %v2937 = vrot.slane %v2935, 4
      %v2938 = vor.u32 %v2937, %v2933
      %v2939 = vrot.slane %v2938, 4
      %v2941 = vshll.u32 %v2849, 16
      %v2943 = vrot.slane %v2941, 5
      %v2944 = vsel %vm2870, %v2939, %v2943
      %v2945 = vshrl.u32 %v2849, 16
      %v2947 = vrot.slane %v2945, 4
      %v2948 = vor.u32 %v2947, %v2943
      %v2949 = vrot.slane %v2948, 4
      %v2951 = vshll.u32 %v2850, 16
      %v2953 = vrot.slane %v2951, 5
      %v2954 = vsel %vm2870, %v2949, %v2953
      %v2955 = vshrl.u32 %v2850, 16
      %v2957 = vrot.slane %v2955, 4
      %v2958 = vor.u32 %v2957, %v2953
      %v2959 = vrot.slane %v2958, 4
      %v2961 = vshll.u32 %v2851, 16
      %v2963 = vrot.slane %v2961, 5
      %v2964 = vsel %vm2870, %v2959, %v2963
      %v2965 = vshrl.u32 %v2851, 16
      %v2967 = vrot.slane %v2965, 4
      %v2968 = vor.u32 %v2967, %v2963
      %v2969 = vrot.slane %v2968, 4
      %v2971 = vshll.u32 %v2852, 16
      %v2973 = vrot.slane %v2971, 5
      %v2974 = vsel %vm2870, %v2969, %v2973
      %v2975 = vshrl.u32 %v2852, 16
      %v2977 = vrot.slane %v2975, 4
      %v2978 = vor.u32 %v2977, %v2973
      %v2979 = vrot.slane %v2978, 4
      %v2981 = vshll.u32 %v2853, 16
      %v2983 = vrot.slane %v2981, 5
      %v2984 = vsel %vm2870, %v2979, %v2983
      %v2985 = vshrl.u32 %v2853, 16
      %v2987 = vrot.slane %v2985, 4
      %v2988 = vor.u32 %v2987, %v2983
      %v2989 = vrot.slane %v2988, 4
      %v2991 = vshll.u32 %v2854, 16
      %v2993 = vrot.slane %v2991, 5
      %v2994 = vsel %vm2870, %v2989, %v2993
      %v2995 = vshrl.u32 %v2854, 16
      %v2997 = vrot.slane %v2995, 4
      %v2998 = vor.u32 %v2997, %v2993
      %v2999 = vrot.slane %v2998, 4
      %v3001 = vshll.u32 %v2855, 16
      %v3003 = vrot.slane %v3001, 5
      %v3004 = vsel %vm2870, %v2999, %v3003
      %v3005 = vshrl.u32 %v2855, 16
      %v3007 = vrot.slane %v3005, 4
      %v3008 = vor.u32 %v3007, %v3003
      %v3009 = vrot.slane %v3008, 4
      %v3011 = vshll.u32 %v2856, 16
      %v3013 = vrot.slane %v3011, 5
      %v3014 = vsel %vm2870, %v3009, %v3013
      %v3015 = vshrl.u32 %v2856, 16
      %v3017 = vrot.slane %v3015, 4
      %v3018 = vor.u32 %v3017, %v3013
      %v3019 = vrot.slane %v3018, 4
      %v3021 = vshll.u32 %v2857, 16
      %v3023 = vrot.slane %v3021, 5
      %v3024 = vsel %vm2870, %v3019, %v3023
      %v3025 = vshrl.u32 %v2857, 16
      %v3027 = vrot.slane %v3025, 4
      %v3028 = vor.u32 %v3027, %v3023
      %v3029 = vrot.slane %v3028, 4
      %v3031 = vshll.u32 %v2858, 16
      %v3033 = vrot.slane %v3031, 5
      %v3034 = vsel %vm2870, %v3029, %v3033
      %v3035 = vshrl.u32 %v2858, 16
      %v3037 = vrot.slane %v3035, 4
      %v3038 = vor.u32 %v3037, %v3033
      %v3039 = vrot.slane %v3038, 4
      %v3041 = vshll.u32 %v2859, 16
      %v3043 = vrot.slane %v3041, 5
      %v3044 = vsel %vm2870, %v3039, %v3043
      %v3045 = vshrl.u32 %v2859, 16
      %v3047 = vrot.slane %v3045, 4
      %v3048 = vor.u32 %v3047, %v3043
      %v3049 = vrot.slane %v3048, 4
      %v3051 = vshll.u32 %v2860, 16
      %v3053 = vrot.slane %v3051, 5
      %v3054 = vsel %vm2870, %v3049, %v3053
      %v3055 = vshrl.u32 %v2860, 16
      %v3057 = vrot.slane %v3055, 4
      %v3058 = vor.u32 %v3057, %v3053
      %v3059 = vrot.slane %v3058, 4
      %v3061 = vshll.u32 %v2861, 16
      %v3063 = vrot.slane %v3061, 5
      %v3064 = vsel %vm2870, %v3059, %v3063
      %v3065 = vshrl.u32 %v2861, 16
      %v3067 = vrot.slane %v3065, 4
      %v3068 = vor.u32 %v3067, %v3063
      %v3069 = vrot.slane %v3068, 4
      %v3071 = vshll.u32 %v2862, 16
      %v3073 = vrot.slane %v3071, 5
      %v3074 = vsel %vm2870, %v3069, %v3073
      %v3075 = vshrl.u32 %v2862, 16
      %v3077 = vrot.slane %v3075, 4
      %v3078 = vor.u32 %v3077, %v3073
      %v3079 = vrot.slane %v3078, 4
      %v3081 = vshll.u32 %v2863, 16
      %v3083 = vrot.slane %v3081, 5
      %v3084 = vsel %vm2870, %v3079, %v3083
      %v3085 = vshrl.u32 %v2863, 16
      %v3087 = vrot.slane %v3085, 4
      %v3088 = vor.u32 %v3087, %v3083
      %v3089 = vrot.slane %v3088, 4
      %v3091 = vshll.u32 %v2864, 16
      %v3093 = vrot.slane %v3091, 5
      %v3094 = vsel %vm2870, %v3089, %v3093
      %v3095 = vshrl.u32 %v2864, 16
      %v3097 = vrot.slane %v3095, 4
      %v3098 = vor.u32 %v3097, %v3093
      %v3099 = vrot.slane %v3098, 4
      %v3101 = vshll.u32 %v2865, 16
      %v3103 = vrot.slane %v3101, 5
      %v3104 = vsel %vm2870, %v3099, %v3103
      %v3105 = vshrl.u32 %v2865, 16
      %v3107 = vrot.slane %v3105, 4
      %v3108 = vor.u32 %v3107, %v3103
      %v3109 = vrot.slane %v3108, 4
      %v3111 = vshll.u32 %v2866, 16
      %v3113 = vrot.slane %v3111, 5
      %v3114 = vsel %vm2870, %v3109, %v3113
      %v3115 = vshrl.u32 %v2866, 16
      %v3117 = vrot.slane %v3115, 4
      %v3118 = vor.u32 %v3117, %v3113
      %v3119 = vrot.slane %v3118, 4
      %v3121 = vshll.u32 %v2867, 16
      %v3123 = vrot.slane %v3121, 5
      %v3124 = vsel %vm2870, %v3119, %v3123
      %3125 = vrot.lane.b32.xlu0 %v2884, 32
      %v3126 = vpop.permute.xlu0 %3125
      %3127 = vrot.lane.b32.xlu0 %v2894, 32
      %v3128 = vpop.permute.xlu0 %3127
      %3129 = vrot.lane.b32.xlu0 %v2904, 32
      %v3130 = vpop.permute.xlu0 %3129
      %3131 = vrot.lane.b32.xlu0 %v2914, 32
      %v3132 = vpop.permute.xlu0 %3131
      %3133 = vrot.lane.b32.xlu0 %v2924, 32
      %v3134 = vpop.permute.xlu0 %3133
      %3135 = vrot.lane.b32.xlu0 %v2934, 32
      %v3136 = vpop.permute.xlu0 %3135
      %3137 = vrot.lane.b32.xlu0 %v2944, 32
      %v3138 = vpop.permute.xlu0 %3137
      %3139 = vrot.lane.b32.xlu0 %v2954, 32
      %v3140 = vpop.permute.xlu0 %3139
      %3141 = vrot.lane.b32.xlu0 %v2964, 32
      %v3142 = vpop.permute.xlu0 %3141
      %3143 = vrot.lane.b32.xlu0 %v2974, 32
      %v3144 = vpop.permute.xlu0 %3143
      %3145 = vrot.lane.b32.xlu0 %v2984, 32
      %v3146 = vpop.permute.xlu0 %3145
      %3147 = vrot.lane.b32.xlu0 %v2994, 32
      %v3148 = vpop.permute.xlu0 %3147
      %3149 = vrot.lane.b32.xlu0 %v3004, 32
      %v3150 = vpop.permute.xlu0 %3149
      %3151 = vrot.lane.b32.xlu0 %v3014, 32
      %v3152 = vpop.permute.xlu0 %3151
      %3153 = vrot.lane.b32.xlu0 %v3024, 32
      %v3154 = vpop.permute.xlu0 %3153
      %3155 = vrot.lane.b32.xlu0 %v3034, 32
      %v3156 = vpop.permute.xlu0 %3155
      %3157 = vrot.lane.b32.xlu0 %v3044, 32
      %v3158 = vpop.permute.xlu0 %3157
      %3159 = vrot.lane.b32.xlu0 %v3054, 32
      %v3160 = vpop.permute.xlu0 %3159
      %3161 = vrot.lane.b32.xlu0 %v3064, 32
      %v3162 = vpop.permute.xlu0 %3161
      %3163 = vrot.lane.b32.xlu0 %v3074, 32
      %v3164 = vpop.permute.xlu0 %3163
      %3165 = vrot.lane.b32.xlu0 %v3084, 32
      %v3166 = vpop.permute.xlu0 %3165
      %3167 = vrot.lane.b32.xlu0 %v3094, 32
      %v3168 = vpop.permute.xlu0 %3167
      %3169 = vrot.lane.b32.xlu0 %v3104, 32
      %v3170 = vpop.permute.xlu0 %3169
      %3171 = vrot.lane.b32.xlu0 %v3114, 32
      %v3172 = vpop.permute.xlu0 %3171
      %3173 = vrot.lane.b32.xlu0 %v3124, 32
      %v3174 = vpop.permute.xlu0 %3173
      %vm3200 = vcmask 519424
      %3201 = vst.msk [vmem:[#allocation3] sm:$0xf] %vm3200, %v3126
      %3202 = vst.msk [vmem:[#allocation3 + $0xc] sm:$0xf] %vm3200, %v3128
      %3203 = vst.msk [vmem:[#allocation3 + $0x18] sm:$0xf] %vm3200, %v3130
      %3204 = vst.msk [vmem:[#allocation3 + $0x24] sm:$0xf] %vm3200, %v3132
      %3205 = vst.msk [vmem:[#allocation3 + $0x30] sm:$0xf] %vm3200, %v3134
      %3206 = vst.msk [vmem:[#allocation3 + $0x3c] sm:$0xf] %vm3200, %v3136
      %3207 = vst.msk [vmem:[#allocation3 + $0x48] sm:$0xf] %vm3200, %v3138
      %3208 = vst.msk [vmem:[#allocation3 + $0x54] sm:$0xf] %vm3200, %v3140
      %3209 = vst.msk [vmem:[#allocation3 + $0x60] sm:$0xf] %vm3200, %v3142
      %3210 = vst.msk [vmem:[#allocation3 + $0x6c] sm:$0xf] %vm3200, %v3144
      %3211 = vst.msk [vmem:[#allocation3 + $0x78] sm:$0xf] %vm3200, %v3146
      %3212 = vst.msk [vmem:[#allocation3 + $0x84] sm:$0xf] %vm3200, %v3148
      %3213 = vst.msk [vmem:[#allocation3 + $0x90] sm:$0xf] %vm3200, %v3150
      %3214 = vst.msk [vmem:[#allocation3 + $0x9c] sm:$0xf] %vm3200, %v3152
      %3215 = vst.msk [vmem:[#allocation3 + $0xa8] sm:$0xf] %vm3200, %v3154
      %3216 = vst.msk [vmem:[#allocation3 + $0xb4] sm:$0xf] %vm3200, %v3156
      %3217 = vst.msk [vmem:[#allocation3 + $0xc0] sm:$0xf] %vm3200, %v3158
      %3218 = vst.msk [vmem:[#allocation3 + $0xcc] sm:$0xf] %vm3200, %v3160
      %3219 = vst.msk [vmem:[#allocation3 + $0xd8] sm:$0xf] %vm3200, %v3162
      %3220 = vst.msk [vmem:[#allocation3 + $0xe4] sm:$0xf] %vm3200, %v3164
      %3221 = vst.msk [vmem:[#allocation3 + $0xf0] sm:$0xf] %vm3200, %v3166
      %3222 = vst.msk [vmem:[#allocation3 + $0xfc] sm:$0xf] %vm3200, %v3168
      %3223 = vst.msk [vmem:[#allocation3 + $0x108] sm:$0xf] %vm3200, %v3170
      %3224 = vst.msk [vmem:[#allocation3 + $0x114] sm:$0xf] %vm3200, %v3172
      %3225 = vst.msk [vmem:[#allocation3 + $0x120] sm:$0xf] %vm3200, %v3174
      %v3226 = vld [vmem:[#allocation4] sm:$0xfe]
      %v3227 = vld [vmem:[#allocation4 + $0x8] sm:$0xff]
      %v3228 = vld [vmem:[#allocation4 + $0x10] sm:$0xff]
      %v3229 = vld [vmem:[#allocation4 + $0x18] sm:$0xff]
      %v3230 = vld [vmem:[#allocation4 + $0x20] sm:$0xff]
      %v3231 = vld [vmem:[#allocation4 + $0x28] sm:$0xff]
      %v3232 = vld [vmem:[#allocation4 + $0x30] sm:$0xff]
      %v3233 = vld [vmem:[#allocation4 + $0x38] sm:$0xff]
      %v3234 = vld [vmem:[#allocation4 + $0x40] sm:$0xff]
      %v3235 = vld [vmem:[#allocation4 + $0x48] sm:$0xff]
      %v3236 = vld [vmem:[#allocation4 + $0x50] sm:$0xff]
      %v3237 = vld [vmem:[#allocation4 + $0x58] sm:$0xff]
      %v3238 = vld [vmem:[#allocation4 + $0x60] sm:$0x1f]
      %v3252 = vunpack.c.l.b16 %v3226
      %v3253 = vunpack.c.h.b16 %v3226
      %v3254 = vunpack.c.l.b16 %v3227
      %v3255 = vunpack.c.h.b16 %v3227
      %v3256 = vunpack.c.l.b16 %v3228
      %v3257 = vunpack.c.h.b16 %v3228
      %v3258 = vunpack.c.l.b16 %v3229
      %v3259 = vunpack.c.h.b16 %v3229
      %v3260 = vunpack.c.l.b16 %v3230
      %v3261 = vunpack.c.h.b16 %v3230
      %v3262 = vunpack.c.l.b16 %v3231
      %v3263 = vunpack.c.h.b16 %v3231
      %v3264 = vunpack.c.l.b16 %v3232
      %v3265 = vunpack.c.h.b16 %v3232
      %v3266 = vunpack.c.l.b16 %v3233
      %v3267 = vunpack.c.h.b16 %v3233
      %v3268 = vunpack.c.l.b16 %v3234
      %v3269 = vunpack.c.h.b16 %v3234
      %v3270 = vunpack.c.l.b16 %v3235
      %v3271 = vunpack.c.h.b16 %v3235
      %v3272 = vunpack.c.l.b16 %v3236
      %v3273 = vunpack.c.h.b16 %v3236
      %v3274 = vunpack.c.l.b16 %v3237
      %v3275 = vunpack.c.h.b16 %v3237
      %v3276 = vunpack.c.l.b16 %v3238
      %v3277 = vunpack.c.h.b16 %v3238
      %v3278 = vpack.c.b16 %v3252, %v3252
      %v3279 = vpack.c.b16 %v3253, %v3253
      %v3280 = vpack.c.b16 %v3254, %v3254
      %v3281 = vpack.c.b16 %v3255, %v3255
      %v3282 = vpack.c.b16 %v3256, %v3256
      %v3283 = vpack.c.b16 %v3257, %v3257
      %v3284 = vpack.c.b16 %v3258, %v3258
      %v3285 = vpack.c.b16 %v3259, %v3259
      %v3286 = vpack.c.b16 %v3260, %v3260
      %v3287 = vpack.c.b16 %v3261, %v3261
      %v3288 = vpack.c.b16 %v3262, %v3262
      %v3289 = vpack.c.b16 %v3263, %v3263
      %v3290 = vpack.c.b16 %v3264, %v3264
      %v3291 = vpack.c.b16 %v3265, %v3265
      %v3292 = vpack.c.b16 %v3266, %v3266
      %v3293 = vpack.c.b16 %v3267, %v3267
      %v3294 = vpack.c.b16 %v3268, %v3268
      %v3295 = vpack.c.b16 %v3269, %v3269
      %v3296 = vpack.c.b16 %v3270, %v3270
      %v3297 = vpack.c.b16 %v3271, %v3271
      %v3298 = vpack.c.b16 %v3272, %v3272
      %v3299 = vpack.c.b16 %v3273, %v3273
      %v3300 = vpack.c.b16 %v3274, %v3274
      %v3301 = vpack.c.b16 %v3275, %v3275
      %v3302 = vpack.c.b16 %v3276, %v3276
      %v3303 = vpack.c.b16 %v3277, %v3277
      %vm3304 = vcmask 1042432
      %vm3305 = vcmask 1046532
      %vm3306 = vmor %vm3304, %vm3305
      %v3307 = vrot.slane %v3278, 5
      %v3308 = vrot.slane %v3307, 4
      %v3309 = vrot.slane %v3279, 5
      %v3310 = vsel %vm3306, %v3308, %v3309
      %v3311 = vrot.slane %v3309, 4
      %v3312 = vrot.slane %v3280, 5
      %v3313 = vsel %vm3306, %v3311, %v3312
      %v3314 = vrot.slane %v3312, 4
      %v3315 = vrot.slane %v3281, 5
      %v3316 = vsel %vm3306, %v3314, %v3315
      %v3317 = vrot.slane %v3315, 4
      %v3318 = vrot.slane %v3282, 5
      %v3319 = vsel %vm3306, %v3317, %v3318
      %v3320 = vrot.slane %v3318, 4
      %v3321 = vrot.slane %v3283, 5
      %v3322 = vsel %vm3306, %v3320, %v3321
      %v3323 = vrot.slane %v3321, 4
      %v3324 = vrot.slane %v3284, 5
      %v3325 = vsel %vm3306, %v3323, %v3324
      %v3326 = vrot.slane %v3324, 4
      %v3327 = vrot.slane %v3285, 5
      %v3328 = vsel %vm3306, %v3326, %v3327
      %v3329 = vrot.slane %v3327, 4
      %v3330 = vrot.slane %v3286, 5
      %v3331 = vsel %vm3306, %v3329, %v3330
      %v3332 = vrot.slane %v3330, 4
      %v3333 = vrot.slane %v3287, 5
      %v3334 = vsel %vm3306, %v3332, %v3333
      %v3335 = vrot.slane %v3333, 4
      %v3336 = vrot.slane %v3288, 5
      %v3337 = vsel %vm3306, %v3335, %v3336
      %v3338 = vrot.slane %v3336, 4
      %v3339 = vrot.slane %v3289, 5
      %v3340 = vsel %vm3306, %v3338, %v3339
      %v3341 = vrot.slane %v3339, 4
      %v3342 = vrot.slane %v3290, 5
      %v3343 = vsel %vm3306, %v3341, %v3342
      %v3344 = vrot.slane %v3342, 4
      %v3345 = vrot.slane %v3291, 5
      %v3346 = vsel %vm3306, %v3344, %v3345
      %v3347 = vrot.slane %v3345, 4
      %v3348 = vrot.slane %v3292, 5
      %v3349 = vsel %vm3306, %v3347, %v3348
      %v3350 = vrot.slane %v3348, 4
      %v3351 = vrot.slane %v3293, 5
      %v3352 = vsel %vm3306, %v3350, %v3351
      %v3353 = vrot.slane %v3351, 4
      %v3354 = vrot.slane %v3294, 5
      %v3355 = vsel %vm3306, %v3353, %v3354
      %v3356 = vrot.slane %v3354, 4
      %v3357 = vrot.slane %v3295, 5
      %v3358 = vsel %vm3306, %v3356, %v3357
      %v3359 = vrot.slane %v3357, 4
      %v3360 = vrot.slane %v3296, 5
      %v3361 = vsel %vm3306, %v3359, %v3360
      %v3362 = vrot.slane %v3360, 4
      %v3363 = vrot.slane %v3297, 5
      %v3364 = vsel %vm3306, %v3362, %v3363
      %v3365 = vrot.slane %v3363, 4
      %v3366 = vrot.slane %v3298, 5
      %v3367 = vsel %vm3306, %v3365, %v3366
      %v3368 = vrot.slane %v3366, 4
      %v3369 = vrot.slane %v3299, 5
      %v3370 = vsel %vm3306, %v3368, %v3369
      %v3371 = vrot.slane %v3369, 4
      %v3372 = vrot.slane %v3300, 5
      %v3373 = vsel %vm3306, %v3371, %v3372
      %v3374 = vrot.slane %v3372, 4
      %v3375 = vrot.slane %v3301, 5
      %v3376 = vsel %vm3306, %v3374, %v3375
      %v3377 = vrot.slane %v3375, 4
      %v3378 = vrot.slane %v3302, 5
      %v3379 = vsel %vm3306, %v3377, %v3378
      %v3380 = vrot.slane %v3378, 4
      %v3381 = vrot.slane %v3303, 5
      %v3382 = vsel %vm3306, %v3380, %v3381
      %3383 = vrot.lane.b32.xlu0 %v3310, 64
      %v3384 = vpop.permute.xlu0 %3383
      %3385 = vrot.lane.b32.xlu0 %v3313, 64
      %v3386 = vpop.permute.xlu0 %3385
      %3387 = vrot.lane.b32.xlu0 %v3316, 64
      %v3388 = vpop.permute.xlu0 %3387
      %3389 = vrot.lane.b32.xlu0 %v3319, 64
      %v3390 = vpop.permute.xlu0 %3389
      %3391 = vrot.lane.b32.xlu0 %v3322, 64
      %v3392 = vpop.permute.xlu0 %3391
      %3393 = vrot.lane.b32.xlu0 %v3325, 64
      %v3394 = vpop.permute.xlu0 %3393
      %3395 = vrot.lane.b32.xlu0 %v3328, 64
      %v3396 = vpop.permute.xlu0 %3395
      %3397 = vrot.lane.b32.xlu0 %v3331, 64
      %v3398 = vpop.permute.xlu0 %3397
      %3399 = vrot.lane.b32.xlu0 %v3334, 64
      %v3400 = vpop.permute.xlu0 %3399
      %3401 = vrot.lane.b32.xlu0 %v3337, 64
      %v3402 = vpop.permute.xlu0 %3401
      %3403 = vrot.lane.b32.xlu0 %v3340, 64
      %v3404 = vpop.permute.xlu0 %3403
      %3405 = vrot.lane.b32.xlu0 %v3343, 64
      %v3406 = vpop.permute.xlu0 %3405
      %3407 = vrot.lane.b32.xlu0 %v3346, 64
      %v3408 = vpop.permute.xlu0 %3407
      %3409 = vrot.lane.b32.xlu0 %v3349, 64
      %v3410 = vpop.permute.xlu0 %3409
      %3411 = vrot.lane.b32.xlu0 %v3352, 64
      %v3412 = vpop.permute.xlu0 %3411
      %3413 = vrot.lane.b32.xlu0 %v3355, 64
      %v3414 = vpop.permute.xlu0 %3413
      %3415 = vrot.lane.b32.xlu0 %v3358, 64
      %v3416 = vpop.permute.xlu0 %3415
      %3417 = vrot.lane.b32.xlu0 %v3361, 64
      %v3418 = vpop.permute.xlu0 %3417
      %3419 = vrot.lane.b32.xlu0 %v3364, 64
      %v3420 = vpop.permute.xlu0 %3419
      %3421 = vrot.lane.b32.xlu0 %v3367, 64
      %v3422 = vpop.permute.xlu0 %3421
      %3423 = vrot.lane.b32.xlu0 %v3370, 64
      %v3424 = vpop.permute.xlu0 %3423
      %3425 = vrot.lane.b32.xlu0 %v3373, 64
      %v3426 = vpop.permute.xlu0 %3425
      %3427 = vrot.lane.b32.xlu0 %v3376, 64
      %v3428 = vpop.permute.xlu0 %3427
      %3429 = vrot.lane.b32.xlu0 %v3379, 64
      %v3430 = vpop.permute.xlu0 %3429
      %3431 = vrot.lane.b32.xlu0 %v3382, 64
      %v3432 = vpop.permute.xlu0 %3431
      %vm3458 = vcmask 781824
      %3459 = vst.msk [vmem:[#allocation3] sm:$0xf] %vm3458, %v3384
      %3460 = vst.msk [vmem:[#allocation3 + $0xc] sm:$0xf] %vm3458, %v3386
      %3461 = vst.msk [vmem:[#allocation3 + $0x18] sm:$0xf] %vm3458, %v3388
      %3462 = vst.msk [vmem:[#allocation3 + $0x24] sm:$0xf] %vm3458, %v3390
      %3463 = vst.msk [vmem:[#allocation3 + $0x30] sm:$0xf] %vm3458, %v3392
      %3464 = vst.msk [vmem:[#allocation3 + $0x3c] sm:$0xf] %vm3458, %v3394
      %3465 = vst.msk [vmem:[#allocation3 + $0x48] sm:$0xf] %vm3458, %v3396
      %3466 = vst.msk [vmem:[#allocation3 + $0x54] sm:$0xf] %vm3458, %v3398
      %3467 = vst.msk [vmem:[#allocation3 + $0x60] sm:$0xf] %vm3458, %v3400
      %3468 = vst.msk [vmem:[#allocation3 + $0x6c] sm:$0xf] %vm3458, %v3402
      %3469 = vst.msk [vmem:[#allocation3 + $0x78] sm:$0xf] %vm3458, %v3404
      %3470 = vst.msk [vmem:[#allocation3 + $0x84] sm:$0xf] %vm3458, %v3406
      %3471 = vst.msk [vmem:[#allocation3 + $0x90] sm:$0xf] %vm3458, %v3408
      %3472 = vst.msk [vmem:[#allocation3 + $0x9c] sm:$0xf] %vm3458, %v3410
      %3473 = vst.msk [vmem:[#allocation3 + $0xa8] sm:$0xf] %vm3458, %v3412
      %3474 = vst.msk [vmem:[#allocation3 + $0xb4] sm:$0xf] %vm3458, %v3414
      %3475 = vst.msk [vmem:[#allocation3 + $0xc0] sm:$0xf] %vm3458, %v3416
      %3476 = vst.msk [vmem:[#allocation3 + $0xcc] sm:$0xf] %vm3458, %v3418
      %3477 = vst.msk [vmem:[#allocation3 + $0xd8] sm:$0xf] %vm3458, %v3420
      %3478 = vst.msk [vmem:[#allocation3 + $0xe4] sm:$0xf] %vm3458, %v3422
      %3479 = vst.msk [vmem:[#allocation3 + $0xf0] sm:$0xf] %vm3458, %v3424
      %3480 = vst.msk [vmem:[#allocation3 + $0xfc] sm:$0xf] %vm3458, %v3426
      %3481 = vst.msk [vmem:[#allocation3 + $0x108] sm:$0xf] %vm3458, %v3428
      %3482 = vst.msk [vmem:[#allocation3 + $0x114] sm:$0xf] %vm3458, %v3430
      %3483 = vst.msk [vmem:[#allocation3 + $0x120] sm:$0xf] %vm3458, %v3432
      %v3484 = vld [vmem:[#allocation4 + $0x8] sm:$0xff]
      %v3485 = vld [vmem:[#allocation4 + $0x10] sm:$0xff]
      %v3486 = vld [vmem:[#allocation4 + $0x18] sm:$0xff]
      %v3487 = vld [vmem:[#allocation4 + $0x20] sm:$0xff]
      %v3488 = vld [vmem:[#allocation4 + $0x28] sm:$0xff]
      %v3489 = vld [vmem:[#allocation4 + $0x30] sm:$0xff]
      %v3490 = vld [vmem:[#allocation4 + $0x38] sm:$0xff]
      %v3491 = vld [vmem:[#allocation4 + $0x40] sm:$0xff]
      %v3492 = vld [vmem:[#allocation4 + $0x48] sm:$0xff]
      %v3493 = vld [vmem:[#allocation4 + $0x50] sm:$0xff]
      %v3494 = vld [vmem:[#allocation4 + $0x58] sm:$0xff]
      %v3495 = vld [vmem:[#allocation4 + $0x60] sm:$0xff]
      %v3496 = vld [vmem:[#allocation4 + $0x68] sm:$0xf]
      %v3510 = vunpack.c.l.b16 %v3484
      %v3511 = vunpack.c.h.b16 %v3484
      %v3512 = vunpack.c.l.b16 %v3485
      %v3513 = vunpack.c.h.b16 %v3485
      %v3514 = vunpack.c.l.b16 %v3486
      %v3515 = vunpack.c.h.b16 %v3486
      %v3516 = vunpack.c.l.b16 %v3487
      %v3517 = vunpack.c.h.b16 %v3487
      %v3518 = vunpack.c.l.b16 %v3488
      %v3519 = vunpack.c.h.b16 %v3488
      %v3520 = vunpack.c.l.b16 %v3489
      %v3521 = vunpack.c.h.b16 %v3489
      %v3522 = vunpack.c.l.b16 %v3490
      %v3523 = vunpack.c.h.b16 %v3490
      %v3524 = vunpack.c.l.b16 %v3491
      %v3525 = vunpack.c.h.b16 %v3491
      %v3526 = vunpack.c.l.b16 %v3492
      %v3527 = vunpack.c.h.b16 %v3492
      %v3528 = vunpack.c.l.b16 %v3493
      %v3529 = vunpack.c.h.b16 %v3493
      %v3530 = vunpack.c.l.b16 %v3494
      %v3531 = vunpack.c.h.b16 %v3494
      %v3532 = vunpack.c.l.b16 %v3495
      %v3533 = vunpack.c.h.b16 %v3495
      %v3534 = vunpack.c.l.b16 %v3496
      %v3535 = vpack.c.b16 %v3510, %v3510
      %v3536 = vpack.c.b16 %v3511, %v3511
      %v3537 = vpack.c.b16 %v3512, %v3512
      %v3538 = vpack.c.b16 %v3513, %v3513
      %v3539 = vpack.c.b16 %v3514, %v3514
      %v3540 = vpack.c.b16 %v3515, %v3515
      %v3541 = vpack.c.b16 %v3516, %v3516
      %v3542 = vpack.c.b16 %v3517, %v3517
      %v3543 = vpack.c.b16 %v3518, %v3518
      %v3544 = vpack.c.b16 %v3519, %v3519
      %v3545 = vpack.c.b16 %v3520, %v3520
      %v3546 = vpack.c.b16 %v3521, %v3521
      %v3547 = vpack.c.b16 %v3522, %v3522
      %v3548 = vpack.c.b16 %v3523, %v3523
      %v3549 = vpack.c.b16 %v3524, %v3524
      %v3550 = vpack.c.b16 %v3525, %v3525
      %v3551 = vpack.c.b16 %v3526, %v3526
      %v3552 = vpack.c.b16 %v3527, %v3527
      %v3553 = vpack.c.b16 %v3528, %v3528
      %v3554 = vpack.c.b16 %v3529, %v3529
      %v3555 = vpack.c.b16 %v3530, %v3530
      %v3556 = vpack.c.b16 %v3531, %v3531
      %v3557 = vpack.c.b16 %v3532, %v3532
      %v3558 = vpack.c.b16 %v3533, %v3533
      %v3559 = vpack.c.b16 %v3534, %v3534
      %3560 = vrot.lane.b32.xlu0 %v3535, 96
      %v3561 = vpop.permute.xlu0 %3560
      %3562 = vrot.lane.b32.xlu0 %v3536, 96
      %v3563 = vpop.permute.xlu0 %3562
      %3564 = vrot.lane.b32.xlu0 %v3537, 96
      %v3565 = vpop.permute.xlu0 %3564
      %3566 = vrot.lane.b32.xlu0 %v3538, 96
      %v3567 = vpop.permute.xlu0 %3566
      %3568 = vrot.lane.b32.xlu0 %v3539, 96
      %v3569 = vpop.permute.xlu0 %3568
      %3570 = vrot.lane.b32.xlu0 %v3540, 96
      %v3571 = vpop.permute.xlu0 %3570
      %3572 = vrot.lane.b32.xlu0 %v3541, 96
      %v3573 = vpop.permute.xlu0 %3572
      %3574 = vrot.lane.b32.xlu0 %v3542, 96
      %v3575 = vpop.permute.xlu0 %3574
      %3576 = vrot.lane.b32.xlu0 %v3543, 96
      %v3577 = vpop.permute.xlu0 %3576
      %3578 = vrot.lane.b32.xlu0 %v3544, 96
      %v3579 = vpop.permute.xlu0 %3578
      %3580 = vrot.lane.b32.xlu0 %v3545, 96
      %v3581 = vpop.permute.xlu0 %3580
      %3582 = vrot.lane.b32.xlu0 %v3546, 96
      %v3583 = vpop.permute.xlu0 %3582
      %3584 = vrot.lane.b32.xlu0 %v3547, 96
      %v3585 = vpop.permute.xlu0 %3584
      %3586 = vrot.lane.b32.xlu0 %v3548, 96
      %v3587 = vpop.permute.xlu0 %3586
      %3588 = vrot.lane.b32.xlu0 %v3549, 96
      %v3589 = vpop.permute.xlu0 %3588
      %3590 = vrot.lane.b32.xlu0 %v3550, 96
      %v3591 = vpop.permute.xlu0 %3590
      %3592 = vrot.lane.b32.xlu0 %v3551, 96
      %v3593 = vpop.permute.xlu0 %3592
      %3594 = vrot.lane.b32.xlu0 %v3552, 96
      %v3595 = vpop.permute.xlu0 %3594
      %3596 = vrot.lane.b32.xlu0 %v3553, 96
      %v3597 = vpop.permute.xlu0 %3596
      %3598 = vrot.lane.b32.xlu0 %v3554, 96
      %v3599 = vpop.permute.xlu0 %3598
      %3600 = vrot.lane.b32.xlu0 %v3555, 96
      %v3601 = vpop.permute.xlu0 %3600
      %3602 = vrot.lane.b32.xlu0 %v3556, 96
      %v3603 = vpop.permute.xlu0 %3602
      %3604 = vrot.lane.b32.xlu0 %v3557, 96
      %v3605 = vpop.permute.xlu0 %3604
      %3606 = vrot.lane.b32.xlu0 %v3558, 96
      %v3607 = vpop.permute.xlu0 %3606
      %3608 = vrot.lane.b32.xlu0 %v3559, 96
      %v3609 = vpop.permute.xlu0 %3608
      %vm3635 = vcmask 1044224
      %3636 = vst.msk [vmem:[#allocation3] sm:$0xf] %vm3635, %v3561
      %3637 = vst.msk [vmem:[#allocation3 + $0xc] sm:$0xf] %vm3635, %v3563
      %3638 = vst.msk [vmem:[#allocation3 + $0x18] sm:$0xf] %vm3635, %v3565
      %3639 = vst.msk [vmem:[#allocation3 + $0x24] sm:$0xf] %vm3635, %v3567
      %3640 = vst.msk [vmem:[#allocation3 + $0x30] sm:$0xf] %vm3635, %v3569
      %3641 = vst.msk [vmem:[#allocation3 + $0x3c] sm:$0xf] %vm3635, %v3571
      %3642 = vst.msk [vmem:[#allocation3 + $0x48] sm:$0xf] %vm3635, %v3573
      %3643 = vst.msk [vmem:[#allocation3 + $0x54] sm:$0xf] %vm3635, %v3575
      %3644 = vst.msk [vmem:[#allocation3 + $0x60] sm:$0xf] %vm3635, %v3577
      %3645 = vst.msk [vmem:[#allocation3 + $0x6c] sm:$0xf] %vm3635, %v3579
      %3646 = vst.msk [vmem:[#allocation3 + $0x78] sm:$0xf] %vm3635, %v3581
      %3647 = vst.msk [vmem:[#allocation3 + $0x84] sm:$0xf] %vm3635, %v3583
      %3648 = vst.msk [vmem:[#allocation3 + $0x90] sm:$0xf] %vm3635, %v3585
      %3649 = vst.msk [vmem:[#allocation3 + $0x9c] sm:$0xf] %vm3635, %v3587
      %3650 = vst.msk [vmem:[#allocation3 + $0xa8] sm:$0xf] %vm3635, %v3589
      %3651 = vst.msk [vmem:[#allocation3 + $0xb4] sm:$0xf] %vm3635, %v3591
      %3652 = vst.msk [vmem:[#allocation3 + $0xc0] sm:$0xf] %vm3635, %v3593
      %3653 = vst.msk [vmem:[#allocation3 + $0xcc] sm:$0xf] %vm3635, %v3595
      %3654 = vst.msk [vmem:[#allocation3 + $0xd8] sm:$0xf] %vm3635, %v3597
      %3655 = vst.msk [vmem:[#allocation3 + $0xe4] sm:$0xf] %vm3635, %v3599
      %3656 = vst.msk [vmem:[#allocation3 + $0xf0] sm:$0xf] %vm3635, %v3601
      %3657 = vst.msk [vmem:[#allocation3 + $0xfc] sm:$0xf] %vm3635, %v3603
      %3658 = vst.msk [vmem:[#allocation3 + $0x108] sm:$0xf] %vm3635, %v3605
      %3659 = vst.msk [vmem:[#allocation3 + $0x114] sm:$0xf] %vm3635, %v3607
      %3660 = vst.msk [vmem:[#allocation3 + $0x120] sm:$0xf] %vm3635, %v3609
      %v3661 = vld [vmem:[#allocation4 + $0x8] sm:$0xff]
      %v3662 = vld [vmem:[#allocation4 + $0x10] sm:$0xff]
      %v3663 = vld [vmem:[#allocation4 + $0x18] sm:$0xff]
      %v3664 = vld [vmem:[#allocation4 + $0x20] sm:$0xff]
      %v3665 = vld [vmem:[#allocation4 + $0x28] sm:$0xff]
      %v3666 = vld [vmem:[#allocation4 + $0x30] sm:$0xff]
      %v3667 = vld [vmem:[#allocation4 + $0x38] sm:$0xff]
      %v3668 = vld [vmem:[#allocation4 + $0x40] sm:$0xff]
      %v3669 = vld [vmem:[#allocation4 + $0x48] sm:$0xff]
      %v3670 = vld [vmem:[#allocation4 + $0x50] sm:$0xff]
      %v3671 = vld [vmem:[#allocation4 + $0x58] sm:$0xff]
      %v3672 = vld [vmem:[#allocation4 + $0x60] sm:$0xff]
      %v3673 = vld [vmem:[#allocation4 + $0x68] sm:$0x1f]
      %v3687 = vunpack.c.l.b16 %v3661
      %v3688 = vunpack.c.h.b16 %v3661
      %v3689 = vunpack.c.l.b16 %v3662
      %v3690 = vunpack.c.h.b16 %v3662
      %v3691 = vunpack.c.l.b16 %v3663
      %v3692 = vunpack.c.h.b16 %v3663
      %v3693 = vunpack.c.l.b16 %v3664
      %v3694 = vunpack.c.h.b16 %v3664
      %v3695 = vunpack.c.l.b16 %v3665
      %v3696 = vunpack.c.h.b16 %v3665
      %v3697 = vunpack.c.l.b16 %v3666
      %v3698 = vunpack.c.h.b16 %v3666
      %v3699 = vunpack.c.l.b16 %v3667
      %v3700 = vunpack.c.h.b16 %v3667
      %v3701 = vunpack.c.l.b16 %v3668
      %v3702 = vunpack.c.h.b16 %v3668
      %v3703 = vunpack.c.l.b16 %v3669
      %v3704 = vunpack.c.h.b16 %v3669
      %v3705 = vunpack.c.l.b16 %v3670
      %v3706 = vunpack.c.h.b16 %v3670
      %v3707 = vunpack.c.l.b16 %v3671
      %v3708 = vunpack.c.h.b16 %v3671
      %v3709 = vunpack.c.l.b16 %v3672
      %v3710 = vunpack.c.h.b16 %v3672
      %v3711 = vunpack.c.l.b16 %v3673
      %v3712 = vunpack.c.h.b16 %v3673
      %v3713 = vpack.c.b16 %v3687, %v3687
      %v3714 = vpack.c.b16 %v3688, %v3688
      %v3715 = vpack.c.b16 %v3689, %v3689
      %v3716 = vpack.c.b16 %v3690, %v3690
      %v3717 = vpack.c.b16 %v3691, %v3691
      %v3718 = vpack.c.b16 %v3692, %v3692
      %v3719 = vpack.c.b16 %v3693, %v3693
      %v3720 = vpack.c.b16 %v3694, %v3694
      %v3721 = vpack.c.b16 %v3695, %v3695
      %v3722 = vpack.c.b16 %v3696, %v3696
      %v3723 = vpack.c.b16 %v3697, %v3697
      %v3724 = vpack.c.b16 %v3698, %v3698
      %v3725 = vpack.c.b16 %v3699, %v3699
      %v3726 = vpack.c.b16 %v3700, %v3700
      %v3727 = vpack.c.b16 %v3701, %v3701
      %v3728 = vpack.c.b16 %v3702, %v3702
      %v3729 = vpack.c.b16 %v3703, %v3703
      %v3730 = vpack.c.b16 %v3704, %v3704
      %v3731 = vpack.c.b16 %v3705, %v3705
      %v3732 = vpack.c.b16 %v3706, %v3706
      %v3733 = vpack.c.b16 %v3707, %v3707
      %v3734 = vpack.c.b16 %v3708, %v3708
      %v3735 = vpack.c.b16 %v3709, %v3709
      %v3736 = vpack.c.b16 %v3710, %v3710
      %v3737 = vpack.c.b16 %v3711, %v3711
      %v3738 = vpack.c.b16 %v3712, %v3712
      %v3740 = vshrl.u32 %v3713, 16
      %v3742 = vrot.slane %v3740, 4
      %v3743 = vshll.u32 %v3713, 16
      %v3745 = vrot.slane %v3743, 5
      %v3746 = vor.u32 %v3742, %v3745
      %v3747 = vrot.slane %v3746, 4
      %v3749 = vshll.u32 %v3714, 16
      %v3751 = vrot.slane %v3749, 5
      %v3752 = vsel %vm2870, %v3747, %v3751
      %v3753 = vshrl.u32 %v3714, 16
      %v3755 = vrot.slane %v3753, 4
      %v3756 = vor.u32 %v3755, %v3751
      %v3757 = vrot.slane %v3756, 4
      %v3759 = vshll.u32 %v3715, 16
      %v3761 = vrot.slane %v3759, 5
      %v3762 = vsel %vm2870, %v3757, %v3761
      %v3763 = vshrl.u32 %v3715, 16
      %v3765 = vrot.slane %v3763, 4
      %v3766 = vor.u32 %v3765, %v3761
      %v3767 = vrot.slane %v3766, 4
      %v3769 = vshll.u32 %v3716, 16
      %v3771 = vrot.slane %v3769, 5
      %v3772 = vsel %vm2870, %v3767, %v3771
      %v3773 = vshrl.u32 %v3716, 16
      %v3775 = vrot.slane %v3773, 4
      %v3776 = vor.u32 %v3775, %v3771
      %v3777 = vrot.slane %v3776, 4
      %v3779 = vshll.u32 %v3717, 16
      %v3781 = vrot.slane %v3779, 5
      %v3782 = vsel %vm2870, %v3777, %v3781
      %v3783 = vshrl.u32 %v3717, 16
      %v3785 = vrot.slane %v3783, 4
      %v3786 = vor.u32 %v3785, %v3781
      %v3787 = vrot.slane %v3786, 4
      %v3789 = vshll.u32 %v3718, 16
      %v3791 = vrot.slane %v3789, 5
      %v3792 = vsel %vm2870, %v3787, %v3791
      %v3793 = vshrl.u32 %v3718, 16
      %v3795 = vrot.slane %v3793, 4
      %v3796 = vor.u32 %v3795, %v3791
      %v3797 = vrot.slane %v3796, 4
      %v3799 = vshll.u32 %v3719, 16
      %v3801 = vrot.slane %v3799, 5
      %v3802 = vsel %vm2870, %v3797, %v3801
      %v3803 = vshrl.u32 %v3719, 16
      %v3805 = vrot.slane %v3803, 4
      %v3806 = vor.u32 %v3805, %v3801
      %v3807 = vrot.slane %v3806, 4
      %v3809 = vshll.u32 %v3720, 16
      %v3811 = vrot.slane %v3809, 5
      %v3812 = vsel %vm2870, %v3807, %v3811
      %v3813 = vshrl.u32 %v3720, 16
      %v3815 = vrot.slane %v3813, 4
      %v3816 = vor.u32 %v3815, %v3811
      %v3817 = vrot.slane %v3816, 4
      %v3819 = vshll.u32 %v3721, 16
      %v3821 = vrot.slane %v3819, 5
      %v3822 = vsel %vm2870, %v3817, %v3821
      %v3823 = vshrl.u32 %v3721, 16
      %v3825 = vrot.slane %v3823, 4
      %v3826 = vor.u32 %v3825, %v3821
      %v3827 = vrot.slane %v3826, 4
      %v3829 = vshll.u32 %v3722, 16
      %v3831 = vrot.slane %v3829, 5
      %v3832 = vsel %vm2870, %v3827, %v3831
      %v3833 = vshrl.u32 %v3722, 16
      %v3835 = vrot.slane %v3833, 4
      %v3836 = vor.u32 %v3835, %v3831
      %v3837 = vrot.slane %v3836, 4
      %v3839 = vshll.u32 %v3723, 16
      %v3841 = vrot.slane %v3839, 5
      %v3842 = vsel %vm2870, %v3837, %v3841
      %v3843 = vshrl.u32 %v3723, 16
      %v3845 = vrot.slane %v3843, 4
      %v3846 = vor.u32 %v3845, %v3841
      %v3847 = vrot.slane %v3846, 4
      %v3849 = vshll.u32 %v3724, 16
      %v3851 = vrot.slane %v3849, 5
      %v3852 = vsel %vm2870, %v3847, %v3851
      %v3853 = vshrl.u32 %v3724, 16
      %v3855 = vrot.slane %v3853, 4
      %v3856 = vor.u32 %v3855, %v3851
      %v3857 = vrot.slane %v3856, 4
      %v3859 = vshll.u32 %v3725, 16
      %v3861 = vrot.slane %v3859, 5
      %v3862 = vsel %vm2870, %v3857, %v3861
      %v3863 = vshrl.u32 %v3725, 16
      %v3865 = vrot.slane %v3863, 4
      %v3866 = vor.u32 %v3865, %v3861
      %v3867 = vrot.slane %v3866, 4
      %v3869 = vshll.u32 %v3726, 16
      %v3871 = vrot.slane %v3869, 5
      %v3872 = vsel %vm2870, %v3867, %v3871
      %v3873 = vshrl.u32 %v3726, 16
      %v3875 = vrot.slane %v3873, 4
      %v3876 = vor.u32 %v3875, %v3871
      %v3877 = vrot.slane %v3876, 4
      %v3879 = vshll.u32 %v3727, 16
      %v3881 = vrot.slane %v3879, 5
      %v3882 = vsel %vm2870, %v3877, %v3881
      %v3883 = vshrl.u32 %v3727, 16
      %v3885 = vrot.slane %v3883, 4
      %v3886 = vor.u32 %v3885, %v3881
      %v3887 = vrot.slane %v3886, 4
      %v3889 = vshll.u32 %v3728, 16
      %v3891 = vrot.slane %v3889, 5
      %v3892 = vsel %vm2870, %v3887, %v3891
      %v3893 = vshrl.u32 %v3728, 16
      %v3895 = vrot.slane %v3893, 4
      %v3896 = vor.u32 %v3895, %v3891
      %v3897 = vrot.slane %v3896, 4
      %v3899 = vshll.u32 %v3729, 16
      %v3901 = vrot.slane %v3899, 5
      %v3902 = vsel %vm2870, %v3897, %v3901
      %v3903 = vshrl.u32 %v3729, 16
      %v3905 = vrot.slane %v3903, 4
      %v3906 = vor.u32 %v3905, %v3901
      %v3907 = vrot.slane %v3906, 4
      %v3909 = vshll.u32 %v3730, 16
      %v3911 = vrot.slane %v3909, 5
      %v3912 = vsel %vm2870, %v3907, %v3911
      %v3913 = vshrl.u32 %v3730, 16
      %v3915 = vrot.slane %v3913, 4
      %v3916 = vor.u32 %v3915, %v3911
      %v3917 = vrot.slane %v3916, 4
      %v3919 = vshll.u32 %v3731, 16
      %v3921 = vrot.slane %v3919, 5
      %v3922 = vsel %vm2870, %v3917, %v3921
      %v3923 = vshrl.u32 %v3731, 16
      %v3925 = vrot.slane %v3923, 4
      %v3926 = vor.u32 %v3925, %v3921
      %v3927 = vrot.slane %v3926, 4
      %v3929 = vshll.u32 %v3732, 16
      %v3931 = vrot.slane %v3929, 5
      %v3932 = vsel %vm2870, %v3927, %v3931
      %v3933 = vshrl.u32 %v3732, 16
      %v3935 = vrot.slane %v3933, 4
      %v3936 = vor.u32 %v3935, %v3931
      %v3937 = vrot.slane %v3936, 4
      %v3939 = vshll.u32 %v3733, 16
      %v3941 = vrot.slane %v3939, 5
      %v3942 = vsel %vm2870, %v3937, %v3941
      %v3943 = vshrl.u32 %v3733, 16
      %v3945 = vrot.slane %v3943, 4
      %v3946 = vor.u32 %v3945, %v3941
      %v3947 = vrot.slane %v3946, 4
      %v3949 = vshll.u32 %v3734, 16
      %v3951 = vrot.slane %v3949, 5
      %v3952 = vsel %vm2870, %v3947, %v3951
      %v3953 = vshrl.u32 %v3734, 16
      %v3955 = vrot.slane %v3953, 4
      %v3956 = vor.u32 %v3955, %v3951
      %v3957 = vrot.slane %v3956, 4
      %v3959 = vshll.u32 %v3735, 16
      %v3961 = vrot.slane %v3959, 5
      %v3962 = vsel %vm2870, %v3957, %v3961
      %v3963 = vshrl.u32 %v3735, 16
      %v3965 = vrot.slane %v3963, 4
      %v3966 = vor.u32 %v3965, %v3961
      %v3967 = vrot.slane %v3966, 4
      %v3969 = vshll.u32 %v3736, 16
      %v3971 = vrot.slane %v3969, 5
      %v3972 = vsel %vm2870, %v3967, %v3971
      %v3973 = vshrl.u32 %v3736, 16
      %v3975 = vrot.slane %v3973, 4
      %v3976 = vor.u32 %v3975, %v3971
      %v3977 = vrot.slane %v3976, 4
      %v3979 = vshll.u32 %v3737, 16
      %v3981 = vrot.slane %v3979, 5
      %v3982 = vsel %vm2870, %v3977, %v3981
      %v3983 = vshrl.u32 %v3737, 16
      %v3985 = vrot.slane %v3983, 4
      %v3986 = vor.u32 %v3985, %v3981
      %v3987 = vrot.slane %v3986, 4
      %v3989 = vshll.u32 %v3738, 16
      %v3991 = vrot.slane %v3989, 5
      %v3992 = vsel %vm2870, %v3987, %v3991
      %4018 = vst.msk [vmem:[#allocation3 + $0x4] sm:$0xf] %vm2764, %v3752
      %4019 = vst.msk [vmem:[#allocation3 + $0x10] sm:$0xf] %vm2764, %v3762
      %4020 = vst.msk [vmem:[#allocation3 + $0x1c] sm:$0xf] %vm2764, %v3772
      %4021 = vst.msk [vmem:[#allocation3 + $0x28] sm:$0xf] %vm2764, %v3782
      %4022 = vst.msk [vmem:[#allocation3 + $0x34] sm:$0xf] %vm2764, %v3792
      %4023 = vst.msk [vmem:[#allocation3 + $0x40] sm:$0xf] %vm2764, %v3802
      %4024 = vst.msk [vmem:[#allocation3 + $0x4c] sm:$0xf] %vm2764, %v3812
      %4025 = vst.msk [vmem:[#allocation3 + $0x58] sm:$0xf] %vm2764, %v3822
      %4026 = vst.msk [vmem:[#allocation3 + $0x64] sm:$0xf] %vm2764, %v3832
      %4027 = vst.msk [vmem:[#allocation3 + $0x70] sm:$0xf] %vm2764, %v3842
      %4028 = vst.msk [vmem:[#allocation3 + $0x7c] sm:$0xf] %vm2764, %v3852
      %4029 = vst.msk [vmem:[#allocation3 + $0x88] sm:$0xf] %vm2764, %v3862
      %4030 = vst.msk [vmem:[#allocation3 + $0x94] sm:$0xf] %vm2764, %v3872
      %4031 = vst.msk [vmem:[#allocation3 + $0xa0] sm:$0xf] %vm2764, %v3882
      %4032 = vst.msk [vmem:[#allocation3 + $0xac] sm:$0xf] %vm2764, %v3892
      %4033 = vst.msk [vmem:[#allocation3 + $0xb8] sm:$0xf] %vm2764, %v3902
      %4034 = vst.msk [vmem:[#allocation3 + $0xc4] sm:$0xf] %vm2764, %v3912
      %4035 = vst.msk [vmem:[#allocation3 + $0xd0] sm:$0xf] %vm2764, %v3922
      %4036 = vst.msk [vmem:[#allocation3 + $0xdc] sm:$0xf] %vm2764, %v3932
      %4037 = vst.msk [vmem:[#allocation3 + $0xe8] sm:$0xf] %vm2764, %v3942
      %4038 = vst.msk [vmem:[#allocation3 + $0xf4] sm:$0xf] %vm2764, %v3952
      %4039 = vst.msk [vmem:[#allocation3 + $0x100] sm:$0xf] %vm2764, %v3962
      %4040 = vst.msk [vmem:[#allocation3 + $0x10c] sm:$0xf] %vm2764, %v3972
      %4041 = vst.msk [vmem:[#allocation3 + $0x118] sm:$0xf] %vm2764, %v3982
      %4042 = vst.msk [vmem:[#allocation3 + $0x124] sm:$0xf] %vm2764, %v3992
      %v4043 = vld [vmem:[#allocation4 + $0x8] sm:$0xfe]
      %v4044 = vld [vmem:[#allocation4 + $0x10] sm:$0xff]
      %v4045 = vld [vmem:[#allocation4 + $0x18] sm:$0xff]
      %v4046 = vld [vmem:[#allocation4 + $0x20] sm:$0xff]
      %v4047 = vld [vmem:[#allocation4 + $0x28] sm:$0xff]
      %v4048 = vld [vmem:[#allocation4 + $0x30] sm:$0xff]
      %v4049 = vld [vmem:[#allocation4 + $0x38] sm:$0xff]
      %v4050 = vld [vmem:[#allocation4 + $0x40] sm:$0xff]
      %v4051 = vld [vmem:[#allocation4 + $0x48] sm:$0xff]
      %v4052 = vld [vmem:[#allocation4 + $0x50] sm:$0xff]
      %v4053 = vld [vmem:[#allocation4 + $0x58] sm:$0xff]
      %v4054 = vld [vmem:[#allocation4 + $0x60] sm:$0xff]
      %v4055 = vld [vmem:[#allocation4 + $0x68] sm:$0x1f]
      %v4069 = vunpack.c.l.b16 %v4043
      %v4070 = vunpack.c.h.b16 %v4043
      %v4071 = vunpack.c.l.b16 %v4044
      %v4072 = vunpack.c.h.b16 %v4044
      %v4073 = vunpack.c.l.b16 %v4045
      %v4074 = vunpack.c.h.b16 %v4045
      %v4075 = vunpack.c.l.b16 %v4046
      %v4076 = vunpack.c.h.b16 %v4046
      %v4077 = vunpack.c.l.b16 %v4047
      %v4078 = vunpack.c.h.b16 %v4047
      %v4079 = vunpack.c.l.b16 %v4048
      %v4080 = vunpack.c.h.b16 %v4048
      %v4081 = vunpack.c.l.b16 %v4049
      %v4082 = vunpack.c.h.b16 %v4049
      %v4083 = vunpack.c.l.b16 %v4050
      %v4084 = vunpack.c.h.b16 %v4050
      %v4085 = vunpack.c.l.b16 %v4051
      %v4086 = vunpack.c.h.b16 %v4051
      %v4087 = vunpack.c.l.b16 %v4052
      %v4088 = vunpack.c.h.b16 %v4052
      %v4089 = vunpack.c.l.b16 %v4053
      %v4090 = vunpack.c.h.b16 %v4053
      %v4091 = vunpack.c.l.b16 %v4054
      %v4092 = vunpack.c.h.b16 %v4054
      %v4093 = vunpack.c.l.b16 %v4055
      %v4094 = vunpack.c.h.b16 %v4055
      %v4095 = vpack.c.b16 %v4069, %v4069
      %v4096 = vpack.c.b16 %v4070, %v4070
      %v4097 = vpack.c.b16 %v4071, %v4071
      %v4098 = vpack.c.b16 %v4072, %v4072
      %v4099 = vpack.c.b16 %v4073, %v4073
      %v4100 = vpack.c.b16 %v4074, %v4074
      %v4101 = vpack.c.b16 %v4075, %v4075
      %v4102 = vpack.c.b16 %v4076, %v4076
      %v4103 = vpack.c.b16 %v4077, %v4077
      %v4104 = vpack.c.b16 %v4078, %v4078
      %v4105 = vpack.c.b16 %v4079, %v4079
      %v4106 = vpack.c.b16 %v4080, %v4080
      %v4107 = vpack.c.b16 %v4081, %v4081
      %v4108 = vpack.c.b16 %v4082, %v4082
      %v4109 = vpack.c.b16 %v4083, %v4083
      %v4110 = vpack.c.b16 %v4084, %v4084
      %v4111 = vpack.c.b16 %v4085, %v4085
      %v4112 = vpack.c.b16 %v4086, %v4086
      %v4113 = vpack.c.b16 %v4087, %v4087
      %v4114 = vpack.c.b16 %v4088, %v4088
      %v4115 = vpack.c.b16 %v4089, %v4089
      %v4116 = vpack.c.b16 %v4090, %v4090
      %v4117 = vpack.c.b16 %v4091, %v4091
      %v4118 = vpack.c.b16 %v4092, %v4092
      %v4119 = vpack.c.b16 %v4093, %v4093
      %v4120 = vpack.c.b16 %v4094, %v4094
      %v4121 = vrot.slane %v4095, 5
      %v4122 = vrot.slane %v4121, 4
      %v4123 = vrot.slane %v4096, 5
      %v4124 = vsel %vm3306, %v4122, %v4123
      %v4125 = vrot.slane %v4123, 4
      %v4126 = vrot.slane %v4097, 5
      %v4127 = vsel %vm3306, %v4125, %v4126
      %v4128 = vrot.slane %v4126, 4
      %v4129 = vrot.slane %v4098, 5
      %v4130 = vsel %vm3306, %v4128, %v4129
      %v4131 = vrot.slane %v4129, 4
      %v4132 = vrot.slane %v4099, 5
      %v4133 = vsel %vm3306, %v4131, %v4132
      %v4134 = vrot.slane %v4132, 4
      %v4135 = vrot.slane %v4100, 5
      %v4136 = vsel %vm3306, %v4134, %v4135
      %v4137 = vrot.slane %v4135, 4
      %v4138 = vrot.slane %v4101, 5
      %v4139 = vsel %vm3306, %v4137, %v4138
      %v4140 = vrot.slane %v4138, 4
      %v4141 = vrot.slane %v4102, 5
      %v4142 = vsel %vm3306, %v4140, %v4141
      %v4143 = vrot.slane %v4141, 4
      %v4144 = vrot.slane %v4103, 5
      %v4145 = vsel %vm3306, %v4143, %v4144
      %v4146 = vrot.slane %v4144, 4
      %v4147 = vrot.slane %v4104, 5
      %v4148 = vsel %vm3306, %v4146, %v4147
      %v4149 = vrot.slane %v4147, 4
      %v4150 = vrot.slane %v4105, 5
      %v4151 = vsel %vm3306, %v4149, %v4150
      %v4152 = vrot.slane %v4150, 4
      %v4153 = vrot.slane %v4106, 5
      %v4154 = vsel %vm3306, %v4152, %v4153
      %v4155 = vrot.slane %v4153, 4
      %v4156 = vrot.slane %v4107, 5
      %v4157 = vsel %vm3306, %v4155, %v4156
      %v4158 = vrot.slane %v4156, 4
      %v4159 = vrot.slane %v4108, 5
      %v4160 = vsel %vm3306, %v4158, %v4159
      %v4161 = vrot.slane %v4159, 4
      %v4162 = vrot.slane %v4109, 5
      %v4163 = vsel %vm3306, %v4161, %v4162
      %v4164 = vrot.slane %v4162, 4
      %v4165 = vrot.slane %v4110, 5
      %v4166 = vsel %vm3306, %v4164, %v4165
      %v4167 = vrot.slane %v4165, 4
      %v4168 = vrot.slane %v4111, 5
      %v4169 = vsel %vm3306, %v4167, %v4168
      %v4170 = vrot.slane %v4168, 4
      %v4171 = vrot.slane %v4112, 5
      %v4172 = vsel %vm3306, %v4170, %v4171
      %v4173 = vrot.slane %v4171, 4
      %v4174 = vrot.slane %v4113, 5
      %v4175 = vsel %vm3306, %v4173, %v4174
      %v4176 = vrot.slane %v4174, 4
      %v4177 = vrot.slane %v4114, 5
      %v4178 = vsel %vm3306, %v4176, %v4177
      %v4179 = vrot.slane %v4177, 4
      %v4180 = vrot.slane %v4115, 5
      %v4181 = vsel %vm3306, %v4179, %v4180
      %v4182 = vrot.slane %v4180, 4
      %v4183 = vrot.slane %v4116, 5
      %v4184 = vsel %vm3306, %v4182, %v4183
      %v4185 = vrot.slane %v4183, 4
      %v4186 = vrot.slane %v4117, 5
      %v4187 = vsel %vm3306, %v4185, %v4186
      %v4188 = vrot.slane %v4186, 4
      %v4189 = vrot.slane %v4118, 5
      %v4190 = vsel %vm3306, %v4188, %v4189
      %v4191 = vrot.slane %v4189, 4
      %v4192 = vrot.slane %v4119, 5
      %v4193 = vsel %vm3306, %v4191, %v4192
      %v4194 = vrot.slane %v4192, 4
      %v4195 = vrot.slane %v4120, 5
      %v4196 = vsel %vm3306, %v4194, %v4195
      %4197 = vrot.lane.b32.xlu0 %v4124, 32
      %v4198 = vpop.permute.xlu0 %4197
      %4199 = vrot.lane.b32.xlu0 %v4127, 32
      %v4200 = vpop.permute.xlu0 %4199
      %4201 = vrot.lane.b32.xlu0 %v4130, 32
      %v4202 = vpop.permute.xlu0 %4201
      %4203 = vrot.lane.b32.xlu0 %v4133, 32
      %v4204 = vpop.permute.xlu0 %4203
      %4205 = vrot.lane.b32.xlu0 %v4136, 32
      %v4206 = vpop.permute.xlu0 %4205
      %4207 = vrot.lane.b32.xlu0 %v4139, 32
      %v4208 = vpop.permute.xlu0 %4207
      %4209 = vrot.lane.b32.xlu0 %v4142, 32
      %v4210 = vpop.permute.xlu0 %4209
      %4211 = vrot.lane.b32.xlu0 %v4145, 32
      %v4212 = vpop.permute.xlu0 %4211
      %4213 = vrot.lane.b32.xlu0 %v4148, 32
      %v4214 = vpop.permute.xlu0 %4213
      %4215 = vrot.lane.b32.xlu0 %v4151, 32
      %v4216 = vpop.permute.xlu0 %4215
      %4217 = vrot.lane.b32.xlu0 %v4154, 32
      %v4218 = vpop.permute.xlu0 %4217
      %4219 = vrot.lane.b32.xlu0 %v4157, 32
      %v4220 = vpop.permute.xlu0 %4219
      %4221 = vrot.lane.b32.xlu0 %v4160, 32
      %v4222 = vpop.permute.xlu0 %4221
      %4223 = vrot.lane.b32.xlu0 %v4163, 32
      %v4224 = vpop.permute.xlu0 %4223
      %4225 = vrot.lane.b32.xlu0 %v4166, 32
      %v4226 = vpop.permute.xlu0 %4225
      %4227 = vrot.lane.b32.xlu0 %v4169, 32
      %v4228 = vpop.permute.xlu0 %4227
      %4229 = vrot.lane.b32.xlu0 %v4172, 32
      %v4230 = vpop.permute.xlu0 %4229
      %4231 = vrot.lane.b32.xlu0 %v4175, 32
      %v4232 = vpop.permute.xlu0 %4231
      %4233 = vrot.lane.b32.xlu0 %v4178, 32
      %v4234 = vpop.permute.xlu0 %4233
      %4235 = vrot.lane.b32.xlu0 %v4181, 32
      %v4236 = vpop.permute.xlu0 %4235
      %4237 = vrot.lane.b32.xlu0 %v4184, 32
      %v4238 = vpop.permute.xlu0 %4237
      %4239 = vrot.lane.b32.xlu0 %v4187, 32
      %v4240 = vpop.permute.xlu0 %4239
      %4241 = vrot.lane.b32.xlu0 %v4190, 32
      %v4242 = vpop.permute.xlu0 %4241
      %4243 = vrot.lane.b32.xlu0 %v4193, 32
      %v4244 = vpop.permute.xlu0 %4243
      %4245 = vrot.lane.b32.xlu0 %v4196, 32
      %v4246 = vpop.permute.xlu0 %4245
      %4272 = vst.msk [vmem:[#allocation3 + $0x4] sm:$0xf] %vm3200, %v4198
      %4273 = vst.msk [vmem:[#allocation3 + $0x10] sm:$0xf] %vm3200, %v4200
      %4274 = vst.msk [vmem:[#allocation3 + $0x1c] sm:$0xf] %vm3200, %v4202
      %4275 = vst.msk [vmem:[#allocation3 + $0x28] sm:$0xf] %vm3200, %v4204
      %4276 = vst.msk [vmem:[#allocation3 + $0x34] sm:$0xf] %vm3200, %v4206
      %4277 = vst.msk [vmem:[#allocation3 + $0x40] sm:$0xf] %vm3200, %v4208
      %4278 = vst.msk [vmem:[#allocation3 + $0x4c] sm:$0xf] %vm3200, %v4210
      %4279 = vst.msk [vmem:[#allocation3 + $0x58] sm:$0xf] %vm3200, %v4212
      %4280 = vst.msk [vmem:[#allocation3 + $0x64] sm:$0xf] %vm3200, %v4214
      %4281 = vst.msk [vmem:[#allocation3 + $0x70] sm:$0xf] %vm3200, %v4216
      %4282 = vst.msk [vmem:[#allocation3 + $0x7c] sm:$0xf] %vm3200, %v4218
      %4283 = vst.msk [vmem:[#allocation3 + $0x88] sm:$0xf] %vm3200, %v4220
      %4284 = vst.msk [vmem:[#allocation3 + $0x94] sm:$0xf] %vm3200, %v4222
      %4285 = vst.msk [vmem:[#allocation3 + $0xa0] sm:$0xf] %vm3200, %v4224
      %4286 = vst.msk [vmem:[#allocation3 + $0xac] sm:$0xf] %vm3200, %v4226
      %4287 = vst.msk [vmem:[#allocation3 + $0xb8] sm:$0xf] %vm3200, %v4228
      %4288 = vst.msk [vmem:[#allocation3 + $0xc4] sm:$0xf] %vm3200, %v4230
      %4289 = vst.msk [vmem:[#allocation3 + $0xd0] sm:$0xf] %vm3200, %v4232
      %4290 = vst.msk [vmem:[#allocation3 + $0xdc] sm:$0xf] %vm3200, %v4234
      %4291 = vst.msk [vmem:[#allocation3 + $0xe8] sm:$0xf] %vm3200, %v4236
      %4292 = vst.msk [vmem:[#allocation3 + $0xf4] sm:$0xf] %vm3200, %v4238
      %4293 = vst.msk [vmem:[#allocation3 + $0x100] sm:$0xf] %vm3200, %v4240
      %4294 = vst.msk [vmem:[#allocation3 + $0x10c] sm:$0xf] %vm3200, %v4242
      %4295 = vst.msk [vmem:[#allocation3 + $0x118] sm:$0xf] %vm3200, %v4244
      %4296 = vst.msk [vmem:[#allocation3 + $0x124] sm:$0xf] %vm3200, %v4246
      %v4297 = vld [vmem:[#allocation4 + $0x10] sm:$0xff]
      %v4298 = vld [vmem:[#allocation4 + $0x18] sm:$0xff]
      %v4299 = vld [vmem:[#allocation4 + $0x20] sm:$0xff]
      %v4300 = vld [vmem:[#allocation4 + $0x28] sm:$0xff]
      %v4301 = vld [vmem:[#allocation4 + $0x30] sm:$0xff]
      %v4302 = vld [vmem:[#allocation4 + $0x38] sm:$0xff]
      %v4303 = vld [vmem:[#allocation4 + $0x40] sm:$0xff]
      %v4304 = vld [vmem:[#allocation4 + $0x48] sm:$0xff]
      %v4305 = vld [vmem:[#allocation4 + $0x50] sm:$0xff]
      %v4306 = vld [vmem:[#allocation4 + $0x58] sm:$0xff]
      %v4307 = vld [vmem:[#allocation4 + $0x60] sm:$0xff]
      %v4308 = vld [vmem:[#allocation4 + $0x68] sm:$0xff]
      %v4309 = vld [vmem:[#allocation4 + $0x70] sm:$0xf]
      %v4323 = vunpack.c.l.b16 %v4297
      %v4324 = vunpack.c.h.b16 %v4297
      %v4325 = vunpack.c.l.b16 %v4298
      %v4326 = vunpack.c.h.b16 %v4298
      %v4327 = vunpack.c.l.b16 %v4299
      %v4328 = vunpack.c.h.b16 %v4299
      %v4329 = vunpack.c.l.b16 %v4300
      %v4330 = vunpack.c.h.b16 %v4300
      %v4331 = vunpack.c.l.b16 %v4301
      %v4332 = vunpack.c.h.b16 %v4301
      %v4333 = vunpack.c.l.b16 %v4302
      %v4334 = vunpack.c.h.b16 %v4302
      %v4335 = vunpack.c.l.b16 %v4303
      %v4336 = vunpack.c.h.b16 %v4303
      %v4337 = vunpack.c.l.b16 %v4304
      %v4338 = vunpack.c.h.b16 %v4304
      %v4339 = vunpack.c.l.b16 %v4305
      %v4340 = vunpack.c.h.b16 %v4305
      %v4341 = vunpack.c.l.b16 %v4306
      %v4342 = vunpack.c.h.b16 %v4306
      %v4343 = vunpack.c.l.b16 %v4307
      %v4344 = vunpack.c.h.b16 %v4307
      %v4345 = vunpack.c.l.b16 %v4308
      %v4346 = vunpack.c.h.b16 %v4308
      %v4347 = vunpack.c.l.b16 %v4309
      %v4348 = vpack.c.b16 %v4323, %v4323
      %v4349 = vpack.c.b16 %v4324, %v4324
      %v4350 = vpack.c.b16 %v4325, %v4325
      %v4351 = vpack.c.b16 %v4326, %v4326
      %v4352 = vpack.c.b16 %v4327, %v4327
      %v4353 = vpack.c.b16 %v4328, %v4328
      %v4354 = vpack.c.b16 %v4329, %v4329
      %v4355 = vpack.c.b16 %v4330, %v4330
      %v4356 = vpack.c.b16 %v4331, %v4331
      %v4357 = vpack.c.b16 %v4332, %v4332
      %v4358 = vpack.c.b16 %v4333, %v4333
      %v4359 = vpack.c.b16 %v4334, %v4334
      %v4360 = vpack.c.b16 %v4335, %v4335
      %v4361 = vpack.c.b16 %v4336, %v4336
      %v4362 = vpack.c.b16 %v4337, %v4337
      %v4363 = vpack.c.b16 %v4338, %v4338
      %v4364 = vpack.c.b16 %v4339, %v4339
      %v4365 = vpack.c.b16 %v4340, %v4340
      %v4366 = vpack.c.b16 %v4341, %v4341
      %v4367 = vpack.c.b16 %v4342, %v4342
      %v4368 = vpack.c.b16 %v4343, %v4343
      %v4369 = vpack.c.b16 %v4344, %v4344
      %v4370 = vpack.c.b16 %v4345, %v4345
      %v4371 = vpack.c.b16 %v4346, %v4346
      %v4372 = vpack.c.b16 %v4347, %v4347
      %4373 = vrot.lane.b32.xlu0 %v4348, 64
      %v4374 = vpop.permute.xlu0 %4373
      %4375 = vrot.lane.b32.xlu0 %v4349, 64
      %v4376 = vpop.permute.xlu0 %4375
      %4377 = vrot.lane.b32.xlu0 %v4350, 64
      %v4378 = vpop.permute.xlu0 %4377
      %4379 = vrot.lane.b32.xlu0 %v4351, 64
      %v4380 = vpop.permute.xlu0 %4379
      %4381 = vrot.lane.b32.xlu0 %v4352, 64
      %v4382 = vpop.permute.xlu0 %4381
      %4383 = vrot.lane.b32.xlu0 %v4353, 64
      %v4384 = vpop.permute.xlu0 %4383
      %4385 = vrot.lane.b32.xlu0 %v4354, 64
      %v4386 = vpop.permute.xlu0 %4385
      %4387 = vrot.lane.b32.xlu0 %v4355, 64
      %v4388 = vpop.permute.xlu0 %4387
      %4389 = vrot.lane.b32.xlu0 %v4356, 64
      %v4390 = vpop.permute.xlu0 %4389
      %4391 = vrot.lane.b32.xlu0 %v4357, 64
      %v4392 = vpop.permute.xlu0 %4391
      %4393 = vrot.lane.b32.xlu0 %v4358, 64
      %v4394 = vpop.permute.xlu0 %4393
      %4395 = vrot.lane.b32.xlu0 %v4359, 64
      %v4396 = vpop.permute.xlu0 %4395
      %4397 = vrot.lane.b32.xlu0 %v4360, 64
      %v4398 = vpop.permute.xlu0 %4397
      %4399 = vrot.lane.b32.xlu0 %v4361, 64
      %v4400 = vpop.permute.xlu0 %4399
      %4401 = vrot.lane.b32.xlu0 %v4362, 64
      %v4402 = vpop.permute.xlu0 %4401
      %4403 = vrot.lane.b32.xlu0 %v4363, 64
      %v4404 = vpop.permute.xlu0 %4403
      %4405 = vrot.lane.b32.xlu0 %v4364, 64
      %v4406 = vpop.permute.xlu0 %4405
      %4407 = vrot.lane.b32.xlu0 %v4365, 64
      %v4408 = vpop.permute.xlu0 %4407
      %4409 = vrot.lane.b32.xlu0 %v4366, 64
      %v4410 = vpop.permute.xlu0 %4409
      %4411 = vrot.lane.b32.xlu0 %v4367, 64
      %v4412 = vpop.permute.xlu0 %4411
      %4413 = vrot.lane.b32.xlu0 %v4368, 64
      %v4414 = vpop.permute.xlu0 %4413
      %4415 = vrot.lane.b32.xlu0 %v4369, 64
      %v4416 = vpop.permute.xlu0 %4415
      %4417 = vrot.lane.b32.xlu0 %v4370, 64
      %v4418 = vpop.permute.xlu0 %4417
      %4419 = vrot.lane.b32.xlu0 %v4371, 64
      %v4420 = vpop.permute.xlu0 %4419
      %4421 = vrot.lane.b32.xlu0 %v4372, 64
      %v4422 = vpop.permute.xlu0 %4421
      %4448 = vst.msk [vmem:[#allocation3 + $0x4] sm:$0xf] %vm3458, %v4374
      %4449 = vst.msk [vmem:[#allocation3 + $0x10] sm:$0xf] %vm3458, %v4376
      %4450 = vst.msk [vmem:[#allocation3 + $0x1c] sm:$0xf] %vm3458, %v4378
      %4451 = vst.msk [vmem:[#allocation3 + $0x28] sm:$0xf] %vm3458, %v4380
      %4452 = vst.msk [vmem:[#allocation3 + $0x34] sm:$0xf] %vm3458, %v4382
      %4453 = vst.msk [vmem:[#allocation3 + $0x40] sm:$0xf] %vm3458, %v4384
      %4454 = vst.msk [vmem:[#allocation3 + $0x4c] sm:$0xf] %vm3458, %v4386
      %4455 = vst.msk [vmem:[#allocation3 + $0x58] sm:$0xf] %vm3458, %v4388
      %4456 = vst.msk [vmem:[#allocation3 + $0x64] sm:$0xf] %vm3458, %v4390
      %4457 = vst.msk [vmem:[#allocation3 + $0x70] sm:$0xf] %vm3458, %v4392
      %4458 = vst.msk [vmem:[#allocation3 + $0x7c] sm:$0xf] %vm3458, %v4394
      %4459 = vst.msk [vmem:[#allocation3 + $0x88] sm:$0xf] %vm3458, %v4396
      %4460 = vst.msk [vmem:[#allocation3 + $0x94] sm:$0xf] %vm3458, %v4398
      %4461 = vst.msk [vmem:[#allocation3 + $0xa0] sm:$0xf] %vm3458, %v4400
      %4462 = vst.msk [vmem:[#allocation3 + $0xac] sm:$0xf] %vm3458, %v4402
      %4463 = vst.msk [vmem:[#allocation3 + $0xb8] sm:$0xf] %vm3458, %v4404
      %4464 = vst.msk [vmem:[#allocation3 + $0xc4] sm:$0xf] %vm3458, %v4406
      %4465 = vst.msk [vmem:[#allocation3 + $0xd0] sm:$0xf] %vm3458, %v4408
      %4466 = vst.msk [vmem:[#allocation3 + $0xdc] sm:$0xf] %vm3458, %v4410
      %4467 = vst.msk [vmem:[#allocation3 + $0xe8] sm:$0xf] %vm3458, %v4412
      %4468 = vst.msk [vmem:[#allocation3 + $0xf4] sm:$0xf] %vm3458, %v4414
      %4469 = vst.msk [vmem:[#allocation3 + $0x100] sm:$0xf] %vm3458, %v4416
      %4470 = vst.msk [vmem:[#allocation3 + $0x10c] sm:$0xf] %vm3458, %v4418
      %4471 = vst.msk [vmem:[#allocation3 + $0x118] sm:$0xf] %vm3458, %v4420
      %4472 = vst.msk [vmem:[#allocation3 + $0x124] sm:$0xf] %vm3458, %v4422
      %v4473 = vld [vmem:[#allocation4 + $0x10] sm:$0xff]
      %v4474 = vld [vmem:[#allocation4 + $0x18] sm:$0xff]
      %v4475 = vld [vmem:[#allocation4 + $0x20] sm:$0xff]
      %v4476 = vld [vmem:[#allocation4 + $0x28] sm:$0xff]
      %v4477 = vld [vmem:[#allocation4 + $0x30] sm:$0xff]
      %v4478 = vld [vmem:[#allocation4 + $0x38] sm:$0xff]
      %v4479 = vld [vmem:[#allocation4 + $0x40] sm:$0xff]
      %v4480 = vld [vmem:[#allocation4 + $0x48] sm:$0xff]
      %v4481 = vld [vmem:[#allocation4 + $0x50] sm:$0xff]
      %v4482 = vld [vmem:[#allocation4 + $0x58] sm:$0xff]
      %v4483 = vld [vmem:[#allocation4 + $0x60] sm:$0xff]
      %v4484 = vld [vmem:[#allocation4 + $0x68] sm:$0xff]
      %v4485 = vld [vmem:[#allocation4 + $0x70] sm:$0x1f]
      %v4499 = vunpack.c.l.b16 %v4473
      %v4500 = vunpack.c.h.b16 %v4473
      %v4501 = vunpack.c.l.b16 %v4474
      %v4502 = vunpack.c.h.b16 %v4474
      %v4503 = vunpack.c.l.b16 %v4475
      %v4504 = vunpack.c.h.b16 %v4475
      %v4505 = vunpack.c.l.b16 %v4476
      %v4506 = vunpack.c.h.b16 %v4476
      %v4507 = vunpack.c.l.b16 %v4477
      %v4508 = vunpack.c.h.b16 %v4477
      %v4509 = vunpack.c.l.b16 %v4478
      %v4510 = vunpack.c.h.b16 %v4478
      %v4511 = vunpack.c.l.b16 %v4479
      %v4512 = vunpack.c.h.b16 %v4479
      %v4513 = vunpack.c.l.b16 %v4480
      %v4514 = vunpack.c.h.b16 %v4480
      %v4515 = vunpack.c.l.b16 %v4481
      %v4516 = vunpack.c.h.b16 %v4481
      %v4517 = vunpack.c.l.b16 %v4482
      %v4518 = vunpack.c.h.b16 %v4482
      %v4519 = vunpack.c.l.b16 %v4483
      %v4520 = vunpack.c.h.b16 %v4483
      %v4521 = vunpack.c.l.b16 %v4484
      %v4522 = vunpack.c.h.b16 %v4484
      %v4523 = vunpack.c.l.b16 %v4485
      %v4524 = vunpack.c.h.b16 %v4485
      %v4525 = vpack.c.b16 %v4499, %v4499
      %v4526 = vpack.c.b16 %v4500, %v4500
      %v4527 = vpack.c.b16 %v4501, %v4501
      %v4528 = vpack.c.b16 %v4502, %v4502
      %v4529 = vpack.c.b16 %v4503, %v4503
      %v4530 = vpack.c.b16 %v4504, %v4504
      %v4531 = vpack.c.b16 %v4505, %v4505
      %v4532 = vpack.c.b16 %v4506, %v4506
      %v4533 = vpack.c.b16 %v4507, %v4507
      %v4534 = vpack.c.b16 %v4508, %v4508
      %v4535 = vpack.c.b16 %v4509, %v4509
      %v4536 = vpack.c.b16 %v4510, %v4510
      %v4537 = vpack.c.b16 %v4511, %v4511
      %v4538 = vpack.c.b16 %v4512, %v4512
      %v4539 = vpack.c.b16 %v4513, %v4513
      %v4540 = vpack.c.b16 %v4514, %v4514
      %v4541 = vpack.c.b16 %v4515, %v4515
      %v4542 = vpack.c.b16 %v4516, %v4516
      %v4543 = vpack.c.b16 %v4517, %v4517
      %v4544 = vpack.c.b16 %v4518, %v4518
      %v4545 = vpack.c.b16 %v4519, %v4519
      %v4546 = vpack.c.b16 %v4520, %v4520
      %v4547 = vpack.c.b16 %v4521, %v4521
      %v4548 = vpack.c.b16 %v4522, %v4522
      %v4549 = vpack.c.b16 %v4523, %v4523
      %v4550 = vpack.c.b16 %v4524, %v4524
      %v4552 = vshrl.u32 %v4525, 16
      %v4554 = vrot.slane %v4552, 4
      %v4555 = vshll.u32 %v4525, 16
      %v4557 = vrot.slane %v4555, 5
      %v4558 = vor.u32 %v4554, %v4557
      %v4559 = vrot.slane %v4558, 4
      %v4561 = vshll.u32 %v4526, 16
      %v4563 = vrot.slane %v4561, 5
      %v4564 = vsel %vm2870, %v4559, %v4563
      %v4565 = vshrl.u32 %v4526, 16
      %v4567 = vrot.slane %v4565, 4
      %v4568 = vor.u32 %v4567, %v4563
      %v4569 = vrot.slane %v4568, 4
      %v4571 = vshll.u32 %v4527, 16
      %v4573 = vrot.slane %v4571, 5
      %v4574 = vsel %vm2870, %v4569, %v4573
      %v4575 = vshrl.u32 %v4527, 16
      %v4577 = vrot.slane %v4575, 4
      %v4578 = vor.u32 %v4577, %v4573
      %v4579 = vrot.slane %v4578, 4
      %v4581 = vshll.u32 %v4528, 16
      %v4583 = vrot.slane %v4581, 5
      %v4584 = vsel %vm2870, %v4579, %v4583
      %v4585 = vshrl.u32 %v4528, 16
      %v4587 = vrot.slane %v4585, 4
      %v4588 = vor.u32 %v4587, %v4583
      %v4589 = vrot.slane %v4588, 4
      %v4591 = vshll.u32 %v4529, 16
      %v4593 = vrot.slane %v4591, 5
      %v4594 = vsel %vm2870, %v4589, %v4593
      %v4595 = vshrl.u32 %v4529, 16
      %v4597 = vrot.slane %v4595, 4
      %v4598 = vor.u32 %v4597, %v4593
      %v4599 = vrot.slane %v4598, 4
      %v4601 = vshll.u32 %v4530, 16
      %v4603 = vrot.slane %v4601, 5
      %v4604 = vsel %vm2870, %v4599, %v4603
      %v4605 = vshrl.u32 %v4530, 16
      %v4607 = vrot.slane %v4605, 4
      %v4608 = vor.u32 %v4607, %v4603
      %v4609 = vrot.slane %v4608, 4
      %v4611 = vshll.u32 %v4531, 16
      %v4613 = vrot.slane %v4611, 5
      %v4614 = vsel %vm2870, %v4609, %v4613
      %v4615 = vshrl.u32 %v4531, 16
      %v4617 = vrot.slane %v4615, 4
      %v4618 = vor.u32 %v4617, %v4613
      %v4619 = vrot.slane %v4618, 4
      %v4621 = vshll.u32 %v4532, 16
      %v4623 = vrot.slane %v4621, 5
      %v4624 = vsel %vm2870, %v4619, %v4623
      %v4625 = vshrl.u32 %v4532, 16
      %v4627 = vrot.slane %v4625, 4
      %v4628 = vor.u32 %v4627, %v4623
      %v4629 = vrot.slane %v4628, 4
      %v4631 = vshll.u32 %v4533, 16
      %v4633 = vrot.slane %v4631, 5
      %v4634 = vsel %vm2870, %v4629, %v4633
      %v4635 = vshrl.u32 %v4533, 16
      %v4637 = vrot.slane %v4635, 4
      %v4638 = vor.u32 %v4637, %v4633
      %v4639 = vrot.slane %v4638, 4
      %v4641 = vshll.u32 %v4534, 16
      %v4643 = vrot.slane %v4641, 5
      %v4644 = vsel %vm2870, %v4639, %v4643
      %v4645 = vshrl.u32 %v4534, 16
      %v4647 = vrot.slane %v4645, 4
      %v4648 = vor.u32 %v4647, %v4643
      %v4649 = vrot.slane %v4648, 4
      %v4651 = vshll.u32 %v4535, 16
      %v4653 = vrot.slane %v4651, 5
      %v4654 = vsel %vm2870, %v4649, %v4653
      %v4655 = vshrl.u32 %v4535, 16
      %v4657 = vrot.slane %v4655, 4
      %v4658 = vor.u32 %v4657, %v4653
      %v4659 = vrot.slane %v4658, 4
      %v4661 = vshll.u32 %v4536, 16
      %v4663 = vrot.slane %v4661, 5
      %v4664 = vsel %vm2870, %v4659, %v4663
      %v4665 = vshrl.u32 %v4536, 16
      %v4667 = vrot.slane %v4665, 4
      %v4668 = vor.u32 %v4667, %v4663
      %v4669 = vrot.slane %v4668, 4
      %v4671 = vshll.u32 %v4537, 16
      %v4673 = vrot.slane %v4671, 5
      %v4674 = vsel %vm2870, %v4669, %v4673
      %v4675 = vshrl.u32 %v4537, 16
      %v4677 = vrot.slane %v4675, 4
      %v4678 = vor.u32 %v4677, %v4673
      %v4679 = vrot.slane %v4678, 4
      %v4681 = vshll.u32 %v4538, 16
      %v4683 = vrot.slane %v4681, 5
      %v4684 = vsel %vm2870, %v4679, %v4683
      %v4685 = vshrl.u32 %v4538, 16
      %v4687 = vrot.slane %v4685, 4
      %v4688 = vor.u32 %v4687, %v4683
      %v4689 = vrot.slane %v4688, 4
      %v4691 = vshll.u32 %v4539, 16
      %v4693 = vrot.slane %v4691, 5
      %v4694 = vsel %vm2870, %v4689, %v4693
      %v4695 = vshrl.u32 %v4539, 16
      %v4697 = vrot.slane %v4695, 4
      %v4698 = vor.u32 %v4697, %v4693
      %v4699 = vrot.slane %v4698, 4
      %v4701 = vshll.u32 %v4540, 16
      %v4703 = vrot.slane %v4701, 5
      %v4704 = vsel %vm2870, %v4699, %v4703
      %v4705 = vshrl.u32 %v4540, 16
      %v4707 = vrot.slane %v4705, 4
      %v4708 = vor.u32 %v4707, %v4703
      %v4709 = vrot.slane %v4708, 4
      %v4711 = vshll.u32 %v4541, 16
      %v4713 = vrot.slane %v4711, 5
      %v4714 = vsel %vm2870, %v4709, %v4713
      %v4715 = vshrl.u32 %v4541, 16
      %v4717 = vrot.slane %v4715, 4
      %v4718 = vor.u32 %v4717, %v4713
      %v4719 = vrot.slane %v4718, 4
      %v4721 = vshll.u32 %v4542, 16
      %v4723 = vrot.slane %v4721, 5
      %v4724 = vsel %vm2870, %v4719, %v4723
      %v4725 = vshrl.u32 %v4542, 16
      %v4727 = vrot.slane %v4725, 4
      %v4728 = vor.u32 %v4727, %v4723
      %v4729 = vrot.slane %v4728, 4
      %v4731 = vshll.u32 %v4543, 16
      %v4733 = vrot.slane %v4731, 5
      %v4734 = vsel %vm2870, %v4729, %v4733
      %v4735 = vshrl.u32 %v4543, 16
      %v4737 = vrot.slane %v4735, 4
      %v4738 = vor.u32 %v4737, %v4733
      %v4739 = vrot.slane %v4738, 4
      %v4741 = vshll.u32 %v4544, 16
      %v4743 = vrot.slane %v4741, 5
      %v4744 = vsel %vm2870, %v4739, %v4743
      %v4745 = vshrl.u32 %v4544, 16
      %v4747 = vrot.slane %v4745, 4
      %v4748 = vor.u32 %v4747, %v4743
      %v4749 = vrot.slane %v4748, 4
      %v4751 = vshll.u32 %v4545, 16
      %v4753 = vrot.slane %v4751, 5
      %v4754 = vsel %vm2870, %v4749, %v4753
      %v4755 = vshrl.u32 %v4545, 16
      %v4757 = vrot.slane %v4755, 4
      %v4758 = vor.u32 %v4757, %v4753
      %v4759 = vrot.slane %v4758, 4
      %v4761 = vshll.u32 %v4546, 16
      %v4763 = vrot.slane %v4761, 5
      %v4764 = vsel %vm2870, %v4759, %v4763
      %v4765 = vshrl.u32 %v4546, 16
      %v4767 = vrot.slane %v4765, 4
      %v4768 = vor.u32 %v4767, %v4763
      %v4769 = vrot.slane %v4768, 4
      %v4771 = vshll.u32 %v4547, 16
      %v4773 = vrot.slane %v4771, 5
      %v4774 = vsel %vm2870, %v4769, %v4773
      %v4775 = vshrl.u32 %v4547, 16
      %v4777 = vrot.slane %v4775, 4
      %v4778 = vor.u32 %v4777, %v4773
      %v4779 = vrot.slane %v4778, 4
      %v4781 = vshll.u32 %v4548, 16
      %v4783 = vrot.slane %v4781, 5
      %v4784 = vsel %vm2870, %v4779, %v4783
      %v4785 = vshrl.u32 %v4548, 16
      %v4787 = vrot.slane %v4785, 4
      %v4788 = vor.u32 %v4787, %v4783
      %v4789 = vrot.slane %v4788, 4
      %v4791 = vshll.u32 %v4549, 16
      %v4793 = vrot.slane %v4791, 5
      %v4794 = vsel %vm2870, %v4789, %v4793
      %v4795 = vshrl.u32 %v4549, 16
      %v4797 = vrot.slane %v4795, 4
      %v4798 = vor.u32 %v4797, %v4793
      %v4799 = vrot.slane %v4798, 4
      %v4801 = vshll.u32 %v4550, 16
      %v4803 = vrot.slane %v4801, 5
      %v4804 = vsel %vm2870, %v4799, %v4803
      %4805 = vrot.lane.b32.xlu0 %v4564, 96
      %v4806 = vpop.permute.xlu0 %4805
      %4807 = vrot.lane.b32.xlu0 %v4574, 96
      %v4808 = vpop.permute.xlu0 %4807
      %4809 = vrot.lane.b32.xlu0 %v4584, 96
      %v4810 = vpop.permute.xlu0 %4809
      %4811 = vrot.lane.b32.xlu0 %v4594, 96
      %v4812 = vpop.permute.xlu0 %4811
      %4813 = vrot.lane.b32.xlu0 %v4604, 96
      %v4814 = vpop.permute.xlu0 %4813
      %4815 = vrot.lane.b32.xlu0 %v4614, 96
      %v4816 = vpop.permute.xlu0 %4815
      %4817 = vrot.lane.b32.xlu0 %v4624, 96
      %v4818 = vpop.permute.xlu0 %4817
      %4819 = vrot.lane.b32.xlu0 %v4634, 96
      %v4820 = vpop.permute.xlu0 %4819
      %4821 = vrot.lane.b32.xlu0 %v4644, 96
      %v4822 = vpop.permute.xlu0 %4821
      %4823 = vrot.lane.b32.xlu0 %v4654, 96
      %v4824 = vpop.permute.xlu0 %4823
      %4825 = vrot.lane.b32.xlu0 %v4664, 96
      %v4826 = vpop.permute.xlu0 %4825
      %4827 = vrot.lane.b32.xlu0 %v4674, 96
      %v4828 = vpop.permute.xlu0 %4827
      %4829 = vrot.lane.b32.xlu0 %v4684, 96
      %v4830 = vpop.permute.xlu0 %4829
      %4831 = vrot.lane.b32.xlu0 %v4694, 96
      %v4832 = vpop.permute.xlu0 %4831
      %4833 = vrot.lane.b32.xlu0 %v4704, 96
      %v4834 = vpop.permute.xlu0 %4833
      %4835 = vrot.lane.b32.xlu0 %v4714, 96
      %v4836 = vpop.permute.xlu0 %4835
      %4837 = vrot.lane.b32.xlu0 %v4724, 96
      %v4838 = vpop.permute.xlu0 %4837
      %4839 = vrot.lane.b32.xlu0 %v4734, 96
      %v4840 = vpop.permute.xlu0 %4839
      %4841 = vrot.lane.b32.xlu0 %v4744, 96
      %v4842 = vpop.permute.xlu0 %4841
      %4843 = vrot.lane.b32.xlu0 %v4754, 96
      %v4844 = vpop.permute.xlu0 %4843
      %4845 = vrot.lane.b32.xlu0 %v4764, 96
      %v4846 = vpop.permute.xlu0 %4845
      %4847 = vrot.lane.b32.xlu0 %v4774, 96
      %v4848 = vpop.permute.xlu0 %4847
      %4849 = vrot.lane.b32.xlu0 %v4784, 96
      %v4850 = vpop.permute.xlu0 %4849
      %4851 = vrot.lane.b32.xlu0 %v4794, 96
      %v4852 = vpop.permute.xlu0 %4851
      %4853 = vrot.lane.b32.xlu0 %v4804, 96
      %v4854 = vpop.permute.xlu0 %4853
      %4880 = vst.msk [vmem:[#allocation3 + $0x4] sm:$0xf] %vm3635, %v4806
      %4881 = vst.msk [vmem:[#allocation3 + $0x10] sm:$0xf] %vm3635, %v4808
      %4882 = vst.msk [vmem:[#allocation3 + $0x1c] sm:$0xf] %vm3635, %v4810
      %4883 = vst.msk [vmem:[#allocation3 + $0x28] sm:$0xf] %vm3635, %v4812
      %4884 = vst.msk [vmem:[#allocation3 + $0x34] sm:$0xf] %vm3635, %v4814
      %4885 = vst.msk [vmem:[#allocation3 + $0x40] sm:$0xf] %vm3635, %v4816
      %4886 = vst.msk [vmem:[#allocation3 + $0x4c] sm:$0xf] %vm3635, %v4818
      %4887 = vst.msk [vmem:[#allocation3 + $0x58] sm:$0xf] %vm3635, %v4820
      %4888 = vst.msk [vmem:[#allocation3 + $0x64] sm:$0xf] %vm3635, %v4822
      %4889 = vst.msk [vmem:[#allocation3 + $0x70] sm:$0xf] %vm3635, %v4824
      %4890 = vst.msk [vmem:[#allocation3 + $0x7c] sm:$0xf] %vm3635, %v4826
      %4891 = vst.msk [vmem:[#allocation3 + $0x88] sm:$0xf] %vm3635, %v4828
      %4892 = vst.msk [vmem:[#allocation3 + $0x94] sm:$0xf] %vm3635, %v4830
      %4893 = vst.msk [vmem:[#allocation3 + $0xa0] sm:$0xf] %vm3635, %v4832
      %4894 = vst.msk [vmem:[#allocation3 + $0xac] sm:$0xf] %vm3635, %v4834
      %4895 = vst.msk [vmem:[#allocation3 + $0xb8] sm:$0xf] %vm3635, %v4836
      %4896 = vst.msk [vmem:[#allocation3 + $0xc4] sm:$0xf] %vm3635, %v4838
      %4897 = vst.msk [vmem:[#allocation3 + $0xd0] sm:$0xf] %vm3635, %v4840
      %4898 = vst.msk [vmem:[#allocation3 + $0xdc] sm:$0xf] %vm3635, %v4842
      %4899 = vst.msk [vmem:[#allocation3 + $0xe8] sm:$0xf] %vm3635, %v4844
      %4900 = vst.msk [vmem:[#allocation3 + $0xf4] sm:$0xf] %vm3635, %v4846
      %4901 = vst.msk [vmem:[#allocation3 + $0x100] sm:$0xf] %vm3635, %v4848
      %4902 = vst.msk [vmem:[#allocation3 + $0x10c] sm:$0xf] %vm3635, %v4850
      %4903 = vst.msk [vmem:[#allocation3 + $0x118] sm:$0xf] %vm3635, %v4852
      %4904 = vst.msk [vmem:[#allocation3 + $0x124] sm:$0xf] %vm3635, %v4854
      %v4905 = vld [vmem:[#allocation4 + $0x10] sm:$0xfe]
      %v4906 = vld [vmem:[#allocation4 + $0x18] sm:$0xff]
      %v4907 = vld [vmem:[#allocation4 + $0x20] sm:$0xff]
      %v4908 = vld [vmem:[#allocation4 + $0x28] sm:$0xff]
      %v4909 = vld [vmem:[#allocation4 + $0x30] sm:$0xff]
      %v4910 = vld [vmem:[#allocation4 + $0x38] sm:$0xff]
      %v4911 = vld [vmem:[#allocation4 + $0x40] sm:$0xff]
      %v4912 = vld [vmem:[#allocation4 + $0x48] sm:$0xff]
      %v4913 = vld [vmem:[#allocation4 + $0x50] sm:$0xff]
      %v4914 = vld [vmem:[#allocation4 + $0x58] sm:$0xff]
      %v4915 = vld [vmem:[#allocation4 + $0x60] sm:$0xff]
      %v4916 = vld [vmem:[#allocation4 + $0x68] sm:$0xff]
      %v4917 = vld [vmem:[#allocation4 + $0x70] sm:$0x1f]
      %v4931 = vunpack.c.l.b16 %v4905
      %v4932 = vunpack.c.h.b16 %v4905
      %v4933 = vunpack.c.l.b16 %v4906
      %v4934 = vunpack.c.h.b16 %v4906
      %v4935 = vunpack.c.l.b16 %v4907
      %v4936 = vunpack.c.h.b16 %v4907
      %v4937 = vunpack.c.l.b16 %v4908
      %v4938 = vunpack.c.h.b16 %v4908
      %v4939 = vunpack.c.l.b16 %v4909
      %v4940 = vunpack.c.h.b16 %v4909
      %v4941 = vunpack.c.l.b16 %v4910
      %v4942 = vunpack.c.h.b16 %v4910
      %v4943 = vunpack.c.l.b16 %v4911
      %v4944 = vunpack.c.h.b16 %v4911
      %v4945 = vunpack.c.l.b16 %v4912
      %v4946 = vunpack.c.h.b16 %v4912
      %v4947 = vunpack.c.l.b16 %v4913
      %v4948 = vunpack.c.h.b16 %v4913
      %v4949 = vunpack.c.l.b16 %v4914
      %v4950 = vunpack.c.h.b16 %v4914
      %v4951 = vunpack.c.l.b16 %v4915
      %v4952 = vunpack.c.h.b16 %v4915
      %v4953 = vunpack.c.l.b16 %v4916
      %v4954 = vunpack.c.h.b16 %v4916
      %v4955 = vunpack.c.l.b16 %v4917
      %v4956 = vunpack.c.h.b16 %v4917
      %v4957 = vpack.c.b16 %v4931, %v4931
      %v4958 = vpack.c.b16 %v4932, %v4932
      %v4959 = vpack.c.b16 %v4933, %v4933
      %v4960 = vpack.c.b16 %v4934, %v4934
      %v4961 = vpack.c.b16 %v4935, %v4935
      %v4962 = vpack.c.b16 %v4936, %v4936
      %v4963 = vpack.c.b16 %v4937, %v4937
      %v4964 = vpack.c.b16 %v4938, %v4938
      %v4965 = vpack.c.b16 %v4939, %v4939
      %v4966 = vpack.c.b16 %v4940, %v4940
      %v4967 = vpack.c.b16 %v4941, %v4941
      %v4968 = vpack.c.b16 %v4942, %v4942
      %v4969 = vpack.c.b16 %v4943, %v4943
      %v4970 = vpack.c.b16 %v4944, %v4944
      %v4971 = vpack.c.b16 %v4945, %v4945
      %v4972 = vpack.c.b16 %v4946, %v4946
      %v4973 = vpack.c.b16 %v4947, %v4947
      %v4974 = vpack.c.b16 %v4948, %v4948
      %v4975 = vpack.c.b16 %v4949, %v4949
      %v4976 = vpack.c.b16 %v4950, %v4950
      %v4977 = vpack.c.b16 %v4951, %v4951
      %v4978 = vpack.c.b16 %v4952, %v4952
      %v4979 = vpack.c.b16 %v4953, %v4953
      %v4980 = vpack.c.b16 %v4954, %v4954
      %v4981 = vpack.c.b16 %v4955, %v4955
      %v4982 = vpack.c.b16 %v4956, %v4956
      %v4983 = vrot.slane %v4957, 5
      %v4984 = vrot.slane %v4983, 4
      %v4985 = vrot.slane %v4958, 5
      %v4986 = vsel %vm3306, %v4984, %v4985
      %v4987 = vrot.slane %v4985, 4
      %v4988 = vrot.slane %v4959, 5
      %v4989 = vsel %vm3306, %v4987, %v4988
      %v4990 = vrot.slane %v4988, 4
      %v4991 = vrot.slane %v4960, 5
      %v4992 = vsel %vm3306, %v4990, %v4991
      %v4993 = vrot.slane %v4991, 4
      %v4994 = vrot.slane %v4961, 5
      %v4995 = vsel %vm3306, %v4993, %v4994
      %v4996 = vrot.slane %v4994, 4
      %v4997 = vrot.slane %v4962, 5
      %v4998 = vsel %vm3306, %v4996, %v4997
      %v4999 = vrot.slane %v4997, 4
      %v5000 = vrot.slane %v4963, 5
      %v5001 = vsel %vm3306, %v4999, %v5000
      %v5002 = vrot.slane %v5000, 4
      %v5003 = vrot.slane %v4964, 5
      %v5004 = vsel %vm3306, %v5002, %v5003
      %v5005 = vrot.slane %v5003, 4
      %v5006 = vrot.slane %v4965, 5
      %v5007 = vsel %vm3306, %v5005, %v5006
      %v5008 = vrot.slane %v5006, 4
      %v5009 = vrot.slane %v4966, 5
      %v5010 = vsel %vm3306, %v5008, %v5009
      %v5011 = vrot.slane %v5009, 4
      %v5012 = vrot.slane %v4967, 5
      %v5013 = vsel %vm3306, %v5011, %v5012
      %v5014 = vrot.slane %v5012, 4
      %v5015 = vrot.slane %v4968, 5
      %v5016 = vsel %vm3306, %v5014, %v5015
      %v5017 = vrot.slane %v5015, 4
      %v5018 = vrot.slane %v4969, 5
      %v5019 = vsel %vm3306, %v5017, %v5018
      %v5020 = vrot.slane %v5018, 4
      %v5021 = vrot.slane %v4970, 5
      %v5022 = vsel %vm3306, %v5020, %v5021
      %v5023 = vrot.slane %v5021, 4
      %v5024 = vrot.slane %v4971, 5
      %v5025 = vsel %vm3306, %v5023, %v5024
      %v5026 = vrot.slane %v5024, 4
      %v5027 = vrot.slane %v4972, 5
      %v5028 = vsel %vm3306, %v5026, %v5027
      %v5029 = vrot.slane %v5027, 4
      %v5030 = vrot.slane %v4973, 5
      %v5031 = vsel %vm3306, %v5029, %v5030
      %v5032 = vrot.slane %v5030, 4
      %v5033 = vrot.slane %v4974, 5
      %v5034 = vsel %vm3306, %v5032, %v5033
      %v5035 = vrot.slane %v5033, 4
      %v5036 = vrot.slane %v4975, 5
      %v5037 = vsel %vm3306, %v5035, %v5036
      %v5038 = vrot.slane %v5036, 4
      %v5039 = vrot.slane %v4976, 5
      %v5040 = vsel %vm3306, %v5038, %v5039
      %v5041 = vrot.slane %v5039, 4
      %v5042 = vrot.slane %v4977, 5
      %v5043 = vsel %vm3306, %v5041, %v5042
      %v5044 = vrot.slane %v5042, 4
      %v5045 = vrot.slane %v4978, 5
      %v5046 = vsel %vm3306, %v5044, %v5045
      %v5047 = vrot.slane %v5045, 4
      %v5048 = vrot.slane %v4979, 5
      %v5049 = vsel %vm3306, %v5047, %v5048
      %v5050 = vrot.slane %v5048, 4
      %v5051 = vrot.slane %v4980, 5
      %v5052 = vsel %vm3306, %v5050, %v5051
      %v5053 = vrot.slane %v5051, 4
      %v5054 = vrot.slane %v4981, 5
      %v5055 = vsel %vm3306, %v5053, %v5054
      %v5056 = vrot.slane %v5054, 4
      %v5057 = vrot.slane %v4982, 5
      %v5058 = vsel %vm3306, %v5056, %v5057
      %5084 = vst.msk [vmem:[#allocation3 + $0x8] sm:$0xf] %vm2764, %v4986
      %5085 = vst.msk [vmem:[#allocation3 + $0x14] sm:$0xf] %vm2764, %v4989
      %5086 = vst.msk [vmem:[#allocation3 + $0x20] sm:$0xf] %vm2764, %v4992
      %5087 = vst.msk [vmem:[#allocation3 + $0x2c] sm:$0xf] %vm2764, %v4995
      %5088 = vst.msk [vmem:[#allocation3 + $0x38] sm:$0xf] %vm2764, %v4998
      %5089 = vst.msk [vmem:[#allocation3 + $0x44] sm:$0xf] %vm2764, %v5001
      %5090 = vst.msk [vmem:[#allocation3 + $0x50] sm:$0xf] %vm2764, %v5004
      %5091 = vst.msk [vmem:[#allocation3 + $0x5c] sm:$0xf] %vm2764, %v5007
      %5092 = vst.msk [vmem:[#allocation3 + $0x68] sm:$0xf] %vm2764, %v5010
      %5093 = vst.msk [vmem:[#allocation3 + $0x74] sm:$0xf] %vm2764, %v5013
      %5094 = vst.msk [vmem:[#allocation3 + $0x80] sm:$0xf] %vm2764, %v5016
      %5095 = vst.msk [vmem:[#allocation3 + $0x8c] sm:$0xf] %vm2764, %v5019
      %5096 = vst.msk [vmem:[#allocation3 + $0x98] sm:$0xf] %vm2764, %v5022
      %5097 = vst.msk [vmem:[#allocation3 + $0xa4] sm:$0xf] %vm2764, %v5025
      %5098 = vst.msk [vmem:[#allocation3 + $0xb0] sm:$0xf] %vm2764, %v5028
      %5099 = vst.msk [vmem:[#allocation3 + $0xbc] sm:$0xf] %vm2764, %v5031
      %5100 = vst.msk [vmem:[#allocation3 + $0xc8] sm:$0xf] %vm2764, %v5034
      %5101 = vst.msk [vmem:[#allocation3 + $0xd4] sm:$0xf] %vm2764, %v5037
      %5102 = vst.msk [vmem:[#allocation3 + $0xe0] sm:$0xf] %vm2764, %v5040
      %5103 = vst.msk [vmem:[#allocation3 + $0xec] sm:$0xf] %vm2764, %v5043
      %5104 = vst.msk [vmem:[#allocation3 + $0xf8] sm:$0xf] %vm2764, %v5046
      %5105 = vst.msk [vmem:[#allocation3 + $0x104] sm:$0xf] %vm2764, %v5049
      %5106 = vst.msk [vmem:[#allocation3 + $0x110] sm:$0xf] %vm2764, %v5052
      %5107 = vst.msk [vmem:[#allocation3 + $0x11c] sm:$0xf] %vm2764, %v5055
      %5108 = vst.msk [vmem:[#allocation3 + $0x128] sm:$0xf] %vm2764, %v5058
      %v5109 = vld [vmem:[#allocation3] sm:$0xff]
      %v5110 = vld [vmem:[#allocation3 + $0x8] sm:$0xf]
      %v5111 = vld [vmem:[#allocation3 + $0xc] sm:$0xff]
      %v5112 = vld [vmem:[#allocation3 + $0x14] sm:$0xf]
      %v5113 = vld [vmem:[#allocation3 + $0x18] sm:$0xff]
      %v5114 = vld [vmem:[#allocation3 + $0x20] sm:$0xf]
      %v5115 = vld [vmem:[#allocation3 + $0x24] sm:$0xff]
      %v5116 = vld [vmem:[#allocation3 + $0x2c] sm:$0xf]
      %v5117 = vld [vmem:[#allocation3 + $0x30] sm:$0xff]
      %v5118 = vld [vmem:[#allocation3 + $0x38] sm:$0xf]
      %v5119 = vld [vmem:[#allocation3 + $0x3c] sm:$0xff]
      %v5120 = vld [vmem:[#allocation3 + $0x44] sm:$0xf]
      %v5121 = vld [vmem:[#allocation3 + $0x48] sm:$0xff]
      %v5122 = vld [vmem:[#allocation3 + $0x50] sm:$0xf]
      %v5123 = vld [vmem:[#allocation3 + $0x54] sm:$0xff]
      %v5124 = vld [vmem:[#allocation3 + $0x5c] sm:$0xf]
      %v5125 = vld [vmem:[#allocation3 + $0x60] sm:$0xff]
      %v5126 = vld [vmem:[#allocation3 + $0x68] sm:$0xf]
      %v5127 = vld [vmem:[#allocation3 + $0x6c] sm:$0xff]
      %v5128 = vld [vmem:[#allocation3 + $0x74] sm:$0xf]
      %v5129 = vld [vmem:[#allocation3 + $0x78] sm:$0xff]
      %v5130 = vld [vmem:[#allocation3 + $0x80] sm:$0xf]
      %v5131 = vld [vmem:[#allocation3 + $0x84] sm:$0xff]
      %v5132 = vld [vmem:[#allocation3 + $0x8c] sm:$0xf]
      %v5133 = vld [vmem:[#allocation3 + $0x90] sm:$0xff]
      %v5134 = vld [vmem:[#allocation3 + $0x98] sm:$0xf]
      %v5135 = vld [vmem:[#allocation3 + $0x9c] sm:$0xff]
      %v5136 = vld [vmem:[#allocation3 + $0xa4] sm:$0xf]
      %v5137 = vld [vmem:[#allocation3 + $0xa8] sm:$0xff]
      %v5138 = vld [vmem:[#allocation3 + $0xb0] sm:$0xf]
      %v5139 = vld [vmem:[#allocation3 + $0xb4] sm:$0xff]
      %v5140 = vld [vmem:[#allocation3 + $0xbc] sm:$0xf]
      %v5141 = vld [vmem:[#allocation3 + $0xc0] sm:$0xff]
      %v5142 = vld [vmem:[#allocation3 + $0xc8] sm:$0xf]
      %v5143 = vld [vmem:[#allocation3 + $0xcc] sm:$0xff]
      %v5144 = vld [vmem:[#allocation3 + $0xd4] sm:$0xf]
      %v5145 = vld [vmem:[#allocation3 + $0xd8] sm:$0xff]
      %v5146 = vld [vmem:[#allocation3 + $0xe0] sm:$0xf]
      %v5147 = vld [vmem:[#allocation3 + $0xe4] sm:$0xff]
      %v5148 = vld [vmem:[#allocation3 + $0xec] sm:$0xf]
      %v5149 = vld [vmem:[#allocation3 + $0xf0] sm:$0xff]
      %v5150 = vld [vmem:[#allocation3 + $0xf8] sm:$0xf]
      %v5151 = vld [vmem:[#allocation3 + $0xfc] sm:$0xff]
      %v5152 = vld [vmem:[#allocation3 + $0x104] sm:$0xf]
      %v5153 = vld [vmem:[#allocation3 + $0x108] sm:$0xff]
      %v5154 = vld [vmem:[#allocation3 + $0x110] sm:$0xf]
      %v5155 = vld [vmem:[#allocation3 + $0x114] sm:$0xff]
      %v5156 = vld [vmem:[#allocation3 + $0x11c] sm:$0xf]
      %v5157 = vld [vmem:[#allocation3 + $0x120] sm:$0xff]
      %v5158 = vld [vmem:[#allocation3 + $0x128] sm:$0xf]
      %v5159 = vld [vmem:[%s3] sm:$0xf]
      %v5160 = vld [vmem:[%s3 + $0x4] sm:$0xf]
      %v5161 = vld [vmem:[%s3 + $0x8] sm:$0xf]
      %v5162 = vld [vmem:[%s3 + $0xc] sm:$0xf]
      %v5163 = vld [vmem:[%s3 + $0x10] sm:$0xf]
      %v5164 = vld [vmem:[%s3 + $0x14] sm:$0xf]
      %v5165 = vld [vmem:[%s3 + $0x18] sm:$0xf]
      %v5166 = vld [vmem:[%s3 + $0x1c] sm:$0xf]
      %v5167 = vld [vmem:[%s3 + $0x20] sm:$0xf]
      %v5168 = vld [vmem:[%s3 + $0x24] sm:$0xf]
      %v5169 = vld [vmem:[%s3 + $0x28] sm:$0xf]
      %v5170 = vld [vmem:[%s3 + $0x2c] sm:$0xf]
      %v5171 = vld [vmem:[%s3 + $0x30] sm:$0xf]
      %v5172 = vld [vmem:[%s3 + $0x34] sm:$0xf]
      %v5173 = vld [vmem:[%s3 + $0x38] sm:$0xf]
      %v5174 = vld [vmem:[%s3 + $0x3c] sm:$0xf]
      %v5175 = vld [vmem:[%s3 + $0x40] sm:$0xf]
      %v5176 = vld [vmem:[%s3 + $0x44] sm:$0xf]
      %v5177 = vld [vmem:[%s3 + $0x48] sm:$0xf]
      %v5178 = vld [vmem:[%s3 + $0x4c] sm:$0xf]
      %v5179 = vld [vmem:[%s3 + $0x50] sm:$0xf]
      %v5180 = vld [vmem:[%s3 + $0x54] sm:$0xf]
      %v5181 = vld [vmem:[%s3 + $0x58] sm:$0xf]
      %v5182 = vld [vmem:[%s3 + $0x5c] sm:$0xf]
      %v5183 = vld [vmem:[%s3 + $0x60] sm:$0xf]
      %v5184 = vld [vmem:[%s3 + $0x64] sm:$0xf]
      %v5185 = vld [vmem:[%s3 + $0x68] sm:$0xf]
      %v5186 = vld [vmem:[%s3 + $0x6c] sm:$0xf]
      %v5187 = vld [vmem:[%s3 + $0x70] sm:$0xf]
      %v5188 = vld [vmem:[%s3 + $0x74] sm:$0xf]
      %v5189 = vld [vmem:[%s3 + $0x78] sm:$0xf]
      %v5190 = vld [vmem:[%s3 + $0x7c] sm:$0xf]
      %v5191 = vld [vmem:[%s3 + $0x80] sm:$0xf]
      %v5192 = vld [vmem:[%s3 + $0x84] sm:$0xf]
      %v5193 = vld [vmem:[%s3 + $0x88] sm:$0xf]
      %v5194 = vld [vmem:[%s3 + $0x8c] sm:$0xf]
      %v5195 = vld [vmem:[%s4] sm:$0x1]
      %v5197 = vlaneseq
      %v5198 = vshrl.u32 %v5197, 7
      %v5199 = vsub.s32 0, %v5198
      %v5200 = vrot.slane %v5195, %v5199
      %v5252 = vunpack.c.l.b16 %v5109
      %v5253 = vunpack.c.h.b16 %v5109
      %v5254 = vunpack.c.l.b16 %v5110
      %v5255 = vunpack.c.l.b16 %v5111
      %v5256 = vunpack.c.h.b16 %v5111
      %v5257 = vunpack.c.l.b16 %v5112
      %v5258 = vunpack.c.l.b16 %v5113
      %v5259 = vunpack.c.h.b16 %v5113
      %v5260 = vunpack.c.l.b16 %v5114
      %v5261 = vunpack.c.l.b16 %v5115
      %v5262 = vunpack.c.h.b16 %v5115
      %v5263 = vunpack.c.l.b16 %v5116
      %v5264 = vunpack.c.l.b16 %v5117
      %v5265 = vunpack.c.h.b16 %v5117
      %v5266 = vunpack.c.l.b16 %v5118
      %v5267 = vunpack.c.l.b16 %v5119
      %v5268 = vunpack.c.h.b16 %v5119
      %v5269 = vunpack.c.l.b16 %v5120
      %v5270 = vunpack.c.l.b16 %v5121
      %v5271 = vunpack.c.h.b16 %v5121
      %v5272 = vunpack.c.l.b16 %v5122
      %v5273 = vunpack.c.l.b16 %v5123
      %v5274 = vunpack.c.h.b16 %v5123
      %v5275 = vunpack.c.l.b16 %v5124
      %v5276 = vunpack.c.l.b16 %v5125
      %v5277 = vunpack.c.h.b16 %v5125
      %v5278 = vunpack.c.l.b16 %v5126
      %v5279 = vunpack.c.l.b16 %v5127
      %v5280 = vunpack.c.h.b16 %v5127
      %v5281 = vunpack.c.l.b16 %v5128
      %v5282 = vunpack.c.l.b16 %v5129
      %v5283 = vunpack.c.h.b16 %v5129
      %v5284 = vunpack.c.l.b16 %v5130
      %v5285 = vunpack.c.l.b16 %v5131
      %v5286 = vunpack.c.h.b16 %v5131
      %v5287 = vunpack.c.l.b16 %v5132
      %v5288 = vunpack.c.l.b16 %v5133
      %v5289 = vunpack.c.h.b16 %v5133
      %v5290 = vunpack.c.l.b16 %v5134
      %v5291 = vunpack.c.l.b16 %v5135
      %v5292 = vunpack.c.h.b16 %v5135
      %v5293 = vunpack.c.l.b16 %v5136
      %v5294 = vunpack.c.l.b16 %v5137
      %v5295 = vunpack.c.h.b16 %v5137
      %v5296 = vunpack.c.l.b16 %v5138
      %v5297 = vunpack.c.l.b16 %v5139
      %v5298 = vunpack.c.h.b16 %v5139
      %v5299 = vunpack.c.l.b16 %v5140
      %v5300 = vunpack.c.l.b16 %v5141
      %v5301 = vunpack.c.h.b16 %v5141
      %v5302 = vunpack.c.l.b16 %v5142
      %v5303 = vunpack.c.l.b16 %v5143
      %v5304 = vunpack.c.h.b16 %v5143
      %v5305 = vunpack.c.l.b16 %v5144
      %v5306 = vunpack.c.l.b16 %v5145
      %v5307 = vunpack.c.h.b16 %v5145
      %v5308 = vunpack.c.l.b16 %v5146
      %v5309 = vunpack.c.l.b16 %v5147
      %v5310 = vunpack.c.h.b16 %v5147
      %v5311 = vunpack.c.l.b16 %v5148
      %v5312 = vunpack.c.l.b16 %v5149
      %v5313 = vunpack.c.h.b16 %v5149
      %v5314 = vunpack.c.l.b16 %v5150
      %v5315 = vunpack.c.l.b16 %v5151
      %v5316 = vunpack.c.h.b16 %v5151
      %v5317 = vunpack.c.l.b16 %v5152
      %v5318 = vunpack.c.l.b16 %v5153
      %v5319 = vunpack.c.h.b16 %v5153
      %v5320 = vunpack.c.l.b16 %v5154
      %v5321 = vunpack.c.l.b16 %v5155
      %v5322 = vunpack.c.h.b16 %v5155
      %v5323 = vunpack.c.l.b16 %v5156
      %v5324 = vunpack.c.l.b16 %v5157
      %v5325 = vunpack.c.h.b16 %v5157
      %v5326 = vunpack.c.l.b16 %v5158
      %v5327 = vpack.c.b16 %v5255, %v5252
      %v5328 = vpack.c.b16 %v5256, %v5253
      %v5329 = vpack.c.b16 %v5257, %v5254
      %v5330 = vpack.c.b16 %v5261, %v5258
      %v5331 = vpack.c.b16 %v5262, %v5259
      %v5332 = vpack.c.b16 %v5263, %v5260
      %v5333 = vpack.c.b16 %v5267, %v5264
      %v5334 = vpack.c.b16 %v5268, %v5265
      %v5335 = vpack.c.b16 %v5269, %v5266
      %v5336 = vpack.c.b16 %v5273, %v5270
      %v5337 = vpack.c.b16 %v5274, %v5271
      %v5338 = vpack.c.b16 %v5275, %v5272
      %v5339 = vpack.c.b16 %v5279, %v5276
      %v5340 = vpack.c.b16 %v5280, %v5277
      %v5341 = vpack.c.b16 %v5281, %v5278
      %v5342 = vpack.c.b16 %v5285, %v5282
      %v5343 = vpack.c.b16 %v5286, %v5283
      %v5344 = vpack.c.b16 %v5287, %v5284
      %v5345 = vpack.c.b16 %v5291, %v5288
      %v5346 = vpack.c.b16 %v5292, %v5289
      %v5347 = vpack.c.b16 %v5293, %v5290
      %v5348 = vpack.c.b16 %v5297, %v5294
      %v5349 = vpack.c.b16 %v5298, %v5295
      %v5350 = vpack.c.b16 %v5299, %v5296
      %v5351 = vpack.c.b16 %v5303, %v5300
      %v5352 = vpack.c.b16 %v5304, %v5301
      %v5353 = vpack.c.b16 %v5305, %v5302
      %v5354 = vpack.c.b16 %v5309, %v5306
      %v5355 = vpack.c.b16 %v5310, %v5307
      %v5356 = vpack.c.b16 %v5311, %v5308
      %v5357 = vpack.c.b16 %v5315, %v5312
      %v5358 = vpack.c.b16 %v5316, %v5313
      %v5359 = vpack.c.b16 %v5317, %v5314
      %v5360 = vpack.c.b16 %v5321, %v5318
      %v5361 = vpack.c.b16 %v5322, %v5319
      %v5362 = vpack.c.b16 %v5323, %v5320
      %v5363 = vpack.c.b16 %v5324, %v5324
      %v5364 = vpack.c.b16 %v5325, %v5325
      %v5365 = vpack.c.b16 %v5326, %v5326
      %v5428 = vunpack.c.l.b16 %v5159
      %v5429 = vunpack.c.l.b16 %v5160
      %v5430 = vunpack.c.l.b16 %v5161
      %v5431 = vunpack.c.l.b16 %v5162
      %v5432 = vunpack.c.l.b16 %v5163
      %v5433 = vunpack.c.l.b16 %v5164
      %v5434 = vunpack.c.l.b16 %v5165
      %v5435 = vunpack.c.l.b16 %v5166
      %v5436 = vunpack.c.l.b16 %v5167
      %v5437 = vunpack.c.l.b16 %v5168
      %v5438 = vunpack.c.l.b16 %v5169
      %v5439 = vunpack.c.l.b16 %v5170
      %v5440 = vunpack.c.l.b16 %v5171
      %v5441 = vunpack.c.l.b16 %v5172
      %v5442 = vunpack.c.l.b16 %v5173
      %v5443 = vunpack.c.l.b16 %v5174
      %v5444 = vunpack.c.l.b16 %v5175
      %v5445 = vunpack.c.l.b16 %v5176
      %v5446 = vunpack.c.l.b16 %v5177
      %v5447 = vunpack.c.l.b16 %v5178
      %v5448 = vunpack.c.l.b16 %v5179
      %v5449 = vunpack.c.l.b16 %v5180
      %v5450 = vunpack.c.l.b16 %v5181
      %v5451 = vunpack.c.l.b16 %v5182
      %v5452 = vunpack.c.l.b16 %v5183
      %v5453 = vunpack.c.l.b16 %v5184
      %v5454 = vunpack.c.l.b16 %v5185
      %v5455 = vunpack.c.l.b16 %v5186
      %v5456 = vunpack.c.l.b16 %v5187
      %v5457 = vunpack.c.l.b16 %v5188
      %v5458 = vunpack.c.l.b16 %v5189
      %v5459 = vunpack.c.l.b16 %v5190
      %v5460 = vunpack.c.l.b16 %v5191
      %v5461 = vunpack.c.l.b16 %v5192
      %v5462 = vunpack.c.l.b16 %v5193
      %v5463 = vunpack.c.l.b16 %v5194
      %v5464 = vpack.c.b16 %v5429, %v5428
      %v5465 = vpack.c.b16 %v5431, %v5430
      %v5466 = vpack.c.b16 %v5433, %v5432
      %v5467 = vpack.c.b16 %v5435, %v5434
      %v5468 = vpack.c.b16 %v5437, %v5436
      %v5469 = vpack.c.b16 %v5439, %v5438
      %v5470 = vpack.c.b16 %v5441, %v5440
      %v5471 = vpack.c.b16 %v5443, %v5442
      %v5472 = vpack.c.b16 %v5445, %v5444
      %v5473 = vpack.c.b16 %v5447, %v5446
      %v5474 = vpack.c.b16 %v5449, %v5448
      %v5475 = vpack.c.b16 %v5451, %v5450
      %v5476 = vpack.c.b16 %v5453, %v5452
      %v5477 = vpack.c.b16 %v5455, %v5454
      %v5478 = vpack.c.b16 %v5457, %v5456
      %v5479 = vpack.c.b16 %v5459, %v5458
      %v5480 = vpack.c.b16 %v5461, %v5460
      %v5481 = vpack.c.b16 %v5463, %v5462
      %v5501 = vsel %vm2647, %v5329, 0
      %v5504 = vsel %vm2647, %v5332, 0
      %v5507 = vsel %vm2647, %v5335, 0
      %v5510 = vsel %vm2647, %v5338, 0
      %v5513 = vsel %vm2647, %v5341, 0
      %v5516 = vsel %vm2647, %v5344, 0
      %v5519 = vsel %vm2647, %v5347, 0
      %v5522 = vsel %vm2647, %v5350, 0
      %v5525 = vsel %vm2647, %v5353, 0
      %v5528 = vsel %vm2647, %v5356, 0
      %v5531 = vsel %vm2647, %v5359, 0
      %v5534 = vsel %vm2647, %v5362, 0
      %v5537 = vsel %vm2647, %v5365, 0
      %5539 = vmatprep.subr.bf16.mxu0 0
      %5540 = vmatpush1.bf16.msra.mxu0 %v5464
      %5541 = vmatprep.subr.bf16.mxu0 0
      %5542 = vmatpush1.bf16.msra.mxu0 %v5465
      %5543 = vmatprep.subr.bf16.mxu0 0
      %5544 = vmatpush1.bf16.msra.mxu0 %v5466
      %5545 = vmatprep.subr.bf16.mxu0 0
      %5546 = vmatpush1.bf16.msra.mxu0 %v5467
      %5547 = vmatprep.subr.bf16.mxu0 0
      %5548 = vmatpush1.bf16.msra.mxu0 %v5468
      %5549 = vmatprep.subr.bf16.mxu0 0
      %5550 = vmatpush1.bf16.msra.mxu0 %v5469
      %5551 = vmatprep.subr.bf16.mxu0 0
      %5552 = vmatpush1.bf16.msra.mxu0 %v5470
      %5553 = vmatprep.subr.bf16.mxu0 0
      %5554 = vmatpush1.bf16.msra.mxu0 %v5471
      %5555 = vmatprep.subr.bf16.mxu0 0
      %5556 = vmatpush1.bf16.msra.mxu0 %v5472
      %5557 = vmatprep.subr.bf16.mxu0 0
      %5558 = vmatpush1.bf16.msra.mxu0 %v5473
      %5559 = vmatprep.subr.bf16.mxu0 0
      %5560 = vmatpush1.bf16.msra.mxu0 %v5474
      %5561 = vmatprep.subr.bf16.mxu0 0
      %5562 = vmatpush1.bf16.msra.mxu0 %v5475
      %5563 = vmatprep.subr.bf16.mxu0 0
      %5564 = vmatpush1.bf16.msra.mxu0 %v5476
      %5565 = vmatprep.subr.bf16.mxu0 0
      %5566 = vmatpush1.bf16.msra.mxu0 %v5477
      %5567 = vmatprep.subr.bf16.mxu0 0
      %5568 = vmatpush1.bf16.msra.mxu0 %v5478
      %5569 = vmatprep.subr.bf16.mxu0 0
      %5570 = vmatpush1.bf16.msra.mxu0 %v5479
      %5571 = vmatprep.mubr.bf16.mxu0 %v5328
      %5572 = vmatmul.mubr.bf16.gmra.mrb[0].mxu0 %v5327
      %v5573 = vpop.f32.mrb[0].mxu0
      %v5574 = vadd.f32 %v5200, %v5573
      %v5575 = vpop.f32.mrb[0].mxu0
      %v5576 = vpop.f32.mrb[0].mxu0
      %v5577 = vadd.f32 %v5200, %v5576
      %v5578 = vpop.f32.mrb[0].mxu0
      %5579 = vmatprep.mubr.bf16.mxu0 %v5331
      %5580 = vmatmul.mubr.bf16.gmra.mrb[0].mxu0 %v5330
      %v5581 = vpop.f32.mrb[0].mxu0
      %v5582 = vadd.f32 %v5200, %v5581
      %v5583 = vpop.f32.mrb[0].mxu0
      %v5584 = vpop.f32.mrb[0].mxu0
      %v5585 = vadd.f32 %v5200, %v5584
      %v5586 = vpop.f32.mrb[0].mxu0
      %5587 = vmatprep.mubr.bf16.mxu0 %v5334
      %5588 = vmatmul.mubr.bf16.gmra.mrb[0].mxu0 %v5333
      %v5589 = vpop.f32.mrb[0].mxu0
      %v5590 = vadd.f32 %v5200, %v5589
      %v5591 = vpop.f32.mrb[0].mxu0
      %v5592 = vpop.f32.mrb[0].mxu0
      %v5593 = vadd.f32 %v5200, %v5592
      %v5594 = vpop.f32.mrb[0].mxu0
      %5595 = vmatprep.mubr.bf16.mxu0 %v5337
      %5596 = vmatmul.mubr.bf16.gmra.mrb[0].mxu0 %v5336
      %v5597 = vpop.f32.mrb[0].mxu0
      %v5598 = vadd.f32 %v5200, %v5597
      %v5599 = vpop.f32.mrb[0].mxu0
      %v5600 = vpop.f32.mrb[0].mxu0
      %v5601 = vadd.f32 %v5200, %v5600
      %v5602 = vpop.f32.mrb[0].mxu0
      %5603 = vmatprep.mubr.bf16.mxu0 %v5340
      %5604 = vmatmul.mubr.bf16.gmra.mrb[0].mxu0 %v5339
      %v5605 = vpop.f32.mrb[0].mxu0
      %v5606 = vadd.f32 %v5200, %v5605
      %v5607 = vpop.f32.mrb[0].mxu0
      %v5608 = vpop.f32.mrb[0].mxu0
      %v5609 = vadd.f32 %v5200, %v5608
      %v5610 = vpop.f32.mrb[0].mxu0
      %5611 = vmatprep.mubr.bf16.mxu0 %v5343
      %5612 = vmatmul.mubr.bf16.gmra.mrb[0].mxu0 %v5342
      %v5613 = vpop.f32.mrb[0].mxu0
      %v5614 = vadd.f32 %v5200, %v5613
      %v5615 = vpop.f32.mrb[0].mxu0
      %v5616 = vpop.f32.mrb[0].mxu0
      %v5617 = vadd.f32 %v5200, %v5616
      %v5618 = vpop.f32.mrb[0].mxu0
      %5619 = vmatprep.mubr.bf16.mxu0 %v5346
      %5620 = vmatmul.mubr.bf16.gmra.mrb[0].mxu0 %v5345
      %v5621 = vpop.f32.mrb[0].mxu0
      %v5622 = vadd.f32 %v5200, %v5621
      %v5623 = vpop.f32.mrb[0].mxu0
      %v5624 = vpop.f32.mrb[0].mxu0
      %v5625 = vadd.f32 %v5200, %v5624
      %v5626 = vpop.f32.mrb[0].mxu0
      %5627 = vmatprep.mubr.bf16.mxu0 %v5349
      %5628 = vmatmul.mubr.bf16.gmra.mrb[0].mxu0 %v5348
      %v5629 = vpop.f32.mrb[0].mxu0
      %v5630 = vadd.f32 %v5200, %v5629
      %v5631 = vpop.f32.mrb[0].mxu0
      %v5632 = vpop.f32.mrb[0].mxu0
      %v5633 = vadd.f32 %v5200, %v5632
      %v5634 = vpop.f32.mrb[0].mxu0
      %5635 = vmatprep.mubr.bf16.mxu0 %v5352
      %5636 = vmatmul.mubr.bf16.gmra.mrb[0].mxu0 %v5351
      %v5637 = vpop.f32.mrb[0].mxu0
      %v5638 = vadd.f32 %v5200, %v5637
      %v5639 = vpop.f32.mrb[0].mxu0
      %v5640 = vpop.f32.mrb[0].mxu0
      %v5641 = vadd.f32 %v5200, %v5640
      %v5642 = vpop.f32.mrb[0].mxu0
      %5643 = vmatprep.mubr.bf16.mxu0 %v5355
      %5644 = vmatmul.mubr.bf16.gmra.mrb[0].mxu0 %v5354
      %v5645 = vpop.f32.mrb[0].mxu0
      %v5646 = vadd.f32 %v5200, %v5645
      %v5647 = vpop.f32.mrb[0].mxu0
      %v5648 = vpop.f32.mrb[0].mxu0
      %v5649 = vadd.f32 %v5200, %v5648
      %v5650 = vpop.f32.mrb[0].mxu0
      %5651 = vmatprep.mubr.bf16.mxu0 %v5358
      %5652 = vmatmul.mubr.bf16.gmra.mrb[0].mxu0 %v5357
      %v5653 = vpop.f32.mrb[0].mxu0
      %v5654 = vadd.f32 %v5200, %v5653
      %v5655 = vpop.f32.mrb[0].mxu0
      %v5656 = vpop.f32.mrb[0].mxu0
      %v5657 = vadd.f32 %v5200, %v5656
      %v5658 = vpop.f32.mrb[0].mxu0
      %5659 = vmatprep.mubr.bf16.mxu0 %v5361
      %5660 = vmatmul.mubr.bf16.gmra.mrb[0].mxu0 %v5360
      %v5661 = vpop.f32.mrb[0].mxu0
      %v5662 = vadd.f32 %v5200, %v5661
      %v5663 = vpop.f32.mrb[0].mxu0
      %v5664 = vpop.f32.mrb[0].mxu0
      %v5665 = vadd.f32 %v5200, %v5664
      %v5666 = vpop.f32.mrb[0].mxu0
      %5667 = vmatprep.mubr.bf16.mxu0 %v5364
      %5668 = vmatmul.mubr.bf16.gmra.mrb[0].mxu0 %v5363
      %v5669 = vpop.f32.mrb[0].mxu0
      %v5670 = vadd.f32 %v5200, %v5669
      %v5671 = vpop.f32.mrb[0].mxu0
      %v5672 = vpop.f32.mrb[0].mxu0
      %v5673 = vpop.f32.mrb[0].mxu0
      %5674 = vdwg.mxu0
      %5675 = vmatprep.subr.bf16.mxu0 0
      %5676 = vmatpush1.bf16.msra.mxu0 %v5480
      %5677 = vmatprep.subr.bf16.mxu0 0
      %5678 = vmatpush1.bf16.msra.mxu0 %v5481
      %5679 = vmatprep.subr.bf16.mxu0 0
      %5680 = vmatpush1.bf16.msra.mxu0 0
      %5681 = vmatprep.subr.bf16.mxu0 0
      %5682 = vmatpush1.bf16.msra.mxu0 0
      %5683 = vmatprep.subr.bf16.mxu0 0
      %5684 = vmatpush1.bf16.msra.mxu0 0
      %5685 = vmatprep.subr.bf16.mxu0 0
      %5686 = vmatpush1.bf16.msra.mxu0 0
      %5687 = vmatprep.subr.bf16.mxu0 0
      %5688 = vmatpush1.bf16.msra.mxu0 0
      %5689 = vmatprep.subr.bf16.mxu0 0
      %5690 = vmatpush1.bf16.msra.mxu0 0
      %5691 = vmatprep.subr.bf16.mxu0 0
      %5692 = vmatpush1.bf16.msra.mxu0 0
      %5693 = vmatprep.subr.bf16.mxu0 0
      %5694 = vmatpush1.bf16.msra.mxu0 0
      %5695 = vmatprep.subr.bf16.mxu0 0
      %5696 = vmatpush1.bf16.msra.mxu0 0
      %5697 = vmatprep.subr.bf16.mxu0 0
      %5698 = vmatpush1.bf16.msra.mxu0 0
      %5699 = vmatprep.subr.bf16.mxu0 0
      %5700 = vmatpush1.bf16.msra.mxu0 0
      %5701 = vmatprep.subr.bf16.mxu0 0
      %5702 = vmatpush1.bf16.msra.mxu0 0
      %5703 = vmatprep.subr.bf16.mxu0 0
      %5704 = vmatpush1.bf16.msra.mxu0 0
      %5705 = vmatprep.subr.bf16.mxu0 0
      %5706 = vmatpush1.bf16.msra.mxu0 0
      %5707 = vmatprep.mubr.bf16.mxu0 0
      %5708 = vmatmul.mubr.bf16.gmra.mrb[0].mxu0 %v5501
      %v5709 = vpop.f32.mrb[0].mxu0
      %v5710 = vadd.f32 %v5574, %v5709
      %v5711 = vpop.f32.mrb[0].mxu0
      %v5712 = vpop.f32.mrb[0].mxu0
      %v5713 = vadd.f32 %v5577, %v5712
      %v5714 = vpop.f32.mrb[0].mxu0
      %5715 = vmatprep.mubr.bf16.mxu0 0
      %5716 = vmatmul.mubr.bf16.gmra.mrb[0].mxu0 %v5504
      %v5717 = vpop.f32.mrb[0].mxu0
      %v5718 = vadd.f32 %v5582, %v5717
      %v5719 = vpop.f32.mrb[0].mxu0
      %v5720 = vpop.f32.mrb[0].mxu0
      %v5721 = vadd.f32 %v5585, %v5720
      %v5722 = vpop.f32.mrb[0].mxu0
      %5723 = vmatprep.mubr.bf16.mxu0 0
      %5724 = vmatmul.mubr.bf16.gmra.mrb[0].mxu0 %v5507
      %v5725 = vpop.f32.mrb[0].mxu0
      %v5726 = vadd.f32 %v5590, %v5725
      %v5727 = vpop.f32.mrb[0].mxu0
      %v5728 = vpop.f32.mrb[0].mxu0
      %v5729 = vadd.f32 %v5593, %v5728
      %v5730 = vpop.f32.mrb[0].mxu0
      %5731 = vmatprep.mubr.bf16.mxu0 0
      %5732 = vmatmul.mubr.bf16.gmra.mrb[0].mxu0 %v5510
      %v5733 = vpop.f32.mrb[0].mxu0
      %v5734 = vadd.f32 %v5598, %v5733
      %v5735 = vpop.f32.mrb[0].mxu0
      %v5736 = vpop.f32.mrb[0].mxu0
      %v5737 = vadd.f32 %v5601, %v5736
      %v5738 = vpop.f32.mrb[0].mxu0
      %5739 = vmatprep.mubr.bf16.mxu0 0
      %5740 = vmatmul.mubr.bf16.gmra.mrb[0].mxu0 %v5513
      %v5741 = vpop.f32.mrb[0].mxu0
      %v5742 = vadd.f32 %v5606, %v5741
      %v5743 = vpop.f32.mrb[0].mxu0
      %v5744 = vpop.f32.mrb[0].mxu0
      %v5745 = vadd.f32 %v5609, %v5744
      %v5746 = vpop.f32.mrb[0].mxu0
      %5747 = vmatprep.mubr.bf16.mxu0 0
      %5748 = vmatmul.mubr.bf16.gmra.mrb[0].mxu0 %v5516
      %v5749 = vpop.f32.mrb[0].mxu0
      %v5750 = vadd.f32 %v5614, %v5749
      %v5751 = vpop.f32.mrb[0].mxu0
      %v5752 = vpop.f32.mrb[0].mxu0
      %v5753 = vadd.f32 %v5617, %v5752
      %v5754 = vpop.f32.mrb[0].mxu0
      %5755 = vmatprep.mubr.bf16.mxu0 0
      %5756 = vmatmul.mubr.bf16.gmra.mrb[0].mxu0 %v5519
      %v5757 = vpop.f32.mrb[0].mxu0
      %v5758 = vadd.f32 %v5622, %v5757
      %v5759 = vpop.f32.mrb[0].mxu0
      %v5760 = vpop.f32.mrb[0].mxu0
      %v5761 = vadd.f32 %v5625, %v5760
      %v5762 = vpop.f32.mrb[0].mxu0
      %5763 = vmatprep.mubr.bf16.mxu0 0
      %5764 = vmatmul.mubr.bf16.gmra.mrb[0].mxu0 %v5522
      %v5765 = vpop.f32.mrb[0].mxu0
      %v5766 = vadd.f32 %v5630, %v5765
      %v5767 = vpop.f32.mrb[0].mxu0
      %v5768 = vpop.f32.mrb[0].mxu0
      %v5769 = vadd.f32 %v5633, %v5768
      %v5770 = vpop.f32.mrb[0].mxu0
      %5771 = vmatprep.mubr.bf16.mxu0 0
      %5772 = vmatmul.mubr.bf16.gmra.mrb[0].mxu0 %v5525
      %v5773 = vpop.f32.mrb[0].mxu0
      %v5774 = vadd.f32 %v5638, %v5773
      %v5775 = vpop.f32.mrb[0].mxu0
      %v5776 = vpop.f32.mrb[0].mxu0
      %v5777 = vadd.f32 %v5641, %v5776
      %v5778 = vpop.f32.mrb[0].mxu0
      %5779 = vmatprep.mubr.bf16.mxu0 0
      %5780 = vmatmul.mubr.bf16.gmra.mrb[0].mxu0 %v5528
      %v5781 = vpop.f32.mrb[0].mxu0
      %v5782 = vadd.f32 %v5646, %v5781
      %v5783 = vpop.f32.mrb[0].mxu0
      %v5784 = vpop.f32.mrb[0].mxu0
      %v5785 = vadd.f32 %v5649, %v5784
      %v5786 = vpop.f32.mrb[0].mxu0
      %5787 = vmatprep.mubr.bf16.mxu0 0
      %5788 = vmatmul.mubr.bf16.gmra.mrb[0].mxu0 %v5531
      %v5789 = vpop.f32.mrb[0].mxu0
      %v5790 = vadd.f32 %v5654, %v5789
      %v5791 = vpop.f32.mrb[0].mxu0
      %v5792 = vpop.f32.mrb[0].mxu0
      %v5793 = vadd.f32 %v5657, %v5792
      %v5794 = vpop.f32.mrb[0].mxu0
      %5795 = vmatprep.mubr.bf16.mxu0 0
      %5796 = vmatmul.mubr.bf16.gmra.mrb[0].mxu0 %v5534
      %v5797 = vpop.f32.mrb[0].mxu0
      %v5798 = vadd.f32 %v5662, %v5797
      %v5799 = vpop.f32.mrb[0].mxu0
      %v5800 = vpop.f32.mrb[0].mxu0
      %v5801 = vadd.f32 %v5665, %v5800
      %v5802 = vpop.f32.mrb[0].mxu0
      %5803 = vmatprep.mubr.bf16.mxu0 0
      %5804 = vmatmul.mubr.bf16.gmra.mrb[0].mxu0 %v5537
      %v5805 = vpop.f32.mrb[0].mxu0
      %v5806 = vadd.f32 %v5670, %v5805
      %v5807 = vpop.f32.mrb[0].mxu0
      %v5808 = vpop.f32.mrb[0].mxu0
      %v5809 = vpop.f32.mrb[0].mxu0
      %5810 = vdwg.mxu0
      %v5811 = vmul.f32 %v5710, 0.5
      %v5812 = vmul.f32 %v5713, 0.5
      %v5813 = vmul.f32 %v5718, 0.5
      %v5814 = vmul.f32 %v5721, 0.5
      %v5815 = vmul.f32 %v5726, 0.5
      %v5816 = vmul.f32 %v5729, 0.5
      %v5817 = vmul.f32 %v5734, 0.5
      %v5818 = vmul.f32 %v5737, 0.5
      %v5819 = vmul.f32 %v5742, 0.5
      %v5820 = vmul.f32 %v5745, 0.5
      %v5821 = vmul.f32 %v5750, 0.5
      %v5822 = vmul.f32 %v5753, 0.5
      %v5823 = vmul.f32 %v5758, 0.5
      %v5824 = vmul.f32 %v5761, 0.5
      %v5825 = vmul.f32 %v5766, 0.5
      %v5826 = vmul.f32 %v5769, 0.5
      %v5827 = vmul.f32 %v5774, 0.5
      %v5828 = vmul.f32 %v5777, 0.5
      %v5829 = vmul.f32 %v5782, 0.5
      %v5830 = vmul.f32 %v5785, 0.5
      %v5831 = vmul.f32 %v5790, 0.5
      %v5832 = vmul.f32 %v5793, 0.5
      %v5833 = vmul.f32 %v5798, 0.5
      %v5834 = vmul.f32 %v5801, 0.5
      %v5835 = vmul.f32 %v5806, 0.5
      %v5836 = vmul.f32 %v5710, 0.70710677
      %v5837 = vmul.f32 %v5713, 0.70710677
      %v5838 = vmul.f32 %v5718, 0.70710677
      %v5839 = vmul.f32 %v5721, 0.70710677
      %v5840 = vmul.f32 %v5726, 0.70710677
      %v5841 = vmul.f32 %v5729, 0.70710677
      %v5842 = vmul.f32 %v5734, 0.70710677
      %v5843 = vmul.f32 %v5737, 0.70710677
      %v5844 = vmul.f32 %v5742, 0.70710677
      %v5845 = vmul.f32 %v5745, 0.70710677
      %v5846 = vmul.f32 %v5750, 0.70710677
      %v5847 = vmul.f32 %v5753, 0.70710677
      %v5848 = vmul.f32 %v5758, 0.70710677
      %v5849 = vmul.f32 %v5761, 0.70710677
      %v5850 = vmul.f32 %v5766, 0.70710677
      %v5851 = vmul.f32 %v5769, 0.70710677
      %v5852 = vmul.f32 %v5774, 0.70710677
      %v5853 = vmul.f32 %v5777, 0.70710677
      %v5854 = vmul.f32 %v5782, 0.70710677
      %v5855 = vmul.f32 %v5785, 0.70710677
      %v5856 = vmul.f32 %v5790, 0.70710677
      %v5857 = vmul.f32 %v5793, 0.70710677
      %v5858 = vmul.f32 %v5798, 0.70710677
      %v5859 = vmul.f32 %v5801, 0.70710677
      %v5860 = vmul.f32 %v5806, 0.70710677
      %v5861 = verf.f32.pop %v5836
      %v5862 = verf.f32.pop %v5837
      %v5863 = verf.f32.pop %v5838
      %v5864 = verf.f32.pop %v5839
      %v5865 = verf.f32.pop %v5840
      %v5866 = verf.f32.pop %v5841
      %v5867 = verf.f32.pop %v5842
      %v5868 = verf.f32.pop %v5843
      %v5869 = verf.f32.pop %v5844
      %v5870 = verf.f32.pop %v5845
      %v5871 = verf.f32.pop %v5846
      %v5872 = verf.f32.pop %v5847
      %v5873 = verf.f32.pop %v5848
      %v5874 = verf.f32.pop %v5849
      %v5875 = verf.f32.pop %v5850
      %v5876 = verf.f32.pop %v5851
      %v5877 = verf.f32.pop %v5852
      %v5878 = verf.f32.pop %v5853
      %v5879 = verf.f32.pop %v5854
      %v5880 = verf.f32.pop %v5855
      %v5881 = verf.f32.pop %v5856
      %v5882 = verf.f32.pop %v5857
      %v5883 = verf.f32.pop %v5858
      %v5884 = verf.f32.pop %v5859
      %v5885 = verf.f32.pop %v5860
      %v5886 = vadd.f32 %v5861, 1.0
      %v5887 = vadd.f32 %v5862, 1.0
      %v5888 = vadd.f32 %v5863, 1.0
      %v5889 = vadd.f32 %v5864, 1.0
      %v5890 = vadd.f32 %v5865, 1.0
      %v5891 = vadd.f32 %v5866, 1.0
      %v5892 = vadd.f32 %v5867, 1.0
      %v5893 = vadd.f32 %v5868, 1.0
      %v5894 = vadd.f32 %v5869, 1.0
      %v5895 = vadd.f32 %v5870, 1.0
      %v5896 = vadd.f32 %v5871, 1.0
      %v5897 = vadd.f32 %v5872, 1.0
      %v5898 = vadd.f32 %v5873, 1.0
      %v5899 = vadd.f32 %v5874, 1.0
      %v5900 = vadd.f32 %v5875, 1.0
      %v5901 = vadd.f32 %v5876, 1.0
      %v5902 = vadd.f32 %v5877, 1.0
      %v5903 = vadd.f32 %v5878, 1.0
      %v5904 = vadd.f32 %v5879, 1.0
      %v5905 = vadd.f32 %v5880, 1.0
      %v5906 = vadd.f32 %v5881, 1.0
      %v5907 = vadd.f32 %v5882, 1.0
      %v5908 = vadd.f32 %v5883, 1.0
      %v5909 = vadd.f32 %v5884, 1.0
      %v5910 = vadd.f32 %v5885, 1.0
      %v5911 = vmul.f32 %v5811, %v5886
      %v5912 = vmul.f32 %v5812, %v5887
      %v5913 = vmul.f32 %v5813, %v5888
      %v5914 = vmul.f32 %v5814, %v5889
      %v5915 = vmul.f32 %v5815, %v5890
      %v5916 = vmul.f32 %v5816, %v5891
      %v5917 = vmul.f32 %v5817, %v5892
      %v5918 = vmul.f32 %v5818, %v5893
      %v5919 = vmul.f32 %v5819, %v5894
      %v5920 = vmul.f32 %v5820, %v5895
      %v5921 = vmul.f32 %v5821, %v5896
      %v5922 = vmul.f32 %v5822, %v5897
      %v5923 = vmul.f32 %v5823, %v5898
      %v5924 = vmul.f32 %v5824, %v5899
      %v5925 = vmul.f32 %v5825, %v5900
      %v5926 = vmul.f32 %v5826, %v5901
      %v5927 = vmul.f32 %v5827, %v5902
      %v5928 = vmul.f32 %v5828, %v5903
      %v5929 = vmul.f32 %v5829, %v5904
      %v5930 = vmul.f32 %v5830, %v5905
      %v5931 = vmul.f32 %v5831, %v5906
      %v5932 = vmul.f32 %v5832, %v5907
      %v5933 = vmul.f32 %v5833, %v5908
      %v5934 = vmul.f32 %v5834, %v5909
      %v5935 = vmul.f32 %v5835, %v5910
      %v5936 = vpack.c.bf16 %v5912, %v5911
      %v5937 = vpack.c.bf16 %v5914, %v5913
      %v5938 = vpack.c.bf16 %v5916, %v5915
      %v5939 = vpack.c.bf16 %v5918, %v5917
      %v5940 = vpack.c.bf16 %v5920, %v5919
      %v5941 = vpack.c.bf16 %v5922, %v5921
      %v5942 = vpack.c.bf16 %v5924, %v5923
      %v5943 = vpack.c.bf16 %v5926, %v5925
      %v5944 = vpack.c.bf16 %v5928, %v5927
      %v5945 = vpack.c.bf16 %v5930, %v5929
      %v5946 = vpack.c.bf16 %v5932, %v5931
      %v5947 = vpack.c.bf16 %v5934, %v5933
      %v5948 = vpack.c.bf16 %v5935, %v5935
      %v5962 = vunpack.c.l.b16 %v5936
      %v5963 = vunpack.c.h.b16 %v5936
      %v5964 = vunpack.c.l.b16 %v5937
      %v5965 = vunpack.c.h.b16 %v5937
      %v5966 = vunpack.c.l.b16 %v5938
      %v5967 = vunpack.c.h.b16 %v5938
      %v5968 = vunpack.c.l.b16 %v5939
      %v5969 = vunpack.c.h.b16 %v5939
      %v5970 = vunpack.c.l.b16 %v5940
      %v5971 = vunpack.c.h.b16 %v5940
      %v5972 = vunpack.c.l.b16 %v5941
      %v5973 = vunpack.c.h.b16 %v5941
      %v5974 = vunpack.c.l.b16 %v5942
      %v5975 = vunpack.c.h.b16 %v5942
      %v5976 = vunpack.c.l.b16 %v5943
      %v5977 = vunpack.c.h.b16 %v5943
      %v5978 = vunpack.c.l.b16 %v5944
      %v5979 = vunpack.c.h.b16 %v5944
      %v5980 = vunpack.c.l.b16 %v5945
      %v5981 = vunpack.c.h.b16 %v5945
      %v5982 = vunpack.c.l.b16 %v5946
      %v5983 = vunpack.c.h.b16 %v5946
      %v5984 = vunpack.c.l.b16 %v5947
      %v5985 = vunpack.c.h.b16 %v5947
      %v5986 = vunpack.c.l.b16 %v5948
      %v5987 = vpack.c.b16 %v5962, %v5962
      %v5988 = vpack.c.b16 %v5963, %v5963
      %v5989 = vpack.c.b16 %v5964, %v5964
      %v5990 = vpack.c.b16 %v5965, %v5965
      %v5991 = vpack.c.b16 %v5966, %v5966
      %v5992 = vpack.c.b16 %v5967, %v5967
      %v5993 = vpack.c.b16 %v5968, %v5968
      %v5994 = vpack.c.b16 %v5969, %v5969
      %v5995 = vpack.c.b16 %v5970, %v5970
      %v5996 = vpack.c.b16 %v5971, %v5971
      %v5997 = vpack.c.b16 %v5972, %v5972
      %v5998 = vpack.c.b16 %v5973, %v5973
      %v5999 = vpack.c.b16 %v5974, %v5974
      %v6000 = vpack.c.b16 %v5975, %v5975
      %v6001 = vpack.c.b16 %v5976, %v5976
      %v6002 = vpack.c.b16 %v5977, %v5977
      %v6003 = vpack.c.b16 %v5978, %v5978
      %v6004 = vpack.c.b16 %v5979, %v5979
      %v6005 = vpack.c.b16 %v5980, %v5980
      %v6006 = vpack.c.b16 %v5981, %v5981
      %v6007 = vpack.c.b16 %v5982, %v5982
      %v6008 = vpack.c.b16 %v5983, %v5983
      %v6009 = vpack.c.b16 %v5984, %v5984
      %v6010 = vpack.c.b16 %v5985, %v5985
      %v6011 = vpack.c.b16 %v5986, %v5986
      %6037 = vst.msk [vmem:[#allocation5] sm:$0xf] %vm2764, %v5987
      %6038 = vst.msk [vmem:[#allocation5 + $0x4] sm:$0xf] %vm2764, %v5988
      %6039 = vst.msk [vmem:[#allocation5 + $0x8] sm:$0xf] %vm2764, %v5989
      %6040 = vst.msk [vmem:[#allocation5 + $0xc] sm:$0xf] %vm2764, %v5990
      %6041 = vst.msk [vmem:[#allocation5 + $0x10] sm:$0xf] %vm2764, %v5991
      %6042 = vst.msk [vmem:[#allocation5 + $0x14] sm:$0xf] %vm2764, %v5992
      %6043 = vst.msk [vmem:[#allocation5 + $0x18] sm:$0xf] %vm2764, %v5993
      %6044 = vst.msk [vmem:[#allocation5 + $0x1c] sm:$0xf] %vm2764, %v5994
      %6045 = vst.msk [vmem:[#allocation5 + $0x20] sm:$0xf] %vm2764, %v5995
      %6046 = vst.msk [vmem:[#allocation5 + $0x24] sm:$0xf] %vm2764, %v5996
      %6047 = vst.msk [vmem:[#allocation5 + $0x28] sm:$0xf] %vm2764, %v5997
      %6048 = vst.msk [vmem:[#allocation5 + $0x2c] sm:$0xf] %vm2764, %v5998
      %6049 = vst.msk [vmem:[#allocation5 + $0x30] sm:$0xf] %vm2764, %v5999
      %6050 = vst.msk [vmem:[#allocation5 + $0x34] sm:$0xf] %vm2764, %v6000
      %6051 = vst.msk [vmem:[#allocation5 + $0x38] sm:$0xf] %vm2764, %v6001
      %6052 = vst.msk [vmem:[#allocation5 + $0x3c] sm:$0xf] %vm2764, %v6002
      %6053 = vst.msk [vmem:[#allocation5 + $0x40] sm:$0xf] %vm2764, %v6003
      %6054 = vst.msk [vmem:[#allocation5 + $0x44] sm:$0xf] %vm2764, %v6004
      %6055 = vst.msk [vmem:[#allocation5 + $0x48] sm:$0xf] %vm2764, %v6005
      %6056 = vst.msk [vmem:[#allocation5 + $0x4c] sm:$0xf] %vm2764, %v6006
      %6057 = vst.msk [vmem:[#allocation5 + $0x50] sm:$0xf] %vm2764, %v6007
      %6058 = vst.msk [vmem:[#allocation5 + $0x54] sm:$0xf] %vm2764, %v6008
      %6059 = vst.msk [vmem:[#allocation5 + $0x58] sm:$0xf] %vm2764, %v6009
      %6060 = vst.msk [vmem:[#allocation5 + $0x5c] sm:$0xf] %vm2764, %v6010
      %6061 = vst.msk [vmem:[#allocation5 + $0x60] sm:$0xf] %vm2764, %v6011
      %v6062 = vld [vmem:[#allocation5] sm:$0xf]
      %v6063 = vld [vmem:[#allocation5 + $0x4] sm:$0xf]
      %v6064 = vld [vmem:[#allocation5 + $0x8] sm:$0xf]
      %v6065 = vld [vmem:[#allocation5 + $0xc] sm:$0xf]
      %v6066 = vld [vmem:[#allocation5 + $0x10] sm:$0xf]
      %v6067 = vld [vmem:[#allocation5 + $0x14] sm:$0xf]
      %v6068 = vld [vmem:[#allocation5 + $0x18] sm:$0xf]
      %v6069 = vld [vmem:[#allocation5 + $0x1c] sm:$0xf]
      %v6070 = vld [vmem:[#allocation5 + $0x20] sm:$0xf]
      %v6071 = vld [vmem:[#allocation5 + $0x24] sm:$0xf]
      %v6072 = vld [vmem:[#allocation5 + $0x28] sm:$0xf]
      %v6073 = vld [vmem:[#allocation5 + $0x2c] sm:$0xf]
      %v6074 = vld [vmem:[#allocation5 + $0x30] sm:$0xf]
      %v6075 = vld [vmem:[#allocation5 + $0x34] sm:$0xf]
      %v6076 = vld [vmem:[#allocation5 + $0x38] sm:$0xf]
      %v6077 = vld [vmem:[#allocation5 + $0x3c] sm:$0xf]
      %v6078 = vld [vmem:[#allocation5 + $0x40] sm:$0xf]
      %v6079 = vld [vmem:[#allocation5 + $0x44] sm:$0xf]
      %v6080 = vld [vmem:[#allocation5 + $0x48] sm:$0xf]
      %v6081 = vld [vmem:[#allocation5 + $0x4c] sm:$0xf]
      %6082 = vst.msk [vmem:[#allocation3] sm:$0xf] %vm2764, %v6062
      %6083 = vst.msk [vmem:[#allocation3 + $0xc] sm:$0xf] %vm2764, %v6063
      %6084 = vst.msk [vmem:[#allocation3 + $0x18] sm:$0xf] %vm2764, %v6064
      %6085 = vst.msk [vmem:[#allocation3 + $0x24] sm:$0xf] %vm2764, %v6065
      %6086 = vst.msk [vmem:[#allocation3 + $0x30] sm:$0xf] %vm2764, %v6066
      %6087 = vst.msk [vmem:[#allocation3 + $0x3c] sm:$0xf] %vm2764, %v6067
      %6088 = vst.msk [vmem:[#allocation3 + $0x48] sm:$0xf] %vm2764, %v6068
      %6089 = vst.msk [vmem:[#allocation3 + $0x54] sm:$0xf] %vm2764, %v6069
      %6090 = vst.msk [vmem:[#allocation3 + $0x60] sm:$0xf] %vm2764, %v6070
      %6091 = vst.msk [vmem:[#allocation3 + $0x6c] sm:$0xf] %vm2764, %v6071
      %6092 = vst.msk [vmem:[#allocation3 + $0x78] sm:$0xf] %vm2764, %v6072
      %6093 = vst.msk [vmem:[#allocation3 + $0x84] sm:$0xf] %vm2764, %v6073
      %6094 = vst.msk [vmem:[#allocation3 + $0x90] sm:$0xf] %vm2764, %v6074
      %6095 = vst.msk [vmem:[#allocation3 + $0x9c] sm:$0xf] %vm2764, %v6075
      %6096 = vst.msk [vmem:[#allocation3 + $0xa8] sm:$0xf] %vm2764, %v6076
      %6097 = vst.msk [vmem:[#allocation3 + $0xb4] sm:$0xf] %vm2764, %v6077
      %6098 = vst.msk [vmem:[#allocation3 + $0xc0] sm:$0xf] %vm2764, %v6078
      %6099 = vst.msk [vmem:[#allocation3 + $0xcc] sm:$0xf] %vm2764, %v6079
      %6100 = vst.msk [vmem:[#allocation3 + $0xd8] sm:$0xf] %vm2764, %v6080
      %6101 = vst.msk [vmem:[#allocation3 + $0xe4] sm:$0xf] %vm2764, %v6081
      %v6102 = vld [vmem:[#allocation5] sm:$0xf]
      %v6103 = vld [vmem:[#allocation5 + $0x4] sm:$0xf]
      %v6104 = vld [vmem:[#allocation5 + $0x8] sm:$0xf]
      %v6105 = vld [vmem:[#allocation5 + $0xc] sm:$0xf]
      %v6106 = vld [vmem:[#allocation5 + $0x10] sm:$0xf]
      %v6107 = vld [vmem:[#allocation5 + $0x14] sm:$0xf]
      %v6108 = vld [vmem:[#allocation5 + $0x18] sm:$0xf]
      %v6109 = vld [vmem:[#allocation5 + $0x1c] sm:$0xf]
      %v6110 = vld [vmem:[#allocation5 + $0x20] sm:$0xf]
      %v6111 = vld [vmem:[#allocation5 + $0x24] sm:$0xf]
      %v6112 = vld [vmem:[#allocation5 + $0x28] sm:$0xf]
      %v6113 = vld [vmem:[#allocation5 + $0x2c] sm:$0xf]
      %v6114 = vld [vmem:[#allocation5 + $0x30] sm:$0xf]
      %v6115 = vld [vmem:[#allocation5 + $0x34] sm:$0xf]
      %v6116 = vld [vmem:[#allocation5 + $0x38] sm:$0xf]
      %v6117 = vld [vmem:[#allocation5 + $0x3c] sm:$0xf]
      %v6118 = vld [vmem:[#allocation5 + $0x40] sm:$0xf]
      %v6119 = vld [vmem:[#allocation5 + $0x44] sm:$0xf]
      %v6120 = vld [vmem:[#allocation5 + $0x48] sm:$0xf]
      %v6121 = vld [vmem:[#allocation5 + $0x4c] sm:$0xf]
      %v6122 = vld [vmem:[#allocation5 + $0x50] sm:$0x1]
      %v6124 = vshrl.u32 %v6102, 16
      %v6126 = vrot.slane %v6124, 4
      %v6127 = vshll.u32 %v6102, 16
      %v6129 = vrot.slane %v6127, 5
      %v6130 = vor.u32 %v6126, %v6129
      %v6131 = vrot.slane %v6130, 4
      %v6133 = vshll.u32 %v6103, 16
      %v6135 = vrot.slane %v6133, 5
      %v6136 = vsel %vm2870, %v6131, %v6135
      %v6137 = vshrl.u32 %v6103, 16
      %v6139 = vrot.slane %v6137, 4
      %v6140 = vor.u32 %v6139, %v6135
      %v6141 = vrot.slane %v6140, 4
      %v6143 = vshll.u32 %v6104, 16
      %v6145 = vrot.slane %v6143, 5
      %v6146 = vsel %vm2870, %v6141, %v6145
      %v6147 = vshrl.u32 %v6104, 16
      %v6149 = vrot.slane %v6147, 4
      %v6150 = vor.u32 %v6149, %v6145
      %v6151 = vrot.slane %v6150, 4
      %v6153 = vshll.u32 %v6105, 16
      %v6155 = vrot.slane %v6153, 5
      %v6156 = vsel %vm2870, %v6151, %v6155
      %v6157 = vshrl.u32 %v6105, 16
      %v6159 = vrot.slane %v6157, 4
      %v6160 = vor.u32 %v6159, %v6155
      %v6161 = vrot.slane %v6160, 4
      %v6163 = vshll.u32 %v6106, 16
      %v6165 = vrot.slane %v6163, 5
      %v6166 = vsel %vm2870, %v6161, %v6165
      %v6167 = vshrl.u32 %v6106, 16
      %v6169 = vrot.slane %v6167, 4
      %v6170 = vor.u32 %v6169, %v6165
      %v6171 = vrot.slane %v6170, 4
      %v6173 = vshll.u32 %v6107, 16
      %v6175 = vrot.slane %v6173, 5
      %v6176 = vsel %vm2870, %v6171, %v6175
      %v6177 = vshrl.u32 %v6107, 16
      %v6179 = vrot.slane %v6177, 4
      %v6180 = vor.u32 %v6179, %v6175
      %v6181 = vrot.slane %v6180, 4
      %v6183 = vshll.u32 %v6108, 16
      %v6185 = vrot.slane %v6183, 5
      %v6186 = vsel %vm2870, %v6181, %v6185
      %v6187 = vshrl.u32 %v6108, 16
      %v6189 = vrot.slane %v6187, 4
      %v6190 = vor.u32 %v6189, %v6185
      %v6191 = vrot.slane %v6190, 4
      %v6193 = vshll.u32 %v6109, 16
      %v6195 = vrot.slane %v6193, 5
      %v6196 = vsel %vm2870, %v6191, %v6195
      %v6197 = vshrl.u32 %v6109, 16
      %v6199 = vrot.slane %v6197, 4
      %v6200 = vor.u32 %v6199, %v6195
      %v6201 = vrot.slane %v6200, 4
      %v6203 = vshll.u32 %v6110, 16
      %v6205 = vrot.slane %v6203, 5
      %v6206 = vsel %vm2870, %v6201, %v6205
      %v6207 = vshrl.u32 %v6110, 16
      %v6209 = vrot.slane %v6207, 4
      %v6210 = vor.u32 %v6209, %v6205
      %v6211 = vrot.slane %v6210, 4
      %v6213 = vshll.u32 %v6111, 16
      %v6215 = vrot.slane %v6213, 5
      %v6216 = vsel %vm2870, %v6211, %v6215
      %v6217 = vshrl.u32 %v6111, 16
      %v6219 = vrot.slane %v6217, 4
      %v6220 = vor.u32 %v6219, %v6215
      %v6221 = vrot.slane %v6220, 4
      %v6223 = vshll.u32 %v6112, 16
      %v6225 = vrot.slane %v6223, 5
      %v6226 = vsel %vm2870, %v6221, %v6225
      %v6227 = vshrl.u32 %v6112, 16
      %v6229 = vrot.slane %v6227, 4
      %v6230 = vor.u32 %v6229, %v6225
      %v6231 = vrot.slane %v6230, 4
      %v6233 = vshll.u32 %v6113, 16
      %v6235 = vrot.slane %v6233, 5
      %v6236 = vsel %vm2870, %v6231, %v6235
      %v6237 = vshrl.u32 %v6113, 16
      %v6239 = vrot.slane %v6237, 4
      %v6240 = vor.u32 %v6239, %v6235
      %v6241 = vrot.slane %v6240, 4
      %v6243 = vshll.u32 %v6114, 16
      %v6245 = vrot.slane %v6243, 5
      %v6246 = vsel %vm2870, %v6241, %v6245
      %v6247 = vshrl.u32 %v6114, 16
      %v6249 = vrot.slane %v6247, 4
      %v6250 = vor.u32 %v6249, %v6245
      %v6251 = vrot.slane %v6250, 4
      %v6253 = vshll.u32 %v6115, 16
      %v6255 = vrot.slane %v6253, 5
      %v6256 = vsel %vm2870, %v6251, %v6255
      %v6257 = vshrl.u32 %v6115, 16
      %v6259 = vrot.slane %v6257, 4
      %v6260 = vor.u32 %v6259, %v6255
      %v6261 = vrot.slane %v6260, 4
      %v6263 = vshll.u32 %v6116, 16
      %v6265 = vrot.slane %v6263, 5
      %v6266 = vsel %vm2870, %v6261, %v6265
      %v6267 = vshrl.u32 %v6116, 16
      %v6269 = vrot.slane %v6267, 4
      %v6270 = vor.u32 %v6269, %v6265
      %v6271 = vrot.slane %v6270, 4
      %v6273 = vshll.u32 %v6117, 16
      %v6275 = vrot.slane %v6273, 5
      %v6276 = vsel %vm2870, %v6271, %v6275
      %v6277 = vshrl.u32 %v6117, 16
      %v6279 = vrot.slane %v6277, 4
      %v6280 = vor.u32 %v6279, %v6275
      %v6281 = vrot.slane %v6280, 4
      %v6283 = vshll.u32 %v6118, 16
      %v6285 = vrot.slane %v6283, 5
      %v6286 = vsel %vm2870, %v6281, %v6285
      %v6287 = vshrl.u32 %v6118, 16
      %v6289 = vrot.slane %v6287, 4
      %v6290 = vor.u32 %v6289, %v6285
      %v6291 = vrot.slane %v6290, 4
      %v6293 = vshll.u32 %v6119, 16
      %v6295 = vrot.slane %v6293, 5
      %v6296 = vsel %vm2870, %v6291, %v6295
      %v6297 = vshrl.u32 %v6119, 16
      %v6299 = vrot.slane %v6297, 4
      %v6300 = vor.u32 %v6299, %v6295
      %v6301 = vrot.slane %v6300, 4
      %v6303 = vshll.u32 %v6120, 16
      %v6305 = vrot.slane %v6303, 5
      %v6306 = vsel %vm2870, %v6301, %v6305
      %v6307 = vshrl.u32 %v6120, 16
      %v6309 = vrot.slane %v6307, 4
      %v6310 = vor.u32 %v6309, %v6305
      %v6311 = vrot.slane %v6310, 4
      %v6313 = vshll.u32 %v6121, 16
      %v6315 = vrot.slane %v6313, 5
      %v6316 = vsel %vm2870, %v6311, %v6315
      %v6317 = vshrl.u32 %v6121, 16
      %v6319 = vrot.slane %v6317, 4
      %v6320 = vor.u32 %v6319, %v6315
      %v6321 = vrot.slane %v6320, 4
      %v6323 = vshll.u32 %v6122, 16
      %v6325 = vrot.slane %v6323, 5
      %v6326 = vsel %vm2870, %v6321, %v6325
      %6327 = vrot.lane.b32.xlu0 %v6136, 32
      %v6328 = vpop.permute.xlu0 %6327
      %6329 = vrot.lane.b32.xlu0 %v6146, 32
      %v6330 = vpop.permute.xlu0 %6329
      %6331 = vrot.lane.b32.xlu0 %v6156, 32
      %v6332 = vpop.permute.xlu0 %6331
      %6333 = vrot.lane.b32.xlu0 %v6166, 32
      %v6334 = vpop.permute.xlu0 %6333
      %6335 = vrot.lane.b32.xlu0 %v6176, 32
      %v6336 = vpop.permute.xlu0 %6335
      %6337 = vrot.lane.b32.xlu0 %v6186, 32
      %v6338 = vpop.permute.xlu0 %6337
      %6339 = vrot.lane.b32.xlu0 %v6196, 32
      %v6340 = vpop.permute.xlu0 %6339
      %6341 = vrot.lane.b32.xlu0 %v6206, 32
      %v6342 = vpop.permute.xlu0 %6341
      %6343 = vrot.lane.b32.xlu0 %v6216, 32
      %v6344 = vpop.permute.xlu0 %6343
      %6345 = vrot.lane.b32.xlu0 %v6226, 32
      %v6346 = vpop.permute.xlu0 %6345
      %6347 = vrot.lane.b32.xlu0 %v6236, 32
      %v6348 = vpop.permute.xlu0 %6347
      %6349 = vrot.lane.b32.xlu0 %v6246, 32
      %v6350 = vpop.permute.xlu0 %6349
      %6351 = vrot.lane.b32.xlu0 %v6256, 32
      %v6352 = vpop.permute.xlu0 %6351
      %6353 = vrot.lane.b32.xlu0 %v6266, 32
      %v6354 = vpop.permute.xlu0 %6353
      %6355 = vrot.lane.b32.xlu0 %v6276, 32
      %v6356 = vpop.permute.xlu0 %6355
      %6357 = vrot.lane.b32.xlu0 %v6286, 32
      %v6358 = vpop.permute.xlu0 %6357
      %6359 = vrot.lane.b32.xlu0 %v6296, 32
      %v6360 = vpop.permute.xlu0 %6359
      %6361 = vrot.lane.b32.xlu0 %v6306, 32
      %v6362 = vpop.permute.xlu0 %6361
      %6363 = vrot.lane.b32.xlu0 %v6316, 32
      %v6364 = vpop.permute.xlu0 %6363
      %6365 = vrot.lane.b32.xlu0 %v6326, 32
      %v6366 = vpop.permute.xlu0 %6365
      %6387 = vst.msk [vmem:[#allocation3] sm:$0xf] %vm3200, %v6328
      %6388 = vst.msk [vmem:[#allocation3 + $0xc] sm:$0xf] %vm3200, %v6330
      %6389 = vst.msk [vmem:[#allocation3 + $0x18] sm:$0xf] %vm3200, %v6332
      %6390 = vst.msk [vmem:[#allocation3 + $0x24] sm:$0xf] %vm3200, %v6334
      %6391 = vst.msk [vmem:[#allocation3 + $0x30] sm:$0xf] %vm3200, %v6336
      %6392 = vst.msk [vmem:[#allocation3 + $0x3c] sm:$0xf] %vm3200, %v6338
      %6393 = vst.msk [vmem:[#allocation3 + $0x48] sm:$0xf] %vm3200, %v6340
      %6394 = vst.msk [vmem:[#allocation3 + $0x54] sm:$0xf] %vm3200, %v6342
      %6395 = vst.msk [vmem:[#allocation3 + $0x60] sm:$0xf] %vm3200, %v6344
      %6396 = vst.msk [vmem:[#allocation3 + $0x6c] sm:$0xf] %vm3200, %v6346
      %6397 = vst.msk [vmem:[#allocation3 + $0x78] sm:$0xf] %vm3200, %v6348
      %6398 = vst.msk [vmem:[#allocation3 + $0x84] sm:$0xf] %vm3200, %v6350
      %6399 = vst.msk [vmem:[#allocation3 + $0x90] sm:$0xf] %vm3200, %v6352
      %6400 = vst.msk [vmem:[#allocation3 + $0x9c] sm:$0xf] %vm3200, %v6354
      %6401 = vst.msk [vmem:[#allocation3 + $0xa8] sm:$0xf] %vm3200, %v6356
      %6402 = vst.msk [vmem:[#allocation3 + $0xb4] sm:$0xf] %vm3200, %v6358
      %6403 = vst.msk [vmem:[#allocation3 + $0xc0] sm:$0xf] %vm3200, %v6360
      %6404 = vst.msk [vmem:[#allocation3 + $0xcc] sm:$0xf] %vm3200, %v6362
      %6405 = vst.msk [vmem:[#allocation3 + $0xd8] sm:$0xf] %vm3200, %v6364
      %6406 = vst.msk [vmem:[#allocation3 + $0xe4] sm:$0xf] %vm3200, %v6366
      %v6407 = vld [vmem:[#allocation5] sm:$0xe]
      %v6408 = vld [vmem:[#allocation5 + $0x4] sm:$0xf]
      %v6409 = vld [vmem:[#allocation5 + $0x8] sm:$0xf]
      %v6410 = vld [vmem:[#allocation5 + $0xc] sm:$0xf]
      %v6411 = vld [vmem:[#allocation5 + $0x10] sm:$0xf]
      %v6412 = vld [vmem:[#allocation5 + $0x14] sm:$0xf]
      %v6413 = vld [vmem:[#allocation5 + $0x18] sm:$0xf]
      %v6414 = vld [vmem:[#allocation5 + $0x1c] sm:$0xf]
      %v6415 = vld [vmem:[#allocation5 + $0x20] sm:$0xf]
      %v6416 = vld [vmem:[#allocation5 + $0x24] sm:$0xf]
      %v6417 = vld [vmem:[#allocation5 + $0x28] sm:$0xf]
      %v6418 = vld [vmem:[#allocation5 + $0x2c] sm:$0xf]
      %v6419 = vld [vmem:[#allocation5 + $0x30] sm:$0xf]
      %v6420 = vld [vmem:[#allocation5 + $0x34] sm:$0xf]
      %v6421 = vld [vmem:[#allocation5 + $0x38] sm:$0xf]
      %v6422 = vld [vmem:[#allocation5 + $0x3c] sm:$0xf]
      %v6423 = vld [vmem:[#allocation5 + $0x40] sm:$0xf]
      %v6424 = vld [vmem:[#allocation5 + $0x44] sm:$0xf]
      %v6425 = vld [vmem:[#allocation5 + $0x48] sm:$0xf]
      %v6426 = vld [vmem:[#allocation5 + $0x4c] sm:$0xf]
      %v6427 = vld [vmem:[#allocation5 + $0x50] sm:$0x1]
      %v6449 = vrot.slane %v6407, 5
      %v6450 = vrot.slane %v6449, 4
      %v6451 = vrot.slane %v6408, 5
      %v6452 = vsel %vm3306, %v6450, %v6451
      %v6453 = vrot.slane %v6451, 4
      %v6454 = vrot.slane %v6409, 5
      %v6455 = vsel %vm3306, %v6453, %v6454
      %v6456 = vrot.slane %v6454, 4
      %v6457 = vrot.slane %v6410, 5
      %v6458 = vsel %vm3306, %v6456, %v6457
      %v6459 = vrot.slane %v6457, 4
      %v6460 = vrot.slane %v6411, 5
      %v6461 = vsel %vm3306, %v6459, %v6460
      %v6462 = vrot.slane %v6460, 4
      %v6463 = vrot.slane %v6412, 5
      %v6464 = vsel %vm3306, %v6462, %v6463
      %v6465 = vrot.slane %v6463, 4
      %v6466 = vrot.slane %v6413, 5
      %v6467 = vsel %vm3306, %v6465, %v6466
      %v6468 = vrot.slane %v6466, 4
      %v6469 = vrot.slane %v6414, 5
      %v6470 = vsel %vm3306, %v6468, %v6469
      %v6471 = vrot.slane %v6469, 4
      %v6472 = vrot.slane %v6415, 5
      %v6473 = vsel %vm3306, %v6471, %v6472
      %v6474 = vrot.slane %v6472, 4
      %v6475 = vrot.slane %v6416, 5
      %v6476 = vsel %vm3306, %v6474, %v6475
      %v6477 = vrot.slane %v6475, 4
      %v6478 = vrot.slane %v6417, 5
      %v6479 = vsel %vm3306, %v6477, %v6478
      %v6480 = vrot.slane %v6478, 4
      %v6481 = vrot.slane %v6418, 5
      %v6482 = vsel %vm3306, %v6480, %v6481
      %v6483 = vrot.slane %v6481, 4
      %v6484 = vrot.slane %v6419, 5
      %v6485 = vsel %vm3306, %v6483, %v6484
      %v6486 = vrot.slane %v6484, 4
      %v6487 = vrot.slane %v6420, 5
      %v6488 = vsel %vm3306, %v6486, %v6487
      %v6489 = vrot.slane %v6487, 4
      %v6490 = vrot.slane %v6421, 5
      %v6491 = vsel %vm3306, %v6489, %v6490
      %v6492 = vrot.slane %v6490, 4
      %v6493 = vrot.slane %v6422, 5
      %v6494 = vsel %vm3306, %v6492, %v6493
      %v6495 = vrot.slane %v6493, 4
      %v6496 = vrot.slane %v6423, 5
      %v6497 = vsel %vm3306, %v6495, %v6496
      %v6498 = vrot.slane %v6496, 4
      %v6499 = vrot.slane %v6424, 5
      %v6500 = vsel %vm3306, %v6498, %v6499
      %v6501 = vrot.slane %v6499, 4
      %v6502 = vrot.slane %v6425, 5
      %v6503 = vsel %vm3306, %v6501, %v6502
      %v6504 = vrot.slane %v6502, 4
      %v6505 = vrot.slane %v6426, 5
      %v6506 = vsel %vm3306, %v6504, %v6505
      %v6507 = vrot.slane %v6505, 4
      %v6508 = vrot.slane %v6427, 5
      %v6509 = vsel %vm3306, %v6507, %v6508
      %6510 = vrot.lane.b32.xlu0 %v6452, 64
      %v6511 = vpop.permute.xlu0 %6510
      %6512 = vrot.lane.b32.xlu0 %v6455, 64
      %v6513 = vpop.permute.xlu0 %6512
      %6514 = vrot.lane.b32.xlu0 %v6458, 64
      %v6515 = vpop.permute.xlu0 %6514
      %6516 = vrot.lane.b32.xlu0 %v6461, 64
      %v6517 = vpop.permute.xlu0 %6516
      %6518 = vrot.lane.b32.xlu0 %v6464, 64
      %v6519 = vpop.permute.xlu0 %6518
      %6520 = vrot.lane.b32.xlu0 %v6467, 64
      %v6521 = vpop.permute.xlu0 %6520
      %6522 = vrot.lane.b32.xlu0 %v6470, 64
      %v6523 = vpop.permute.xlu0 %6522
      %6524 = vrot.lane.b32.xlu0 %v6473, 64
      %v6525 = vpop.permute.xlu0 %6524
      %6526 = vrot.lane.b32.xlu0 %v6476, 64
      %v6527 = vpop.permute.xlu0 %6526
      %6528 = vrot.lane.b32.xlu0 %v6479, 64
      %v6529 = vpop.permute.xlu0 %6528
      %6530 = vrot.lane.b32.xlu0 %v6482, 64
      %v6531 = vpop.permute.xlu0 %6530
      %6532 = vrot.lane.b32.xlu0 %v6485, 64
      %v6533 = vpop.permute.xlu0 %6532
      %6534 = vrot.lane.b32.xlu0 %v6488, 64
      %v6535 = vpop.permute.xlu0 %6534
      %6536 = vrot.lane.b32.xlu0 %v6491, 64
      %v6537 = vpop.permute.xlu0 %6536
      %6538 = vrot.lane.b32.xlu0 %v6494, 64
      %v6539 = vpop.permute.xlu0 %6538
      %6540 = vrot.lane.b32.xlu0 %v6497, 64
      %v6541 = vpop.permute.xlu0 %6540
      %6542 = vrot.lane.b32.xlu0 %v6500, 64
      %v6543 = vpop.permute.xlu0 %6542
      %6544 = vrot.lane.b32.xlu0 %v6503, 64
      %v6545 = vpop.permute.xlu0 %6544
      %6546 = vrot.lane.b32.xlu0 %v6506, 64
      %v6547 = vpop.permute.xlu0 %6546
      %6548 = vrot.lane.b32.xlu0 %v6509, 64
      %v6549 = vpop.permute.xlu0 %6548
      %6570 = vst.msk [vmem:[#allocation3] sm:$0xf] %vm3458, %v6511
      %6571 = vst.msk [vmem:[#allocation3 + $0xc] sm:$0xf] %vm3458, %v6513
      %6572 = vst.msk [vmem:[#allocation3 + $0x18] sm:$0xf] %vm3458, %v6515
      %6573 = vst.msk [vmem:[#allocation3 + $0x24] sm:$0xf] %vm3458, %v6517
      %6574 = vst.msk [vmem:[#allocation3 + $0x30] sm:$0xf] %vm3458, %v6519
      %6575 = vst.msk [vmem:[#allocation3 + $0x3c] sm:$0xf] %vm3458, %v6521
      %6576 = vst.msk [vmem:[#allocation3 + $0x48] sm:$0xf] %vm3458, %v6523
      %6577 = vst.msk [vmem:[#allocation3 + $0x54] sm:$0xf] %vm3458, %v6525
      %6578 = vst.msk [vmem:[#allocation3 + $0x60] sm:$0xf] %vm3458, %v6527
      %6579 = vst.msk [vmem:[#allocation3 + $0x6c] sm:$0xf] %vm3458, %v6529
      %6580 = vst.msk [vmem:[#allocation3 + $0x78] sm:$0xf] %vm3458, %v6531
      %6581 = vst.msk [vmem:[#allocation3 + $0x84] sm:$0xf] %vm3458, %v6533
      %6582 = vst.msk [vmem:[#allocation3 + $0x90] sm:$0xf] %vm3458, %v6535
      %6583 = vst.msk [vmem:[#allocation3 + $0x9c] sm:$0xf] %vm3458, %v6537
      %6584 = vst.msk [vmem:[#allocation3 + $0xa8] sm:$0xf] %vm3458, %v6539
      %6585 = vst.msk [vmem:[#allocation3 + $0xb4] sm:$0xf] %vm3458, %v6541
      %6586 = vst.msk [vmem:[#allocation3 + $0xc0] sm:$0xf] %vm3458, %v6543
      %6587 = vst.msk [vmem:[#allocation3 + $0xcc] sm:$0xf] %vm3458, %v6545
      %6588 = vst.msk [vmem:[#allocation3 + $0xd8] sm:$0xf] %vm3458, %v6547
      %6589 = vst.msk [vmem:[#allocation3 + $0xe4] sm:$0xf] %vm3458, %v6549
      %v6590 = vld [vmem:[#allocation5 + $0x8] sm:$0xf]
      %v6591 = vld [vmem:[#allocation5 + $0xc] sm:$0xf]
      %v6592 = vld [vmem:[#allocation5 + $0x10] sm:$0xf]
      %v6593 = vld [vmem:[#allocation5 + $0x14] sm:$0xf]
      %v6594 = vld [vmem:[#allocation5 + $0x18] sm:$0xf]
      %v6595 = vld [vmem:[#allocation5 + $0x1c] sm:$0xf]
      %v6596 = vld [vmem:[#allocation5 + $0x20] sm:$0xf]
      %v6597 = vld [vmem:[#allocation5 + $0x24] sm:$0xf]
      %v6598 = vld [vmem:[#allocation5 + $0x28] sm:$0xf]
      %v6599 = vld [vmem:[#allocation5 + $0x2c] sm:$0xf]
      %v6600 = vld [vmem:[#allocation5 + $0x30] sm:$0xf]
      %v6601 = vld [vmem:[#allocation5 + $0x34] sm:$0xf]
      %v6602 = vld [vmem:[#allocation5 + $0x38] sm:$0xf]
      %v6603 = vld [vmem:[#allocation5 + $0x3c] sm:$0xf]
      %v6604 = vld [vmem:[#allocation5 + $0x40] sm:$0xf]
      %v6605 = vld [vmem:[#allocation5 + $0x44] sm:$0xf]
      %v6606 = vld [vmem:[#allocation5 + $0x48] sm:$0xf]
      %v6607 = vld [vmem:[#allocation5 + $0x4c] sm:$0xf]
      %v6608 = vld [vmem:[#allocation5 + $0x50] sm:$0xf]
      %v6609 = vld [vmem:[#allocation5 + $0x54] sm:$0xf]
      %6630 = vrot.lane.b32.xlu0 %v6590, 96
      %v6631 = vpop.permute.xlu0 %6630
      %6632 = vrot.lane.b32.xlu0 %v6591, 96
      %v6633 = vpop.permute.xlu0 %6632
      %6634 = vrot.lane.b32.xlu0 %v6592, 96
      %v6635 = vpop.permute.xlu0 %6634
      %6636 = vrot.lane.b32.xlu0 %v6593, 96
      %v6637 = vpop.permute.xlu0 %6636
      %6638 = vrot.lane.b32.xlu0 %v6594, 96
      %v6639 = vpop.permute.xlu0 %6638
      %6640 = vrot.lane.b32.xlu0 %v6595, 96
      %v6641 = vpop.permute.xlu0 %6640
      %6642 = vrot.lane.b32.xlu0 %v6596, 96
      %v6643 = vpop.permute.xlu0 %6642
      %6644 = vrot.lane.b32.xlu0 %v6597, 96
      %v6645 = vpop.permute.xlu0 %6644
      %6646 = vrot.lane.b32.xlu0 %v6598, 96
      %v6647 = vpop.permute.xlu0 %6646
      %6648 = vrot.lane.b32.xlu0 %v6599, 96
      %v6649 = vpop.permute.xlu0 %6648
      %6650 = vrot.lane.b32.xlu0 %v6600, 96
      %v6651 = vpop.permute.xlu0 %6650
      %6652 = vrot.lane.b32.xlu0 %v6601, 96
      %v6653 = vpop.permute.xlu0 %6652
      %6654 = vrot.lane.b32.xlu0 %v6602, 96
      %v6655 = vpop.permute.xlu0 %6654
      %6656 = vrot.lane.b32.xlu0 %v6603, 96
      %v6657 = vpop.permute.xlu0 %6656
      %6658 = vrot.lane.b32.xlu0 %v6604, 96
      %v6659 = vpop.permute.xlu0 %6658
      %6660 = vrot.lane.b32.xlu0 %v6605, 96
      %v6661 = vpop.permute.xlu0 %6660
      %6662 = vrot.lane.b32.xlu0 %v6606, 96
      %v6663 = vpop.permute.xlu0 %6662
      %6664 = vrot.lane.b32.xlu0 %v6607, 96
      %v6665 = vpop.permute.xlu0 %6664
      %6666 = vrot.lane.b32.xlu0 %v6608, 96
      %v6667 = vpop.permute.xlu0 %6666
      %6668 = vrot.lane.b32.xlu0 %v6609, 96
      %v6669 = vpop.permute.xlu0 %6668
      %6690 = vst.msk [vmem:[#allocation3] sm:$0xf] %vm3635, %v6631
      %6691 = vst.msk [vmem:[#allocation3 + $0xc] sm:$0xf] %vm3635, %v6633
      %6692 = vst.msk [vmem:[#allocation3 + $0x18] sm:$0xf] %vm3635, %v6635
      %6693 = vst.msk [vmem:[#allocation3 + $0x24] sm:$0xf] %vm3635, %v6637
      %6694 = vst.msk [vmem:[#allocation3 + $0x30] sm:$0xf] %vm3635, %v6639
      %6695 = vst.msk [vmem:[#allocation3 + $0x3c] sm:$0xf] %vm3635, %v6641
      %6696 = vst.msk [vmem:[#allocation3 + $0x48] sm:$0xf] %vm3635, %v6643
      %6697 = vst.msk [vmem:[#allocation3 + $0x54] sm:$0xf] %vm3635, %v6645
      %6698 = vst.msk [vmem:[#allocation3 + $0x60] sm:$0xf] %vm3635, %v6647
      %6699 = vst.msk [vmem:[#allocation3 + $0x6c] sm:$0xf] %vm3635, %v6649
      %6700 = vst.msk [vmem:[#allocation3 + $0x78] sm:$0xf] %vm3635, %v6651
      %6701 = vst.msk [vmem:[#allocation3 + $0x84] sm:$0xf] %vm3635, %v6653
      %6702 = vst.msk [vmem:[#allocation3 + $0x90] sm:$0xf] %vm3635, %v6655
      %6703 = vst.msk [vmem:[#allocation3 + $0x9c] sm:$0xf] %vm3635, %v6657
      %6704 = vst.msk [vmem:[#allocation3 + $0xa8] sm:$0xf] %vm3635, %v6659
      %6705 = vst.msk [vmem:[#allocation3 + $0xb4] sm:$0xf] %vm3635, %v6661
      %6706 = vst.msk [vmem:[#allocation3 + $0xc0] sm:$0xf] %vm3635, %v6663
      %6707 = vst.msk [vmem:[#allocation3 + $0xcc] sm:$0xf] %vm3635, %v6665
      %6708 = vst.msk [vmem:[#allocation3 + $0xd8] sm:$0xf] %vm3635, %v6667
      %6709 = vst.msk [vmem:[#allocation3 + $0xe4] sm:$0xf] %vm3635, %v6669
      %v6710 = vld [vmem:[#allocation5 + $0x8] sm:$0xf]
      %v6711 = vld [vmem:[#allocation5 + $0xc] sm:$0xf]
      %v6712 = vld [vmem:[#allocation5 + $0x10] sm:$0xf]
      %v6713 = vld [vmem:[#allocation5 + $0x14] sm:$0xf]
      %v6714 = vld [vmem:[#allocation5 + $0x18] sm:$0xf]
      %v6715 = vld [vmem:[#allocation5 + $0x1c] sm:$0xf]
      %v6716 = vld [vmem:[#allocation5 + $0x20] sm:$0xf]
      %v6717 = vld [vmem:[#allocation5 + $0x24] sm:$0xf]
      %v6718 = vld [vmem:[#allocation5 + $0x28] sm:$0xf]
      %v6719 = vld [vmem:[#allocation5 + $0x2c] sm:$0xf]
      %v6720 = vld [vmem:[#allocation5 + $0x30] sm:$0xf]
      %v6721 = vld [vmem:[#allocation5 + $0x34] sm:$0xf]
      %v6722 = vld [vmem:[#allocation5 + $0x38] sm:$0xf]
      %v6723 = vld [vmem:[#allocation5 + $0x3c] sm:$0xf]
      %v6724 = vld [vmem:[#allocation5 + $0x40] sm:$0xf]
      %v6725 = vld [vmem:[#allocation5 + $0x44] sm:$0xf]
      %v6726 = vld [vmem:[#allocation5 + $0x48] sm:$0xf]
      %v6727 = vld [vmem:[#allocation5 + $0x4c] sm:$0xf]
      %v6728 = vld [vmem:[#allocation5 + $0x50] sm:$0xf]
      %v6729 = vld [vmem:[#allocation5 + $0x54] sm:$0xf]
      %v6730 = vld [vmem:[#allocation5 + $0x58] sm:$0x1]
      %v6732 = vshrl.u32 %v6710, 16
      %v6734 = vrot.slane %v6732, 4
      %v6735 = vshll.u32 %v6710, 16
      %v6737 = vrot.slane %v6735, 5
      %v6738 = vor.u32 %v6734, %v6737
      %v6739 = vrot.slane %v6738, 4
      %v6741 = vshll.u32 %v6711, 16
      %v6743 = vrot.slane %v6741, 5
      %v6744 = vsel %vm2870, %v6739, %v6743
      %v6745 = vshrl.u32 %v6711, 16
      %v6747 = vrot.slane %v6745, 4
      %v6748 = vor.u32 %v6747, %v6743
      %v6749 = vrot.slane %v6748, 4
      %v6751 = vshll.u32 %v6712, 16
      %v6753 = vrot.slane %v6751, 5
      %v6754 = vsel %vm2870, %v6749, %v6753
      %v6755 = vshrl.u32 %v6712, 16
      %v6757 = vrot.slane %v6755, 4
      %v6758 = vor.u32 %v6757, %v6753
      %v6759 = vrot.slane %v6758, 4
      %v6761 = vshll.u32 %v6713, 16
      %v6763 = vrot.slane %v6761, 5
      %v6764 = vsel %vm2870, %v6759, %v6763
      %v6765 = vshrl.u32 %v6713, 16
      %v6767 = vrot.slane %v6765, 4
      %v6768 = vor.u32 %v6767, %v6763
      %v6769 = vrot.slane %v6768, 4
      %v6771 = vshll.u32 %v6714, 16
      %v6773 = vrot.slane %v6771, 5
      %v6774 = vsel %vm2870, %v6769, %v6773
      %v6775 = vshrl.u32 %v6714, 16
      %v6777 = vrot.slane %v6775, 4
      %v6778 = vor.u32 %v6777, %v6773
      %v6779 = vrot.slane %v6778, 4
      %v6781 = vshll.u32 %v6715, 16
      %v6783 = vrot.slane %v6781, 5
      %v6784 = vsel %vm2870, %v6779, %v6783
      %v6785 = vshrl.u32 %v6715, 16
      %v6787 = vrot.slane %v6785, 4
      %v6788 = vor.u32 %v6787, %v6783
      %v6789 = vrot.slane %v6788, 4
      %v6791 = vshll.u32 %v6716, 16
      %v6793 = vrot.slane %v6791, 5
      %v6794 = vsel %vm2870, %v6789, %v6793
      %v6795 = vshrl.u32 %v6716, 16
      %v6797 = vrot.slane %v6795, 4
      %v6798 = vor.u32 %v6797, %v6793
      %v6799 = vrot.slane %v6798, 4
      %v6801 = vshll.u32 %v6717, 16
      %v6803 = vrot.slane %v6801, 5
      %v6804 = vsel %vm2870, %v6799, %v6803
      %v6805 = vshrl.u32 %v6717, 16
      %v6807 = vrot.slane %v6805, 4
      %v6808 = vor.u32 %v6807, %v6803
      %v6809 = vrot.slane %v6808, 4
      %v6811 = vshll.u32 %v6718, 16
      %v6813 = vrot.slane %v6811, 5
      %v6814 = vsel %vm2870, %v6809, %v6813
      %v6815 = vshrl.u32 %v6718, 16
      %v6817 = vrot.slane %v6815, 4
      %v6818 = vor.u32 %v6817, %v6813
      %v6819 = vrot.slane %v6818, 4
      %v6821 = vshll.u32 %v6719, 16
      %v6823 = vrot.slane %v6821, 5
      %v6824 = vsel %vm2870, %v6819, %v6823
      %v6825 = vshrl.u32 %v6719, 16
      %v6827 = vrot.slane %v6825, 4
      %v6828 = vor.u32 %v6827, %v6823
      %v6829 = vrot.slane %v6828, 4
      %v6831 = vshll.u32 %v6720, 16
      %v6833 = vrot.slane %v6831, 5
      %v6834 = vsel %vm2870, %v6829, %v6833
      %v6835 = vshrl.u32 %v6720, 16
      %v6837 = vrot.slane %v6835, 4
      %v6838 = vor.u32 %v6837, %v6833
      %v6839 = vrot.slane %v6838, 4
      %v6841 = vshll.u32 %v6721, 16
      %v6843 = vrot.slane %v6841, 5
      %v6844 = vsel %vm2870, %v6839, %v6843
      %v6845 = vshrl.u32 %v6721, 16
      %v6847 = vrot.slane %v6845, 4
      %v6848 = vor.u32 %v6847, %v6843
      %v6849 = vrot.slane %v6848, 4
      %v6851 = vshll.u32 %v6722, 16
      %v6853 = vrot.slane %v6851, 5
      %v6854 = vsel %vm2870, %v6849, %v6853
      %v6855 = vshrl.u32 %v6722, 16
      %v6857 = vrot.slane %v6855, 4
      %v6858 = vor.u32 %v6857, %v6853
      %v6859 = vrot.slane %v6858, 4
      %v6861 = vshll.u32 %v6723, 16
      %v6863 = vrot.slane %v6861, 5
      %v6864 = vsel %vm2870, %v6859, %v6863
      %v6865 = vshrl.u32 %v6723, 16
      %v6867 = vrot.slane %v6865, 4
      %v6868 = vor.u32 %v6867, %v6863
      %v6869 = vrot.slane %v6868, 4
      %v6871 = vshll.u32 %v6724, 16
      %v6873 = vrot.slane %v6871, 5
      %v6874 = vsel %vm2870, %v6869, %v6873
      %v6875 = vshrl.u32 %v6724, 16
      %v6877 = vrot.slane %v6875, 4
      %v6878 = vor.u32 %v6877, %v6873
      %v6879 = vrot.slane %v6878, 4
      %v6881 = vshll.u32 %v6725, 16
      %v6883 = vrot.slane %v6881, 5
      %v6884 = vsel %vm2870, %v6879, %v6883
      %v6885 = vshrl.u32 %v6725, 16
      %v6887 = vrot.slane %v6885, 4
      %v6888 = vor.u32 %v6887, %v6883
      %v6889 = vrot.slane %v6888, 4
      %v6891 = vshll.u32 %v6726, 16
      %v6893 = vrot.slane %v6891, 5
      %v6894 = vsel %vm2870, %v6889, %v6893
      %v6895 = vshrl.u32 %v6726, 16
      %v6897 = vrot.slane %v6895, 4
      %v6898 = vor.u32 %v6897, %v6893
      %v6899 = vrot.slane %v6898, 4
      %v6901 = vshll.u32 %v6727, 16
      %v6903 = vrot.slane %v6901, 5
      %v6904 = vsel %vm2870, %v6899, %v6903
      %v6905 = vshrl.u32 %v6727, 16
      %v6907 = vrot.slane %v6905, 4
      %v6908 = vor.u32 %v6907, %v6903
      %v6909 = vrot.slane %v6908, 4
      %v6911 = vshll.u32 %v6728, 16
      %v6913 = vrot.slane %v6911, 5
      %v6914 = vsel %vm2870, %v6909, %v6913
      %v6915 = vshrl.u32 %v6728, 16
      %v6917 = vrot.slane %v6915, 4
      %v6918 = vor.u32 %v6917, %v6913
      %v6919 = vrot.slane %v6918, 4
      %v6921 = vshll.u32 %v6729, 16
      %v6923 = vrot.slane %v6921, 5
      %v6924 = vsel %vm2870, %v6919, %v6923
      %v6925 = vshrl.u32 %v6729, 16
      %v6927 = vrot.slane %v6925, 4
      %v6928 = vor.u32 %v6927, %v6923
      %v6929 = vrot.slane %v6928, 4
      %v6931 = vshll.u32 %v6730, 16
      %v6933 = vrot.slane %v6931, 5
      %v6934 = vsel %vm2870, %v6929, %v6933
      %6955 = vst.msk [vmem:[#allocation3 + $0x4] sm:$0xf] %vm2764, %v6744
      %6956 = vst.msk [vmem:[#allocation3 + $0x10] sm:$0xf] %vm2764, %v6754
      %6957 = vst.msk [vmem:[#allocation3 + $0x1c] sm:$0xf] %vm2764, %v6764
      %6958 = vst.msk [vmem:[#allocation3 + $0x28] sm:$0xf] %vm2764, %v6774
      %6959 = vst.msk [vmem:[#allocation3 + $0x34] sm:$0xf] %vm2764, %v6784
      %6960 = vst.msk [vmem:[#allocation3 + $0x40] sm:$0xf] %vm2764, %v6794
      %6961 = vst.msk [vmem:[#allocation3 + $0x4c] sm:$0xf] %vm2764, %v6804
      %6962 = vst.msk [vmem:[#allocation3 + $0x58] sm:$0xf] %vm2764, %v6814
      %6963 = vst.msk [vmem:[#allocation3 + $0x64] sm:$0xf] %vm2764, %v6824
      %6964 = vst.msk [vmem:[#allocation3 + $0x70] sm:$0xf] %vm2764, %v6834
      %6965 = vst.msk [vmem:[#allocation3 + $0x7c] sm:$0xf] %vm2764, %v6844
      %6966 = vst.msk [vmem:[#allocation3 + $0x88] sm:$0xf] %vm2764, %v6854
      %6967 = vst.msk [vmem:[#allocation3 + $0x94] sm:$0xf] %vm2764, %v6864
      %6968 = vst.msk [vmem:[#allocation3 + $0xa0] sm:$0xf] %vm2764, %v6874
      %6969 = vst.msk [vmem:[#allocation3 + $0xac] sm:$0xf] %vm2764, %v6884
      %6970 = vst.msk [vmem:[#allocation3 + $0xb8] sm:$0xf] %vm2764, %v6894
      %6971 = vst.msk [vmem:[#allocation3 + $0xc4] sm:$0xf] %vm2764, %v6904
      %6972 = vst.msk [vmem:[#allocation3 + $0xd0] sm:$0xf] %vm2764, %v6914
      %6973 = vst.msk [vmem:[#allocation3 + $0xdc] sm:$0xf] %vm2764, %v6924
      %6974 = vst.msk [vmem:[#allocation3 + $0xe8] sm:$0xf] %vm2764, %v6934
      %v6975 = vld [vmem:[#allocation5 + $0x8] sm:$0xe]
      %v6976 = vld [vmem:[#allocation5 + $0xc] sm:$0xf]
      %v6977 = vld [vmem:[#allocation5 + $0x10] sm:$0xf]
      %v6978 = vld [vmem:[#allocation5 + $0x14] sm:$0xf]
      %v6979 = vld [vmem:[#allocation5 + $0x18] sm:$0xf]
      %v6980 = vld [vmem:[#allocation5 + $0x1c] sm:$0xf]
      %v6981 = vld [vmem:[#allocation5 + $0x20] sm:$0xf]
      %v6982 = vld [vmem:[#allocation5 + $0x24] sm:$0xf]
      %v6983 = vld [vmem:[#allocation5 + $0x28] sm:$0xf]
      %v6984 = vld [vmem:[#allocation5 + $0x2c] sm:$0xf]
      %v6985 = vld [vmem:[#allocation5 + $0x30] sm:$0xf]
      %v6986 = vld [vmem:[#allocation5 + $0x34] sm:$0xf]
      %v6987 = vld [vmem:[#allocation5 + $0x38] sm:$0xf]
      %v6988 = vld [vmem:[#allocation5 + $0x3c] sm:$0xf]
      %v6989 = vld [vmem:[#allocation5 + $0x40] sm:$0xf]
      %v6990 = vld [vmem:[#allocation5 + $0x44] sm:$0xf]
      %v6991 = vld [vmem:[#allocation5 + $0x48] sm:$0xf]
      %v6992 = vld [vmem:[#allocation5 + $0x4c] sm:$0xf]
      %v6993 = vld [vmem:[#allocation5 + $0x50] sm:$0xf]
      %v6994 = vld [vmem:[#allocation5 + $0x54] sm:$0xf]
      %v6995 = vld [vmem:[#allocation5 + $0x58] sm:$0x1]
      %v7017 = vrot.slane %v6975, 5
      %v7018 = vrot.slane %v7017, 4
      %v7019 = vrot.slane %v6976, 5
      %v7020 = vsel %vm3306, %v7018, %v7019
      %v7021 = vrot.slane %v7019, 4
      %v7022 = vrot.slane %v6977, 5
      %v7023 = vsel %vm3306, %v7021, %v7022
      %v7024 = vrot.slane %v7022, 4
      %v7025 = vrot.slane %v6978, 5
      %v7026 = vsel %vm3306, %v7024, %v7025
      %v7027 = vrot.slane %v7025, 4
      %v7028 = vrot.slane %v6979, 5
      %v7029 = vsel %vm3306, %v7027, %v7028
      %v7030 = vrot.slane %v7028, 4
      %v7031 = vrot.slane %v6980, 5
      %v7032 = vsel %vm3306, %v7030, %v7031
      %v7033 = vrot.slane %v7031, 4
      %v7034 = vrot.slane %v6981, 5
      %v7035 = vsel %vm3306, %v7033, %v7034
      %v7036 = vrot.slane %v7034, 4
      %v7037 = vrot.slane %v6982, 5
      %v7038 = vsel %vm3306, %v7036, %v7037
      %v7039 = vrot.slane %v7037, 4
      %v7040 = vrot.slane %v6983, 5
      %v7041 = vsel %vm3306, %v7039, %v7040
      %v7042 = vrot.slane %v7040, 4
      %v7043 = vrot.slane %v6984, 5
      %v7044 = vsel %vm3306, %v7042, %v7043
      %v7045 = vrot.slane %v7043, 4
      %v7046 = vrot.slane %v6985, 5
      %v7047 = vsel %vm3306, %v7045, %v7046
      %v7048 = vrot.slane %v7046, 4
      %v7049 = vrot.slane %v6986, 5
      %v7050 = vsel %vm3306, %v7048, %v7049
      %v7051 = vrot.slane %v7049, 4
      %v7052 = vrot.slane %v6987, 5
      %v7053 = vsel %vm3306, %v7051, %v7052
      %v7054 = vrot.slane %v7052, 4
      %v7055 = vrot.slane %v6988, 5
      %v7056 = vsel %vm3306, %v7054, %v7055
      %v7057 = vrot.slane %v7055, 4
      %v7058 = vrot.slane %v6989, 5
      %v7059 = vsel %vm3306, %v7057, %v7058
      %v7060 = vrot.slane %v7058, 4
      %v7061 = vrot.slane %v6990, 5
      %v7062 = vsel %vm3306, %v7060, %v7061
      %v7063 = vrot.slane %v7061, 4
      %v7064 = vrot.slane %v6991, 5
      %v7065 = vsel %vm3306, %v7063, %v7064
      %v7066 = vrot.slane %v7064, 4
      %v7067 = vrot.slane %v6992, 5
      %v7068 = vsel %vm3306, %v7066, %v7067
      %v7069 = vrot.slane %v7067, 4
      %v7070 = vrot.slane %v6993, 5
      %v7071 = vsel %vm3306, %v7069, %v7070
      %v7072 = vrot.slane %v7070, 4
      %v7073 = vrot.slane %v6994, 5
      %v7074 = vsel %vm3306, %v7072, %v7073
      %v7075 = vrot.slane %v7073, 4
      %v7076 = vrot.slane %v6995, 5
      %v7077 = vsel %vm3306, %v7075, %v7076
      %7078 = vrot.lane.b32.xlu0 %v7020, 32
      %v7079 = vpop.permute.xlu0 %7078
      %7080 = vrot.lane.b32.xlu0 %v7023, 32
      %v7081 = vpop.permute.xlu0 %7080
      %7082 = vrot.lane.b32.xlu0 %v7026, 32
      %v7083 = vpop.permute.xlu0 %7082
      %7084 = vrot.lane.b32.xlu0 %v7029, 32
      %v7085 = vpop.permute.xlu0 %7084
      %7086 = vrot.lane.b32.xlu0 %v7032, 32
      %v7087 = vpop.permute.xlu0 %7086
      %7088 = vrot.lane.b32.xlu0 %v7035, 32
      %v7089 = vpop.permute.xlu0 %7088
      %7090 = vrot.lane.b32.xlu0 %v7038, 32
      %v7091 = vpop.permute.xlu0 %7090
      %7092 = vrot.lane.b32.xlu0 %v7041, 32
      %v7093 = vpop.permute.xlu0 %7092
      %7094 = vrot.lane.b32.xlu0 %v7044, 32
      %v7095 = vpop.permute.xlu0 %7094
      %7096 = vrot.lane.b32.xlu0 %v7047, 32
      %v7097 = vpop.permute.xlu0 %7096
      %7098 = vrot.lane.b32.xlu0 %v7050, 32
      %v7099 = vpop.permute.xlu0 %7098
      %7100 = vrot.lane.b32.xlu0 %v7053, 32
      %v7101 = vpop.permute.xlu0 %7100
      %7102 = vrot.lane.b32.xlu0 %v7056, 32
      %v7103 = vpop.permute.xlu0 %7102
      %7104 = vrot.lane.b32.xlu0 %v7059, 32
      %v7105 = vpop.permute.xlu0 %7104
      %7106 = vrot.lane.b32.xlu0 %v7062, 32
      %v7107 = vpop.permute.xlu0 %7106
      %7108 = vrot.lane.b32.xlu0 %v7065, 32
      %v7109 = vpop.permute.xlu0 %7108
      %7110 = vrot.lane.b32.xlu0 %v7068, 32
      %v7111 = vpop.permute.xlu0 %7110
      %7112 = vrot.lane.b32.xlu0 %v7071, 32
      %v7113 = vpop.permute.xlu0 %7112
      %7114 = vrot.lane.b32.xlu0 %v7074, 32
      %v7115 = vpop.permute.xlu0 %7114
      %7116 = vrot.lane.b32.xlu0 %v7077, 32
      %v7117 = vpop.permute.xlu0 %7116
      %7138 = vst.msk [vmem:[#allocation3 + $0x4] sm:$0xf] %vm3200, %v7079
      %7139 = vst.msk [vmem:[#allocation3 + $0x10] sm:$0xf] %vm3200, %v7081
      %7140 = vst.msk [vmem:[#allocation3 + $0x1c] sm:$0xf] %vm3200, %v7083
      %7141 = vst.msk [vmem:[#allocation3 + $0x28] sm:$0xf] %vm3200, %v7085
      %7142 = vst.msk [vmem:[#allocation3 + $0x34] sm:$0xf] %vm3200, %v7087
      %7143 = vst.msk [vmem:[#allocation3 + $0x40] sm:$0xf] %vm3200, %v7089
      %7144 = vst.msk [vmem:[#allocation3 + $0x4c] sm:$0xf] %vm3200, %v7091
      %7145 = vst.msk [vmem:[#allocation3 + $0x58] sm:$0xf] %vm3200, %v7093
      %7146 = vst.msk [vmem:[#allocation3 + $0x64] sm:$0xf] %vm3200, %v7095
      %7147 = vst.msk [vmem:[#allocation3 + $0x70] sm:$0xf] %vm3200, %v7097
      %7148 = vst.msk [vmem:[#allocation3 + $0x7c] sm:$0xf] %vm3200, %v7099
      %7149 = vst.msk [vmem:[#allocation3 + $0x88] sm:$0xf] %vm3200, %v7101
      %7150 = vst.msk [vmem:[#allocation3 + $0x94] sm:$0xf] %vm3200, %v7103
      %7151 = vst.msk [vmem:[#allocation3 + $0xa0] sm:$0xf] %vm3200, %v7105
      %7152 = vst.msk [vmem:[#allocation3 + $0xac] sm:$0xf] %vm3200, %v7107
      %7153 = vst.msk [vmem:[#allocation3 + $0xb8] sm:$0xf] %vm3200, %v7109
      %7154 = vst.msk [vmem:[#allocation3 + $0xc4] sm:$0xf] %vm3200, %v7111
      %7155 = vst.msk [vmem:[#allocation3 + $0xd0] sm:$0xf] %vm3200, %v7113
      %7156 = vst.msk [vmem:[#allocation3 + $0xdc] sm:$0xf] %vm3200, %v7115
      %7157 = vst.msk [vmem:[#allocation3 + $0xe8] sm:$0xf] %vm3200, %v7117
      %v7158 = vld [vmem:[#allocation5 + $0x10] sm:$0xf]
      %v7159 = vld [vmem:[#allocation5 + $0x14] sm:$0xf]
      %v7160 = vld [vmem:[#allocation5 + $0x18] sm:$0xf]
      %v7161 = vld [vmem:[#allocation5 + $0x1c] sm:$0xf]
      %v7162 = vld [vmem:[#allocation5 + $0x20] sm:$0xf]
      %v7163 = vld [vmem:[#allocation5 + $0x24] sm:$0xf]
      %v7164 = vld [vmem:[#allocation5 + $0x28] sm:$0xf]
      %v7165 = vld [vmem:[#allocation5 + $0x2c] sm:$0xf]
      %v7166 = vld [vmem:[#allocation5 + $0x30] sm:$0xf]
      %v7167 = vld [vmem:[#allocation5 + $0x34] sm:$0xf]
      %v7168 = vld [vmem:[#allocation5 + $0x38] sm:$0xf]
      %v7169 = vld [vmem:[#allocation5 + $0x3c] sm:$0xf]
      %v7170 = vld [vmem:[#allocation5 + $0x40] sm:$0xf]
      %v7171 = vld [vmem:[#allocation5 + $0x44] sm:$0xf]
      %v7172 = vld [vmem:[#allocation5 + $0x48] sm:$0xf]
      %v7173 = vld [vmem:[#allocation5 + $0x4c] sm:$0xf]
      %v7174 = vld [vmem:[#allocation5 + $0x50] sm:$0xf]
      %v7175 = vld [vmem:[#allocation5 + $0x54] sm:$0xf]
      %v7176 = vld [vmem:[#allocation5 + $0x58] sm:$0xf]
      %v7177 = vld [vmem:[#allocation5 + $0x5c] sm:$0xf]
      %7198 = vrot.lane.b32.xlu0 %v7158, 64
      %v7199 = vpop.permute.xlu0 %7198
      %7200 = vrot.lane.b32.xlu0 %v7159, 64
      %v7201 = vpop.permute.xlu0 %7200
      %7202 = vrot.lane.b32.xlu0 %v7160, 64
      %v7203 = vpop.permute.xlu0 %7202
      %7204 = vrot.lane.b32.xlu0 %v7161, 64
      %v7205 = vpop.permute.xlu0 %7204
      %7206 = vrot.lane.b32.xlu0 %v7162, 64
      %v7207 = vpop.permute.xlu0 %7206
      %7208 = vrot.lane.b32.xlu0 %v7163, 64
      %v7209 = vpop.permute.xlu0 %7208
      %7210 = vrot.lane.b32.xlu0 %v7164, 64
      %v7211 = vpop.permute.xlu0 %7210
      %7212 = vrot.lane.b32.xlu0 %v7165, 64
      %v7213 = vpop.permute.xlu0 %7212
      %7214 = vrot.lane.b32.xlu0 %v7166, 64
      %v7215 = vpop.permute.xlu0 %7214
      %7216 = vrot.lane.b32.xlu0 %v7167, 64
      %v7217 = vpop.permute.xlu0 %7216
      %7218 = vrot.lane.b32.xlu0 %v7168, 64
      %v7219 = vpop.permute.xlu0 %7218
      %7220 = vrot.lane.b32.xlu0 %v7169, 64
      %v7221 = vpop.permute.xlu0 %7220
      %7222 = vrot.lane.b32.xlu0 %v7170, 64
      %v7223 = vpop.permute.xlu0 %7222
      %7224 = vrot.lane.b32.xlu0 %v7171, 64
      %v7225 = vpop.permute.xlu0 %7224
      %7226 = vrot.lane.b32.xlu0 %v7172, 64
      %v7227 = vpop.permute.xlu0 %7226
      %7228 = vrot.lane.b32.xlu0 %v7173, 64
      %v7229 = vpop.permute.xlu0 %7228
      %7230 = vrot.lane.b32.xlu0 %v7174, 64
      %v7231 = vpop.permute.xlu0 %7230
      %7232 = vrot.lane.b32.xlu0 %v7175, 64
      %v7233 = vpop.permute.xlu0 %7232
      %7234 = vrot.lane.b32.xlu0 %v7176, 64
      %v7235 = vpop.permute.xlu0 %7234
      %7236 = vrot.lane.b32.xlu0 %v7177, 64
      %v7237 = vpop.permute.xlu0 %7236
      %7258 = vst.msk [vmem:[#allocation3 + $0x4] sm:$0xf] %vm3458, %v7199
      %7259 = vst.msk [vmem:[#allocation3 + $0x10] sm:$0xf] %vm3458, %v7201
      %7260 = vst.msk [vmem:[#allocation3 + $0x1c] sm:$0xf] %vm3458, %v7203
      %7261 = vst.msk [vmem:[#allocation3 + $0x28] sm:$0xf] %vm3458, %v7205
      %7262 = vst.msk [vmem:[#allocation3 + $0x34] sm:$0xf] %vm3458, %v7207
      %7263 = vst.msk [vmem:[#allocation3 + $0x40] sm:$0xf] %vm3458, %v7209
      %7264 = vst.msk [vmem:[#allocation3 + $0x4c] sm:$0xf] %vm3458, %v7211
      %7265 = vst.msk [vmem:[#allocation3 + $0x58] sm:$0xf] %vm3458, %v7213
      %7266 = vst.msk [vmem:[#allocation3 + $0x64] sm:$0xf] %vm3458, %v7215
      %7267 = vst.msk [vmem:[#allocation3 + $0x70] sm:$0xf] %vm3458, %v7217
      %7268 = vst.msk [vmem:[#allocation3 + $0x7c] sm:$0xf] %vm3458, %v7219
      %7269 = vst.msk [vmem:[#allocation3 + $0x88] sm:$0xf] %vm3458, %v7221
      %7270 = vst.msk [vmem:[#allocation3 + $0x94] sm:$0xf] %vm3458, %v7223
      %7271 = vst.msk [vmem:[#allocation3 + $0xa0] sm:$0xf] %vm3458, %v7225
      %7272 = vst.msk [vmem:[#allocation3 + $0xac] sm:$0xf] %vm3458, %v7227
      %7273 = vst.msk [vmem:[#allocation3 + $0xb8] sm:$0xf] %vm3458, %v7229
      %7274 = vst.msk [vmem:[#allocation3 + $0xc4] sm:$0xf] %vm3458, %v7231
      %7275 = vst.msk [vmem:[#allocation3 + $0xd0] sm:$0xf] %vm3458, %v7233
      %7276 = vst.msk [vmem:[#allocation3 + $0xdc] sm:$0xf] %vm3458, %v7235
      %7277 = vst.msk [vmem:[#allocation3 + $0xe8] sm:$0xf] %vm3458, %v7237
      %v7278 = vld [vmem:[#allocation5 + $0x10] sm:$0xf]
      %v7279 = vld [vmem:[#allocation5 + $0x14] sm:$0xf]
      %v7280 = vld [vmem:[#allocation5 + $0x18] sm:$0xf]
      %v7281 = vld [vmem:[#allocation5 + $0x1c] sm:$0xf]
      %v7282 = vld [vmem:[#allocation5 + $0x20] sm:$0xf]
      %v7283 = vld [vmem:[#allocation5 + $0x24] sm:$0xf]
      %v7284 = vld [vmem:[#allocation5 + $0x28] sm:$0xf]
      %v7285 = vld [vmem:[#allocation5 + $0x2c] sm:$0xf]
      %v7286 = vld [vmem:[#allocation5 + $0x30] sm:$0xf]
      %v7287 = vld [vmem:[#allocation5 + $0x34] sm:$0xf]
      %v7288 = vld [vmem:[#allocation5 + $0x38] sm:$0xf]
      %v7289 = vld [vmem:[#allocation5 + $0x3c] sm:$0xf]
      %v7290 = vld [vmem:[#allocation5 + $0x40] sm:$0xf]
      %v7291 = vld [vmem:[#allocation5 + $0x44] sm:$0xf]
      %v7292 = vld [vmem:[#allocation5 + $0x48] sm:$0xf]
      %v7293 = vld [vmem:[#allocation5 + $0x4c] sm:$0xf]
      %v7294 = vld [vmem:[#allocation5 + $0x50] sm:$0xf]
      %v7295 = vld [vmem:[#allocation5 + $0x54] sm:$0xf]
      %v7296 = vld [vmem:[#allocation5 + $0x58] sm:$0xf]
      %v7297 = vld [vmem:[#allocation5 + $0x5c] sm:$0xf]
      %v7298 = vld [vmem:[#allocation5 + $0x60] sm:$0x1]
      %v7300 = vshrl.u32 %v7278, 16
      %v7302 = vrot.slane %v7300, 4
      %v7303 = vshll.u32 %v7278, 16
      %v7305 = vrot.slane %v7303, 5
      %v7306 = vor.u32 %v7302, %v7305
      %v7307 = vrot.slane %v7306, 4
      %v7309 = vshll.u32 %v7279, 16
      %v7311 = vrot.slane %v7309, 5
      %v7312 = vsel %vm2870, %v7307, %v7311
      %v7313 = vshrl.u32 %v7279, 16
      %v7315 = vrot.slane %v7313, 4
      %v7316 = vor.u32 %v7315, %v7311
      %v7317 = vrot.slane %v7316, 4
      %v7319 = vshll.u32 %v7280, 16
      %v7321 = vrot.slane %v7319, 5
      %v7322 = vsel %vm2870, %v7317, %v7321
      %v7323 = vshrl.u32 %v7280, 16
      %v7325 = vrot.slane %v7323, 4
      %v7326 = vor.u32 %v7325, %v7321
      %v7327 = vrot.slane %v7326, 4
      %v7329 = vshll.u32 %v7281, 16
      %v7331 = vrot.slane %v7329, 5
      %v7332 = vsel %vm2870, %v7327, %v7331
      %v7333 = vshrl.u32 %v7281, 16
      %v7335 = vrot.slane %v7333, 4
      %v7336 = vor.u32 %v7335, %v7331
      %v7337 = vrot.slane %v7336, 4
      %v7339 = vshll.u32 %v7282, 16
      %v7341 = vrot.slane %v7339, 5
      %v7342 = vsel %vm2870, %v7337, %v7341
      %v7343 = vshrl.u32 %v7282, 16
      %v7345 = vrot.slane %v7343, 4
      %v7346 = vor.u32 %v7345, %v7341
      %v7347 = vrot.slane %v7346, 4
      %v7349 = vshll.u32 %v7283, 16
      %v7351 = vrot.slane %v7349, 5
      %v7352 = vsel %vm2870, %v7347, %v7351
      %v7353 = vshrl.u32 %v7283, 16
      %v7355 = vrot.slane %v7353, 4
      %v7356 = vor.u32 %v7355, %v7351
      %v7357 = vrot.slane %v7356, 4
      %v7359 = vshll.u32 %v7284, 16
      %v7361 = vrot.slane %v7359, 5
      %v7362 = vsel %vm2870, %v7357, %v7361
      %v7363 = vshrl.u32 %v7284, 16
      %v7365 = vrot.slane %v7363, 4
      %v7366 = vor.u32 %v7365, %v7361
      %v7367 = vrot.slane %v7366, 4
      %v7369 = vshll.u32 %v7285, 16
      %v7371 = vrot.slane %v7369, 5
      %v7372 = vsel %vm2870, %v7367, %v7371
      %v7373 = vshrl.u32 %v7285, 16
      %v7375 = vrot.slane %v7373, 4
      %v7376 = vor.u32 %v7375, %v7371
      %v7377 = vrot.slane %v7376, 4
      %v7379 = vshll.u32 %v7286, 16
      %v7381 = vrot.slane %v7379, 5
      %v7382 = vsel %vm2870, %v7377, %v7381
      %v7383 = vshrl.u32 %v7286, 16
      %v7385 = vrot.slane %v7383, 4
      %v7386 = vor.u32 %v7385, %v7381
      %v7387 = vrot.slane %v7386, 4
      %v7389 = vshll.u32 %v7287, 16
      %v7391 = vrot.slane %v7389, 5
      %v7392 = vsel %vm2870, %v7387, %v7391
      %v7393 = vshrl.u32 %v7287, 16
      %v7395 = vrot.slane %v7393, 4
      %v7396 = vor.u32 %v7395, %v7391
      %v7397 = vrot.slane %v7396, 4
      %v7399 = vshll.u32 %v7288, 16
      %v7401 = vrot.slane %v7399, 5
      %v7402 = vsel %vm2870, %v7397, %v7401
      %v7403 = vshrl.u32 %v7288, 16
      %v7405 = vrot.slane %v7403, 4
      %v7406 = vor.u32 %v7405, %v7401
      %v7407 = vrot.slane %v7406, 4
      %v7409 = vshll.u32 %v7289, 16
      %v7411 = vrot.slane %v7409, 5
      %v7412 = vsel %vm2870, %v7407, %v7411
      %v7413 = vshrl.u32 %v7289, 16
      %v7415 = vrot.slane %v7413, 4
      %v7416 = vor.u32 %v7415, %v7411
      %v7417 = vrot.slane %v7416, 4
      %v7419 = vshll.u32 %v7290, 16
      %v7421 = vrot.slane %v7419, 5
      %v7422 = vsel %vm2870, %v7417, %v7421
      %v7423 = vshrl.u32 %v7290, 16
      %v7425 = vrot.slane %v7423, 4
      %v7426 = vor.u32 %v7425, %v7421
      %v7427 = vrot.slane %v7426, 4
      %v7429 = vshll.u32 %v7291, 16
      %v7431 = vrot.slane %v7429, 5
      %v7432 = vsel %vm2870, %v7427, %v7431
      %v7433 = vshrl.u32 %v7291, 16
      %v7435 = vrot.slane %v7433, 4
      %v7436 = vor.u32 %v7435, %v7431
      %v7437 = vrot.slane %v7436, 4
      %v7439 = vshll.u32 %v7292, 16
      %v7441 = vrot.slane %v7439, 5
      %v7442 = vsel %vm2870, %v7437, %v7441
      %v7443 = vshrl.u32 %v7292, 16
      %v7445 = vrot.slane %v7443, 4
      %v7446 = vor.u32 %v7445, %v7441
      %v7447 = vrot.slane %v7446, 4
      %v7449 = vshll.u32 %v7293, 16
      %v7451 = vrot.slane %v7449, 5
      %v7452 = vsel %vm2870, %v7447, %v7451
      %v7453 = vshrl.u32 %v7293, 16
      %v7455 = vrot.slane %v7453, 4
      %v7456 = vor.u32 %v7455, %v7451
      %v7457 = vrot.slane %v7456, 4
      %v7459 = vshll.u32 %v7294, 16
      %v7461 = vrot.slane %v7459, 5
      %v7462 = vsel %vm2870, %v7457, %v7461
      %v7463 = vshrl.u32 %v7294, 16
      %v7465 = vrot.slane %v7463, 4
      %v7466 = vor.u32 %v7465, %v7461
      %v7467 = vrot.slane %v7466, 4
      %v7469 = vshll.u32 %v7295, 16
      %v7471 = vrot.slane %v7469, 5
      %v7472 = vsel %vm2870, %v7467, %v7471
      %v7473 = vshrl.u32 %v7295, 16
      %v7475 = vrot.slane %v7473, 4
      %v7476 = vor.u32 %v7475, %v7471
      %v7477 = vrot.slane %v7476, 4
      %v7479 = vshll.u32 %v7296, 16
      %v7481 = vrot.slane %v7479, 5
      %v7482 = vsel %vm2870, %v7477, %v7481
      %v7483 = vshrl.u32 %v7296, 16
      %v7485 = vrot.slane %v7483, 4
      %v7486 = vor.u32 %v7485, %v7481
      %v7487 = vrot.slane %v7486, 4
      %v7489 = vshll.u32 %v7297, 16
      %v7491 = vrot.slane %v7489, 5
      %v7492 = vsel %vm2870, %v7487, %v7491
      %v7493 = vshrl.u32 %v7297, 16
      %v7495 = vrot.slane %v7493, 4
      %v7496 = vor.u32 %v7495, %v7491
      %v7497 = vrot.slane %v7496, 4
      %v7499 = vshll.u32 %v7298, 16
      %v7501 = vrot.slane %v7499, 5
      %v7502 = vsel %vm2870, %v7497, %v7501
      %7503 = vrot.lane.b32.xlu0 %v7312, 96
      %v7504 = vpop.permute.xlu0 %7503
      %7505 = vrot.lane.b32.xlu0 %v7322, 96
      %v7506 = vpop.permute.xlu0 %7505
      %7507 = vrot.lane.b32.xlu0 %v7332, 96
      %v7508 = vpop.permute.xlu0 %7507
      %7509 = vrot.lane.b32.xlu0 %v7342, 96
      %v7510 = vpop.permute.xlu0 %7509
      %7511 = vrot.lane.b32.xlu0 %v7352, 96
      %v7512 = vpop.permute.xlu0 %7511
      %7513 = vrot.lane.b32.xlu0 %v7362, 96
      %v7514 = vpop.permute.xlu0 %7513
      %7515 = vrot.lane.b32.xlu0 %v7372, 96
      %v7516 = vpop.permute.xlu0 %7515
      %7517 = vrot.lane.b32.xlu0 %v7382, 96
      %v7518 = vpop.permute.xlu0 %7517
      %7519 = vrot.lane.b32.xlu0 %v7392, 96
      %v7520 = vpop.permute.xlu0 %7519
      %7521 = vrot.lane.b32.xlu0 %v7402, 96
      %v7522 = vpop.permute.xlu0 %7521
      %7523 = vrot.lane.b32.xlu0 %v7412, 96
      %v7524 = vpop.permute.xlu0 %7523
      %7525 = vrot.lane.b32.xlu0 %v7422, 96
      %v7526 = vpop.permute.xlu0 %7525
      %7527 = vrot.lane.b32.xlu0 %v7432, 96
      %v7528 = vpop.permute.xlu0 %7527
      %7529 = vrot.lane.b32.xlu0 %v7442, 96
      %v7530 = vpop.permute.xlu0 %7529
      %7531 = vrot.lane.b32.xlu0 %v7452, 96
      %v7532 = vpop.permute.xlu0 %7531
      %7533 = vrot.lane.b32.xlu0 %v7462, 96
      %v7534 = vpop.permute.xlu0 %7533
      %7535 = vrot.lane.b32.xlu0 %v7472, 96
      %v7536 = vpop.permute.xlu0 %7535
      %7537 = vrot.lane.b32.xlu0 %v7482, 96
      %v7538 = vpop.permute.xlu0 %7537
      %7539 = vrot.lane.b32.xlu0 %v7492, 96
      %v7540 = vpop.permute.xlu0 %7539
      %7541 = vrot.lane.b32.xlu0 %v7502, 96
      %v7542 = vpop.permute.xlu0 %7541
      %7563 = vst.msk [vmem:[#allocation3 + $0x4] sm:$0xf] %vm3635, %v7504
      %7564 = vst.msk [vmem:[#allocation3 + $0x10] sm:$0xf] %vm3635, %v7506
      %7565 = vst.msk [vmem:[#allocation3 + $0x1c] sm:$0xf] %vm3635, %v7508
      %7566 = vst.msk [vmem:[#allocation3 + $0x28] sm:$0xf] %vm3635, %v7510
      %7567 = vst.msk [vmem:[#allocation3 + $0x34] sm:$0xf] %vm3635, %v7512
      %7568 = vst.msk [vmem:[#allocation3 + $0x40] sm:$0xf] %vm3635, %v7514
      %7569 = vst.msk [vmem:[#allocation3 + $0x4c] sm:$0xf] %vm3635, %v7516
      %7570 = vst.msk [vmem:[#allocation3 + $0x58] sm:$0xf] %vm3635, %v7518
      %7571 = vst.msk [vmem:[#allocation3 + $0x64] sm:$0xf] %vm3635, %v7520
      %7572 = vst.msk [vmem:[#allocation3 + $0x70] sm:$0xf] %vm3635, %v7522
      %7573 = vst.msk [vmem:[#allocation3 + $0x7c] sm:$0xf] %vm3635, %v7524
      %7574 = vst.msk [vmem:[#allocation3 + $0x88] sm:$0xf] %vm3635, %v7526
      %7575 = vst.msk [vmem:[#allocation3 + $0x94] sm:$0xf] %vm3635, %v7528
      %7576 = vst.msk [vmem:[#allocation3 + $0xa0] sm:$0xf] %vm3635, %v7530
      %7577 = vst.msk [vmem:[#allocation3 + $0xac] sm:$0xf] %vm3635, %v7532
      %7578 = vst.msk [vmem:[#allocation3 + $0xb8] sm:$0xf] %vm3635, %v7534
      %7579 = vst.msk [vmem:[#allocation3 + $0xc4] sm:$0xf] %vm3635, %v7536
      %7580 = vst.msk [vmem:[#allocation3 + $0xd0] sm:$0xf] %vm3635, %v7538
      %7581 = vst.msk [vmem:[#allocation3 + $0xdc] sm:$0xf] %vm3635, %v7540
      %7582 = vst.msk [vmem:[#allocation3 + $0xe8] sm:$0xf] %vm3635, %v7542
      %v7583 = vld [vmem:[#allocation5 + $0x10] sm:$0xe]
      %v7584 = vld [vmem:[#allocation5 + $0x14] sm:$0xf]
      %v7585 = vld [vmem:[#allocation5 + $0x18] sm:$0xf]
      %v7586 = vld [vmem:[#allocation5 + $0x1c] sm:$0xf]
      %v7587 = vld [vmem:[#allocation5 + $0x20] sm:$0xf]
      %v7588 = vld [vmem:[#allocation5 + $0x24] sm:$0xf]
      %v7589 = vld [vmem:[#allocation5 + $0x28] sm:$0xf]
      %v7590 = vld [vmem:[#allocation5 + $0x2c] sm:$0xf]
      %v7591 = vld [vmem:[#allocation5 + $0x30] sm:$0xf]
      %v7592 = vld [vmem:[#allocation5 + $0x34] sm:$0xf]
      %v7593 = vld [vmem:[#allocation5 + $0x38] sm:$0xf]
      %v7594 = vld [vmem:[#allocation5 + $0x3c] sm:$0xf]
      %v7595 = vld [vmem:[#allocation5 + $0x40] sm:$0xf]
      %v7596 = vld [vmem:[#allocation5 + $0x44] sm:$0xf]
      %v7597 = vld [vmem:[#allocation5 + $0x48] sm:$0xf]
      %v7598 = vld [vmem:[#allocation5 + $0x4c] sm:$0xf]
      %v7599 = vld [vmem:[#allocation5 + $0x50] sm:$0xf]
      %v7600 = vld [vmem:[#allocation5 + $0x54] sm:$0xf]
      %v7601 = vld [vmem:[#allocation5 + $0x58] sm:$0xf]
      %v7602 = vld [vmem:[#allocation5 + $0x5c] sm:$0xf]
      %v7603 = vld [vmem:[#allocation5 + $0x60] sm:$0x1]
      %v7625 = vrot.slane %v7583, 5
      %v7626 = vrot.slane %v7625, 4
      %v7627 = vrot.slane %v7584, 5
      %v7628 = vsel %vm3306, %v7626, %v7627
      %v7629 = vrot.slane %v7627, 4
      %v7630 = vrot.slane %v7585, 5
      %v7631 = vsel %vm3306, %v7629, %v7630
      %v7632 = vrot.slane %v7630, 4
      %v7633 = vrot.slane %v7586, 5
      %v7634 = vsel %vm3306, %v7632, %v7633
      %v7635 = vrot.slane %v7633, 4
      %v7636 = vrot.slane %v7587, 5
      %v7637 = vsel %vm3306, %v7635, %v7636
      %v7638 = vrot.slane %v7636, 4
      %v7639 = vrot.slane %v7588, 5
      %v7640 = vsel %vm3306, %v7638, %v7639
      %v7641 = vrot.slane %v7639, 4
      %v7642 = vrot.slane %v7589, 5
      %v7643 = vsel %vm3306, %v7641, %v7642
      %v7644 = vrot.slane %v7642, 4
      %v7645 = vrot.slane %v7590, 5
      %v7646 = vsel %vm3306, %v7644, %v7645
      %v7647 = vrot.slane %v7645, 4
      %v7648 = vrot.slane %v7591, 5
      %v7649 = vsel %vm3306, %v7647, %v7648
      %v7650 = vrot.slane %v7648, 4
      %v7651 = vrot.slane %v7592, 5
      %v7652 = vsel %vm3306, %v7650, %v7651
      %v7653 = vrot.slane %v7651, 4
      %v7654 = vrot.slane %v7593, 5
      %v7655 = vsel %vm3306, %v7653, %v7654
      %v7656 = vrot.slane %v7654, 4
      %v7657 = vrot.slane %v7594, 5
      %v7658 = vsel %vm3306, %v7656, %v7657
      %v7659 = vrot.slane %v7657, 4
      %v7660 = vrot.slane %v7595, 5
      %v7661 = vsel %vm3306, %v7659, %v7660
      %v7662 = vrot.slane %v7660, 4
      %v7663 = vrot.slane %v7596, 5
      %v7664 = vsel %vm3306, %v7662, %v7663
      %v7665 = vrot.slane %v7663, 4
      %v7666 = vrot.slane %v7597, 5
      %v7667 = vsel %vm3306, %v7665, %v7666
      %v7668 = vrot.slane %v7666, 4
      %v7669 = vrot.slane %v7598, 5
      %v7670 = vsel %vm3306, %v7668, %v7669
      %v7671 = vrot.slane %v7669, 4
      %v7672 = vrot.slane %v7599, 5
      %v7673 = vsel %vm3306, %v7671, %v7672
      %v7674 = vrot.slane %v7672, 4
      %v7675 = vrot.slane %v7600, 5
      %v7676 = vsel %vm3306, %v7674, %v7675
      %v7677 = vrot.slane %v7675, 4
      %v7678 = vrot.slane %v7601, 5
      %v7679 = vsel %vm3306, %v7677, %v7678
      %v7680 = vrot.slane %v7678, 4
      %v7681 = vrot.slane %v7602, 5
      %v7682 = vsel %vm3306, %v7680, %v7681
      %v7683 = vrot.slane %v7681, 4
      %v7684 = vrot.slane %v7603, 5
      %v7685 = vsel %vm3306, %v7683, %v7684
      %7706 = vst.msk [vmem:[#allocation3 + $0x8] sm:$0xf] %vm2764, %v7628
      %7707 = vst.msk [vmem:[#allocation3 + $0x14] sm:$0xf] %vm2764, %v7631
      %7708 = vst.msk [vmem:[#allocation3 + $0x20] sm:$0xf] %vm2764, %v7634
      %7709 = vst.msk [vmem:[#allocation3 + $0x2c] sm:$0xf] %vm2764, %v7637
      %7710 = vst.msk [vmem:[#allocation3 + $0x38] sm:$0xf] %vm2764, %v7640
      %7711 = vst.msk [vmem:[#allocation3 + $0x44] sm:$0xf] %vm2764, %v7643
      %7712 = vst.msk [vmem:[#allocation3 + $0x50] sm:$0xf] %vm2764, %v7646
      %7713 = vst.msk [vmem:[#allocation3 + $0x5c] sm:$0xf] %vm2764, %v7649
      %7714 = vst.msk [vmem:[#allocation3 + $0x68] sm:$0xf] %vm2764, %v7652
      %7715 = vst.msk [vmem:[#allocation3 + $0x74] sm:$0xf] %vm2764, %v7655
      %7716 = vst.msk [vmem:[#allocation3 + $0x80] sm:$0xf] %vm2764, %v7658
      %7717 = vst.msk [vmem:[#allocation3 + $0x8c] sm:$0xf] %vm2764, %v7661
      %7718 = vst.msk [vmem:[#allocation3 + $0x98] sm:$0xf] %vm2764, %v7664
      %7719 = vst.msk [vmem:[#allocation3 + $0xa4] sm:$0xf] %vm2764, %v7667
      %7720 = vst.msk [vmem:[#allocation3 + $0xb0] sm:$0xf] %vm2764, %v7670
      %7721 = vst.msk [vmem:[#allocation3 + $0xbc] sm:$0xf] %vm2764, %v7673
      %7722 = vst.msk [vmem:[#allocation3 + $0xc8] sm:$0xf] %vm2764, %v7676
      %7723 = vst.msk [vmem:[#allocation3 + $0xd4] sm:$0xf] %vm2764, %v7679
      %7724 = vst.msk [vmem:[#allocation3 + $0xe0] sm:$0xf] %vm2764, %v7682
      %7725 = vst.msk [vmem:[#allocation3 + $0xec] sm:$0xf] %vm2764, %v7685
      %v7726 = vld [vmem:[#allocation3] sm:$0xff]
      %v7727 = vld [vmem:[#allocation3 + $0x8] sm:$0xf]
      %v7728 = vld [vmem:[#allocation3 + $0xc] sm:$0xff]
      %v7729 = vld [vmem:[#allocation3 + $0x14] sm:$0xf]
      %v7730 = vld [vmem:[#allocation3 + $0x18] sm:$0xff]
      %v7731 = vld [vmem:[#allocation3 + $0x20] sm:$0xf]
      %v7732 = vld [vmem:[#allocation3 + $0x24] sm:$0xff]
      %v7733 = vld [vmem:[#allocation3 + $0x2c] sm:$0xf]
      %v7734 = vld [vmem:[#allocation3 + $0x30] sm:$0xff]
      %v7735 = vld [vmem:[#allocation3 + $0x38] sm:$0xf]
      %v7736 = vld [vmem:[#allocation3 + $0x3c] sm:$0xff]
      %v7737 = vld [vmem:[#allocation3 + $0x44] sm:$0xf]
      %v7738 = vld [vmem:[#allocation3 + $0x48] sm:$0xff]
      %v7739 = vld [vmem:[#allocation3 + $0x50] sm:$0xf]
      %v7740 = vld [vmem:[#allocation3 + $0x54] sm:$0xff]
      %v7741 = vld [vmem:[#allocation3 + $0x5c] sm:$0xf]
      %v7742 = vld [vmem:[#allocation3 + $0x60] sm:$0xff]
      %v7743 = vld [vmem:[#allocation3 + $0x68] sm:$0xf]
      %v7744 = vld [vmem:[#allocation3 + $0x6c] sm:$0xff]
      %v7745 = vld [vmem:[#allocation3 + $0x74] sm:$0xf]
      %v7746 = vld [vmem:[#allocation3 + $0x78] sm:$0xff]
      %v7747 = vld [vmem:[#allocation3 + $0x80] sm:$0xf]
      %v7748 = vld [vmem:[#allocation3 + $0x84] sm:$0xff]
      %v7749 = vld [vmem:[#allocation3 + $0x8c] sm:$0xf]
      %v7750 = vld [vmem:[#allocation3 + $0x90] sm:$0xff]
      %v7751 = vld [vmem:[#allocation3 + $0x98] sm:$0xf]
      %v7752 = vld [vmem:[#allocation3 + $0x9c] sm:$0xff]
      %v7753 = vld [vmem:[#allocation3 + $0xa4] sm:$0xf]
      %v7754 = vld [vmem:[#allocation3 + $0xa8] sm:$0xff]
      %v7755 = vld [vmem:[#allocation3 + $0xb0] sm:$0xf]
      %v7756 = vld [vmem:[#allocation3 + $0xb4] sm:$0xff]
      %v7757 = vld [vmem:[#allocation3 + $0xbc] sm:$0xf]
      %v7758 = vld [vmem:[#allocation3 + $0xc0] sm:$0xff]
      %v7759 = vld [vmem:[#allocation3 + $0xc8] sm:$0xf]
      %v7760 = vld [vmem:[#allocation3 + $0xcc] sm:$0xff]
      %v7761 = vld [vmem:[#allocation3 + $0xd4] sm:$0xf]
      %v7762 = vld [vmem:[#allocation3 + $0xd8] sm:$0xff]
      %v7763 = vld [vmem:[#allocation3 + $0xe0] sm:$0xf]
      %v7764 = vld [vmem:[#allocation3 + $0xe4] sm:$0xff]
      %v7765 = vld [vmem:[#allocation3 + $0xec] sm:$0xf]
      %v7766 = vld [vmem:[%s5] sm:$0xf]
      %v7767 = vld [vmem:[%s5 + $0x4] sm:$0xf]
      %v7768 = vld [vmem:[%s5 + $0x8] sm:$0xf]
      %v7769 = vld [vmem:[%s5 + $0xc] sm:$0xf]
      %v7770 = vld [vmem:[%s5 + $0x10] sm:$0xf]
      %v7771 = vld [vmem:[%s5 + $0x14] sm:$0xf]
      %v7772 = vld [vmem:[%s5 + $0x18] sm:$0xf]
      %v7773 = vld [vmem:[%s5 + $0x1c] sm:$0xf]
      %v7774 = vld [vmem:[%s5 + $0x20] sm:$0xf]
      %v7775 = vld [vmem:[%s5 + $0x24] sm:$0xf]
      %v7776 = vld [vmem:[%s5 + $0x28] sm:$0xf]
      %v7777 = vld [vmem:[%s5 + $0x2c] sm:$0xf]
      %v7778 = vld [vmem:[%s5 + $0x30] sm:$0xf]
      %v7779 = vld [vmem:[%s5 + $0x34] sm:$0xf]
      %v7780 = vld [vmem:[%s5 + $0x38] sm:$0xf]
      %v7781 = vld [vmem:[%s5 + $0x3c] sm:$0xf]
      %v7782 = vld [vmem:[%s5 + $0x40] sm:$0xf]
      %v7783 = vld [vmem:[%s5 + $0x44] sm:$0xf]
      %v7784 = vld [vmem:[%s5 + $0x48] sm:$0xf]
      %v7785 = vld [vmem:[%s5 + $0x4c] sm:$0xf]
      %v7786 = vld [vmem:[%s5 + $0x50] sm:$0xf]
      %v7787 = vld [vmem:[%s5 + $0x54] sm:$0xf]
      %v7788 = vld [vmem:[%s5 + $0x58] sm:$0xf]
      %v7789 = vld [vmem:[%s5 + $0x5c] sm:$0xf]
      %v7790 = vld [vmem:[%s5 + $0x60] sm:$0xf]
      %v7791 = vld [vmem:[%s5 + $0x64] sm:$0xf]
      %v7792 = vld [vmem:[%s5 + $0x68] sm:$0xf]
      %v7793 = vld [vmem:[%s5 + $0x6c] sm:$0xf]
      %v7794 = vld [vmem:[%s5 + $0x70] sm:$0xf]
      %v7795 = vld [vmem:[%s5 + $0x74] sm:$0xf]
      %v7796 = vld [vmem:[%s5 + $0x78] sm:$0xf]
      %v7797 = vld [vmem:[%s5 + $0x7c] sm:$0xf]
      %v7798 = vld [vmem:[%s5 + $0x80] sm:$0xf]
      %v7799 = vld [vmem:[%s5 + $0x84] sm:$0xf]
      %v7800 = vld [vmem:[%s5 + $0x88] sm:$0xf]
      %v7801 = vld [vmem:[%s5 + $0x8c] sm:$0xf]
      %v7802 = vld [vmem:[%s6] sm:$0x1]
      %v7804 = vlaneseq
      %v7805 = vshrl.u32 %v7804, 7
      %v7806 = vsub.s32 0, %v7805
      %v7807 = vrot.slane %v7802, %v7806
      %v7849 = vunpack.c.l.b16 %v7726
      %v7850 = vunpack.c.h.b16 %v7726
      %v7851 = vunpack.c.l.b16 %v7727
      %v7852 = vunpack.c.l.b16 %v7728
      %v7853 = vunpack.c.h.b16 %v7728
      %v7854 = vunpack.c.l.b16 %v7729
      %v7855 = vunpack.c.l.b16 %v7730
      %v7856 = vunpack.c.h.b16 %v7730
      %v7857 = vunpack.c.l.b16 %v7731
      %v7858 = vunpack.c.l.b16 %v7732
      %v7859 = vunpack.c.h.b16 %v7732
      %v7860 = vunpack.c.l.b16 %v7733
      %v7861 = vunpack.c.l.b16 %v7734
      %v7862 = vunpack.c.h.b16 %v7734
      %v7863 = vunpack.c.l.b16 %v7735
      %v7864 = vunpack.c.l.b16 %v7736
      %v7865 = vunpack.c.h.b16 %v7736
      %v7866 = vunpack.c.l.b16 %v7737
      %v7867 = vunpack.c.l.b16 %v7738
      %v7868 = vunpack.c.h.b16 %v7738
      %v7869 = vunpack.c.l.b16 %v7739
      %v7870 = vunpack.c.l.b16 %v7740
      %v7871 = vunpack.c.h.b16 %v7740
      %v7872 = vunpack.c.l.b16 %v7741
      %v7873 = vunpack.c.l.b16 %v7742
      %v7874 = vunpack.c.h.b16 %v7742
      %v7875 = vunpack.c.l.b16 %v7743
      %v7876 = vunpack.c.l.b16 %v7744
      %v7877 = vunpack.c.h.b16 %v7744
      %v7878 = vunpack.c.l.b16 %v7745
      %v7879 = vunpack.c.l.b16 %v7746
      %v7880 = vunpack.c.h.b16 %v7746
      %v7881 = vunpack.c.l.b16 %v7747
      %v7882 = vunpack.c.l.b16 %v7748
      %v7883 = vunpack.c.h.b16 %v7748
      %v7884 = vunpack.c.l.b16 %v7749
      %v7885 = vunpack.c.l.b16 %v7750
      %v7886 = vunpack.c.h.b16 %v7750
      %v7887 = vunpack.c.l.b16 %v7751
      %v7888 = vunpack.c.l.b16 %v7752
      %v7889 = vunpack.c.h.b16 %v7752
      %v7890 = vunpack.c.l.b16 %v7753
      %v7891 = vunpack.c.l.b16 %v7754
      %v7892 = vunpack.c.h.b16 %v7754
      %v7893 = vunpack.c.l.b16 %v7755
      %v7894 = vunpack.c.l.b16 %v7756
      %v7895 = vunpack.c.h.b16 %v7756
      %v7896 = vunpack.c.l.b16 %v7757
      %v7897 = vunpack.c.l.b16 %v7758
      %v7898 = vunpack.c.h.b16 %v7758
      %v7899 = vunpack.c.l.b16 %v7759
      %v7900 = vunpack.c.l.b16 %v7760
      %v7901 = vunpack.c.h.b16 %v7760
      %v7902 = vunpack.c.l.b16 %v7761
      %v7903 = vunpack.c.l.b16 %v7762
      %v7904 = vunpack.c.h.b16 %v7762
      %v7905 = vunpack.c.l.b16 %v7763
      %v7906 = vunpack.c.l.b16 %v7764
      %v7907 = vunpack.c.h.b16 %v7764
      %v7908 = vunpack.c.l.b16 %v7765
      %v7909 = vpack.c.b16 %v7852, %v7849
      %v7910 = vpack.c.b16 %v7853, %v7850
      %v7911 = vpack.c.b16 %v7854, %v7851
      %v7912 = vpack.c.b16 %v7858, %v7855
      %v7913 = vpack.c.b16 %v7859, %v7856
      %v7914 = vpack.c.b16 %v7860, %v7857
      %v7915 = vpack.c.b16 %v7864, %v7861
      %v7916 = vpack.c.b16 %v7865, %v7862
      %v7917 = vpack.c.b16 %v7866, %v7863
      %v7918 = vpack.c.b16 %v7870, %v7867
      %v7919 = vpack.c.b16 %v7871, %v7868
      %v7920 = vpack.c.b16 %v7872, %v7869
      %v7921 = vpack.c.b16 %v7876, %v7873
      %v7922 = vpack.c.b16 %v7877, %v7874
      %v7923 = vpack.c.b16 %v7878, %v7875
      %v7924 = vpack.c.b16 %v7882, %v7879
      %v7925 = vpack.c.b16 %v7883, %v7880
      %v7926 = vpack.c.b16 %v7884, %v7881
      %v7927 = vpack.c.b16 %v7888, %v7885
      %v7928 = vpack.c.b16 %v7889, %v7886
      %v7929 = vpack.c.b16 %v7890, %v7887
      %v7930 = vpack.c.b16 %v7894, %v7891
      %v7931 = vpack.c.b16 %v7895, %v7892
      %v7932 = vpack.c.b16 %v7896, %v7893
      %v7933 = vpack.c.b16 %v7900, %v7897
      %v7934 = vpack.c.b16 %v7901, %v7898
      %v7935 = vpack.c.b16 %v7902, %v7899
      %v7936 = vpack.c.b16 %v7906, %v7903
      %v7937 = vpack.c.b16 %v7907, %v7904
      %v7938 = vpack.c.b16 %v7908, %v7905
      %v7995 = vunpack.c.l.b16 %v7766
      %v7996 = vunpack.c.l.b16 %v7767
      %v7997 = vunpack.c.l.b16 %v7768
      %v7998 = vunpack.c.l.b16 %v7769
      %v7999 = vunpack.c.l.b16 %v7770
      %v8000 = vunpack.c.l.b16 %v7771
      %v8001 = vunpack.c.l.b16 %v7772
      %v8002 = vunpack.c.l.b16 %v7773
      %v8003 = vunpack.c.l.b16 %v7774
      %v8004 = vunpack.c.l.b16 %v7775
      %v8005 = vunpack.c.l.b16 %v7776
      %v8006 = vunpack.c.l.b16 %v7777
      %v8007 = vunpack.c.l.b16 %v7778
      %v8008 = vunpack.c.l.b16 %v7779
      %v8009 = vunpack.c.l.b16 %v7780
      %v8010 = vunpack.c.l.b16 %v7781
      %v8011 = vunpack.c.l.b16 %v7782
      %v8012 = vunpack.c.l.b16 %v7783
      %v8013 = vunpack.c.l.b16 %v7784
      %v8014 = vunpack.c.l.b16 %v7785
      %v8015 = vunpack.c.l.b16 %v7786
      %v8016 = vunpack.c.l.b16 %v7787
      %v8017 = vunpack.c.l.b16 %v7788
      %v8018 = vunpack.c.l.b16 %v7789
      %v8019 = vunpack.c.l.b16 %v7790
      %v8020 = vunpack.c.l.b16 %v7791
      %v8021 = vunpack.c.l.b16 %v7792
      %v8022 = vunpack.c.l.b16 %v7793
      %v8023 = vunpack.c.l.b16 %v7794
      %v8024 = vunpack.c.l.b16 %v7795
      %v8025 = vunpack.c.l.b16 %v7796
      %v8026 = vunpack.c.l.b16 %v7797
      %v8027 = vunpack.c.l.b16 %v7798
      %v8028 = vunpack.c.l.b16 %v7799
      %v8029 = vunpack.c.l.b16 %v7800
      %v8030 = vunpack.c.l.b16 %v7801
      %v8031 = vpack.c.b16 %v7996, %v7995
      %v8032 = vpack.c.b16 %v7998, %v7997
      %v8033 = vpack.c.b16 %v8000, %v7999
      %v8034 = vpack.c.b16 %v8002, %v8001
      %v8035 = vpack.c.b16 %v8004, %v8003
      %v8036 = vpack.c.b16 %v8006, %v8005
      %v8037 = vpack.c.b16 %v8008, %v8007
      %v8038 = vpack.c.b16 %v8010, %v8009
      %v8039 = vpack.c.b16 %v8012, %v8011
      %v8040 = vpack.c.b16 %v8014, %v8013
      %v8041 = vpack.c.b16 %v8016, %v8015
      %v8042 = vpack.c.b16 %v8018, %v8017
      %v8043 = vpack.c.b16 %v8020, %v8019
      %v8044 = vpack.c.b16 %v8022, %v8021
      %v8045 = vpack.c.b16 %v8024, %v8023
      %v8046 = vpack.c.b16 %v8026, %v8025
      %v8047 = vpack.c.b16 %v8028, %v8027
      %v8048 = vpack.c.b16 %v8030, %v8029
      %v8068 = vsel %vm2647, %v7911, 0
      %v8071 = vsel %vm2647, %v7914, 0
      %v8074 = vsel %vm2647, %v7917, 0
      %v8077 = vsel %vm2647, %v7920, 0
      %v8080 = vsel %vm2647, %v7923, 0
      %v8083 = vsel %vm2647, %v7926, 0
      %v8086 = vsel %vm2647, %v7929, 0
      %v8089 = vsel %vm2647, %v7932, 0
      %v8092 = vsel %vm2647, %v7935, 0
      %v8095 = vsel %vm2647, %v7938, 0
      %8097 = vmatprep.subr.bf16.mxu0 0
      %8098 = vmatpush1.bf16.msra.mxu0 %v8031
      %8099 = vmatprep.subr.bf16.mxu0 0
      %8100 = vmatpush1.bf16.msra.mxu0 %v8032
      %8101 = vmatprep.subr.bf16.mxu0 0
      %8102 = vmatpush1.bf16.msra.mxu0 %v8033
      %8103 = vmatprep.subr.bf16.mxu0 0
      %8104 = vmatpush1.bf16.msra.mxu0 %v8034
      %8105 = vmatprep.subr.bf16.mxu0 0
      %8106 = vmatpush1.bf16.msra.mxu0 %v8035
      %8107 = vmatprep.subr.bf16.mxu0 0
      %8108 = vmatpush1.bf16.msra.mxu0 %v8036
      %8109 = vmatprep.subr.bf16.mxu0 0
      %8110 = vmatpush1.bf16.msra.mxu0 %v8037
      %8111 = vmatprep.subr.bf16.mxu0 0
      %8112 = vmatpush1.bf16.msra.mxu0 %v8038
      %8113 = vmatprep.subr.bf16.mxu0 0
      %8114 = vmatpush1.bf16.msra.mxu0 %v8039
      %8115 = vmatprep.subr.bf16.mxu0 0
      %8116 = vmatpush1.bf16.msra.mxu0 %v8040
      %8117 = vmatprep.subr.bf16.mxu0 0
      %8118 = vmatpush1.bf16.msra.mxu0 %v8041
      %8119 = vmatprep.subr.bf16.mxu0 0
      %8120 = vmatpush1.bf16.msra.mxu0 %v8042
      %8121 = vmatprep.subr.bf16.mxu0 0
      %8122 = vmatpush1.bf16.msra.mxu0 %v8043
      %8123 = vmatprep.subr.bf16.mxu0 0
      %8124 = vmatpush1.bf16.msra.mxu0 %v8044
      %8125 = vmatprep.subr.bf16.mxu0 0
      %8126 = vmatpush1.bf16.msra.mxu0 %v8045
      %8127 = vmatprep.subr.bf16.mxu0 0
      %8128 = vmatpush1.bf16.msra.mxu0 %v8046
      %8129 = vmatprep.mubr.bf16.mxu0 %v7910
      %8130 = vmatmul.mubr.bf16.gmra.mrb[0].mxu0 %v7909
      %v8131 = vpop.f32.mrb[0].mxu0
      %v8132 = vadd.f32 %v7807, %v8131
      %v8133 = vpop.f32.mrb[0].mxu0
      %v8134 = vpop.f32.mrb[0].mxu0
      %v8135 = vadd.f32 %v7807, %v8134
      %v8136 = vpop.f32.mrb[0].mxu0
      %8137 = vmatprep.mubr.bf16.mxu0 %v7913
      %8138 = vmatmul.mubr.bf16.gmra.mrb[0].mxu0 %v7912
      %v8139 = vpop.f32.mrb[0].mxu0
      %v8140 = vadd.f32 %v7807, %v8139
      %v8141 = vpop.f32.mrb[0].mxu0
      %v8142 = vpop.f32.mrb[0].mxu0
      %v8143 = vadd.f32 %v7807, %v8142
      %v8144 = vpop.f32.mrb[0].mxu0
      %8145 = vmatprep.mubr.bf16.mxu0 %v7916
      %8146 = vmatmul.mubr.bf16.gmra.mrb[0].mxu0 %v7915
      %v8147 = vpop.f32.mrb[0].mxu0
      %v8148 = vadd.f32 %v7807, %v8147
      %v8149 = vpop.f32.mrb[0].mxu0
      %v8150 = vpop.f32.mrb[0].mxu0
      %v8151 = vadd.f32 %v7807, %v8150
      %v8152 = vpop.f32.mrb[0].mxu0
      %8153 = vmatprep.mubr.bf16.mxu0 %v7919
      %8154 = vmatmul.mubr.bf16.gmra.mrb[0].mxu0 %v7918
      %v8155 = vpop.f32.mrb[0].mxu0
      %v8156 = vadd.f32 %v7807, %v8155
      %v8157 = vpop.f32.mrb[0].mxu0
      %v8158 = vpop.f32.mrb[0].mxu0
      %v8159 = vadd.f32 %v7807, %v8158
      %v8160 = vpop.f32.mrb[0].mxu0
      %8161 = vmatprep.mubr.bf16.mxu0 %v7922
      %8162 = vmatmul.mubr.bf16.gmra.mrb[0].mxu0 %v7921
      %v8163 = vpop.f32.mrb[0].mxu0
      %v8164 = vadd.f32 %v7807, %v8163
      %v8165 = vpop.f32.mrb[0].mxu0
      %v8166 = vpop.f32.mrb[0].mxu0
      %v8167 = vadd.f32 %v7807, %v8166
      %v8168 = vpop.f32.mrb[0].mxu0
      %8169 = vmatprep.mubr.bf16.mxu0 %v7925
      %8170 = vmatmul.mubr.bf16.gmra.mrb[0].mxu0 %v7924
      %v8171 = vpop.f32.mrb[0].mxu0
      %v8172 = vadd.f32 %v7807, %v8171
      %v8173 = vpop.f32.mrb[0].mxu0
      %v8174 = vpop.f32.mrb[0].mxu0
      %v8175 = vadd.f32 %v7807, %v8174
      %v8176 = vpop.f32.mrb[0].mxu0
      %8177 = vmatprep.mubr.bf16.mxu0 %v7928
      %8178 = vmatmul.mubr.bf16.gmra.mrb[0].mxu0 %v7927
      %v8179 = vpop.f32.mrb[0].mxu0
      %v8180 = vadd.f32 %v7807, %v8179
      %v8181 = vpop.f32.mrb[0].mxu0
      %v8182 = vpop.f32.mrb[0].mxu0
      %v8183 = vadd.f32 %v7807, %v8182
      %v8184 = vpop.f32.mrb[0].mxu0
      %8185 = vmatprep.mubr.bf16.mxu0 %v7931
      %8186 = vmatmul.mubr.bf16.gmra.mrb[0].mxu0 %v7930
      %v8187 = vpop.f32.mrb[0].mxu0
      %v8188 = vadd.f32 %v7807, %v8187
      %v8189 = vpop.f32.mrb[0].mxu0
      %v8190 = vpop.f32.mrb[0].mxu0
      %v8191 = vadd.f32 %v7807, %v8190
      %v8192 = vpop.f32.mrb[0].mxu0
      %8193 = vmatprep.mubr.bf16.mxu0 %v7934
      %8194 = vmatmul.mubr.bf16.gmra.mrb[0].mxu0 %v7933
      %v8195 = vpop.f32.mrb[0].mxu0
      %v8196 = vadd.f32 %v7807, %v8195
      %v8197 = vpop.f32.mrb[0].mxu0
      %v8198 = vpop.f32.mrb[0].mxu0
      %v8199 = vadd.f32 %v7807, %v8198
      %v8200 = vpop.f32.mrb[0].mxu0
      %8201 = vmatprep.mubr.bf16.mxu0 %v7937
      %8202 = vmatmul.mubr.bf16.gmra.mrb[0].mxu0 %v7936
      %v8203 = vpop.f32.mrb[0].mxu0
      %v8204 = vadd.f32 %v7807, %v8203
      %v8205 = vpop.f32.mrb[0].mxu0
      %v8206 = vpop.f32.mrb[0].mxu0
      %v8207 = vadd.f32 %v7807, %v8206
      %v8208 = vpop.f32.mrb[0].mxu0
      %8209 = vdwg.mxu0
      %8210 = vmatprep.subr.bf16.mxu0 0
      %8211 = vmatpush1.bf16.msra.mxu0 %v8047
      %8212 = vmatprep.subr.bf16.mxu0 0
      %8213 = vmatpush1.bf16.msra.mxu0 %v8048
      %8214 = vmatprep.subr.bf16.mxu0 0
      %8215 = vmatpush1.bf16.msra.mxu0 0
      %8216 = vmatprep.subr.bf16.mxu0 0
      %8217 = vmatpush1.bf16.msra.mxu0 0
      %8218 = vmatprep.subr.bf16.mxu0 0
      %8219 = vmatpush1.bf16.msra.mxu0 0
      %8220 = vmatprep.subr.bf16.mxu0 0
      %8221 = vmatpush1.bf16.msra.mxu0 0
      %8222 = vmatprep.subr.bf16.mxu0 0
      %8223 = vmatpush1.bf16.msra.mxu0 0
      %8224 = vmatprep.subr.bf16.mxu0 0
      %8225 = vmatpush1.bf16.msra.mxu0 0
      %8226 = vmatprep.subr.bf16.mxu0 0
      %8227 = vmatpush1.bf16.msra.mxu0 0
      %8228 = vmatprep.subr.bf16.mxu0 0
      %8229 = vmatpush1.bf16.msra.mxu0 0
      %8230 = vmatprep.subr.bf16.mxu0 0
      %8231 = vmatpush1.bf16.msra.mxu0 0
      %8232 = vmatprep.subr.bf16.mxu0 0
      %8233 = vmatpush1.bf16.msra.mxu0 0
      %8234 = vmatprep.subr.bf16.mxu0 0
      %8235 = vmatpush1.bf16.msra.mxu0 0
      %8236 = vmatprep.subr.bf16.mxu0 0
      %8237 = vmatpush1.bf16.msra.mxu0 0
      %8238 = vmatprep.subr.bf16.mxu0 0
      %8239 = vmatpush1.bf16.msra.mxu0 0
      %8240 = vmatprep.subr.bf16.mxu0 0
      %8241 = vmatpush1.bf16.msra.mxu0 0
      %8242 = vmatprep.mubr.bf16.mxu0 0
      %8243 = vmatmul.mubr.bf16.gmra.mrb[0].mxu0 %v8068
      %v8244 = vpop.f32.mrb[0].mxu0
      %v8245 = vadd.f32 %v8132, %v8244
      %v8246 = vpop.f32.mrb[0].mxu0
      %v8247 = vpop.f32.mrb[0].mxu0
      %v8248 = vadd.f32 %v8135, %v8247
      %v8249 = vpop.f32.mrb[0].mxu0
      %8250 = vmatprep.mubr.bf16.mxu0 0
      %8251 = vmatmul.mubr.bf16.gmra.mrb[0].mxu0 %v8071
      %v8252 = vpop.f32.mrb[0].mxu0
      %v8253 = vadd.f32 %v8140, %v8252
      %v8254 = vpop.f32.mrb[0].mxu0
      %v8255 = vpop.f32.mrb[0].mxu0
      %v8256 = vadd.f32 %v8143, %v8255
      %v8257 = vpop.f32.mrb[0].mxu0
      %8258 = vmatprep.mubr.bf16.mxu0 0
      %8259 = vmatmul.mubr.bf16.gmra.mrb[0].mxu0 %v8074
      %v8260 = vpop.f32.mrb[0].mxu0
      %v8261 = vadd.f32 %v8148, %v8260
      %v8262 = vpop.f32.mrb[0].mxu0
      %v8263 = vpop.f32.mrb[0].mxu0
      %v8264 = vadd.f32 %v8151, %v8263
      %v8265 = vpop.f32.mrb[0].mxu0
      %8266 = vmatprep.mubr.bf16.mxu0 0
      %8267 = vmatmul.mubr.bf16.gmra.mrb[0].mxu0 %v8077
      %v8268 = vpop.f32.mrb[0].mxu0
      %v8269 = vadd.f32 %v8156, %v8268
      %v8270 = vpop.f32.mrb[0].mxu0
      %v8271 = vpop.f32.mrb[0].mxu0
      %v8272 = vadd.f32 %v8159, %v8271
      %v8273 = vpop.f32.mrb[0].mxu0
      %8274 = vmatprep.mubr.bf16.mxu0 0
      %8275 = vmatmul.mubr.bf16.gmra.mrb[0].mxu0 %v8080
      %v8276 = vpop.f32.mrb[0].mxu0
      %v8277 = vadd.f32 %v8164, %v8276
      %v8278 = vpop.f32.mrb[0].mxu0
      %v8279 = vpop.f32.mrb[0].mxu0
      %v8280 = vadd.f32 %v8167, %v8279
      %v8281 = vpop.f32.mrb[0].mxu0
      %8282 = vmatprep.mubr.bf16.mxu0 0
      %8283 = vmatmul.mubr.bf16.gmra.mrb[0].mxu0 %v8083
      %v8284 = vpop.f32.mrb[0].mxu0
      %v8285 = vadd.f32 %v8172, %v8284
      %v8286 = vpop.f32.mrb[0].mxu0
      %v8287 = vpop.f32.mrb[0].mxu0
      %v8288 = vadd.f32 %v8175, %v8287
      %v8289 = vpop.f32.mrb[0].mxu0
      %8290 = vmatprep.mubr.bf16.mxu0 0
      %8291 = vmatmul.mubr.bf16.gmra.mrb[0].mxu0 %v8086
      %v8292 = vpop.f32.mrb[0].mxu0
      %v8293 = vadd.f32 %v8180, %v8292
      %v8294 = vpop.f32.mrb[0].mxu0
      %v8295 = vpop.f32.mrb[0].mxu0
      %v8296 = vadd.f32 %v8183, %v8295
      %v8297 = vpop.f32.mrb[0].mxu0
      %8298 = vmatprep.mubr.bf16.mxu0 0
      %8299 = vmatmul.mubr.bf16.gmra.mrb[0].mxu0 %v8089
      %v8300 = vpop.f32.mrb[0].mxu0
      %v8301 = vadd.f32 %v8188, %v8300
      %v8302 = vpop.f32.mrb[0].mxu0
      %v8303 = vpop.f32.mrb[0].mxu0
      %v8304 = vadd.f32 %v8191, %v8303
      %v8305 = vpop.f32.mrb[0].mxu0
      %8306 = vmatprep.mubr.bf16.mxu0 0
      %8307 = vmatmul.mubr.bf16.gmra.mrb[0].mxu0 %v8092
      %v8308 = vpop.f32.mrb[0].mxu0
      %v8309 = vadd.f32 %v8196, %v8308
      %v8310 = vpop.f32.mrb[0].mxu0
      %v8311 = vpop.f32.mrb[0].mxu0
      %v8312 = vadd.f32 %v8199, %v8311
      %v8313 = vpop.f32.mrb[0].mxu0
      %8314 = vmatprep.mubr.bf16.mxu0 0
      %8315 = vmatmul.mubr.bf16.gmra.mrb[0].mxu0 %v8095
      %v8316 = vpop.f32.mrb[0].mxu0
      %v8317 = vadd.f32 %v8204, %v8316
      %v8318 = vpop.f32.mrb[0].mxu0
      %v8319 = vpop.f32.mrb[0].mxu0
      %v8320 = vadd.f32 %v8207, %v8319
      %v8321 = vpop.f32.mrb[0].mxu0
      %8322 = vdwg.mxu0
      %v8323 = vmul.f32 %v8245, 0.5
      %v8324 = vmul.f32 %v8248, 0.5
      %v8325 = vmul.f32 %v8253, 0.5
      %v8326 = vmul.f32 %v8256, 0.5
      %v8327 = vmul.f32 %v8261, 0.5
      %v8328 = vmul.f32 %v8264, 0.5
      %v8329 = vmul.f32 %v8269, 0.5
      %v8330 = vmul.f32 %v8272, 0.5
      %v8331 = vmul.f32 %v8277, 0.5
      %v8332 = vmul.f32 %v8280, 0.5
      %v8333 = vmul.f32 %v8285, 0.5
      %v8334 = vmul.f32 %v8288, 0.5
      %v8335 = vmul.f32 %v8293, 0.5
      %v8336 = vmul.f32 %v8296, 0.5
      %v8337 = vmul.f32 %v8301, 0.5
      %v8338 = vmul.f32 %v8304, 0.5
      %v8339 = vmul.f32 %v8309, 0.5
      %v8340 = vmul.f32 %v8312, 0.5
      %v8341 = vmul.f32 %v8317, 0.5
      %v8342 = vmul.f32 %v8320, 0.5
      %v8343 = vmul.f32 %v8245, 0.70710677
      %v8344 = vmul.f32 %v8248, 0.70710677
      %v8345 = vmul.f32 %v8253, 0.70710677
      %v8346 = vmul.f32 %v8256, 0.70710677
      %v8347 = vmul.f32 %v8261, 0.70710677
      %v8348 = vmul.f32 %v8264, 0.70710677
      %v8349 = vmul.f32 %v8269, 0.70710677
      %v8350 = vmul.f32 %v8272, 0.70710677
      %v8351 = vmul.f32 %v8277, 0.70710677
      %v8352 = vmul.f32 %v8280, 0.70710677
      %v8353 = vmul.f32 %v8285, 0.70710677
      %v8354 = vmul.f32 %v8288, 0.70710677
      %v8355 = vmul.f32 %v8293, 0.70710677
      %v8356 = vmul.f32 %v8296, 0.70710677
      %v8357 = vmul.f32 %v8301, 0.70710677
      %v8358 = vmul.f32 %v8304, 0.70710677
      %v8359 = vmul.f32 %v8309, 0.70710677
      %v8360 = vmul.f32 %v8312, 0.70710677
      %v8361 = vmul.f32 %v8317, 0.70710677
      %v8362 = vmul.f32 %v8320, 0.70710677
      %v8363 = verf.f32.pop %v8343
      %v8364 = verf.f32.pop %v8344
      %v8365 = verf.f32.pop %v8345
      %v8366 = verf.f32.pop %v8346
      %v8367 = verf.f32.pop %v8347
      %v8368 = verf.f32.pop %v8348
      %v8369 = verf.f32.pop %v8349
      %v8370 = verf.f32.pop %v8350
      %v8371 = verf.f32.pop %v8351
      %v8372 = verf.f32.pop %v8352
      %v8373 = verf.f32.pop %v8353
      %v8374 = verf.f32.pop %v8354
      %v8375 = verf.f32.pop %v8355
      %v8376 = verf.f32.pop %v8356
      %v8377 = verf.f32.pop %v8357
      %v8378 = verf.f32.pop %v8358
      %v8379 = verf.f32.pop %v8359
      %v8380 = verf.f32.pop %v8360
      %v8381 = verf.f32.pop %v8361
      %v8382 = verf.f32.pop %v8362
      %v8383 = vadd.f32 %v8363, 1.0
      %v8384 = vadd.f32 %v8364, 1.0
      %v8385 = vadd.f32 %v8365, 1.0
      %v8386 = vadd.f32 %v8366, 1.0
      %v8387 = vadd.f32 %v8367, 1.0
      %v8388 = vadd.f32 %v8368, 1.0
      %v8389 = vadd.f32 %v8369, 1.0
      %v8390 = vadd.f32 %v8370, 1.0
      %v8391 = vadd.f32 %v8371, 1.0
      %v8392 = vadd.f32 %v8372, 1.0
      %v8393 = vadd.f32 %v8373, 1.0
      %v8394 = vadd.f32 %v8374, 1.0
      %v8395 = vadd.f32 %v8375, 1.0
      %v8396 = vadd.f32 %v8376, 1.0
      %v8397 = vadd.f32 %v8377, 1.0
      %v8398 = vadd.f32 %v8378, 1.0
      %v8399 = vadd.f32 %v8379, 1.0
      %v8400 = vadd.f32 %v8380, 1.0
      %v8401 = vadd.f32 %v8381, 1.0
      %v8402 = vadd.f32 %v8382, 1.0
      %v8403 = vmul.f32 %v8323, %v8383
      %v8404 = vmul.f32 %v8324, %v8384
      %v8405 = vmul.f32 %v8325, %v8385
      %v8406 = vmul.f32 %v8326, %v8386
      %v8407 = vmul.f32 %v8327, %v8387
      %v8408 = vmul.f32 %v8328, %v8388
      %v8409 = vmul.f32 %v8329, %v8389
      %v8410 = vmul.f32 %v8330, %v8390
      %v8411 = vmul.f32 %v8331, %v8391
      %v8412 = vmul.f32 %v8332, %v8392
      %v8413 = vmul.f32 %v8333, %v8393
      %v8414 = vmul.f32 %v8334, %v8394
      %v8415 = vmul.f32 %v8335, %v8395
      %v8416 = vmul.f32 %v8336, %v8396
      %v8417 = vmul.f32 %v8337, %v8397
      %v8418 = vmul.f32 %v8338, %v8398
      %v8419 = vmul.f32 %v8339, %v8399
      %v8420 = vmul.f32 %v8340, %v8400
      %v8421 = vmul.f32 %v8341, %v8401
      %v8422 = vmul.f32 %v8342, %v8402
      %8423 = vst.msk [vmem:[%s280] sm:$0xff] %vm2647, %v8403
      %8424 = vst.msk [vmem:[%s280 + $0x8] sm:$0xff] %vm2647, %v8404
      %8425 = vst.msk [vmem:[%s280 + $0x10] sm:$0xff] %vm2647, %v8405
      %8426 = vst.msk [vmem:[%s280 + $0x18] sm:$0xff] %vm2647, %v8406
      %8427 = vst.msk [vmem:[%s280 + $0x20] sm:$0xff] %vm2647, %v8407
      %8428 = vst.msk [vmem:[%s280 + $0x28] sm:$0xff] %vm2647, %v8408
      %8429 = vst.msk [vmem:[%s280 + $0x30] sm:$0xff] %vm2647, %v8409
      %8430 = vst.msk [vmem:[%s280 + $0x38] sm:$0xff] %vm2647, %v8410
      %8431 = vst.msk [vmem:[%s280 + $0x40] sm:$0xff] %vm2647, %v8411
      %8432 = vst.msk [vmem:[%s280 + $0x48] sm:$0xff] %vm2647, %v8412
      %8433 = vst.msk [vmem:[%s280 + $0x50] sm:$0xff] %vm2647, %v8413
      %8434 = vst.msk [vmem:[%s280 + $0x58] sm:$0xff] %vm2647, %v8414
      %8435 = vst.msk [vmem:[%s280 + $0x60] sm:$0xff] %vm2647, %v8415
      %8436 = vst.msk [vmem:[%s280 + $0x68] sm:$0xff] %vm2647, %v8416
      %8437 = vst.msk [vmem:[%s280 + $0x70] sm:$0xff] %vm2647, %v8417
      %8438 = vst.msk [vmem:[%s280 + $0x78] sm:$0xff] %vm2647, %v8418
      %8439 = vst.msk [vmem:[%s280 + $0x80] sm:$0xff] %vm2647, %v8419
      %8440 = vst.msk [vmem:[%s280 + $0x88] sm:$0xff] %vm2647, %v8420
      %8441 = vst.msk [vmem:[%s280 + $0x90] sm:$0xff] %vm2647, %v8421
      %8442 = vst.msk [vmem:[%s280 + $0x98] sm:$0xff] %vm2647, %v8422
      %p8443 = scmp.lt.s32.totalorder %s18, 1
      %s8444 = scalar_select %p8443, %s18, 1
      %s8445 = smul.addr %s8444, 20
      %s8446 = smul.addr %s8445, 8
      %s8447 = scalar_lea.vmem %s7, %s8446
      // Predicated region
      $region49: #{my_conv2d_forward.1} parent=47 // pred_check
        %p8448 = pneg %p188
      $region50: #{my_conv2d_forward.1} parent=47 // pred_check_branch
        %8450 = sbr.rel (%p8448) target = $region52
      $region51: #{my_conv2d_forward.1} parent=47 // pred_region
        _
      $region52: #{my_conv2d_forward.1} parent=47 // pred_fallthru
        _
    $region48: #{my_conv2d_forward.1} parent=5 // pred_fallthru
      _
    %p8451 = scmp.le.s32.totalorder 2, %s13
    // Predicated region
    $region53: #{my_conv2d_forward.1} parent=5 // pred_check
      %p8452 = pneg %p8451
    $region54: #{my_conv2d_forward.1} parent=5 // pred_check_branch
      %8454 = sbr.rel (%p8452) target = $region56
    $region55: #{my_conv2d_forward.1} parent=5 // pred_region
      %s8455 = ssub.s32 %s13, 2
      // Predicated region
      $region57: #{my_conv2d_forward.1} parent=55 // pred_check
        %p8456 = pneg %p194
      $region58: #{my_conv2d_forward.1} parent=55 // pred_check_branch
        %8458 = sbr.rel (%p8456) target = $region60
      $region59: #{my_conv2d_forward.1} parent=55 // pred_region
        %p8459 = scmp.lt.s32.totalorder %s19, 1
        %s8460 = scalar_select %p8459, %s19, 1
        %s8461 = smul.addr %s8460, 20
        %s8462 = smul.addr %s8461, 8
        %s8463 = scalar_lea.vmem %s7, %s8462
      $region60: #{my_conv2d_forward.1} parent=55 // pred_fallthru
        _
    $region56: #{my_conv2d_forward.1} parent=5 // pred_fallthru
      _
  $region6: #{my_conv2d_forward.1} parent=0 // loop_footer
    %s17 = sadd.s32 1, %s13
  $region7: #{my_conv2d_forward.1} parent=0 // loop_footer_branch
    %12 = sbr.rel target = $region3
  $region8: #{my_conv2d_forward.1} parent=0 // loop_exit
    _

</llo_original>
